<compile_context>
chip_gen: v6e
topology: v6e:2x2x1
jax: 0.10.0
libtpu: 0.0.40
codegen_flags: <defaults>
</compile_context>

<pallas_src>
import functools

import jax
import jax.numpy as jnp
from jax.experimental import pallas as pl
from jax.experimental.pallas import tpu as pltpu


# ---------------------------------------------------------------------------
# Pallas kernels
# ---------------------------------------------------------------------------
def _gemm_bias_kernel(x_ref, w_ref, b_ref, o_ref, *, relu):
    """o = [relu](x @ w + b); x/w tiles are bf16, accumulation in f32."""
    acc = jnp.dot(x_ref[...], w_ref[...], preferred_element_type=jnp.float32)
    acc = acc + b_ref[...]
    if relu:
        acc = jnp.maximum(acc, 0.0)
    o_ref[...] = acc.astype(o_ref.dtype)


def _head_kernel(x_ref, w1_ref, b1_ref, w2_ref, b2_ref, fc1_ref, out_ref):
    """Fused fc1(+ReLU) and output head; the fc1 activation never leaves VMEM."""
    h = jnp.dot(x_ref[...], w1_ref[...], preferred_element_type=jnp.float32)
    h = jnp.maximum(h + b1_ref[...], 0.0)
    fc1_ref[...] = h.astype(fc1_ref.dtype)
    out = jnp.dot(h.astype(jnp.bfloat16), w2_ref[...],
                  preferred_element_type=jnp.float32) + b2_ref[...]
    out_ref[...] = out.astype(out_ref.dtype)


# ---------------------------------------------------------------------------
# Pallas wrappers
# ---------------------------------------------------------------------------
def gemm_bias(x, w, b, *, relu):
    """x: (M, K) bf16, w: (K, N) bf16, b: (1, N) f32 -> (M, N) f32."""
    M, K = x.shape
    Kw, N = w.shape
    assert K == Kw and b.shape == (1, N)
    kernel = functools.partial(_gemm_bias_kernel, relu=relu)
    out_shape = jax.ShapeDtypeStruct((M, N), jnp.float32)

    # Split the row axis into two "parallel" blocks only when there is enough
    # work (conv1): v7x's two TensorCores can then share it. Everywhere else
    # a single launch with whole-array VMEM-resident operands is fastest.
    block_m = M // 2 if (M >= 512 and (M // 2) % 8 == 0) else M
    if block_m == M:
        # Single grid point: full arrays live in VMEM, no pipeline steps.
        return pl.pallas_call(kernel, out_shape=out_shape)(x, w, b)

    return pl.pallas_call(
        kernel,
        out_shape=out_shape,
        grid=(M // block_m,),
        in_specs=[
            pl.BlockSpec((block_m, K), lambda i: (i, 0)),
            pl.BlockSpec((K, N), lambda i: (0, 0)),
            pl.BlockSpec((1, N), lambda i: (0, 0)),
        ],
        out_specs=pl.BlockSpec((block_m, N), lambda i: (i, 0)),
        compiler_params=pltpu.CompilerParams(
            dimension_semantics=("parallel",)),
    )(x, w, b)


def head_fused(x, w1, b1, w2, b2):
    """Fused fc1 + output head in one launch.

    x: (B, K) bf16, w1: (K, N1) bf16, b1: (1, N1) f32,
    w2: (N1, N2) bf16, b2: (1, N2) f32 -> ((B, N1) f32, (B, N2) f32)
    """
    B = x.shape[0]
    N1 = w1.shape[1]
    N2 = w2.shape[1]
    return pl.pallas_call(
        _head_kernel,
        out_shape=(jax.ShapeDtypeStruct((B, N1), jnp.float32),
                   jax.ShapeDtypeStruct((B, N2), jnp.float32)),
    )(x, w1, b1, w2, b2)


# ---------------------------------------------------------------------------
# im2col glue (NHWC; patch columns ordered (kh, kw, c) to match the
# pre-transposed weights from prepare_params).
# ---------------------------------------------------------------------------
def _im2col_nhwc(x, kh, kw, stride):
    B, H, W, C = x.shape
    Ho = (H - kh) // stride + 1
    Wo = (W - kw) // stride + 1
    patches = []
    for i in range(kh):
        for j in range(kw):
            patches.append(
                x[:, i:i + stride * Ho:stride, j:j + stride * Wo:stride, :])
    cols = jnp.stack(patches, axis=3)                 # (B, Ho, Wo, kh*kw, C)
    return cols.reshape(B * Ho * Wo, kh * kw * C), Ho, Wo


def conv2d_relu_nhwc(x_nhwc, w2d, b, *, kh, kw, stride):
    """NHWC conv + ReLU via an im2col GEMM; returns NHWC output (f32)."""
    B = x_nhwc.shape[0]
    Cout = w2d.shape[1]
    cols, Ho, Wo = _im2col_nhwc(x_nhwc, kh, kw, stride)
    y = gemm_bias(cols.astype(jnp.bfloat16), w2d, b, relu=True)
    return y.reshape(B, Ho, Wo, Cout)


# ---------------------------------------------------------------------------
# Parameter init (deterministic, PyTorch-like uniform(-1/sqrt(fan_in), +))
# ---------------------------------------------------------------------------
def init_params(key, num_actions):
    def uni(key, shape, fan_in):
        bound = 1.0 / jnp.sqrt(jnp.float32(fan_in))
        return jax.random.uniform(key, shape, jnp.float32, -bound, bound)

    ks = jax.random.split(key, 10)
    p = {}
    p["w1"] = uni(ks[0], (32, 4, 8, 8), 4 * 8 * 8)
    p["b1"] = uni(ks[1], (32,), 4 * 8 * 8)
    p["w2"] = uni(ks[2], (64, 32, 4, 4), 32 * 4 * 4)
    p["b2"] = uni(ks[3], (64,), 32 * 4 * 4)
    p["w3"] = uni(ks[4], (64, 64, 3, 3), 64 * 3 * 3)
    p["b3"] = uni(ks[5], (64,), 64 * 3 * 3)
    p["wf1"] = uni(ks[6], (512, 64 * 7 * 7), 64 * 7 * 7)
    p["bf1"] = uni(ks[7], (512,), 64 * 7 * 7)
    p["wo"] = uni(ks[8], (num_actions, 512), 512)
    p["bo"] = uni(ks[9], (num_actions,), 512)
    return p


def prepare_params(p):
    """One-time weight re-layout (hoisted out of the forward pass)."""
    def conv_w(w):
        # (Cout, Cin, kh, kw) -> (kh*kw*Cin, Cout): row index
        # (i*kw + j)*Cin + c matches the NHWC im2col column order.
        Cout, Cin, kh, kw = w.shape
        return (jnp.transpose(w, (2, 3, 1, 0))
                .reshape(kh * kw * Cin, Cout)
                .astype(jnp.bfloat16))

    num_actions, hidden = p["wo"].shape
    n_pad = max(128, -(-num_actions // 128) * 128)    # lane-dense output head
    wo_p = jnp.zeros((hidden, n_pad), jnp.bfloat16).at[:, :num_actions].set(
        p["wo"].T.astype(jnp.bfloat16))
    bo_p = jnp.zeros((1, n_pad), jnp.float32).at[0, :num_actions].set(p["bo"])

    return {
        "w1": conv_w(p["w1"]), "b1": p["b1"].reshape(1, -1),
        "w2": conv_w(p["w2"]), "b2": p["b2"].reshape(1, -1),
        "w3": conv_w(p["w3"]), "b3": p["b3"].reshape(1, -1),
        "wf1": p["wf1"].T.astype(jnp.bfloat16),
        "bf1": p["bf1"].reshape(1, -1),
        "wo": wo_p, "bo": bo_p,
    }


# ---------------------------------------------------------------------------
# Forward pass (matches NatureNet.forward, returning the 5-tuple)
# ---------------------------------------------------------------------------
def nature_net_forward(x, q, num_actions):
    """x: (B, 4, 84, 84) NCHW f32; returns (conv1, conv2, conv3, fc1, output)."""
    B = x.shape[0]
    x_nhwc = jnp.transpose(x, (0, 2, 3, 1))                            # (B, 84, 84, 4)

    c1 = conv2d_relu_nhwc(x_nhwc, q["w1"], q["b1"], kh=8, kw=8, stride=4)   # (B,20,20,32)
    c2 = conv2d_relu_nhwc(c1, q["w2"], q["b2"], kh=4, kw=4, stride=2)       # (B, 9, 9,64)
    c3 = conv2d_relu_nhwc(c2, q["w3"], q["b3"], kh=3, kw=3, stride=1)       # (B, 7, 7,64)

    # NCHW materialized only for the returned tensors / torch-.view flatten.
    conv1_out = jnp.transpose(c1, (0, 3, 1, 2))
    conv2_out = jnp.transpose(c2, (0, 3, 1, 2))
    conv3_out = jnp.transpose(c3, (0, 3, 1, 2))

    flat = conv3_out.reshape(B, -1).astype(jnp.bfloat16)   # NCHW flatten == torch .view
    fc1_out, out_padded = head_fused(flat, q["wf1"], q["bf1"], q["wo"], q["bo"])
    output = out_padded[:, :num_actions]
    return conv1_out, conv2_out, conv3_out, fc1_out, output


if __name__ == "__main__":
    key = jax.random.PRNGKey(0)
    k_in, k_param = jax.random.split(key)

    batch = 2
    num_actions = 6
    # fc1 expects 64*7*7 features -> the architecture implies 84x84 input.
    x = jax.random.uniform(k_in, (batch, 4, 84, 84), jnp.float32)
    params = init_params(k_param, num_actions)
    q = prepare_params(params)                 # one-time weight layout + bf16 cast

    fwd = jax.jit(nature_net_forward, static_argnums=(2,))
    outs = fwd(x, q, num_actions)
    outs = jax.block_until_ready(outs)

    expected = [(batch, 32, 20, 20), (batch, 64, 9, 9), (batch, 64, 7, 7),
                (batch, 512), (batch, num_actions)]
    assert [tuple(o.shape) for o in outs] == expected, [o.shape for o in outs]
    assert all(o.dtype == jnp.float32 for o in outs)

    print("KERNEL_OK")
</pallas_src>

<mosaic_0001>
module attributes {stable_mosaic.version = 11 : i64} {
  func.func @_gemm_bias_kernel(%arg0: i32, %arg1: memref<400x256xbf16, #tpu.memory_space<vmem>>, %arg2: memref<256x32xbf16, #tpu.memory_space<vmem>>, %arg3: memref<1x32xf32, #tpu.memory_space<vmem>>, %arg4: memref<400x32xf32, #tpu.memory_space<vmem>>) attributes {dimension_semantics = [#tpu.dimension_semantics<parallel>], iteration_bounds = array<i64: 2>, scalar_prefetch = 0 : i64, scratch_operands = 0 : i64, tpu.core_type = #tpu.core_type<tc>, window_params = [{transform_indices = @transform_0, window_bounds = array<i64: 400, 256>}, {pipeline_mode = #tpu.pipeline_mode<synchronous>, transform_indices = @transform_1, window_bounds = array<i64: 256, 32>}, {pipeline_mode = #tpu.pipeline_mode<synchronous>, transform_indices = @transform_2, window_bounds = array<i64: 1, 32>}, {transform_indices = @transform_3, window_bounds = array<i64: 400, 32>}]} {
    %c0 = arith.constant 0 : index
    %c0_0 = arith.constant 0 : index
    %0 = vector.load %arg1[%c0, %c0_0] : memref<400x256xbf16, #tpu.memory_space<vmem>>, vector<400x256xbf16>
    %c0_1 = arith.constant 0 : index
    %c0_2 = arith.constant 0 : index
    %1 = vector.load %arg2[%c0_1, %c0_2] : memref<256x32xbf16, #tpu.memory_space<vmem>>, vector<256x32xbf16>
    %cst = arith.constant dense<0.000000e+00> : vector<400x32xf32>
    %2 = tpu.matmul %0, %1, %cst {dimension_numbers = #tpu.dot_dimension_numbers<[1], [0], [0], [1], [0, 0, 1, 1], [], []>} : vector<400x256xbf16>, vector<256x32xbf16>, vector<400x32xf32> -> vector<400x32xf32>
    %c0_3 = arith.constant 0 : index
    %c0_4 = arith.constant 0 : index
    %3 = vector.load %arg3[%c0_3, %c0_4] : memref<1x32xf32, #tpu.memory_space<vmem>>, vector<1x32xf32>
    %4 = vector.broadcast %3 : vector<1x32xf32> to vector<400x32xf32>
    %5 = arith.addf %2, %4 : vector<400x32xf32>
    %cst_5 = arith.constant 0.000000e+00 : f32
    %6 = vector.broadcast %cst_5 : f32 to vector<400x32xf32>
    %7 = arith.maximumf %5, %6 : vector<400x32xf32>
    %c0_6 = arith.constant 0 : index
    %c0_7 = arith.constant 0 : index
    %8 = vector.load %arg4[%c0_6, %c0_7] : memref<400x32xf32, #tpu.memory_space<vmem>>, vector<400x32xf32>
    tpu.vector_store %arg4[%c0_6, %c0_7], %7 {strides = array<i32>} : memref<400x32xf32, #tpu.memory_space<vmem>>, vector<400x32xf32>,
    return
  }
  func.func @transform_0(%arg0: i32) -> (i32, i32) {
    %c0_i32 = arith.constant 0 : i32
    %c0_i32_0 = arith.constant 0 : i32
    return %arg0, %c0_i32 : i32, i32
  }
  func.func @transform_1(%arg0: i32) -> (i32, i32) {
    %c0_i32 = arith.constant 0 : i32
    %c0_i32_0 = arith.constant 0 : i32
    %c0_i32_1 = arith.constant 0 : i32
    return %c0_i32, %c0_i32_0 : i32, i32
  }
  func.func @transform_2(%arg0: i32) -> (i32, i32) {
    %c0_i32 = arith.constant 0 : i32
    %c0_i32_0 = arith.constant 0 : i32
    %c0_i32_1 = arith.constant 0 : i32
    return %c0_i32, %c0_i32_0 : i32, i32
  }
  func.func @transform_3(%arg0: i32) -> (i32, i32) {
    %c0_i32 = arith.constant 0 : i32
    %c0_i32_0 = arith.constant 0 : i32
    return %arg0, %c0_i32 : i32, i32
  }
}

module attributes {stable_mosaic.version = 11 : i64} {
  func.func @_gemm_bias_kernel(%arg0: memref<162x512xbf16, #tpu.memory_space<vmem>>, %arg1: memref<512x64xbf16, #tpu.memory_space<vmem>>, %arg2: memref<1x64xf32, #tpu.memory_space<vmem>>, %arg3: memref<162x64xf32, #tpu.memory_space<vmem>>) attributes {dimension_semantics = [], scalar_prefetch = 0 : i64, scratch_operands = 0 : i64, tpu.core_type = #tpu.core_type<tc>} {
    %c0 = arith.constant 0 : index
    %c0_0 = arith.constant 0 : index
    %0 = vector.load %arg0[%c0, %c0_0] : memref<162x512xbf16, #tpu.memory_space<vmem>>, vector<162x512xbf16>
    %c0_1 = arith.constant 0 : index
    %c0_2 = arith.constant 0 : index
    %1 = vector.load %arg1[%c0_1, %c0_2] : memref<512x64xbf16, #tpu.memory_space<vmem>>, vector<512x64xbf16>
    %cst = arith.constant dense<0.000000e+00> : vector<162x64xf32>
    %2 = tpu.matmul %0, %1, %cst {dimension_numbers = #tpu.dot_dimension_numbers<[1], [0], [0], [1], [0, 0, 1, 1], [], []>} : vector<162x512xbf16>, vector<512x64xbf16>, vector<162x64xf32> -> vector<162x64xf32>
    %c0_3 = arith.constant 0 : index
    %c0_4 = arith.constant 0 : index
    %3 = vector.load %arg2[%c0_3, %c0_4] : memref<1x64xf32, #tpu.memory_space<vmem>>, vector<1x64xf32>
    %4 = vector.broadcast %3 : vector<1x64xf32> to vector<162x64xf32>
    %5 = arith.addf %2, %4 : vector<162x64xf32>
    %cst_5 = arith.constant 0.000000e+00 : f32
    %6 = vector.broadcast %cst_5 : f32 to vector<162x64xf32>
    %7 = arith.maximumf %5, %6 : vector<162x64xf32>
    %c0_6 = arith.constant 0 : index
    %c0_7 = arith.constant 0 : index
    %8 = vector.load %arg3[%c0_6, %c0_7] : memref<162x64xf32, #tpu.memory_space<vmem>>, vector<162x64xf32>
    tpu.vector_store %arg3[%c0_6, %c0_7], %7 {strides = array<i32>} : memref<162x64xf32, #tpu.memory_space<vmem>>, vector<162x64xf32>,
    return
  }
}

module attributes {stable_mosaic.version = 11 : i64} {
  func.func @_gemm_bias_kernel(%arg0: memref<98x576xbf16, #tpu.memory_space<vmem>>, %arg1: memref<576x64xbf16, #tpu.memory_space<vmem>>, %arg2: memref<1x64xf32, #tpu.memory_space<vmem>>, %arg3: memref<98x64xf32, #tpu.memory_space<vmem>>) attributes {dimension_semantics = [], scalar_prefetch = 0 : i64, scratch_operands = 0 : i64, tpu.core_type = #tpu.core_type<tc>} {
    %c0 = arith.constant 0 : index
    %c0_0 = arith.constant 0 : index
    %0 = vector.load %arg0[%c0, %c0_0] : memref<98x576xbf16, #tpu.memory_space<vmem>>, vector<98x576xbf16>
    %c0_1 = arith.constant 0 : index
    %c0_2 = arith.constant 0 : index
    %1 = vector.load %arg1[%c0_1, %c0_2] : memref<576x64xbf16, #tpu.memory_space<vmem>>, vector<576x64xbf16>
    %cst = arith.constant dense<0.000000e+00> : vector<98x64xf32>
    %2 = tpu.matmul %0, %1, %cst {dimension_numbers = #tpu.dot_dimension_numbers<[1], [0], [0], [1], [0, 0, 1, 1], [], []>} : vector<98x576xbf16>, vector<576x64xbf16>, vector<98x64xf32> -> vector<98x64xf32>
    %c0_3 = arith.constant 0 : index
    %c0_4 = arith.constant 0 : index
    %3 = vector.load %arg2[%c0_3, %c0_4] : memref<1x64xf32, #tpu.memory_space<vmem>>, vector<1x64xf32>
    %4 = vector.broadcast %3 : vector<1x64xf32> to vector<98x64xf32>
    %5 = arith.addf %2, %4 : vector<98x64xf32>
    %cst_5 = arith.constant 0.000000e+00 : f32
    %6 = vector.broadcast %cst_5 : f32 to vector<98x64xf32>
    %7 = arith.maximumf %5, %6 : vector<98x64xf32>
    %c0_6 = arith.constant 0 : index
    %c0_7 = arith.constant 0 : index
    %8 = vector.load %arg3[%c0_6, %c0_7] : memref<98x64xf32, #tpu.memory_space<vmem>>, vector<98x64xf32>
    tpu.vector_store %arg3[%c0_6, %c0_7], %7 {strides = array<i32>} : memref<98x64xf32, #tpu.memory_space<vmem>>, vector<98x64xf32>,
    return
  }
}

module attributes {stable_mosaic.version = 11 : i64} {
  func.func @_head_kernel(%arg0: memref<2x3136xbf16, #tpu.memory_space<vmem>>, %arg1: memref<3136x512xbf16, #tpu.memory_space<vmem>>, %arg2: memref<1x512xf32, #tpu.memory_space<vmem>>, %arg3: memref<512x128xbf16, #tpu.memory_space<vmem>>, %arg4: memref<1x128xf32, #tpu.memory_space<vmem>>, %arg5: memref<2x512xf32, #tpu.memory_space<vmem>>, %arg6: memref<2x128xf32, #tpu.memory_space<vmem>>) attributes {dimension_semantics = [], scalar_prefetch = 0 : i64, scratch_operands = 0 : i64, tpu.core_type = #tpu.core_type<tc>} {
    %c0 = arith.constant 0 : index
    %c0_0 = arith.constant 0 : index
    %0 = vector.load %arg0[%c0, %c0_0] : memref<2x3136xbf16, #tpu.memory_space<vmem>>, vector<2x3136xbf16>
    %c0_1 = arith.constant 0 : index
    %c0_2 = arith.constant 0 : index
    %1 = vector.load %arg1[%c0_1, %c0_2] : memref<3136x512xbf16, #tpu.memory_space<vmem>>, vector<3136x512xbf16>
    %cst = arith.constant dense<0.000000e+00> : vector<2x512xf32>
    %2 = tpu.matmul %0, %1, %cst {dimension_numbers = #tpu.dot_dimension_numbers<[1], [0], [0], [1], [0, 0, 1, 1], [], []>} : vector<2x3136xbf16>, vector<3136x512xbf16>, vector<2x512xf32> -> vector<2x512xf32>
    %c0_3 = arith.constant 0 : index
    %c0_4 = arith.constant 0 : index
    %3 = vector.load %arg2[%c0_3, %c0_4] : memref<1x512xf32, #tpu.memory_space<vmem>>, vector<1x512xf32>
    %4 = vector.broadcast %3 : vector<1x512xf32> to vector<2x512xf32>
    %5 = arith.addf %2, %4 : vector<2x512xf32>
    %cst_5 = arith.constant 0.000000e+00 : f32
    %6 = vector.broadcast %cst_5 : f32 to vector<2x512xf32>
    %7 = arith.maximumf %5, %6 : vector<2x512xf32>
    %c0_6 = arith.constant 0 : index
    %c0_7 = arith.constant 0 : index
    %8 = vector.load %arg5[%c0_6, %c0_7] : memref<2x512xf32, #tpu.memory_space<vmem>>, vector<2x512xf32>
    tpu.vector_store %arg5[%c0_6, %c0_7], %7 {strides = array<i32>} : memref<2x512xf32, #tpu.memory_space<vmem>>, vector<2x512xf32>,
    %9 = arith.truncf %7 : vector<2x512xf32> to vector<2x512xbf16>
    %c0_8 = arith.constant 0 : index
    %c0_9 = arith.constant 0 : index
    %10 = vector.load %arg3[%c0_8, %c0_9] : memref<512x128xbf16, #tpu.memory_space<vmem>>, vector<512x128xbf16>
    %cst_10 = arith.constant dense<0.000000e+00> : vector<2x128xf32>
    %11 = tpu.matmul %9, %10, %cst_10 {dimension_numbers = #tpu.dot_dimension_numbers<[1], [0], [0], [1], [0, 0, 1, 1], [], []>} : vector<2x512xbf16>, vector<512x128xbf16>, vector<2x128xf32> -> vector<2x128xf32>
    %c0_11 = arith.constant 0 : index
    %c0_12 = arith.constant 0 : index
    %12 = vector.load %arg4[%c0_11, %c0_12] : memref<1x128xf32, #tpu.memory_space<vmem>>, vector<1x128xf32>
    %13 = vector.broadcast %12 : vector<1x128xf32> to vector<2x128xf32>
    %14 = arith.addf %11, %13 : vector<2x128xf32>
    %c0_13 = arith.constant 0 : index
    %c0_14 = arith.constant 0 : index
    %15 = vector.load %arg6[%c0_13, %c0_14] : memref<2x128xf32, #tpu.memory_space<vmem>>, vector<2x128xf32>
    tpu.vector_store %arg6[%c0_13, %c0_14], %14 {strides = array<i32>} : memref<2x128xf32, #tpu.memory_space<vmem>>, vector<2x128xf32>,
    return
  }
}

</mosaic_0001>

<llo_original>
// kernel: nature_net_forward.4
$region0: #{nature_net_forward.4}
  #allocation0 [shape = 'u32[]', space=smem, size = 0x4, offset = 0x4, fixed_abs, tag = 'smem constant byte address 0x4 - core index']
  #allocation1 [shape = 'u32[144,128]{1,0:T(1,128)}', space=vmem, size = 0x12000, scoped, tag = 'internal scratch']
  %s0 = inlined_call_operand.vmem [shape: bf16[800,256], index: 0, kind: input, shape index: {}]
  %s1 = inlined_call_operand.vmem [shape: bf16[256,32], index: 1, kind: input, shape index: {}]
  %s2 = inlined_call_operand.vmem [shape: f32[1,32], index: 2, kind: input, shape index: {}]
  %s3 = inlined_call_operand.vmem [shape: f32[800,32], index: 3, kind: output, shape index: {}]
  %s4 = sld [smem:[#allocation0]]
  $region45: #{nature_net_forward.4} parent=0
    _
  %s6 = ssub.s32 1, %s4
  %s7 = scalar_select 0, %s6, %s4
  loop: start=0, step=1, limit=4
  $region2: #{nature_net_forward.4} parent=0 // loop_pre_header
    _
  $region3: #{nature_net_forward.4} parent=0 // loop_header
    %s9 = sphi 0, %s13
    %p10 = scmp.ge.s32.totalorder %s9, 4
    %s19 = sphi 0, %s21
    %s22 = sphi 0, %s19
    %s23 = sphi 0, %s22
    %s39 = sphi 0, %s23
    %s43 = sphi 0, %s43
    %s45 = sphi 0, %s43
    %s46 = sphi 0, %s45
    %s60 = sphi 0, %s46
    %s64 = sphi 0, %s64
    %s66 = sphi 0, %s64
    %s67 = sphi 0, %s66
    %s81 = sphi 0, %s67
    %s87 = sphi 0, %s89
    %s90 = sphi 0, %s87
    %s91 = sphi 0, %s90
    %s107 = sphi 0, %s91
  $region4: #{nature_net_forward.4} parent=0 // loop_header_branch
    %12 = sbr.rel (%p10) target = $region8
  $region5: #{nature_net_forward.4} parent=0 // loop_body
    %s14 = ssub.s32 %s9, 1
    %s15 = ssub.s32 %s9, 2
    %s16 = sadd.s32 %s9, 1
    %s17 = ssub.s32 %s9, %s16
    %p18 = scmp.eq.s32.totalorder %s17, 0
    %s20 = sadd.s32 %s19, 1
    %s21 = scalar_select %p18, %s19, %s20
    %p24 = pneg %p18
    %p25 = scmp.eq.s32.totalorder %s9, 1
    %p26 = por %p24, %p25
    %p27 = scmp.ne.s32.totalorder %s19, %s22
    %p28 = scmp.eq.s32.totalorder %s9, 0
    %p29 = por %p27, %p28
    %p30 = scmp.ne.s32.totalorder %s19, %s22
    %p31 = scmp.eq.s32.totalorder %s14, 1
    %p32 = por %p30, %p31
    %p33 = scmp.ne.s32.totalorder %s22, %s23
    %p34 = scmp.eq.s32.totalorder %s14, 0
    %p35 = por %p33, %p34
    %p36 = scmp.ne.s32.totalorder %s22, %s23
    %p37 = scmp.eq.s32.totalorder %s15, 1
    %p38 = por %p36, %p37
    %p40 = scmp.ne.s32.totalorder %s23, %s39
    %p41 = scmp.eq.s32.totalorder %s15, 0
    %p42 = por %p40, %p41
    %s44 = sadd.s32 %s43, 1
    %p47 = scmp.eq.s32.totalorder %s9, 1
    %p48 = scmp.ne.s32.totalorder %s43, %s45
    %p49 = scmp.eq.s32.totalorder %s9, 0
    %p50 = por %p48, %p49
    %p51 = scmp.ne.s32.totalorder %s43, %s45
    %p52 = scmp.eq.s32.totalorder %s14, 1
    %p53 = por %p51, %p52
    %p54 = scmp.ne.s32.totalorder %s45, %s46
    %p55 = scmp.eq.s32.totalorder %s14, 0
    %p56 = por %p54, %p55
    %p57 = scmp.ne.s32.totalorder %s45, %s46
    %p58 = scmp.eq.s32.totalorder %s15, 1
    %p59 = por %p57, %p58
    %p61 = scmp.ne.s32.totalorder %s46, %s60
    %p62 = scmp.eq.s32.totalorder %s15, 0
    %p63 = por %p61, %p62
    %s65 = sadd.s32 %s64, 1
    %p68 = scmp.eq.s32.totalorder %s9, 1
    %p69 = scmp.ne.s32.totalorder %s64, %s66
    %p70 = scmp.eq.s32.totalorder %s9, 0
    %p71 = por %p69, %p70
    %p72 = scmp.ne.s32.totalorder %s64, %s66
    %p73 = scmp.eq.s32.totalorder %s14, 1
    %p74 = por %p72, %p73
    %p75 = scmp.ne.s32.totalorder %s66, %s67
    %p76 = scmp.eq.s32.totalorder %s14, 0
    %p77 = por %p75, %p76
    %p78 = scmp.ne.s32.totalorder %s66, %s67
    %p79 = scmp.eq.s32.totalorder %s15, 1
    %p80 = por %p78, %p79
    %p82 = scmp.ne.s32.totalorder %s67, %s81
    %p83 = scmp.eq.s32.totalorder %s15, 0
    %p84 = por %p82, %p83
    %s85 = ssub.s32 %s9, %s16
    %p86 = scmp.eq.s32.totalorder %s85, 0
    %s88 = sadd.s32 %s87, 1
    %s89 = scalar_select %p86, %s87, %s88
    %p92 = pneg %p86
    %p93 = scmp.eq.s32.totalorder %s9, 1
    %p94 = por %p92, %p93
    %p95 = scmp.ne.s32.totalorder %s87, %s90
    %p96 = scmp.eq.s32.totalorder %s9, 0
    %p97 = por %p95, %p96
    %p98 = scmp.ne.s32.totalorder %s87, %s90
    %p99 = scmp.eq.s32.totalorder %s14, 1
    %p100 = por %p98, %p99
    %p101 = scmp.ne.s32.totalorder %s90, %s91
    %p102 = scmp.eq.s32.totalorder %s14, 0
    %p103 = por %p101, %p102
    %p104 = scmp.ne.s32.totalorder %s90, %s91
    %p105 = scmp.eq.s32.totalorder %s15, 1
    %p106 = por %p104, %p105
    %p108 = scmp.ne.s32.totalorder %s91, %s107
    %p109 = scmp.eq.s32.totalorder %s15, 0
    %p110 = por %p108, %p109
    %p111 = scmp.le.s32.totalorder 1, %s9
    %p112 = scmp.lt.s32.totalorder %s9, 3
    %p113 = pnand %p111, %p112
    %p114 = pneg %p113
    // Predicated region
    $region9: #{nature_net_forward.4} parent=5 // pred_check
      _
    $region10: #{nature_net_forward.4} parent=5 // pred_check_branch
      %116 = sbr.rel (%p113) target = $region12
    $region11: #{nature_net_forward.4} parent=5 // pred_region
      %s117 = ssub.s32 %s9, 1
      // Predicated region
      $region13: #{nature_net_forward.4} parent=11 // pred_check
        %p118 = pneg %p56
      $region14: #{nature_net_forward.4} parent=11 // pred_check_branch
        %120 = sbr.rel (%p118) target = $region16
      $region15: #{nature_net_forward.4} parent=11 // pred_region
        _
      $region16: #{nature_net_forward.4} parent=11 // pred_fallthru
        _
      // Predicated region
      $region17: #{nature_net_forward.4} parent=11 // pred_check
        %p121 = pneg %p77
      $region18: #{nature_net_forward.4} parent=11 // pred_check_branch
        %123 = sbr.rel (%p121) target = $region20
      $region19: #{nature_net_forward.4} parent=11 // pred_region
        _
      $region20: #{nature_net_forward.4} parent=11 // pred_fallthru
        _
    $region12: #{nature_net_forward.4} parent=5 // pred_fallthru
      _
    %p124 = scmp.lt.s32.totalorder %s9, 2
    // Predicated region
    $region21: #{nature_net_forward.4} parent=5 // pred_check
      %p125 = pneg %p124
    $region22: #{nature_net_forward.4} parent=5 // pred_check_branch
      %127 = sbr.rel (%p125) target = $region24
    $region23: #{nature_net_forward.4} parent=5 // pred_region
      // Predicated region
      $region25: #{nature_net_forward.4} parent=23 // pred_check
        %p128 = pneg %p29
      $region26: #{nature_net_forward.4} parent=23 // pred_check_branch
        %130 = sbr.rel (%p128) target = $region28
      $region27: #{nature_net_forward.4} parent=23 // pred_region
        %s131 = smul.u32 50, %s9
        %p132 = scmp.lt.s32.totalorder %s131, 99
        %s133 = scalar_select %p132, %s131, 99
        %s134 = smul.addr %s133, 2
        %s135 = smul.addr %s134, 4
        %s136 = scalar_lea.vmem %s0, %s135
        %s137 = smul.u32 50, %s9
      $region28: #{nature_net_forward.4} parent=23 // pred_fallthru
        _
    $region24: #{nature_net_forward.4} parent=5 // pred_fallthru
      _
    %p138 = scmp.le.s32.totalorder 1, %s9
    %p139 = scmp.lt.s32.totalorder %s9, 3
    %p140 = pnand %p138, %p139
    %p141 = pneg %p140
    // Predicated region
    $region29: #{nature_net_forward.4} parent=5 // pred_check
      _
    $region30: #{nature_net_forward.4} parent=5 // pred_check_branch
      %143 = sbr.rel (%p140) target = $region32
    $region31: #{nature_net_forward.4} parent=5 // pred_region
      %s144 = ssub.s32 %s9, 1
      %s145 = smul.u32 50, %s14
      %p146 = scmp.lt.s32.totalorder %s145, 99
      %s147 = scalar_select %p146, %s145, 99
      %s148 = smul.addr %s147, 2
      %s149 = smul.addr %s148, 4
      %s150 = scalar_lea.vmem %s0, %s149
      %p151 = pneg %p35
      %p152 = pneg %p32
      %p153 = pneg %p56
      %p154 = pneg %p53
      %p155 = pneg %p77
      %p156 = pneg %p74
      %p157 = pneg %p103
      %p158 = pneg %p100
      %s159 = smul.u32 50, %s14
      %p160 = scmp.lt.s32.totalorder %s159, 99
      %s161 = scalar_select %p160, %s159, 99
      %s162 = smul.addr %s161, 8
      %s163 = scalar_lea.vmem %s3, %s162
      %s164 = smul.u32 50, %s14
      %p165 = scmp.lt.s32.totalorder %s164, 99
      %s166 = scalar_select %p165, %s164, 99
      %s167 = smul.addr %s166, 2
      %s168 = smul.addr %s167, 4
      %s169 = scalar_lea.vmem %s0, %s168
      %s170 = smul.u32 50, %s14
      %s171 = smul.u32 50, %s14
      %p172 = scmp.lt.s32.totalorder %s171, 99
      %s173 = scalar_select %p172, %s171, 99
      %s174 = smul.addr %s173, 8
      %s175 = scalar_lea.vmem %s3, %s174
      %s176 = smul.u32 50, %s14
      %v178 = vld [vmem:[%s169] sm:$0xff]
      %v179 = vld [vmem:[%s169 + $0x8] sm:$0xff]
      %v180 = vld [vmem:[%s169 + $0x10] sm:$0xff]
      %v181 = vld [vmem:[%s169 + $0x18] sm:$0xff]
      %v182 = vld [vmem:[%s169 + $0x20] sm:$0xff]
      %v183 = vld [vmem:[%s169 + $0x28] sm:$0xff]
      %v184 = vld [vmem:[%s169 + $0x30] sm:$0xff]
      %v185 = vld [vmem:[%s169 + $0x38] sm:$0xff]
      %v186 = vld [vmem:[%s169 + $0x40] sm:$0xff]
      %v187 = vld [vmem:[%s169 + $0x48] sm:$0xff]
      %v188 = vld [vmem:[%s169 + $0x50] sm:$0xff]
      %v189 = vld [vmem:[%s169 + $0x58] sm:$0xff]
      %v190 = vld [vmem:[%s169 + $0x60] sm:$0xff]
      %v191 = vld [vmem:[%s169 + $0x68] sm:$0xff]
      %v192 = vld [vmem:[%s169 + $0x70] sm:$0xff]
      %v193 = vld [vmem:[%s169 + $0x78] sm:$0xff]
      %v194 = vld [vmem:[%s169 + $0x80] sm:$0xff]
      %v195 = vld [vmem:[%s169 + $0x88] sm:$0xff]
      %v196 = vld [vmem:[%s169 + $0x90] sm:$0xff]
      %v197 = vld [vmem:[%s169 + $0x98] sm:$0xff]
      %v198 = vld [vmem:[%s169 + $0xa0] sm:$0xff]
      %v199 = vld [vmem:[%s169 + $0xa8] sm:$0xff]
      %v200 = vld [vmem:[%s169 + $0xb0] sm:$0xff]
      %v201 = vld [vmem:[%s169 + $0xb8] sm:$0xff]
      %v202 = vld [vmem:[%s169 + $0xc0] sm:$0xff]
      %v203 = vld [vmem:[%s169 + $0xc8] sm:$0xff]
      %v204 = vld [vmem:[%s169 + $0xd0] sm:$0xff]
      %v205 = vld [vmem:[%s169 + $0xd8] sm:$0xff]
      %v206 = vld [vmem:[%s169 + $0xe0] sm:$0xff]
      %v207 = vld [vmem:[%s169 + $0xe8] sm:$0xff]
      %v208 = vld [vmem:[%s169 + $0xf0] sm:$0xff]
      %v209 = vld [vmem:[%s169 + $0xf8] sm:$0xff]
      %v210 = vld [vmem:[%s169 + $0x100] sm:$0xff]
      %v211 = vld [vmem:[%s169 + $0x108] sm:$0xff]
      %v212 = vld [vmem:[%s169 + $0x110] sm:$0xff]
      %v213 = vld [vmem:[%s169 + $0x118] sm:$0xff]
      %v214 = vld [vmem:[%s169 + $0x120] sm:$0xff]
      %v215 = vld [vmem:[%s169 + $0x128] sm:$0xff]
      %v216 = vld [vmem:[%s169 + $0x130] sm:$0xff]
      %v217 = vld [vmem:[%s169 + $0x138] sm:$0xff]
      %v218 = vld [vmem:[%s169 + $0x140] sm:$0xff]
      %v219 = vld [vmem:[%s169 + $0x148] sm:$0xff]
      %v220 = vld [vmem:[%s169 + $0x150] sm:$0xff]
      %v221 = vld [vmem:[%s169 + $0x158] sm:$0xff]
      %v222 = vld [vmem:[%s169 + $0x160] sm:$0xff]
      %v223 = vld [vmem:[%s169 + $0x168] sm:$0xff]
      %v224 = vld [vmem:[%s169 + $0x170] sm:$0xff]
      %v225 = vld [vmem:[%s169 + $0x178] sm:$0xff]
      %v226 = vld [vmem:[%s169 + $0x180] sm:$0xff]
      %v227 = vld [vmem:[%s169 + $0x188] sm:$0xff]
      %v228 = vld [vmem:[%s1] sm:$0xf]
      %v229 = vld [vmem:[%s1 + $0x4] sm:$0xf]
      %v230 = vld [vmem:[%s1 + $0x8] sm:$0xf]
      %v231 = vld [vmem:[%s1 + $0xc] sm:$0xf]
      %v232 = vld [vmem:[%s1 + $0x10] sm:$0xf]
      %v233 = vld [vmem:[%s1 + $0x14] sm:$0xf]
      %v234 = vld [vmem:[%s1 + $0x18] sm:$0xf]
      %v235 = vld [vmem:[%s1 + $0x1c] sm:$0xf]
      %v236 = vld [vmem:[%s1 + $0x20] sm:$0xf]
      %v237 = vld [vmem:[%s1 + $0x24] sm:$0xf]
      %v238 = vld [vmem:[%s1 + $0x28] sm:$0xf]
      %v239 = vld [vmem:[%s1 + $0x2c] sm:$0xf]
      %v240 = vld [vmem:[%s1 + $0x30] sm:$0xf]
      %v241 = vld [vmem:[%s1 + $0x34] sm:$0xf]
      %v242 = vld [vmem:[%s1 + $0x38] sm:$0xf]
      %v243 = vld [vmem:[%s1 + $0x3c] sm:$0xf]
      %v244 = vld [vmem:[%s1 + $0x40] sm:$0xf]
      %v245 = vld [vmem:[%s1 + $0x44] sm:$0xf]
      %v246 = vld [vmem:[%s1 + $0x48] sm:$0xf]
      %v247 = vld [vmem:[%s1 + $0x4c] sm:$0xf]
      %v248 = vld [vmem:[%s1 + $0x50] sm:$0xf]
      %v249 = vld [vmem:[%s1 + $0x54] sm:$0xf]
      %v250 = vld [vmem:[%s1 + $0x58] sm:$0xf]
      %v251 = vld [vmem:[%s1 + $0x5c] sm:$0xf]
      %v252 = vld [vmem:[%s1 + $0x60] sm:$0xf]
      %v253 = vld [vmem:[%s1 + $0x64] sm:$0xf]
      %v254 = vld [vmem:[%s1 + $0x68] sm:$0xf]
      %v255 = vld [vmem:[%s1 + $0x6c] sm:$0xf]
      %v256 = vld [vmem:[%s1 + $0x70] sm:$0xf]
      %v257 = vld [vmem:[%s1 + $0x74] sm:$0xf]
      %v258 = vld [vmem:[%s1 + $0x78] sm:$0xf]
      %v259 = vld [vmem:[%s1 + $0x7c] sm:$0xf]
      %v260 = vld [vmem:[%s2] sm:$0x1]
      %v262 = vlaneseq
      %v263 = vshrl.u32 %v262, 7
      %v264 = vsub.s32 0, %v263
      %v265 = vrot.slane %v260, %v264
      %v317 = vunpack.c.l.b16 %v178
      %v318 = vunpack.c.h.b16 %v178
      %v319 = vunpack.c.l.b16 %v179
      %v320 = vunpack.c.h.b16 %v179
      %v321 = vunpack.c.l.b16 %v180
      %v322 = vunpack.c.h.b16 %v180
      %v323 = vunpack.c.l.b16 %v181
      %v324 = vunpack.c.h.b16 %v181
      %v325 = vunpack.c.l.b16 %v182
      %v326 = vunpack.c.h.b16 %v182
      %v327 = vunpack.c.l.b16 %v183
      %v328 = vunpack.c.h.b16 %v183
      %v329 = vunpack.c.l.b16 %v184
      %v330 = vunpack.c.h.b16 %v184
      %v331 = vunpack.c.l.b16 %v185
      %v332 = vunpack.c.h.b16 %v185
      %v333 = vunpack.c.l.b16 %v186
      %v334 = vunpack.c.h.b16 %v186
      %v335 = vunpack.c.l.b16 %v187
      %v336 = vunpack.c.h.b16 %v187
      %v337 = vunpack.c.l.b16 %v188
      %v338 = vunpack.c.h.b16 %v188
      %v339 = vunpack.c.l.b16 %v189
      %v340 = vunpack.c.h.b16 %v189
      %v341 = vunpack.c.l.b16 %v190
      %v342 = vunpack.c.h.b16 %v190
      %v343 = vunpack.c.l.b16 %v191
      %v344 = vunpack.c.h.b16 %v191
      %v345 = vunpack.c.l.b16 %v192
      %v346 = vunpack.c.h.b16 %v192
      %v347 = vunpack.c.l.b16 %v193
      %v348 = vunpack.c.h.b16 %v193
      %v349 = vunpack.c.l.b16 %v194
      %v350 = vunpack.c.h.b16 %v194
      %v351 = vunpack.c.l.b16 %v195
      %v352 = vunpack.c.h.b16 %v195
      %v353 = vunpack.c.l.b16 %v196
      %v354 = vunpack.c.h.b16 %v196
      %v355 = vunpack.c.l.b16 %v197
      %v356 = vunpack.c.h.b16 %v197
      %v357 = vunpack.c.l.b16 %v198
      %v358 = vunpack.c.h.b16 %v198
      %v359 = vunpack.c.l.b16 %v199
      %v360 = vunpack.c.h.b16 %v199
      %v361 = vunpack.c.l.b16 %v200
      %v362 = vunpack.c.h.b16 %v200
      %v363 = vunpack.c.l.b16 %v201
      %v364 = vunpack.c.h.b16 %v201
      %v365 = vunpack.c.l.b16 %v202
      %v366 = vunpack.c.h.b16 %v202
      %v367 = vunpack.c.l.b16 %v203
      %v368 = vunpack.c.h.b16 %v203
      %v369 = vunpack.c.l.b16 %v204
      %v370 = vunpack.c.h.b16 %v204
      %v371 = vunpack.c.l.b16 %v205
      %v372 = vunpack.c.h.b16 %v205
      %v373 = vunpack.c.l.b16 %v206
      %v374 = vunpack.c.h.b16 %v206
      %v375 = vunpack.c.l.b16 %v207
      %v376 = vunpack.c.h.b16 %v207
      %v377 = vunpack.c.l.b16 %v208
      %v378 = vunpack.c.h.b16 %v208
      %v379 = vunpack.c.l.b16 %v209
      %v380 = vunpack.c.h.b16 %v209
      %v381 = vunpack.c.l.b16 %v210
      %v382 = vunpack.c.h.b16 %v210
      %v383 = vunpack.c.l.b16 %v211
      %v384 = vunpack.c.h.b16 %v211
      %v385 = vunpack.c.l.b16 %v212
      %v386 = vunpack.c.h.b16 %v212
      %v387 = vunpack.c.l.b16 %v213
      %v388 = vunpack.c.h.b16 %v213
      %v389 = vunpack.c.l.b16 %v214
      %v390 = vunpack.c.h.b16 %v214
      %v391 = vunpack.c.l.b16 %v215
      %v392 = vunpack.c.h.b16 %v215
      %v393 = vunpack.c.l.b16 %v216
      %v394 = vunpack.c.h.b16 %v216
      %v395 = vunpack.c.l.b16 %v217
      %v396 = vunpack.c.h.b16 %v217
      %v397 = vunpack.c.l.b16 %v218
      %v398 = vunpack.c.h.b16 %v218
      %v399 = vunpack.c.l.b16 %v219
      %v400 = vunpack.c.h.b16 %v219
      %v401 = vunpack.c.l.b16 %v220
      %v402 = vunpack.c.h.b16 %v220
      %v403 = vunpack.c.l.b16 %v221
      %v404 = vunpack.c.h.b16 %v221
      %v405 = vunpack.c.l.b16 %v222
      %v406 = vunpack.c.h.b16 %v222
      %v407 = vunpack.c.l.b16 %v223
      %v408 = vunpack.c.h.b16 %v223
      %v409 = vunpack.c.l.b16 %v224
      %v410 = vunpack.c.h.b16 %v224
      %v411 = vunpack.c.l.b16 %v225
      %v412 = vunpack.c.h.b16 %v225
      %v413 = vunpack.c.l.b16 %v226
      %v414 = vunpack.c.h.b16 %v226
      %v415 = vunpack.c.l.b16 %v227
      %v416 = vunpack.c.h.b16 %v227
      %v417 = vpack.c.b16 %v319, %v317
      %v418 = vpack.c.b16 %v320, %v318
      %v419 = vpack.c.b16 %v323, %v321
      %v420 = vpack.c.b16 %v324, %v322
      %v421 = vpack.c.b16 %v327, %v325
      %v422 = vpack.c.b16 %v328, %v326
      %v423 = vpack.c.b16 %v331, %v329
      %v424 = vpack.c.b16 %v332, %v330
      %v425 = vpack.c.b16 %v335, %v333
      %v426 = vpack.c.b16 %v336, %v334
      %v427 = vpack.c.b16 %v339, %v337
      %v428 = vpack.c.b16 %v340, %v338
      %v429 = vpack.c.b16 %v343, %v341
      %v430 = vpack.c.b16 %v344, %v342
      %v431 = vpack.c.b16 %v347, %v345
      %v432 = vpack.c.b16 %v348, %v346
      %v433 = vpack.c.b16 %v351, %v349
      %v434 = vpack.c.b16 %v352, %v350
      %v435 = vpack.c.b16 %v355, %v353
      %v436 = vpack.c.b16 %v356, %v354
      %v437 = vpack.c.b16 %v359, %v357
      %v438 = vpack.c.b16 %v360, %v358
      %v439 = vpack.c.b16 %v363, %v361
      %v440 = vpack.c.b16 %v364, %v362
      %v441 = vpack.c.b16 %v367, %v365
      %v442 = vpack.c.b16 %v368, %v366
      %v443 = vpack.c.b16 %v371, %v369
      %v444 = vpack.c.b16 %v372, %v370
      %v445 = vpack.c.b16 %v375, %v373
      %v446 = vpack.c.b16 %v376, %v374
      %v447 = vpack.c.b16 %v379, %v377
      %v448 = vpack.c.b16 %v380, %v378
      %v449 = vpack.c.b16 %v383, %v381
      %v450 = vpack.c.b16 %v384, %v382
      %v451 = vpack.c.b16 %v387, %v385
      %v452 = vpack.c.b16 %v388, %v386
      %v453 = vpack.c.b16 %v391, %v389
      %v454 = vpack.c.b16 %v392, %v390
      %v455 = vpack.c.b16 %v395, %v393
      %v456 = vpack.c.b16 %v396, %v394
      %v457 = vpack.c.b16 %v399, %v397
      %v458 = vpack.c.b16 %v400, %v398
      %v459 = vpack.c.b16 %v403, %v401
      %v460 = vpack.c.b16 %v404, %v402
      %v461 = vpack.c.b16 %v407, %v405
      %v462 = vpack.c.b16 %v408, %v406
      %v463 = vpack.c.b16 %v411, %v409
      %v464 = vpack.c.b16 %v412, %v410
      %v465 = vpack.c.b16 %v415, %v413
      %v466 = vpack.c.b16 %v416, %v414
      %v549 = vunpack.c.l.b16 %v228
      %v550 = vunpack.c.l.b16 %v229
      %v551 = vunpack.c.l.b16 %v230
      %v552 = vunpack.c.l.b16 %v231
      %v553 = vunpack.c.l.b16 %v232
      %v554 = vunpack.c.l.b16 %v233
      %v555 = vunpack.c.l.b16 %v234
      %v556 = vunpack.c.l.b16 %v235
      %v557 = vunpack.c.l.b16 %v236
      %v558 = vunpack.c.l.b16 %v237
      %v559 = vunpack.c.l.b16 %v238
      %v560 = vunpack.c.l.b16 %v239
      %v561 = vunpack.c.l.b16 %v240
      %v562 = vunpack.c.l.b16 %v241
      %v563 = vunpack.c.l.b16 %v242
      %v564 = vunpack.c.l.b16 %v243
      %v565 = vunpack.c.l.b16 %v244
      %v566 = vunpack.c.l.b16 %v245
      %v567 = vunpack.c.l.b16 %v246
      %v568 = vunpack.c.l.b16 %v247
      %v569 = vunpack.c.l.b16 %v248
      %v570 = vunpack.c.l.b16 %v249
      %v571 = vunpack.c.l.b16 %v250
      %v572 = vunpack.c.l.b16 %v251
      %v573 = vunpack.c.l.b16 %v252
      %v574 = vunpack.c.l.b16 %v253
      %v575 = vunpack.c.l.b16 %v254
      %v576 = vunpack.c.l.b16 %v255
      %v577 = vunpack.c.l.b16 %v256
      %v578 = vunpack.c.l.b16 %v257
      %v579 = vunpack.c.l.b16 %v258
      %v580 = vunpack.c.l.b16 %v259
      %v581 = vpack.c.b16 %v550, %v549
      %v582 = vpack.c.b16 %v552, %v551
      %v583 = vpack.c.b16 %v554, %v553
      %v584 = vpack.c.b16 %v556, %v555
      %v585 = vpack.c.b16 %v558, %v557
      %v586 = vpack.c.b16 %v560, %v559
      %v587 = vpack.c.b16 %v562, %v561
      %v588 = vpack.c.b16 %v564, %v563
      %v589 = vpack.c.b16 %v566, %v565
      %v590 = vpack.c.b16 %v568, %v567
      %v591 = vpack.c.b16 %v570, %v569
      %v592 = vpack.c.b16 %v572, %v571
      %v593 = vpack.c.b16 %v574, %v573
      %v594 = vpack.c.b16 %v576, %v575
      %v595 = vpack.c.b16 %v578, %v577
      %v596 = vpack.c.b16 %v580, %v579
      %613 = vmatprep.subr.bf16.mxu0 0
      %614 = vmatpush1.bf16.msra.mxu0 %v588
      %615 = vmatprep.subr.bf16.mxu0 0
      %616 = vmatpush1.bf16.msra.mxu0 %v587
      %617 = vmatprep.subr.bf16.mxu0 0
      %618 = vmatpush1.bf16.msra.mxu0 %v586
      %619 = vmatprep.subr.bf16.mxu0 0
      %620 = vmatpush1.bf16.msra.mxu0 %v585
      %621 = vmatprep.subr.bf16.mxu0 0
      %622 = vmatpush1.bf16.msra.mxu0 %v584
      %623 = vmatprep.subr.bf16.mxu0 0
      %624 = vmatpush1.bf16.msra.mxu0 %v583
      %625 = vmatprep.subr.bf16.mxu0 0
      %626 = vmatpush1.bf16.msra.mxu0 %v582
      %627 = vmatprep.subr.bf16.mxu0 0
      %628 = vmatpush1.bf16.msra.mxu0 %v581
      %629 = vmatprep.subr.bf16.mxu0 0
      %630 = vmatpush2.bf16.msra.mxu0 %v596
      %631 = vmatprep.subr.bf16.mxu0 0
      %632 = vmatpush2.bf16.msra.mxu0 %v595
      %633 = vmatprep.subr.bf16.mxu0 0
      %634 = vmatpush2.bf16.msra.mxu0 %v594
      %635 = vmatprep.subr.bf16.mxu0 0
      %636 = vmatpush2.bf16.msra.mxu0 %v593
      %637 = vmatprep.subr.bf16.mxu0 0
      %638 = vmatpush2.bf16.msra.mxu0 %v592
      %639 = vmatprep.subr.bf16.mxu0 0
      %640 = vmatpush2.bf16.msra.mxu0 %v591
      %641 = vmatprep.subr.bf16.mxu0 0
      %642 = vmatpush2.bf16.msra.mxu0 %v590
      %643 = vmatprep.subr.bf16.mxu0 0
      %644 = vmatpush2.bf16.msra.mxu0 %v589
      %645 = vmatprep.mubr.bf16.mxu0 %v418
      %646 = vmatmul.mubr.bf16.gmra.mxu0 %v417
      %v647 = vpop.f32.mrf.mxu0
      %v648 = vadd.f32 %v265, %v647
      %v649 = vpop.f32.mrf.mxu0
      %v650 = vpop.f32.mrf.mxu0
      %v651 = vadd.f32 %v265, %v650
      %v652 = vpop.f32.mrf.mxu0
      %653 = vmatprep.mubr.bf16.mxu0 %v420
      %654 = vmatmul.mubr.bf16.gmra.mxu0 %v419
      %v655 = vpop.f32.mrf.mxu0
      %v656 = vadd.f32 %v265, %v655
      %v657 = vpop.f32.mrf.mxu0
      %v658 = vpop.f32.mrf.mxu0
      %v659 = vadd.f32 %v265, %v658
      %v660 = vpop.f32.mrf.mxu0
      %661 = vmatprep.mubr.bf16.mxu0 %v422
      %662 = vmatmul.mubr.bf16.gmra.mxu0 %v421
      %v663 = vpop.f32.mrf.mxu0
      %v664 = vadd.f32 %v265, %v663
      %v665 = vpop.f32.mrf.mxu0
      %v666 = vpop.f32.mrf.mxu0
      %v667 = vadd.f32 %v265, %v666
      %v668 = vpop.f32.mrf.mxu0
      %669 = vmatprep.mubr.bf16.mxu0 %v424
      %670 = vmatmul.mubr.bf16.gmra.mxu0 %v423
      %v671 = vpop.f32.mrf.mxu0
      %v672 = vadd.f32 %v265, %v671
      %v673 = vpop.f32.mrf.mxu0
      %v674 = vpop.f32.mrf.mxu0
      %v675 = vadd.f32 %v265, %v674
      %v676 = vpop.f32.mrf.mxu0
      %677 = vmatprep.mubr.bf16.mxu0 %v426
      %678 = vmatmul.mubr.bf16.gmra.mxu0 %v425
      %v679 = vpop.f32.mrf.mxu0
      %v680 = vadd.f32 %v265, %v679
      %v681 = vpop.f32.mrf.mxu0
      %v682 = vpop.f32.mrf.mxu0
      %v683 = vadd.f32 %v265, %v682
      %v684 = vpop.f32.mrf.mxu0
      %685 = vmatprep.mubr.bf16.mxu0 %v428
      %686 = vmatmul.mubr.bf16.gmra.mxu0 %v427
      %v687 = vpop.f32.mrf.mxu0
      %v688 = vadd.f32 %v265, %v687
      %v689 = vpop.f32.mrf.mxu0
      %v690 = vpop.f32.mrf.mxu0
      %v691 = vadd.f32 %v265, %v690
      %v692 = vpop.f32.mrf.mxu0
      %693 = vmatprep.mubr.bf16.mxu0 %v430
      %694 = vmatmul.mubr.bf16.gmra.mxu0 %v429
      %v695 = vpop.f32.mrf.mxu0
      %v696 = vadd.f32 %v265, %v695
      %v697 = vpop.f32.mrf.mxu0
      %v698 = vpop.f32.mrf.mxu0
      %v699 = vadd.f32 %v265, %v698
      %v700 = vpop.f32.mrf.mxu0
      %701 = vmatprep.mubr.bf16.mxu0 %v432
      %702 = vmatmul.mubr.bf16.gmra.mxu0 %v431
      %v703 = vpop.f32.mrf.mxu0
      %v704 = vadd.f32 %v265, %v703
      %v705 = vpop.f32.mrf.mxu0
      %v706 = vpop.f32.mrf.mxu0
      %v707 = vadd.f32 %v265, %v706
      %v708 = vpop.f32.mrf.mxu0
      %709 = vmatprep.mubr.bf16.mxu0 %v434
      %710 = vmatmul.mubr.bf16.gmra.mxu0 %v433
      %v711 = vpop.f32.mrf.mxu0
      %v712 = vadd.f32 %v265, %v711
      %v713 = vpop.f32.mrf.mxu0
      %v714 = vpop.f32.mrf.mxu0
      %v715 = vadd.f32 %v265, %v714
      %v716 = vpop.f32.mrf.mxu0
      %717 = vmatprep.mubr.bf16.mxu0 %v436
      %718 = vmatmul.mubr.bf16.gmra.mxu0 %v435
      %v719 = vpop.f32.mrf.mxu0
      %v720 = vadd.f32 %v265, %v719
      %v721 = vpop.f32.mrf.mxu0
      %v722 = vpop.f32.mrf.mxu0
      %v723 = vadd.f32 %v265, %v722
      %v724 = vpop.f32.mrf.mxu0
      %725 = vmatprep.mubr.bf16.mxu0 %v438
      %726 = vmatmul.mubr.bf16.gmra.mxu0 %v437
      %v727 = vpop.f32.mrf.mxu0
      %v728 = vadd.f32 %v265, %v727
      %v729 = vpop.f32.mrf.mxu0
      %v730 = vpop.f32.mrf.mxu0
      %v731 = vadd.f32 %v265, %v730
      %v732 = vpop.f32.mrf.mxu0
      %733 = vmatprep.mubr.bf16.mxu0 %v440
      %734 = vmatmul.mubr.bf16.gmra.mxu0 %v439
      %v735 = vpop.f32.mrf.mxu0
      %v736 = vadd.f32 %v265, %v735
      %v737 = vpop.f32.mrf.mxu0
      %v738 = vpop.f32.mrf.mxu0
      %v739 = vadd.f32 %v265, %v738
      %v740 = vpop.f32.mrf.mxu0
      %741 = vmatprep.mubr.bf16.mxu0 %v442
      %742 = vmatmul.mubr.bf16.gmra.mxu0 %v441
      %v743 = vpop.f32.mrf.mxu0
      %v744 = vadd.f32 %v265, %v743
      %v745 = vpop.f32.mrf.mxu0
      %v746 = vpop.f32.mrf.mxu0
      %v747 = vadd.f32 %v265, %v746
      %v748 = vpop.f32.mrf.mxu0
      %749 = vmatprep.mubr.bf16.mxu0 %v444
      %750 = vmatmul.mubr.bf16.gmra.mxu0 %v443
      %v751 = vpop.f32.mrf.mxu0
      %v752 = vadd.f32 %v265, %v751
      %v753 = vpop.f32.mrf.mxu0
      %v754 = vpop.f32.mrf.mxu0
      %v755 = vadd.f32 %v265, %v754
      %v756 = vpop.f32.mrf.mxu0
      %757 = vmatprep.mubr.bf16.mxu0 %v446
      %758 = vmatmul.mubr.bf16.gmra.mxu0 %v445
      %v759 = vpop.f32.mrf.mxu0
      %v760 = vadd.f32 %v265, %v759
      %v761 = vpop.f32.mrf.mxu0
      %v762 = vpop.f32.mrf.mxu0
      %v763 = vadd.f32 %v265, %v762
      %v764 = vpop.f32.mrf.mxu0
      %765 = vmatprep.mubr.bf16.mxu0 %v448
      %766 = vmatmul.mubr.bf16.gmra.mxu0 %v447
      %v767 = vpop.f32.mrf.mxu0
      %v768 = vadd.f32 %v265, %v767
      %v769 = vpop.f32.mrf.mxu0
      %v770 = vpop.f32.mrf.mxu0
      %v771 = vadd.f32 %v265, %v770
      %v772 = vpop.f32.mrf.mxu0
      %773 = vmatprep.mubr.bf16.mxu0 %v450
      %774 = vmatmul.mubr.bf16.gmra.mxu0 %v449
      %v775 = vpop.f32.mrf.mxu0
      %v776 = vadd.f32 %v265, %v775
      %v777 = vpop.f32.mrf.mxu0
      %v778 = vpop.f32.mrf.mxu0
      %v779 = vadd.f32 %v265, %v778
      %v780 = vpop.f32.mrf.mxu0
      %781 = vmatprep.mubr.bf16.mxu0 %v452
      %782 = vmatmul.mubr.bf16.gmra.mxu0 %v451
      %v783 = vpop.f32.mrf.mxu0
      %v784 = vadd.f32 %v265, %v783
      %v785 = vpop.f32.mrf.mxu0
      %v786 = vpop.f32.mrf.mxu0
      %v787 = vadd.f32 %v265, %v786
      %v788 = vpop.f32.mrf.mxu0
      %789 = vmatprep.mubr.bf16.mxu0 %v454
      %790 = vmatmul.mubr.bf16.gmra.mxu0 %v453
      %v791 = vpop.f32.mrf.mxu0
      %v792 = vadd.f32 %v265, %v791
      %v793 = vpop.f32.mrf.mxu0
      %v794 = vpop.f32.mrf.mxu0
      %v795 = vadd.f32 %v265, %v794
      %v796 = vpop.f32.mrf.mxu0
      %797 = vmatprep.mubr.bf16.mxu0 %v456
      %798 = vmatmul.mubr.bf16.gmra.mxu0 %v455
      %v799 = vpop.f32.mrf.mxu0
      %v800 = vadd.f32 %v265, %v799
      %v801 = vpop.f32.mrf.mxu0
      %v802 = vpop.f32.mrf.mxu0
      %v803 = vadd.f32 %v265, %v802
      %v804 = vpop.f32.mrf.mxu0
      %805 = vmatprep.mubr.bf16.mxu0 %v458
      %806 = vmatmul.mubr.bf16.gmra.mxu0 %v457
      %v807 = vpop.f32.mrf.mxu0
      %v808 = vadd.f32 %v265, %v807
      %v809 = vpop.f32.mrf.mxu0
      %v810 = vpop.f32.mrf.mxu0
      %v811 = vadd.f32 %v265, %v810
      %v812 = vpop.f32.mrf.mxu0
      %813 = vmatprep.mubr.bf16.mxu0 %v460
      %814 = vmatmul.mubr.bf16.gmra.mxu0 %v459
      %v815 = vpop.f32.mrf.mxu0
      %v816 = vadd.f32 %v265, %v815
      %v817 = vpop.f32.mrf.mxu0
      %v818 = vpop.f32.mrf.mxu0
      %v819 = vadd.f32 %v265, %v818
      %v820 = vpop.f32.mrf.mxu0
      %821 = vmatprep.mubr.bf16.mxu0 %v462
      %822 = vmatmul.mubr.bf16.gmra.mxu0 %v461
      %v823 = vpop.f32.mrf.mxu0
      %v824 = vadd.f32 %v265, %v823
      %v825 = vpop.f32.mrf.mxu0
      %v826 = vpop.f32.mrf.mxu0
      %v827 = vadd.f32 %v265, %v826
      %v828 = vpop.f32.mrf.mxu0
      %829 = vmatprep.mubr.bf16.mxu0 %v464
      %830 = vmatmul.mubr.bf16.gmra.mxu0 %v463
      %v831 = vpop.f32.mrf.mxu0
      %v832 = vadd.f32 %v265, %v831
      %v833 = vpop.f32.mrf.mxu0
      %v834 = vpop.f32.mrf.mxu0
      %v835 = vadd.f32 %v265, %v834
      %v836 = vpop.f32.mrf.mxu0
      %837 = vmatprep.mubr.bf16.mxu0 %v466
      %838 = vmatmul.mubr.bf16.gmra.mxu0 %v465
      %v839 = vpop.f32.mrf.mxu0
      %v840 = vadd.f32 %v265, %v839
      %v841 = vpop.f32.mrf.mxu0
      %v842 = vpop.f32.mrf.mxu0
      %v843 = vadd.f32 %v265, %v842
      %v844 = vpop.f32.mrf.mxu0
      %845 = vdwg.mxu0
      %v846 = vmax.f32 %v648, 0.0
      %v847 = vmax.f32 %v651, 0.0
      %v848 = vmax.f32 %v656, 0.0
      %v849 = vmax.f32 %v659, 0.0
      %v850 = vmax.f32 %v664, 0.0
      %v851 = vmax.f32 %v667, 0.0
      %v852 = vmax.f32 %v672, 0.0
      %v853 = vmax.f32 %v675, 0.0
      %v854 = vmax.f32 %v680, 0.0
      %v855 = vmax.f32 %v683, 0.0
      %v856 = vmax.f32 %v688, 0.0
      %v857 = vmax.f32 %v691, 0.0
      %v858 = vmax.f32 %v696, 0.0
      %v859 = vmax.f32 %v699, 0.0
      %v860 = vmax.f32 %v704, 0.0
      %v861 = vmax.f32 %v707, 0.0
      %v862 = vmax.f32 %v712, 0.0
      %v863 = vmax.f32 %v715, 0.0
      %v864 = vmax.f32 %v720, 0.0
      %v865 = vmax.f32 %v723, 0.0
      %v866 = vmax.f32 %v728, 0.0
      %v867 = vmax.f32 %v731, 0.0
      %v868 = vmax.f32 %v736, 0.0
      %v869 = vmax.f32 %v739, 0.0
      %v870 = vmax.f32 %v744, 0.0
      %v871 = vmax.f32 %v747, 0.0
      %v872 = vmax.f32 %v752, 0.0
      %v873 = vmax.f32 %v755, 0.0
      %v874 = vmax.f32 %v760, 0.0
      %v875 = vmax.f32 %v763, 0.0
      %v876 = vmax.f32 %v768, 0.0
      %v877 = vmax.f32 %v771, 0.0
      %v878 = vmax.f32 %v776, 0.0
      %v879 = vmax.f32 %v779, 0.0
      %v880 = vmax.f32 %v784, 0.0
      %v881 = vmax.f32 %v787, 0.0
      %v882 = vmax.f32 %v792, 0.0
      %v883 = vmax.f32 %v795, 0.0
      %v884 = vmax.f32 %v800, 0.0
      %v885 = vmax.f32 %v803, 0.0
      %v886 = vmax.f32 %v808, 0.0
      %v887 = vmax.f32 %v811, 0.0
      %v888 = vmax.f32 %v816, 0.0
      %v889 = vmax.f32 %v819, 0.0
      %v890 = vmax.f32 %v824, 0.0
      %v891 = vmax.f32 %v827, 0.0
      %v892 = vmax.f32 %v832, 0.0
      %v893 = vmax.f32 %v835, 0.0
      %v894 = vmax.f32 %v840, 0.0
      %v895 = vmax.f32 %v843, 0.0
      %vm896 = vcmask 261120
      %897 = vst.msk [vmem:[%s175] sm:$0xff] %vm896, %v846
      %898 = vst.msk [vmem:[%s175 + $0x8] sm:$0xff] %vm896, %v847
      %899 = vst.msk [vmem:[%s175 + $0x10] sm:$0xff] %vm896, %v848
      %900 = vst.msk [vmem:[%s175 + $0x18] sm:$0xff] %vm896, %v849
      %901 = vst.msk [vmem:[%s175 + $0x20] sm:$0xff] %vm896, %v850
      %902 = vst.msk [vmem:[%s175 + $0x28] sm:$0xff] %vm896, %v851
      %903 = vst.msk [vmem:[%s175 + $0x30] sm:$0xff] %vm896, %v852
      %904 = vst.msk [vmem:[%s175 + $0x38] sm:$0xff] %vm896, %v853
      %905 = vst.msk [vmem:[%s175 + $0x40] sm:$0xff] %vm896, %v854
      %906 = vst.msk [vmem:[%s175 + $0x48] sm:$0xff] %vm896, %v855
      %907 = vst.msk [vmem:[%s175 + $0x50] sm:$0xff] %vm896, %v856
      %908 = vst.msk [vmem:[%s175 + $0x58] sm:$0xff] %vm896, %v857
      %909 = vst.msk [vmem:[%s175 + $0x60] sm:$0xff] %vm896, %v858
      %910 = vst.msk [vmem:[%s175 + $0x68] sm:$0xff] %vm896, %v859
      %911 = vst.msk [vmem:[%s175 + $0x70] sm:$0xff] %vm896, %v860
      %912 = vst.msk [vmem:[%s175 + $0x78] sm:$0xff] %vm896, %v861
      %913 = vst.msk [vmem:[%s175 + $0x80] sm:$0xff] %vm896, %v862
      %914 = vst.msk [vmem:[%s175 + $0x88] sm:$0xff] %vm896, %v863
      %915 = vst.msk [vmem:[%s175 + $0x90] sm:$0xff] %vm896, %v864
      %916 = vst.msk [vmem:[%s175 + $0x98] sm:$0xff] %vm896, %v865
      %917 = vst.msk [vmem:[%s175 + $0xa0] sm:$0xff] %vm896, %v866
      %918 = vst.msk [vmem:[%s175 + $0xa8] sm:$0xff] %vm896, %v867
      %919 = vst.msk [vmem:[%s175 + $0xb0] sm:$0xff] %vm896, %v868
      %920 = vst.msk [vmem:[%s175 + $0xb8] sm:$0xff] %vm896, %v869
      %921 = vst.msk [vmem:[%s175 + $0xc0] sm:$0xff] %vm896, %v870
      %922 = vst.msk [vmem:[%s175 + $0xc8] sm:$0xff] %vm896, %v871
      %923 = vst.msk [vmem:[%s175 + $0xd0] sm:$0xff] %vm896, %v872
      %924 = vst.msk [vmem:[%s175 + $0xd8] sm:$0xff] %vm896, %v873
      %925 = vst.msk [vmem:[%s175 + $0xe0] sm:$0xff] %vm896, %v874
      %926 = vst.msk [vmem:[%s175 + $0xe8] sm:$0xff] %vm896, %v875
      %927 = vst.msk [vmem:[%s175 + $0xf0] sm:$0xff] %vm896, %v876
      %928 = vst.msk [vmem:[%s175 + $0xf8] sm:$0xff] %vm896, %v877
      %929 = vst.msk [vmem:[%s175 + $0x100] sm:$0xff] %vm896, %v878
      %930 = vst.msk [vmem:[%s175 + $0x108] sm:$0xff] %vm896, %v879
      %931 = vst.msk [vmem:[%s175 + $0x110] sm:$0xff] %vm896, %v880
      %932 = vst.msk [vmem:[%s175 + $0x118] sm:$0xff] %vm896, %v881
      %933 = vst.msk [vmem:[%s175 + $0x120] sm:$0xff] %vm896, %v882
      %934 = vst.msk [vmem:[%s175 + $0x128] sm:$0xff] %vm896, %v883
      %935 = vst.msk [vmem:[%s175 + $0x130] sm:$0xff] %vm896, %v884
      %936 = vst.msk [vmem:[%s175 + $0x138] sm:$0xff] %vm896, %v885
      %937 = vst.msk [vmem:[%s175 + $0x140] sm:$0xff] %vm896, %v886
      %938 = vst.msk [vmem:[%s175 + $0x148] sm:$0xff] %vm896, %v887
      %939 = vst.msk [vmem:[%s175 + $0x150] sm:$0xff] %vm896, %v888
      %940 = vst.msk [vmem:[%s175 + $0x158] sm:$0xff] %vm896, %v889
      %941 = vst.msk [vmem:[%s175 + $0x160] sm:$0xff] %vm896, %v890
      %942 = vst.msk [vmem:[%s175 + $0x168] sm:$0xff] %vm896, %v891
      %943 = vst.msk [vmem:[%s175 + $0x170] sm:$0xff] %vm896, %v892
      %944 = vst.msk [vmem:[%s175 + $0x178] sm:$0xff] %vm896, %v893
      %945 = vst.msk [vmem:[%s175 + $0x180] sm:$0xff] %vm896, %v894
      %946 = vst.msk [vmem:[%s175 + $0x188] sm:$0xff] %vm896, %v895
      %s947 = smul.u32 50, %s14
      %p948 = scmp.lt.s32.totalorder %s947, 99
      %s949 = scalar_select %p948, %s947, 99
      %s950 = smul.addr %s949, 8
      %s951 = scalar_lea.vmem %s3, %s950
      // Predicated region
      $region33: #{nature_net_forward.4} parent=31 // pred_check
        %p952 = pneg %p100
      $region34: #{nature_net_forward.4} parent=31 // pred_check_branch
        %954 = sbr.rel (%p952) target = $region36
      $region35: #{nature_net_forward.4} parent=31 // pred_region
        %s955 = smul.u32 50, %s14
      $region36: #{nature_net_forward.4} parent=31 // pred_fallthru
        _
    $region32: #{nature_net_forward.4} parent=5 // pred_fallthru
      _
    %p956 = scmp.le.s32.totalorder 2, %s9
    // Predicated region
    $region37: #{nature_net_forward.4} parent=5 // pred_check
      %p957 = pneg %p956
    $region38: #{nature_net_forward.4} parent=5 // pred_check_branch
      %959 = sbr.rel (%p957) target = $region40
    $region39: #{nature_net_forward.4} parent=5 // pred_region
      %s960 = ssub.s32 %s9, 2
      // Predicated region
      $region41: #{nature_net_forward.4} parent=39 // pred_check
        %p961 = pneg %p106
      $region42: #{nature_net_forward.4} parent=39 // pred_check_branch
        %963 = sbr.rel (%p961) target = $region44
      $region43: #{nature_net_forward.4} parent=39 // pred_region
        %s964 = smul.u32 50, %s15
        %p965 = scmp.lt.s32.totalorder %s964, 99
        %s966 = scalar_select %p965, %s964, 99
        %s967 = smul.addr %s966, 8
        %s968 = scalar_lea.vmem %s3, %s967
      $region44: #{nature_net_forward.4} parent=39 // pred_fallthru
        _
    $region40: #{nature_net_forward.4} parent=5 // pred_fallthru
      _
  $region6: #{nature_net_forward.4} parent=0 // loop_footer
    %s13 = sadd.s32 1, %s9
  $region7: #{nature_net_forward.4} parent=0 // loop_footer_branch
    %8 = sbr.rel target = $region3
  $region8: #{nature_net_forward.4} parent=0 // loop_exit
    _

// kernel: nature_net_forward.5
$region0: #{nature_net_forward.5}
  #allocation0 [shape = 'u32[]', space=smem, size = 0x4, offset = 0x4, fixed_abs, tag = 'smem constant byte address 0x4 - core index']
  #allocation1 [shape = 'u32[144,128]{1,0:T(1,128)}', space=vmem, size = 0x12000, scoped, tag = 'internal scratch']
  %s0 = inlined_call_operand.vmem [shape: bf16[162,512], index: 0, kind: input, shape index: {}]
  %s1 = inlined_call_operand.vmem [shape: bf16[512,64], index: 1, kind: input, shape index: {}]
  %s2 = inlined_call_operand.vmem [shape: f32[1,64], index: 2, kind: input, shape index: {}]
  %s3 = inlined_call_operand.vmem [shape: f32[162,64], index: 3, kind: output, shape index: {}]
  %s4 = sld [smem:[#allocation0]]
  $region22: #{nature_net_forward.5} parent=0
    _
  %s6 = ssub.s32 1, %s4
  %s7 = scalar_select 0, %s6, %s4
  // Predicated region
  $region2: #{nature_net_forward.5} parent=0 // pred_check
    _
  $region3: #{nature_net_forward.5} parent=0 // pred_check_branch
    %9 = sbr.rel (0) target = $region5
  $region4: #{nature_net_forward.5} parent=0 // pred_region
    _
  $region5: #{nature_net_forward.5} parent=0 // pred_fallthru
    _
  // Predicated region
  $region6: #{nature_net_forward.5} parent=0 // pred_check
    _
  $region7: #{nature_net_forward.5} parent=0 // pred_check_branch
    %11 = sbr.rel (0) target = $region9
  $region8: #{nature_net_forward.5} parent=0 // pred_region
    _
  $region9: #{nature_net_forward.5} parent=0 // pred_fallthru
    _
  // Predicated region
  $region10: #{nature_net_forward.5} parent=0 // pred_check
    _
  $region11: #{nature_net_forward.5} parent=0 // pred_check_branch
    %13 = sbr.rel (0) target = $region13
  $region12: #{nature_net_forward.5} parent=0 // pred_region
    _
  $region13: #{nature_net_forward.5} parent=0 // pred_fallthru
    _
  %v15 = vld [vmem:[%s0] sm:$0xff]
  %v16 = vld [vmem:[%s0 + $0x8] sm:$0xff]
  %v17 = vld [vmem:[%s0 + $0x10] sm:$0xff]
  %v18 = vld [vmem:[%s0 + $0x18] sm:$0xff]
  %v19 = vld [vmem:[%s0 + $0x20] sm:$0xff]
  %v20 = vld [vmem:[%s0 + $0x28] sm:$0xff]
  %v21 = vld [vmem:[%s0 + $0x30] sm:$0xff]
  %v22 = vld [vmem:[%s0 + $0x38] sm:$0xff]
  %v23 = vld [vmem:[%s0 + $0x40] sm:$0xff]
  %v24 = vld [vmem:[%s0 + $0x48] sm:$0xff]
  %v25 = vld [vmem:[%s0 + $0x50] sm:$0xff]
  %v26 = vld [vmem:[%s0 + $0x58] sm:$0xff]
  %v27 = vld [vmem:[%s0 + $0x60] sm:$0xff]
  %v28 = vld [vmem:[%s0 + $0x68] sm:$0xff]
  %v29 = vld [vmem:[%s0 + $0x70] sm:$0xff]
  %v30 = vld [vmem:[%s0 + $0x78] sm:$0xff]
  %v31 = vld [vmem:[%s0 + $0x80] sm:$0xff]
  %v32 = vld [vmem:[%s0 + $0x88] sm:$0xff]
  %v33 = vld [vmem:[%s0 + $0x90] sm:$0xff]
  %v34 = vld [vmem:[%s0 + $0x98] sm:$0xff]
  %v35 = vld [vmem:[%s0 + $0xa0] sm:$0xff]
  %v36 = vld [vmem:[%s0 + $0xa8] sm:$0xff]
  %v37 = vld [vmem:[%s0 + $0xb0] sm:$0xff]
  %v38 = vld [vmem:[%s0 + $0xb8] sm:$0xff]
  %v39 = vld [vmem:[%s0 + $0xc0] sm:$0xff]
  %v40 = vld [vmem:[%s0 + $0xc8] sm:$0xff]
  %v41 = vld [vmem:[%s0 + $0xd0] sm:$0xff]
  %v42 = vld [vmem:[%s0 + $0xd8] sm:$0xff]
  %v43 = vld [vmem:[%s0 + $0xe0] sm:$0xff]
  %v44 = vld [vmem:[%s0 + $0xe8] sm:$0xff]
  %v45 = vld [vmem:[%s0 + $0xf0] sm:$0xff]
  %v46 = vld [vmem:[%s0 + $0xf8] sm:$0xff]
  %v47 = vld [vmem:[%s0 + $0x100] sm:$0xff]
  %v48 = vld [vmem:[%s0 + $0x108] sm:$0xff]
  %v49 = vld [vmem:[%s0 + $0x110] sm:$0xff]
  %v50 = vld [vmem:[%s0 + $0x118] sm:$0xff]
  %v51 = vld [vmem:[%s0 + $0x120] sm:$0xff]
  %v52 = vld [vmem:[%s0 + $0x128] sm:$0xff]
  %v53 = vld [vmem:[%s0 + $0x130] sm:$0xff]
  %v54 = vld [vmem:[%s0 + $0x138] sm:$0xff]
  %v55 = vld [vmem:[%s0 + $0x140] sm:$0x11]
  %v56 = vld [vmem:[%s0 + $0x148] sm:$0x11]
  %v57 = vld [vmem:[%s1] sm:$0xf]
  %v58 = vld [vmem:[%s1 + $0x4] sm:$0xf]
  %v59 = vld [vmem:[%s1 + $0x8] sm:$0xf]
  %v60 = vld [vmem:[%s1 + $0xc] sm:$0xf]
  %v61 = vld [vmem:[%s1 + $0x10] sm:$0xf]
  %v62 = vld [vmem:[%s1 + $0x14] sm:$0xf]
  %v63 = vld [vmem:[%s1 + $0x18] sm:$0xf]
  %v64 = vld [vmem:[%s1 + $0x1c] sm:$0xf]
  %v65 = vld [vmem:[%s1 + $0x20] sm:$0xf]
  %v66 = vld [vmem:[%s1 + $0x24] sm:$0xf]
  %v67 = vld [vmem:[%s1 + $0x28] sm:$0xf]
  %v68 = vld [vmem:[%s1 + $0x2c] sm:$0xf]
  %v69 = vld [vmem:[%s1 + $0x30] sm:$0xf]
  %v70 = vld [vmem:[%s1 + $0x34] sm:$0xf]
  %v71 = vld [vmem:[%s1 + $0x38] sm:$0xf]
  %v72 = vld [vmem:[%s1 + $0x3c] sm:$0xf]
  %v73 = vld [vmem:[%s1 + $0x40] sm:$0xf]
  %v74 = vld [vmem:[%s1 + $0x44] sm:$0xf]
  %v75 = vld [vmem:[%s1 + $0x48] sm:$0xf]
  %v76 = vld [vmem:[%s1 + $0x4c] sm:$0xf]
  %v77 = vld [vmem:[%s1 + $0x50] sm:$0xf]
  %v78 = vld [vmem:[%s1 + $0x54] sm:$0xf]
  %v79 = vld [vmem:[%s1 + $0x58] sm:$0xf]
  %v80 = vld [vmem:[%s1 + $0x5c] sm:$0xf]
  %v81 = vld [vmem:[%s1 + $0x60] sm:$0xf]
  %v82 = vld [vmem:[%s1 + $0x64] sm:$0xf]
  %v83 = vld [vmem:[%s1 + $0x68] sm:$0xf]
  %v84 = vld [vmem:[%s1 + $0x6c] sm:$0xf]
  %v85 = vld [vmem:[%s1 + $0x70] sm:$0xf]
  %v86 = vld [vmem:[%s1 + $0x74] sm:$0xf]
  %v87 = vld [vmem:[%s1 + $0x78] sm:$0xf]
  %v88 = vld [vmem:[%s1 + $0x7c] sm:$0xf]
  %v89 = vld [vmem:[%s1 + $0x80] sm:$0xf]
  %v90 = vld [vmem:[%s1 + $0x84] sm:$0xf]
  %v91 = vld [vmem:[%s1 + $0x88] sm:$0xf]
  %v92 = vld [vmem:[%s1 + $0x8c] sm:$0xf]
  %v93 = vld [vmem:[%s1 + $0x90] sm:$0xf]
  %v94 = vld [vmem:[%s1 + $0x94] sm:$0xf]
  %v95 = vld [vmem:[%s1 + $0x98] sm:$0xf]
  %v96 = vld [vmem:[%s1 + $0x9c] sm:$0xf]
  %v97 = vld [vmem:[%s1 + $0xa0] sm:$0xf]
  %v98 = vld [vmem:[%s1 + $0xa4] sm:$0xf]
  %v99 = vld [vmem:[%s1 + $0xa8] sm:$0xf]
  %v100 = vld [vmem:[%s1 + $0xac] sm:$0xf]
  %v101 = vld [vmem:[%s1 + $0xb0] sm:$0xf]
  %v102 = vld [vmem:[%s1 + $0xb4] sm:$0xf]
  %v103 = vld [vmem:[%s1 + $0xb8] sm:$0xf]
  %v104 = vld [vmem:[%s1 + $0xbc] sm:$0xf]
  %v105 = vld [vmem:[%s1 + $0xc0] sm:$0xf]
  %v106 = vld [vmem:[%s1 + $0xc4] sm:$0xf]
  %v107 = vld [vmem:[%s1 + $0xc8] sm:$0xf]
  %v108 = vld [vmem:[%s1 + $0xcc] sm:$0xf]
  %v109 = vld [vmem:[%s1 + $0xd0] sm:$0xf]
  %v110 = vld [vmem:[%s1 + $0xd4] sm:$0xf]
  %v111 = vld [vmem:[%s1 + $0xd8] sm:$0xf]
  %v112 = vld [vmem:[%s1 + $0xdc] sm:$0xf]
  %v113 = vld [vmem:[%s1 + $0xe0] sm:$0xf]
  %v114 = vld [vmem:[%s1 + $0xe4] sm:$0xf]
  %v115 = vld [vmem:[%s1 + $0xe8] sm:$0xf]
  %v116 = vld [vmem:[%s1 + $0xec] sm:$0xf]
  %v117 = vld [vmem:[%s1 + $0xf0] sm:$0xf]
  %v118 = vld [vmem:[%s1 + $0xf4] sm:$0xf]
  %v119 = vld [vmem:[%s1 + $0xf8] sm:$0xf]
  %v120 = vld [vmem:[%s1 + $0xfc] sm:$0xf]
  %v121 = vld [vmem:[%s2] sm:$0x1]
  %v123 = vlaneseq
  %v124 = vshrl.u32 %v123, 7
  %v125 = vsub.s32 0, %v124
  %v126 = vrot.slane %v121, %v125
  %v170 = vunpack.c.l.b16 %v15
  %v171 = vunpack.c.h.b16 %v15
  %v172 = vunpack.c.l.b16 %v16
  %v173 = vunpack.c.h.b16 %v16
  %v174 = vunpack.c.l.b16 %v17
  %v175 = vunpack.c.h.b16 %v17
  %v176 = vunpack.c.l.b16 %v18
  %v177 = vunpack.c.h.b16 %v18
  %v178 = vunpack.c.l.b16 %v19
  %v179 = vunpack.c.h.b16 %v19
  %v180 = vunpack.c.l.b16 %v20
  %v181 = vunpack.c.h.b16 %v20
  %v182 = vunpack.c.l.b16 %v21
  %v183 = vunpack.c.h.b16 %v21
  %v184 = vunpack.c.l.b16 %v22
  %v185 = vunpack.c.h.b16 %v22
  %v186 = vunpack.c.l.b16 %v23
  %v187 = vunpack.c.h.b16 %v23
  %v188 = vunpack.c.l.b16 %v24
  %v189 = vunpack.c.h.b16 %v24
  %v190 = vunpack.c.l.b16 %v25
  %v191 = vunpack.c.h.b16 %v25
  %v192 = vunpack.c.l.b16 %v26
  %v193 = vunpack.c.h.b16 %v26
  %v194 = vunpack.c.l.b16 %v27
  %v195 = vunpack.c.h.b16 %v27
  %v196 = vunpack.c.l.b16 %v28
  %v197 = vunpack.c.h.b16 %v28
  %v198 = vunpack.c.l.b16 %v29
  %v199 = vunpack.c.h.b16 %v29
  %v200 = vunpack.c.l.b16 %v30
  %v201 = vunpack.c.h.b16 %v30
  %v202 = vunpack.c.l.b16 %v31
  %v203 = vunpack.c.h.b16 %v31
  %v204 = vunpack.c.l.b16 %v32
  %v205 = vunpack.c.h.b16 %v32
  %v206 = vunpack.c.l.b16 %v33
  %v207 = vunpack.c.h.b16 %v33
  %v208 = vunpack.c.l.b16 %v34
  %v209 = vunpack.c.h.b16 %v34
  %v210 = vunpack.c.l.b16 %v35
  %v211 = vunpack.c.h.b16 %v35
  %v212 = vunpack.c.l.b16 %v36
  %v213 = vunpack.c.h.b16 %v36
  %v214 = vunpack.c.l.b16 %v37
  %v215 = vunpack.c.h.b16 %v37
  %v216 = vunpack.c.l.b16 %v38
  %v217 = vunpack.c.h.b16 %v38
  %v218 = vunpack.c.l.b16 %v39
  %v219 = vunpack.c.h.b16 %v39
  %v220 = vunpack.c.l.b16 %v40
  %v221 = vunpack.c.h.b16 %v40
  %v222 = vunpack.c.l.b16 %v41
  %v223 = vunpack.c.h.b16 %v41
  %v224 = vunpack.c.l.b16 %v42
  %v225 = vunpack.c.h.b16 %v42
  %v226 = vunpack.c.l.b16 %v43
  %v227 = vunpack.c.h.b16 %v43
  %v228 = vunpack.c.l.b16 %v44
  %v229 = vunpack.c.h.b16 %v44
  %v230 = vunpack.c.l.b16 %v45
  %v231 = vunpack.c.h.b16 %v45
  %v232 = vunpack.c.l.b16 %v46
  %v233 = vunpack.c.h.b16 %v46
  %v234 = vunpack.c.l.b16 %v47
  %v235 = vunpack.c.h.b16 %v47
  %v236 = vunpack.c.l.b16 %v48
  %v237 = vunpack.c.h.b16 %v48
  %v238 = vunpack.c.l.b16 %v49
  %v239 = vunpack.c.h.b16 %v49
  %v240 = vunpack.c.l.b16 %v50
  %v241 = vunpack.c.h.b16 %v50
  %v242 = vunpack.c.l.b16 %v51
  %v243 = vunpack.c.h.b16 %v51
  %v244 = vunpack.c.l.b16 %v52
  %v245 = vunpack.c.h.b16 %v52
  %v246 = vunpack.c.l.b16 %v53
  %v247 = vunpack.c.h.b16 %v53
  %v248 = vunpack.c.l.b16 %v54
  %v249 = vunpack.c.h.b16 %v54
  %v250 = vunpack.c.l.b16 %v55
  %v251 = vunpack.c.h.b16 %v55
  %v252 = vunpack.c.l.b16 %v56
  %v253 = vunpack.c.h.b16 %v56
  %v254 = vpack.c.b16 %v174, %v170
  %v255 = vpack.c.b16 %v175, %v171
  %v256 = vpack.c.b16 %v176, %v172
  %v257 = vpack.c.b16 %v177, %v173
  %v258 = vpack.c.b16 %v182, %v178
  %v259 = vpack.c.b16 %v183, %v179
  %v260 = vpack.c.b16 %v184, %v180
  %v261 = vpack.c.b16 %v185, %v181
  %v262 = vpack.c.b16 %v190, %v186
  %v263 = vpack.c.b16 %v191, %v187
  %v264 = vpack.c.b16 %v192, %v188
  %v265 = vpack.c.b16 %v193, %v189
  %v266 = vpack.c.b16 %v198, %v194
  %v267 = vpack.c.b16 %v199, %v195
  %v268 = vpack.c.b16 %v200, %v196
  %v269 = vpack.c.b16 %v201, %v197
  %v270 = vpack.c.b16 %v206, %v202
  %v271 = vpack.c.b16 %v207, %v203
  %v272 = vpack.c.b16 %v208, %v204
  %v273 = vpack.c.b16 %v209, %v205
  %v274 = vpack.c.b16 %v214, %v210
  %v275 = vpack.c.b16 %v215, %v211
  %v276 = vpack.c.b16 %v216, %v212
  %v277 = vpack.c.b16 %v217, %v213
  %v278 = vpack.c.b16 %v222, %v218
  %v279 = vpack.c.b16 %v223, %v219
  %v280 = vpack.c.b16 %v224, %v220
  %v281 = vpack.c.b16 %v225, %v221
  %v282 = vpack.c.b16 %v230, %v226
  %v283 = vpack.c.b16 %v231, %v227
  %v284 = vpack.c.b16 %v232, %v228
  %v285 = vpack.c.b16 %v233, %v229
  %v286 = vpack.c.b16 %v238, %v234
  %v287 = vpack.c.b16 %v239, %v235
  %v288 = vpack.c.b16 %v240, %v236
  %v289 = vpack.c.b16 %v241, %v237
  %v290 = vpack.c.b16 %v246, %v242
  %v291 = vpack.c.b16 %v247, %v243
  %v292 = vpack.c.b16 %v248, %v244
  %v293 = vpack.c.b16 %v249, %v245
  %v294 = vpack.c.b16 %v250, %v250
  %v295 = vpack.c.b16 %v251, %v251
  %v296 = vpack.c.b16 %v252, %v252
  %v297 = vpack.c.b16 %v253, %v253
  %v406 = vunpack.c.l.b16 %v57
  %v407 = vunpack.c.l.b16 %v58
  %v408 = vunpack.c.l.b16 %v59
  %v409 = vunpack.c.l.b16 %v60
  %v410 = vunpack.c.l.b16 %v61
  %v411 = vunpack.c.l.b16 %v62
  %v412 = vunpack.c.l.b16 %v63
  %v413 = vunpack.c.l.b16 %v64
  %v414 = vunpack.c.l.b16 %v65
  %v415 = vunpack.c.l.b16 %v66
  %v416 = vunpack.c.l.b16 %v67
  %v417 = vunpack.c.l.b16 %v68
  %v418 = vunpack.c.l.b16 %v69
  %v419 = vunpack.c.l.b16 %v70
  %v420 = vunpack.c.l.b16 %v71
  %v421 = vunpack.c.l.b16 %v72
  %v422 = vunpack.c.l.b16 %v73
  %v423 = vunpack.c.l.b16 %v74
  %v424 = vunpack.c.l.b16 %v75
  %v425 = vunpack.c.l.b16 %v76
  %v426 = vunpack.c.l.b16 %v77
  %v427 = vunpack.c.l.b16 %v78
  %v428 = vunpack.c.l.b16 %v79
  %v429 = vunpack.c.l.b16 %v80
  %v430 = vunpack.c.l.b16 %v81
  %v431 = vunpack.c.l.b16 %v82
  %v432 = vunpack.c.l.b16 %v83
  %v433 = vunpack.c.l.b16 %v84
  %v434 = vunpack.c.l.b16 %v85
  %v435 = vunpack.c.l.b16 %v86
  %v436 = vunpack.c.l.b16 %v87
  %v437 = vunpack.c.l.b16 %v88
  %v438 = vunpack.c.l.b16 %v89
  %v439 = vunpack.c.l.b16 %v90
  %v440 = vunpack.c.l.b16 %v91
  %v441 = vunpack.c.l.b16 %v92
  %v442 = vunpack.c.l.b16 %v93
  %v443 = vunpack.c.l.b16 %v94
  %v444 = vunpack.c.l.b16 %v95
  %v445 = vunpack.c.l.b16 %v96
  %v446 = vunpack.c.l.b16 %v97
  %v447 = vunpack.c.l.b16 %v98
  %v448 = vunpack.c.l.b16 %v99
  %v449 = vunpack.c.l.b16 %v100
  %v450 = vunpack.c.l.b16 %v101
  %v451 = vunpack.c.l.b16 %v102
  %v452 = vunpack.c.l.b16 %v103
  %v453 = vunpack.c.l.b16 %v104
  %v454 = vunpack.c.l.b16 %v105
  %v455 = vunpack.c.l.b16 %v106
  %v456 = vunpack.c.l.b16 %v107
  %v457 = vunpack.c.l.b16 %v108
  %v458 = vunpack.c.l.b16 %v109
  %v459 = vunpack.c.l.b16 %v110
  %v460 = vunpack.c.l.b16 %v111
  %v461 = vunpack.c.l.b16 %v112
  %v462 = vunpack.c.l.b16 %v113
  %v463 = vunpack.c.l.b16 %v114
  %v464 = vunpack.c.l.b16 %v115
  %v465 = vunpack.c.l.b16 %v116
  %v466 = vunpack.c.l.b16 %v117
  %v467 = vunpack.c.l.b16 %v118
  %v468 = vunpack.c.l.b16 %v119
  %v469 = vunpack.c.l.b16 %v120
  %v470 = vpack.c.b16 %v407, %v406
  %v471 = vpack.c.b16 %v409, %v408
  %v472 = vpack.c.b16 %v411, %v410
  %v473 = vpack.c.b16 %v413, %v412
  %v474 = vpack.c.b16 %v415, %v414
  %v475 = vpack.c.b16 %v417, %v416
  %v476 = vpack.c.b16 %v419, %v418
  %v477 = vpack.c.b16 %v421, %v420
  %v478 = vpack.c.b16 %v423, %v422
  %v479 = vpack.c.b16 %v425, %v424
  %v480 = vpack.c.b16 %v427, %v426
  %v481 = vpack.c.b16 %v429, %v428
  %v482 = vpack.c.b16 %v431, %v430
  %v483 = vpack.c.b16 %v433, %v432
  %v484 = vpack.c.b16 %v435, %v434
  %v485 = vpack.c.b16 %v437, %v436
  %v486 = vpack.c.b16 %v439, %v438
  %v487 = vpack.c.b16 %v441, %v440
  %v488 = vpack.c.b16 %v443, %v442
  %v489 = vpack.c.b16 %v445, %v444
  %v490 = vpack.c.b16 %v447, %v446
  %v491 = vpack.c.b16 %v449, %v448
  %v492 = vpack.c.b16 %v451, %v450
  %v493 = vpack.c.b16 %v453, %v452
  %v494 = vpack.c.b16 %v455, %v454
  %v495 = vpack.c.b16 %v457, %v456
  %v496 = vpack.c.b16 %v459, %v458
  %v497 = vpack.c.b16 %v461, %v460
  %v498 = vpack.c.b16 %v463, %v462
  %v499 = vpack.c.b16 %v465, %v464
  %v500 = vpack.c.b16 %v467, %v466
  %v501 = vpack.c.b16 %v469, %v468
  %534 = vmatprep.subr.bf16.mxu0 0
  %535 = vmatpush1.bf16.msra.mxu0 %v477
  %536 = vmatprep.subr.bf16.mxu0 0
  %537 = vmatpush1.bf16.msra.mxu0 %v476
  %538 = vmatprep.subr.bf16.mxu0 0
  %539 = vmatpush1.bf16.msra.mxu0 %v475
  %540 = vmatprep.subr.bf16.mxu0 0
  %541 = vmatpush1.bf16.msra.mxu0 %v474
  %542 = vmatprep.subr.bf16.mxu0 0
  %543 = vmatpush1.bf16.msra.mxu0 %v473
  %544 = vmatprep.subr.bf16.mxu0 0
  %545 = vmatpush1.bf16.msra.mxu0 %v472
  %546 = vmatprep.subr.bf16.mxu0 0
  %547 = vmatpush1.bf16.msra.mxu0 %v471
  %548 = vmatprep.subr.bf16.mxu0 0
  %549 = vmatpush1.bf16.msra.mxu0 %v470
  %550 = vmatprep.subr.bf16.mxu0 0
  %551 = vmatpush2.bf16.msra.mxu0 %v485
  %552 = vmatprep.subr.bf16.mxu0 0
  %553 = vmatpush2.bf16.msra.mxu0 %v484
  %554 = vmatprep.subr.bf16.mxu0 0
  %555 = vmatpush2.bf16.msra.mxu0 %v483
  %556 = vmatprep.subr.bf16.mxu0 0
  %557 = vmatpush2.bf16.msra.mxu0 %v482
  %558 = vmatprep.subr.bf16.mxu0 0
  %559 = vmatpush2.bf16.msra.mxu0 %v481
  %560 = vmatprep.subr.bf16.mxu0 0
  %561 = vmatpush2.bf16.msra.mxu0 %v480
  %562 = vmatprep.subr.bf16.mxu0 0
  %563 = vmatpush2.bf16.msra.mxu0 %v479
  %564 = vmatprep.subr.bf16.mxu0 0
  %565 = vmatpush2.bf16.msra.mxu0 %v478
  %566 = vmatprep.mubr.bf16.mxu0 %v255
  %567 = vmatmul.mubr.bf16.gmra.mxu0 %v254
  %v568 = vpop.f32.mrf.mxu0
  %v569 = vadd.f32 %v126, %v568
  %v570 = vpop.f32.mrf.mxu0
  %v571 = vpop.f32.mrf.mxu0
  %v572 = vadd.f32 %v126, %v571
  %v573 = vpop.f32.mrf.mxu0
  %574 = vmatprep.mubr.bf16.mxu0 %v259
  %575 = vmatmul.mubr.bf16.gmra.mxu0 %v258
  %v576 = vpop.f32.mrf.mxu0
  %v577 = vadd.f32 %v126, %v576
  %v578 = vpop.f32.mrf.mxu0
  %v579 = vpop.f32.mrf.mxu0
  %v580 = vadd.f32 %v126, %v579
  %v581 = vpop.f32.mrf.mxu0
  %582 = vmatprep.mubr.bf16.mxu0 %v263
  %583 = vmatmul.mubr.bf16.gmra.mxu0 %v262
  %v584 = vpop.f32.mrf.mxu0
  %v585 = vadd.f32 %v126, %v584
  %v586 = vpop.f32.mrf.mxu0
  %v587 = vpop.f32.mrf.mxu0
  %v588 = vadd.f32 %v126, %v587
  %v589 = vpop.f32.mrf.mxu0
  %590 = vmatprep.mubr.bf16.mxu0 %v267
  %591 = vmatmul.mubr.bf16.gmra.mxu0 %v266
  %v592 = vpop.f32.mrf.mxu0
  %v593 = vadd.f32 %v126, %v592
  %v594 = vpop.f32.mrf.mxu0
  %v595 = vpop.f32.mrf.mxu0
  %v596 = vadd.f32 %v126, %v595
  %v597 = vpop.f32.mrf.mxu0
  %598 = vmatprep.mubr.bf16.mxu0 %v271
  %599 = vmatmul.mubr.bf16.gmra.mxu0 %v270
  %v600 = vpop.f32.mrf.mxu0
  %v601 = vadd.f32 %v126, %v600
  %v602 = vpop.f32.mrf.mxu0
  %v603 = vpop.f32.mrf.mxu0
  %v604 = vadd.f32 %v126, %v603
  %v605 = vpop.f32.mrf.mxu0
  %606 = vmatprep.mubr.bf16.mxu0 %v275
  %607 = vmatmul.mubr.bf16.gmra.mxu0 %v274
  %v608 = vpop.f32.mrf.mxu0
  %v609 = vadd.f32 %v126, %v608
  %v610 = vpop.f32.mrf.mxu0
  %v611 = vpop.f32.mrf.mxu0
  %v612 = vadd.f32 %v126, %v611
  %v613 = vpop.f32.mrf.mxu0
  %614 = vmatprep.mubr.bf16.mxu0 %v279
  %615 = vmatmul.mubr.bf16.gmra.mxu0 %v278
  %v616 = vpop.f32.mrf.mxu0
  %v617 = vadd.f32 %v126, %v616
  %v618 = vpop.f32.mrf.mxu0
  %v619 = vpop.f32.mrf.mxu0
  %v620 = vadd.f32 %v126, %v619
  %v621 = vpop.f32.mrf.mxu0
  %622 = vmatprep.mubr.bf16.mxu0 %v283
  %623 = vmatmul.mubr.bf16.gmra.mxu0 %v282
  %v624 = vpop.f32.mrf.mxu0
  %v625 = vadd.f32 %v126, %v624
  %v626 = vpop.f32.mrf.mxu0
  %v627 = vpop.f32.mrf.mxu0
  %v628 = vadd.f32 %v126, %v627
  %v629 = vpop.f32.mrf.mxu0
  %630 = vmatprep.mubr.bf16.mxu0 %v287
  %631 = vmatmul.mubr.bf16.gmra.mxu0 %v286
  %v632 = vpop.f32.mrf.mxu0
  %v633 = vadd.f32 %v126, %v632
  %v634 = vpop.f32.mrf.mxu0
  %v635 = vpop.f32.mrf.mxu0
  %v636 = vadd.f32 %v126, %v635
  %v637 = vpop.f32.mrf.mxu0
  %638 = vmatprep.mubr.bf16.mxu0 %v291
  %639 = vmatmul.mubr.bf16.gmra.mxu0 %v290
  %v640 = vpop.f32.mrf.mxu0
  %v641 = vadd.f32 %v126, %v640
  %v642 = vpop.f32.mrf.mxu0
  %v643 = vpop.f32.mrf.mxu0
  %v644 = vadd.f32 %v126, %v643
  %v645 = vpop.f32.mrf.mxu0
  %646 = vmatprep.mubr.bf16.mxu0 %v295
  %647 = vmatmul.mubr.bf16.gmra.mxu0 %v294
  %v648 = vpop.f32.mrf.mxu0
  %v649 = vadd.f32 %v126, %v648
  %v650 = vpop.f32.mrf.mxu0
  %v651 = vpop.f32.mrf.mxu0
  %v652 = vpop.f32.mrf.mxu0
  %653 = vdwg.mxu0
  %654 = vmatprep.subr.bf16.mxu0 0
  %655 = vmatpush1.bf16.msra.mxu0 %v493
  %656 = vmatprep.subr.bf16.mxu0 0
  %657 = vmatpush1.bf16.msra.mxu0 %v492
  %658 = vmatprep.subr.bf16.mxu0 0
  %659 = vmatpush1.bf16.msra.mxu0 %v491
  %660 = vmatprep.subr.bf16.mxu0 0
  %661 = vmatpush1.bf16.msra.mxu0 %v490
  %662 = vmatprep.subr.bf16.mxu0 0
  %663 = vmatpush1.bf16.msra.mxu0 %v489
  %664 = vmatprep.subr.bf16.mxu0 0
  %665 = vmatpush1.bf16.msra.mxu0 %v488
  %666 = vmatprep.subr.bf16.mxu0 0
  %667 = vmatpush1.bf16.msra.mxu0 %v487
  %668 = vmatprep.subr.bf16.mxu0 0
  %669 = vmatpush1.bf16.msra.mxu0 %v486
  %670 = vmatprep.subr.bf16.mxu0 0
  %671 = vmatpush2.bf16.msra.mxu0 %v501
  %672 = vmatprep.subr.bf16.mxu0 0
  %673 = vmatpush2.bf16.msra.mxu0 %v500
  %674 = vmatprep.subr.bf16.mxu0 0
  %675 = vmatpush2.bf16.msra.mxu0 %v499
  %676 = vmatprep.subr.bf16.mxu0 0
  %677 = vmatpush2.bf16.msra.mxu0 %v498
  %678 = vmatprep.subr.bf16.mxu0 0
  %679 = vmatpush2.bf16.msra.mxu0 %v497
  %680 = vmatprep.subr.bf16.mxu0 0
  %681 = vmatpush2.bf16.msra.mxu0 %v496
  %682 = vmatprep.subr.bf16.mxu0 0
  %683 = vmatpush2.bf16.msra.mxu0 %v495
  %684 = vmatprep.subr.bf16.mxu0 0
  %685 = vmatpush2.bf16.msra.mxu0 %v494
  %686 = vmatprep.mubr.bf16.mxu0 %v257
  %687 = vmatmul.mubr.bf16.gmra.mxu0 %v256
  %v688 = vpop.f32.mrf.mxu0
  %v689 = vadd.f32 %v569, %v688
  %v690 = vpop.f32.mrf.mxu0
  %v691 = vpop.f32.mrf.mxu0
  %v692 = vadd.f32 %v572, %v691
  %v693 = vpop.f32.mrf.mxu0
  %694 = vmatprep.mubr.bf16.mxu0 %v261
  %695 = vmatmul.mubr.bf16.gmra.mxu0 %v260
  %v696 = vpop.f32.mrf.mxu0
  %v697 = vadd.f32 %v577, %v696
  %v698 = vpop.f32.mrf.mxu0
  %v699 = vpop.f32.mrf.mxu0
  %v700 = vadd.f32 %v580, %v699
  %v701 = vpop.f32.mrf.mxu0
  %702 = vmatprep.mubr.bf16.mxu0 %v265
  %703 = vmatmul.mubr.bf16.gmra.mxu0 %v264
  %v704 = vpop.f32.mrf.mxu0
  %v705 = vadd.f32 %v585, %v704
  %v706 = vpop.f32.mrf.mxu0
  %v707 = vpop.f32.mrf.mxu0
  %v708 = vadd.f32 %v588, %v707
  %v709 = vpop.f32.mrf.mxu0
  %710 = vmatprep.mubr.bf16.mxu0 %v269
  %711 = vmatmul.mubr.bf16.gmra.mxu0 %v268
  %v712 = vpop.f32.mrf.mxu0
  %v713 = vadd.f32 %v593, %v712
  %v714 = vpop.f32.mrf.mxu0
  %v715 = vpop.f32.mrf.mxu0
  %v716 = vadd.f32 %v596, %v715
  %v717 = vpop.f32.mrf.mxu0
  %718 = vmatprep.mubr.bf16.mxu0 %v273
  %719 = vmatmul.mubr.bf16.gmra.mxu0 %v272
  %v720 = vpop.f32.mrf.mxu0
  %v721 = vadd.f32 %v601, %v720
  %v722 = vpop.f32.mrf.mxu0
  %v723 = vpop.f32.mrf.mxu0
  %v724 = vadd.f32 %v604, %v723
  %v725 = vpop.f32.mrf.mxu0
  %726 = vmatprep.mubr.bf16.mxu0 %v277
  %727 = vmatmul.mubr.bf16.gmra.mxu0 %v276
  %v728 = vpop.f32.mrf.mxu0
  %v729 = vadd.f32 %v609, %v728
  %v730 = vpop.f32.mrf.mxu0
  %v731 = vpop.f32.mrf.mxu0
  %v732 = vadd.f32 %v612, %v731
  %v733 = vpop.f32.mrf.mxu0
  %734 = vmatprep.mubr.bf16.mxu0 %v281
  %735 = vmatmul.mubr.bf16.gmra.mxu0 %v280
  %v736 = vpop.f32.mrf.mxu0
  %v737 = vadd.f32 %v617, %v736
  %v738 = vpop.f32.mrf.mxu0
  %v739 = vpop.f32.mrf.mxu0
  %v740 = vadd.f32 %v620, %v739
  %v741 = vpop.f32.mrf.mxu0
  %742 = vmatprep.mubr.bf16.mxu0 %v285
  %743 = vmatmul.mubr.bf16.gmra.mxu0 %v284
  %v744 = vpop.f32.mrf.mxu0
  %v745 = vadd.f32 %v625, %v744
  %v746 = vpop.f32.mrf.mxu0
  %v747 = vpop.f32.mrf.mxu0
  %v748 = vadd.f32 %v628, %v747
  %v749 = vpop.f32.mrf.mxu0
  %750 = vmatprep.mubr.bf16.mxu0 %v289
  %751 = vmatmul.mubr.bf16.gmra.mxu0 %v288
  %v752 = vpop.f32.mrf.mxu0
  %v753 = vadd.f32 %v633, %v752
  %v754 = vpop.f32.mrf.mxu0
  %v755 = vpop.f32.mrf.mxu0
  %v756 = vadd.f32 %v636, %v755
  %v757 = vpop.f32.mrf.mxu0
  %758 = vmatprep.mubr.bf16.mxu0 %v293
  %759 = vmatmul.mubr.bf16.gmra.mxu0 %v292
  %v760 = vpop.f32.mrf.mxu0
  %v761 = vadd.f32 %v641, %v760
  %v762 = vpop.f32.mrf.mxu0
  %v763 = vpop.f32.mrf.mxu0
  %v764 = vadd.f32 %v644, %v763
  %v765 = vpop.f32.mrf.mxu0
  %766 = vmatprep.mubr.bf16.mxu0 %v297
  %767 = vmatmul.mubr.bf16.gmra.mxu0 %v296
  %v768 = vpop.f32.mrf.mxu0
  %v769 = vadd.f32 %v649, %v768
  %v770 = vpop.f32.mrf.mxu0
  %v771 = vpop.f32.mrf.mxu0
  %v772 = vpop.f32.mrf.mxu0
  %773 = vdwg.mxu0
  %v774 = vmax.f32 %v689, 0.0
  %v775 = vmax.f32 %v692, 0.0
  %v776 = vmax.f32 %v697, 0.0
  %v777 = vmax.f32 %v700, 0.0
  %v778 = vmax.f32 %v705, 0.0
  %v779 = vmax.f32 %v708, 0.0
  %v780 = vmax.f32 %v713, 0.0
  %v781 = vmax.f32 %v716, 0.0
  %v782 = vmax.f32 %v721, 0.0
  %v783 = vmax.f32 %v724, 0.0
  %v784 = vmax.f32 %v729, 0.0
  %v785 = vmax.f32 %v732, 0.0
  %v786 = vmax.f32 %v737, 0.0
  %v787 = vmax.f32 %v740, 0.0
  %v788 = vmax.f32 %v745, 0.0
  %v789 = vmax.f32 %v748, 0.0
  %v790 = vmax.f32 %v753, 0.0
  %v791 = vmax.f32 %v756, 0.0
  %v792 = vmax.f32 %v761, 0.0
  %v793 = vmax.f32 %v764, 0.0
  %v794 = vmax.f32 %v769, 0.0
  %vm795 = vcmask 523264
  %796 = vst.msk [vmem:[%s3] sm:$0xff] %vm795, %v774
  %797 = vst.msk [vmem:[%s3 + $0x8] sm:$0xff] %vm795, %v775
  %798 = vst.msk [vmem:[%s3 + $0x10] sm:$0xff] %vm795, %v776
  %799 = vst.msk [vmem:[%s3 + $0x18] sm:$0xff] %vm795, %v777
  %800 = vst.msk [vmem:[%s3 + $0x20] sm:$0xff] %vm795, %v778
  %801 = vst.msk [vmem:[%s3 + $0x28] sm:$0xff] %vm795, %v779
  %802 = vst.msk [vmem:[%s3 + $0x30] sm:$0xff] %vm795, %v780
  %803 = vst.msk [vmem:[%s3 + $0x38] sm:$0xff] %vm795, %v781
  %804 = vst.msk [vmem:[%s3 + $0x40] sm:$0xff] %vm795, %v782
  %805 = vst.msk [vmem:[%s3 + $0x48] sm:$0xff] %vm795, %v783
  %806 = vst.msk [vmem:[%s3 + $0x50] sm:$0xff] %vm795, %v784
  %807 = vst.msk [vmem:[%s3 + $0x58] sm:$0xff] %vm795, %v785
  %808 = vst.msk [vmem:[%s3 + $0x60] sm:$0xff] %vm795, %v786
  %809 = vst.msk [vmem:[%s3 + $0x68] sm:$0xff] %vm795, %v787
  %810 = vst.msk [vmem:[%s3 + $0x70] sm:$0xff] %vm795, %v788
  %811 = vst.msk [vmem:[%s3 + $0x78] sm:$0xff] %vm795, %v789
  %812 = vst.msk [vmem:[%s3 + $0x80] sm:$0xff] %vm795, %v790
  %813 = vst.msk [vmem:[%s3 + $0x88] sm:$0xff] %vm795, %v791
  %814 = vst.msk [vmem:[%s3 + $0x90] sm:$0xff] %vm795, %v792
  %815 = vst.msk [vmem:[%s3 + $0x98] sm:$0xff] %vm795, %v793
  %vm816 = vcmask 517120
  %817 = vst.msk [vmem:[%s3 + $0xa0] sm:$0x3] %vm816, %v794
  // Predicated region
  $region14: #{nature_net_forward.5} parent=0 // pred_check
    _
  $region15: #{nature_net_forward.5} parent=0 // pred_check_branch
    %819 = sbr.rel (0) target = $region17
  $region16: #{nature_net_forward.5} parent=0 // pred_region
    _
  $region17: #{nature_net_forward.5} parent=0 // pred_fallthru
    _
  // Predicated region
  $region18: #{nature_net_forward.5} parent=0 // pred_check
    _
  $region19: #{nature_net_forward.5} parent=0 // pred_check_branch
    %821 = sbr.rel (0) target = $region21
  $region20: #{nature_net_forward.5} parent=0 // pred_region
    _
  $region21: #{nature_net_forward.5} parent=0 // pred_fallthru
    _

// kernel: nature_net_forward.6
$region0: #{nature_net_forward.6}
  #allocation0 [shape = 'u32[]', space=smem, size = 0x4, offset = 0x4, fixed_abs, tag = 'smem constant byte address 0x4 - core index']
  #allocation1 [shape = 'u32[144,128]{1,0:T(1,128)}', space=vmem, size = 0x12000, scoped, tag = 'internal scratch']
  %s0 = inlined_call_operand.vmem [shape: bf16[98,576], index: 0, kind: input, shape index: {}]
  %s1 = inlined_call_operand.vmem [shape: bf16[576,64], index: 1, kind: input, shape index: {}]
  %s2 = inlined_call_operand.vmem [shape: f32[1,64], index: 2, kind: input, shape index: {}]
  %s3 = inlined_call_operand.vmem [shape: f32[98,64], index: 3, kind: output, shape index: {}]
  %s4 = sld [smem:[#allocation0]]
  $region22: #{nature_net_forward.6} parent=0
    _
  %s6 = ssub.s32 1, %s4
  %s7 = scalar_select 0, %s6, %s4
  // Predicated region
  $region2: #{nature_net_forward.6} parent=0 // pred_check
    _
  $region3: #{nature_net_forward.6} parent=0 // pred_check_branch
    %9 = sbr.rel (0) target = $region5
  $region4: #{nature_net_forward.6} parent=0 // pred_region
    _
  $region5: #{nature_net_forward.6} parent=0 // pred_fallthru
    _
  // Predicated region
  $region6: #{nature_net_forward.6} parent=0 // pred_check
    _
  $region7: #{nature_net_forward.6} parent=0 // pred_check_branch
    %11 = sbr.rel (0) target = $region9
  $region8: #{nature_net_forward.6} parent=0 // pred_region
    _
  $region9: #{nature_net_forward.6} parent=0 // pred_fallthru
    _
  // Predicated region
  $region10: #{nature_net_forward.6} parent=0 // pred_check
    _
  $region11: #{nature_net_forward.6} parent=0 // pred_check_branch
    %13 = sbr.rel (0) target = $region13
  $region12: #{nature_net_forward.6} parent=0 // pred_region
    _
  $region13: #{nature_net_forward.6} parent=0 // pred_fallthru
    _
  %v15 = vld [vmem:[%s0] sm:$0xff]
  %v16 = vld [vmem:[%s0 + $0x8] sm:$0xff]
  %v17 = vld [vmem:[%s0 + $0x10] sm:$0xf]
  %v18 = vld [vmem:[%s0 + $0x14] sm:$0xff]
  %v19 = vld [vmem:[%s0 + $0x1c] sm:$0xff]
  %v20 = vld [vmem:[%s0 + $0x24] sm:$0xf]
  %v21 = vld [vmem:[%s0 + $0x28] sm:$0xff]
  %v22 = vld [vmem:[%s0 + $0x30] sm:$0xff]
  %v23 = vld [vmem:[%s0 + $0x38] sm:$0xf]
  %v24 = vld [vmem:[%s0 + $0x3c] sm:$0xff]
  %v25 = vld [vmem:[%s0 + $0x44] sm:$0xff]
  %v26 = vld [vmem:[%s0 + $0x4c] sm:$0xf]
  %v27 = vld [vmem:[%s0 + $0x50] sm:$0xff]
  %v28 = vld [vmem:[%s0 + $0x58] sm:$0xff]
  %v29 = vld [vmem:[%s0 + $0x60] sm:$0xf]
  %v30 = vld [vmem:[%s0 + $0x64] sm:$0xff]
  %v31 = vld [vmem:[%s0 + $0x6c] sm:$0xff]
  %v32 = vld [vmem:[%s0 + $0x74] sm:$0xf]
  %v33 = vld [vmem:[%s0 + $0x78] sm:$0xff]
  %v34 = vld [vmem:[%s0 + $0x80] sm:$0xff]
  %v35 = vld [vmem:[%s0 + $0x88] sm:$0xf]
  %v36 = vld [vmem:[%s0 + $0x8c] sm:$0xff]
  %v37 = vld [vmem:[%s0 + $0x94] sm:$0xff]
  %v38 = vld [vmem:[%s0 + $0x9c] sm:$0xf]
  %v39 = vld [vmem:[%s0 + $0xa0] sm:$0xff]
  %v40 = vld [vmem:[%s0 + $0xa8] sm:$0xff]
  %v41 = vld [vmem:[%s0 + $0xb0] sm:$0xf]
  %v42 = vld [vmem:[%s0 + $0xb4] sm:$0xff]
  %v43 = vld [vmem:[%s0 + $0xbc] sm:$0xff]
  %v44 = vld [vmem:[%s0 + $0xc4] sm:$0xf]
  %v45 = vld [vmem:[%s0 + $0xc8] sm:$0xff]
  %v46 = vld [vmem:[%s0 + $0xd0] sm:$0xff]
  %v47 = vld [vmem:[%s0 + $0xd8] sm:$0xf]
  %v48 = vld [vmem:[%s0 + $0xdc] sm:$0xff]
  %v49 = vld [vmem:[%s0 + $0xe4] sm:$0xff]
  %v50 = vld [vmem:[%s0 + $0xec] sm:$0xf]
  %v51 = vld [vmem:[%s0 + $0xf0] sm:$0x11]
  %v52 = vld [vmem:[%s0 + $0xf8] sm:$0x11]
  %v53 = vld [vmem:[%s0 + $0x100] sm:$0x1]
  %v54 = vld [vmem:[%s1] sm:$0xf]
  %v55 = vld [vmem:[%s1 + $0x4] sm:$0xf]
  %v56 = vld [vmem:[%s1 + $0x8] sm:$0xf]
  %v57 = vld [vmem:[%s1 + $0xc] sm:$0xf]
  %v58 = vld [vmem:[%s1 + $0x10] sm:$0xf]
  %v59 = vld [vmem:[%s1 + $0x14] sm:$0xf]
  %v60 = vld [vmem:[%s1 + $0x18] sm:$0xf]
  %v61 = vld [vmem:[%s1 + $0x1c] sm:$0xf]
  %v62 = vld [vmem:[%s1 + $0x20] sm:$0xf]
  %v63 = vld [vmem:[%s1 + $0x24] sm:$0xf]
  %v64 = vld [vmem:[%s1 + $0x28] sm:$0xf]
  %v65 = vld [vmem:[%s1 + $0x2c] sm:$0xf]
  %v66 = vld [vmem:[%s1 + $0x30] sm:$0xf]
  %v67 = vld [vmem:[%s1 + $0x34] sm:$0xf]
  %v68 = vld [vmem:[%s1 + $0x38] sm:$0xf]
  %v69 = vld [vmem:[%s1 + $0x3c] sm:$0xf]
  %v70 = vld [vmem:[%s1 + $0x40] sm:$0xf]
  %v71 = vld [vmem:[%s1 + $0x44] sm:$0xf]
  %v72 = vld [vmem:[%s1 + $0x48] sm:$0xf]
  %v73 = vld [vmem:[%s1 + $0x4c] sm:$0xf]
  %v74 = vld [vmem:[%s1 + $0x50] sm:$0xf]
  %v75 = vld [vmem:[%s1 + $0x54] sm:$0xf]
  %v76 = vld [vmem:[%s1 + $0x58] sm:$0xf]
  %v77 = vld [vmem:[%s1 + $0x5c] sm:$0xf]
  %v78 = vld [vmem:[%s1 + $0x60] sm:$0xf]
  %v79 = vld [vmem:[%s1 + $0x64] sm:$0xf]
  %v80 = vld [vmem:[%s1 + $0x68] sm:$0xf]
  %v81 = vld [vmem:[%s1 + $0x6c] sm:$0xf]
  %v82 = vld [vmem:[%s1 + $0x70] sm:$0xf]
  %v83 = vld [vmem:[%s1 + $0x74] sm:$0xf]
  %v84 = vld [vmem:[%s1 + $0x78] sm:$0xf]
  %v85 = vld [vmem:[%s1 + $0x7c] sm:$0xf]
  %v86 = vld [vmem:[%s1 + $0x80] sm:$0xf]
  %v87 = vld [vmem:[%s1 + $0x84] sm:$0xf]
  %v88 = vld [vmem:[%s1 + $0x88] sm:$0xf]
  %v89 = vld [vmem:[%s1 + $0x8c] sm:$0xf]
  %v90 = vld [vmem:[%s1 + $0x90] sm:$0xf]
  %v91 = vld [vmem:[%s1 + $0x94] sm:$0xf]
  %v92 = vld [vmem:[%s1 + $0x98] sm:$0xf]
  %v93 = vld [vmem:[%s1 + $0x9c] sm:$0xf]
  %v94 = vld [vmem:[%s1 + $0xa0] sm:$0xf]
  %v95 = vld [vmem:[%s1 + $0xa4] sm:$0xf]
  %v96 = vld [vmem:[%s1 + $0xa8] sm:$0xf]
  %v97 = vld [vmem:[%s1 + $0xac] sm:$0xf]
  %v98 = vld [vmem:[%s1 + $0xb0] sm:$0xf]
  %v99 = vld [vmem:[%s1 + $0xb4] sm:$0xf]
  %v100 = vld [vmem:[%s1 + $0xb8] sm:$0xf]
  %v101 = vld [vmem:[%s1 + $0xbc] sm:$0xf]
  %v102 = vld [vmem:[%s1 + $0xc0] sm:$0xf]
  %v103 = vld [vmem:[%s1 + $0xc4] sm:$0xf]
  %v104 = vld [vmem:[%s1 + $0xc8] sm:$0xf]
  %v105 = vld [vmem:[%s1 + $0xcc] sm:$0xf]
  %v106 = vld [vmem:[%s1 + $0xd0] sm:$0xf]
  %v107 = vld [vmem:[%s1 + $0xd4] sm:$0xf]
  %v108 = vld [vmem:[%s1 + $0xd8] sm:$0xf]
  %v109 = vld [vmem:[%s1 + $0xdc] sm:$0xf]
  %v110 = vld [vmem:[%s1 + $0xe0] sm:$0xf]
  %v111 = vld [vmem:[%s1 + $0xe4] sm:$0xf]
  %v112 = vld [vmem:[%s1 + $0xe8] sm:$0xf]
  %v113 = vld [vmem:[%s1 + $0xec] sm:$0xf]
  %v114 = vld [vmem:[%s1 + $0xf0] sm:$0xf]
  %v115 = vld [vmem:[%s1 + $0xf4] sm:$0xf]
  %v116 = vld [vmem:[%s1 + $0xf8] sm:$0xf]
  %v117 = vld [vmem:[%s1 + $0xfc] sm:$0xf]
  %v118 = vld [vmem:[%s1 + $0x100] sm:$0xf]
  %v119 = vld [vmem:[%s1 + $0x104] sm:$0xf]
  %v120 = vld [vmem:[%s1 + $0x108] sm:$0xf]
  %v121 = vld [vmem:[%s1 + $0x10c] sm:$0xf]
  %v122 = vld [vmem:[%s1 + $0x110] sm:$0xf]
  %v123 = vld [vmem:[%s1 + $0x114] sm:$0xf]
  %v124 = vld [vmem:[%s1 + $0x118] sm:$0xf]
  %v125 = vld [vmem:[%s1 + $0x11c] sm:$0xf]
  %v126 = vld [vmem:[%s2] sm:$0x1]
  %v128 = vlaneseq
  %v129 = vshrl.u32 %v128, 7
  %v130 = vsub.s32 0, %v129
  %v131 = vrot.slane %v126, %v130
  %v172 = vunpack.c.l.b16 %v15
  %v173 = vunpack.c.h.b16 %v15
  %v174 = vunpack.c.l.b16 %v16
  %v175 = vunpack.c.h.b16 %v16
  %v176 = vunpack.c.l.b16 %v17
  %v177 = vunpack.c.l.b16 %v18
  %v178 = vunpack.c.h.b16 %v18
  %v179 = vunpack.c.l.b16 %v19
  %v180 = vunpack.c.h.b16 %v19
  %v181 = vunpack.c.l.b16 %v20
  %v182 = vunpack.c.l.b16 %v21
  %v183 = vunpack.c.h.b16 %v21
  %v184 = vunpack.c.l.b16 %v22
  %v185 = vunpack.c.h.b16 %v22
  %v186 = vunpack.c.l.b16 %v23
  %v187 = vunpack.c.l.b16 %v24
  %v188 = vunpack.c.h.b16 %v24
  %v189 = vunpack.c.l.b16 %v25
  %v190 = vunpack.c.h.b16 %v25
  %v191 = vunpack.c.l.b16 %v26
  %v192 = vunpack.c.l.b16 %v27
  %v193 = vunpack.c.h.b16 %v27
  %v194 = vunpack.c.l.b16 %v28
  %v195 = vunpack.c.h.b16 %v28
  %v196 = vunpack.c.l.b16 %v29
  %v197 = vunpack.c.l.b16 %v30
  %v198 = vunpack.c.h.b16 %v30
  %v199 = vunpack.c.l.b16 %v31
  %v200 = vunpack.c.h.b16 %v31
  %v201 = vunpack.c.l.b16 %v32
  %v202 = vunpack.c.l.b16 %v33
  %v203 = vunpack.c.h.b16 %v33
  %v204 = vunpack.c.l.b16 %v34
  %v205 = vunpack.c.h.b16 %v34
  %v206 = vunpack.c.l.b16 %v35
  %v207 = vunpack.c.l.b16 %v36
  %v208 = vunpack.c.h.b16 %v36
  %v209 = vunpack.c.l.b16 %v37
  %v210 = vunpack.c.h.b16 %v37
  %v211 = vunpack.c.l.b16 %v38
  %v212 = vunpack.c.l.b16 %v39
  %v213 = vunpack.c.h.b16 %v39
  %v214 = vunpack.c.l.b16 %v40
  %v215 = vunpack.c.h.b16 %v40
  %v216 = vunpack.c.l.b16 %v41
  %v217 = vunpack.c.l.b16 %v42
  %v218 = vunpack.c.h.b16 %v42
  %v219 = vunpack.c.l.b16 %v43
  %v220 = vunpack.c.h.b16 %v43
  %v221 = vunpack.c.l.b16 %v44
  %v222 = vunpack.c.l.b16 %v45
  %v223 = vunpack.c.h.b16 %v45
  %v224 = vunpack.c.l.b16 %v46
  %v225 = vunpack.c.h.b16 %v46
  %v226 = vunpack.c.l.b16 %v47
  %v227 = vunpack.c.l.b16 %v48
  %v228 = vunpack.c.h.b16 %v48
  %v229 = vunpack.c.l.b16 %v49
  %v230 = vunpack.c.h.b16 %v49
  %v231 = vunpack.c.l.b16 %v50
  %v232 = vunpack.c.l.b16 %v51
  %v233 = vunpack.c.h.b16 %v51
  %v234 = vunpack.c.l.b16 %v52
  %v235 = vunpack.c.h.b16 %v52
  %v236 = vunpack.c.l.b16 %v53
  %v237 = vpack.c.b16 %v177, %v172
  %v238 = vpack.c.b16 %v178, %v173
  %v239 = vpack.c.b16 %v179, %v174
  %v240 = vpack.c.b16 %v180, %v175
  %v241 = vpack.c.b16 %v181, %v176
  %v242 = vpack.c.b16 %v187, %v182
  %v243 = vpack.c.b16 %v188, %v183
  %v244 = vpack.c.b16 %v189, %v184
  %v245 = vpack.c.b16 %v190, %v185
  %v246 = vpack.c.b16 %v191, %v186
  %v247 = vpack.c.b16 %v197, %v192
  %v248 = vpack.c.b16 %v198, %v193
  %v249 = vpack.c.b16 %v199, %v194
  %v250 = vpack.c.b16 %v200, %v195
  %v251 = vpack.c.b16 %v201, %v196
  %v252 = vpack.c.b16 %v207, %v202
  %v253 = vpack.c.b16 %v208, %v203
  %v254 = vpack.c.b16 %v209, %v204
  %v255 = vpack.c.b16 %v210, %v205
  %v256 = vpack.c.b16 %v211, %v206
  %v257 = vpack.c.b16 %v217, %v212
  %v258 = vpack.c.b16 %v218, %v213
  %v259 = vpack.c.b16 %v219, %v214
  %v260 = vpack.c.b16 %v220, %v215
  %v261 = vpack.c.b16 %v221, %v216
  %v262 = vpack.c.b16 %v227, %v222
  %v263 = vpack.c.b16 %v228, %v223
  %v264 = vpack.c.b16 %v229, %v224
  %v265 = vpack.c.b16 %v230, %v225
  %v266 = vpack.c.b16 %v231, %v226
  %v267 = vpack.c.b16 %v232, %v232
  %v268 = vpack.c.b16 %v233, %v233
  %v269 = vpack.c.b16 %v234, %v234
  %v270 = vpack.c.b16 %v235, %v235
  %v271 = vpack.c.b16 %v236, %v236
  %v372 = vunpack.c.l.b16 %v54
  %v373 = vunpack.c.l.b16 %v55
  %v374 = vunpack.c.l.b16 %v56
  %v375 = vunpack.c.l.b16 %v57
  %v376 = vunpack.c.l.b16 %v58
  %v377 = vunpack.c.l.b16 %v59
  %v378 = vunpack.c.l.b16 %v60
  %v379 = vunpack.c.l.b16 %v61
  %v380 = vunpack.c.l.b16 %v62
  %v381 = vunpack.c.l.b16 %v63
  %v382 = vunpack.c.l.b16 %v64
  %v383 = vunpack.c.l.b16 %v65
  %v384 = vunpack.c.l.b16 %v66
  %v385 = vunpack.c.l.b16 %v67
  %v386 = vunpack.c.l.b16 %v68
  %v387 = vunpack.c.l.b16 %v69
  %v388 = vunpack.c.l.b16 %v70
  %v389 = vunpack.c.l.b16 %v71
  %v390 = vunpack.c.l.b16 %v72
  %v391 = vunpack.c.l.b16 %v73
  %v392 = vunpack.c.l.b16 %v74
  %v393 = vunpack.c.l.b16 %v75
  %v394 = vunpack.c.l.b16 %v76
  %v395 = vunpack.c.l.b16 %v77
  %v396 = vunpack.c.l.b16 %v78
  %v397 = vunpack.c.l.b16 %v79
  %v398 = vunpack.c.l.b16 %v80
  %v399 = vunpack.c.l.b16 %v81
  %v400 = vunpack.c.l.b16 %v82
  %v401 = vunpack.c.l.b16 %v83
  %v402 = vunpack.c.l.b16 %v84
  %v403 = vunpack.c.l.b16 %v85
  %v404 = vunpack.c.l.b16 %v86
  %v405 = vunpack.c.l.b16 %v87
  %v406 = vunpack.c.l.b16 %v88
  %v407 = vunpack.c.l.b16 %v89
  %v408 = vunpack.c.l.b16 %v90
  %v409 = vunpack.c.l.b16 %v91
  %v410 = vunpack.c.l.b16 %v92
  %v411 = vunpack.c.l.b16 %v93
  %v412 = vunpack.c.l.b16 %v94
  %v413 = vunpack.c.l.b16 %v95
  %v414 = vunpack.c.l.b16 %v96
  %v415 = vunpack.c.l.b16 %v97
  %v416 = vunpack.c.l.b16 %v98
  %v417 = vunpack.c.l.b16 %v99
  %v418 = vunpack.c.l.b16 %v100
  %v419 = vunpack.c.l.b16 %v101
  %v420 = vunpack.c.l.b16 %v102
  %v421 = vunpack.c.l.b16 %v103
  %v422 = vunpack.c.l.b16 %v104
  %v423 = vunpack.c.l.b16 %v105
  %v424 = vunpack.c.l.b16 %v106
  %v425 = vunpack.c.l.b16 %v107
  %v426 = vunpack.c.l.b16 %v108
  %v427 = vunpack.c.l.b16 %v109
  %v428 = vunpack.c.l.b16 %v110
  %v429 = vunpack.c.l.b16 %v111
  %v430 = vunpack.c.l.b16 %v112
  %v431 = vunpack.c.l.b16 %v113
  %v432 = vunpack.c.l.b16 %v114
  %v433 = vunpack.c.l.b16 %v115
  %v434 = vunpack.c.l.b16 %v116
  %v435 = vunpack.c.l.b16 %v117
  %v436 = vunpack.c.l.b16 %v118
  %v437 = vunpack.c.l.b16 %v119
  %v438 = vunpack.c.l.b16 %v120
  %v439 = vunpack.c.l.b16 %v121
  %v440 = vunpack.c.l.b16 %v122
  %v441 = vunpack.c.l.b16 %v123
  %v442 = vunpack.c.l.b16 %v124
  %v443 = vunpack.c.l.b16 %v125
  %v444 = vpack.c.b16 %v373, %v372
  %v445 = vpack.c.b16 %v375, %v374
  %v446 = vpack.c.b16 %v377, %v376
  %v447 = vpack.c.b16 %v379, %v378
  %v448 = vpack.c.b16 %v381, %v380
  %v449 = vpack.c.b16 %v383, %v382
  %v450 = vpack.c.b16 %v385, %v384
  %v451 = vpack.c.b16 %v387, %v386
  %v452 = vpack.c.b16 %v389, %v388
  %v453 = vpack.c.b16 %v391, %v390
  %v454 = vpack.c.b16 %v393, %v392
  %v455 = vpack.c.b16 %v395, %v394
  %v456 = vpack.c.b16 %v397, %v396
  %v457 = vpack.c.b16 %v399, %v398
  %v458 = vpack.c.b16 %v401, %v400
  %v459 = vpack.c.b16 %v403, %v402
  %v460 = vpack.c.b16 %v405, %v404
  %v461 = vpack.c.b16 %v407, %v406
  %v462 = vpack.c.b16 %v409, %v408
  %v463 = vpack.c.b16 %v411, %v410
  %v464 = vpack.c.b16 %v413, %v412
  %v465 = vpack.c.b16 %v415, %v414
  %v466 = vpack.c.b16 %v417, %v416
  %v467 = vpack.c.b16 %v419, %v418
  %v468 = vpack.c.b16 %v421, %v420
  %v469 = vpack.c.b16 %v423, %v422
  %v470 = vpack.c.b16 %v425, %v424
  %v471 = vpack.c.b16 %v427, %v426
  %v472 = vpack.c.b16 %v429, %v428
  %v473 = vpack.c.b16 %v431, %v430
  %v474 = vpack.c.b16 %v433, %v432
  %v475 = vpack.c.b16 %v435, %v434
  %v476 = vpack.c.b16 %v437, %v436
  %v477 = vpack.c.b16 %v439, %v438
  %v478 = vpack.c.b16 %v441, %v440
  %v479 = vpack.c.b16 %v443, %v442
  %vm516 = vcmask 523264
  %v518 = vsel %vm516, %v241, 0
  %v521 = vsel %vm516, %v246, 0
  %v524 = vsel %vm516, %v251, 0
  %v527 = vsel %vm516, %v256, 0
  %v530 = vsel %vm516, %v261, 0
  %v533 = vsel %vm516, %v266, 0
  %v536 = vsel %vm516, %v271, 0
  %538 = vmatprep.subr.bf16.mxu0 0
  %539 = vmatpush1.bf16.msra.mxu0 %v451
  %540 = vmatprep.subr.bf16.mxu0 0
  %541 = vmatpush1.bf16.msra.mxu0 %v450
  %542 = vmatprep.subr.bf16.mxu0 0
  %543 = vmatpush1.bf16.msra.mxu0 %v449
  %544 = vmatprep.subr.bf16.mxu0 0
  %545 = vmatpush1.bf16.msra.mxu0 %v448
  %546 = vmatprep.subr.bf16.mxu0 0
  %547 = vmatpush1.bf16.msra.mxu0 %v447
  %548 = vmatprep.subr.bf16.mxu0 0
  %549 = vmatpush1.bf16.msra.mxu0 %v446
  %550 = vmatprep.subr.bf16.mxu0 0
  %551 = vmatpush1.bf16.msra.mxu0 %v445
  %552 = vmatprep.subr.bf16.mxu0 0
  %553 = vmatpush1.bf16.msra.mxu0 %v444
  %554 = vmatprep.subr.bf16.mxu0 0
  %555 = vmatpush2.bf16.msra.mxu0 %v459
  %556 = vmatprep.subr.bf16.mxu0 0
  %557 = vmatpush2.bf16.msra.mxu0 %v458
  %558 = vmatprep.subr.bf16.mxu0 0
  %559 = vmatpush2.bf16.msra.mxu0 %v457
  %560 = vmatprep.subr.bf16.mxu0 0
  %561 = vmatpush2.bf16.msra.mxu0 %v456
  %562 = vmatprep.subr.bf16.mxu0 0
  %563 = vmatpush2.bf16.msra.mxu0 %v455
  %564 = vmatprep.subr.bf16.mxu0 0
  %565 = vmatpush2.bf16.msra.mxu0 %v454
  %566 = vmatprep.subr.bf16.mxu0 0
  %567 = vmatpush2.bf16.msra.mxu0 %v453
  %568 = vmatprep.subr.bf16.mxu0 0
  %569 = vmatpush2.bf16.msra.mxu0 %v452
  %570 = vmatprep.mubr.bf16.mxu0 %v238
  %571 = vmatmul.mubr.bf16.gmra.mxu0 %v237
  %v572 = vpop.f32.mrf.mxu0
  %v573 = vadd.f32 %v131, %v572
  %v574 = vpop.f32.mrf.mxu0
  %v575 = vpop.f32.mrf.mxu0
  %v576 = vadd.f32 %v131, %v575
  %v577 = vpop.f32.mrf.mxu0
  %578 = vmatprep.mubr.bf16.mxu0 %v243
  %579 = vmatmul.mubr.bf16.gmra.mxu0 %v242
  %v580 = vpop.f32.mrf.mxu0
  %v581 = vadd.f32 %v131, %v580
  %v582 = vpop.f32.mrf.mxu0
  %v583 = vpop.f32.mrf.mxu0
  %v584 = vadd.f32 %v131, %v583
  %v585 = vpop.f32.mrf.mxu0
  %586 = vmatprep.mubr.bf16.mxu0 %v248
  %587 = vmatmul.mubr.bf16.gmra.mxu0 %v247
  %v588 = vpop.f32.mrf.mxu0
  %v589 = vadd.f32 %v131, %v588
  %v590 = vpop.f32.mrf.mxu0
  %v591 = vpop.f32.mrf.mxu0
  %v592 = vadd.f32 %v131, %v591
  %v593 = vpop.f32.mrf.mxu0
  %594 = vmatprep.mubr.bf16.mxu0 %v253
  %595 = vmatmul.mubr.bf16.gmra.mxu0 %v252
  %v596 = vpop.f32.mrf.mxu0
  %v597 = vadd.f32 %v131, %v596
  %v598 = vpop.f32.mrf.mxu0
  %v599 = vpop.f32.mrf.mxu0
  %v600 = vadd.f32 %v131, %v599
  %v601 = vpop.f32.mrf.mxu0
  %602 = vmatprep.mubr.bf16.mxu0 %v258
  %603 = vmatmul.mubr.bf16.gmra.mxu0 %v257
  %v604 = vpop.f32.mrf.mxu0
  %v605 = vadd.f32 %v131, %v604
  %v606 = vpop.f32.mrf.mxu0
  %v607 = vpop.f32.mrf.mxu0
  %v608 = vadd.f32 %v131, %v607
  %v609 = vpop.f32.mrf.mxu0
  %610 = vmatprep.mubr.bf16.mxu0 %v263
  %611 = vmatmul.mubr.bf16.gmra.mxu0 %v262
  %v612 = vpop.f32.mrf.mxu0
  %v613 = vadd.f32 %v131, %v612
  %v614 = vpop.f32.mrf.mxu0
  %v615 = vpop.f32.mrf.mxu0
  %v616 = vadd.f32 %v131, %v615
  %v617 = vpop.f32.mrf.mxu0
  %618 = vmatprep.mubr.bf16.mxu0 %v268
  %619 = vmatmul.mubr.bf16.gmra.mxu0 %v267
  %v620 = vpop.f32.mrf.mxu0
  %v621 = vadd.f32 %v131, %v620
  %v622 = vpop.f32.mrf.mxu0
  %v623 = vpop.f32.mrf.mxu0
  %v624 = vpop.f32.mrf.mxu0
  %625 = vdwg.mxu0
  %626 = vmatprep.subr.bf16.mxu0 0
  %627 = vmatpush1.bf16.msra.mxu0 %v467
  %628 = vmatprep.subr.bf16.mxu0 0
  %629 = vmatpush1.bf16.msra.mxu0 %v466
  %630 = vmatprep.subr.bf16.mxu0 0
  %631 = vmatpush1.bf16.msra.mxu0 %v465
  %632 = vmatprep.subr.bf16.mxu0 0
  %633 = vmatpush1.bf16.msra.mxu0 %v464
  %634 = vmatprep.subr.bf16.mxu0 0
  %635 = vmatpush1.bf16.msra.mxu0 %v463
  %636 = vmatprep.subr.bf16.mxu0 0
  %637 = vmatpush1.bf16.msra.mxu0 %v462
  %638 = vmatprep.subr.bf16.mxu0 0
  %639 = vmatpush1.bf16.msra.mxu0 %v461
  %640 = vmatprep.subr.bf16.mxu0 0
  %641 = vmatpush1.bf16.msra.mxu0 %v460
  %642 = vmatprep.subr.bf16.mxu0 0
  %643 = vmatpush2.bf16.msra.mxu0 %v475
  %644 = vmatprep.subr.bf16.mxu0 0
  %645 = vmatpush2.bf16.msra.mxu0 %v474
  %646 = vmatprep.subr.bf16.mxu0 0
  %647 = vmatpush2.bf16.msra.mxu0 %v473
  %648 = vmatprep.subr.bf16.mxu0 0
  %649 = vmatpush2.bf16.msra.mxu0 %v472
  %650 = vmatprep.subr.bf16.mxu0 0
  %651 = vmatpush2.bf16.msra.mxu0 %v471
  %652 = vmatprep.subr.bf16.mxu0 0
  %653 = vmatpush2.bf16.msra.mxu0 %v470
  %654 = vmatprep.subr.bf16.mxu0 0
  %655 = vmatpush2.bf16.msra.mxu0 %v469
  %656 = vmatprep.subr.bf16.mxu0 0
  %657 = vmatpush2.bf16.msra.mxu0 %v468
  %658 = vmatprep.mubr.bf16.mxu0 %v240
  %659 = vmatmul.mubr.bf16.gmra.mxu0 %v239
  %v660 = vpop.f32.mrf.mxu0
  %v661 = vadd.f32 %v573, %v660
  %v662 = vpop.f32.mrf.mxu0
  %v663 = vpop.f32.mrf.mxu0
  %v664 = vadd.f32 %v576, %v663
  %v665 = vpop.f32.mrf.mxu0
  %666 = vmatprep.mubr.bf16.mxu0 %v245
  %667 = vmatmul.mubr.bf16.gmra.mxu0 %v244
  %v668 = vpop.f32.mrf.mxu0
  %v669 = vadd.f32 %v581, %v668
  %v670 = vpop.f32.mrf.mxu0
  %v671 = vpop.f32.mrf.mxu0
  %v672 = vadd.f32 %v584, %v671
  %v673 = vpop.f32.mrf.mxu0
  %674 = vmatprep.mubr.bf16.mxu0 %v250
  %675 = vmatmul.mubr.bf16.gmra.mxu0 %v249
  %v676 = vpop.f32.mrf.mxu0
  %v677 = vadd.f32 %v589, %v676
  %v678 = vpop.f32.mrf.mxu0
  %v679 = vpop.f32.mrf.mxu0
  %v680 = vadd.f32 %v592, %v679
  %v681 = vpop.f32.mrf.mxu0
  %682 = vmatprep.mubr.bf16.mxu0 %v255
  %683 = vmatmul.mubr.bf16.gmra.mxu0 %v254
  %v684 = vpop.f32.mrf.mxu0
  %v685 = vadd.f32 %v597, %v684
  %v686 = vpop.f32.mrf.mxu0
  %v687 = vpop.f32.mrf.mxu0
  %v688 = vadd.f32 %v600, %v687
  %v689 = vpop.f32.mrf.mxu0
  %690 = vmatprep.mubr.bf16.mxu0 %v260
  %691 = vmatmul.mubr.bf16.gmra.mxu0 %v259
  %v692 = vpop.f32.mrf.mxu0
  %v693 = vadd.f32 %v605, %v692
  %v694 = vpop.f32.mrf.mxu0
  %v695 = vpop.f32.mrf.mxu0
  %v696 = vadd.f32 %v608, %v695
  %v697 = vpop.f32.mrf.mxu0
  %698 = vmatprep.mubr.bf16.mxu0 %v265
  %699 = vmatmul.mubr.bf16.gmra.mxu0 %v264
  %v700 = vpop.f32.mrf.mxu0
  %v701 = vadd.f32 %v613, %v700
  %v702 = vpop.f32.mrf.mxu0
  %v703 = vpop.f32.mrf.mxu0
  %v704 = vadd.f32 %v616, %v703
  %v705 = vpop.f32.mrf.mxu0
  %706 = vmatprep.mubr.bf16.mxu0 %v270
  %707 = vmatmul.mubr.bf16.gmra.mxu0 %v269
  %v708 = vpop.f32.mrf.mxu0
  %v709 = vadd.f32 %v621, %v708
  %v710 = vpop.f32.mrf.mxu0
  %v711 = vpop.f32.mrf.mxu0
  %v712 = vpop.f32.mrf.mxu0
  %713 = vdwg.mxu0
  %714 = vmatprep.subr.bf16.mxu0 0
  %715 = vmatpush1.bf16.msra.mxu0 0
  %716 = vmatprep.subr.bf16.mxu0 0
  %717 = vmatpush1.bf16.msra.mxu0 0
  %718 = vmatprep.subr.bf16.mxu0 0
  %719 = vmatpush1.bf16.msra.mxu0 0
  %720 = vmatprep.subr.bf16.mxu0 0
  %721 = vmatpush1.bf16.msra.mxu0 0
  %722 = vmatprep.subr.bf16.mxu0 0
  %723 = vmatpush1.bf16.msra.mxu0 %v479
  %724 = vmatprep.subr.bf16.mxu0 0
  %725 = vmatpush1.bf16.msra.mxu0 %v478
  %726 = vmatprep.subr.bf16.mxu0 0
  %727 = vmatpush1.bf16.msra.mxu0 %v477
  %728 = vmatprep.subr.bf16.mxu0 0
  %729 = vmatpush1.bf16.msra.mxu0 %v476
  %730 = vmatprep.subr.bf16.mxu0 0
  %731 = vmatpush2.bf16.msra.mxu0 0
  %732 = vmatprep.subr.bf16.mxu0 0
  %733 = vmatpush2.bf16.msra.mxu0 0
  %734 = vmatprep.subr.bf16.mxu0 0
  %735 = vmatpush2.bf16.msra.mxu0 0
  %736 = vmatprep.subr.bf16.mxu0 0
  %737 = vmatpush2.bf16.msra.mxu0 0
  %738 = vmatprep.subr.bf16.mxu0 0
  %739 = vmatpush2.bf16.msra.mxu0 0
  %740 = vmatprep.subr.bf16.mxu0 0
  %741 = vmatpush2.bf16.msra.mxu0 0
  %742 = vmatprep.subr.bf16.mxu0 0
  %743 = vmatpush2.bf16.msra.mxu0 0
  %744 = vmatprep.subr.bf16.mxu0 0
  %745 = vmatpush2.bf16.msra.mxu0 0
  %746 = vmatprep.mubr.bf16.mxu0 0
  %747 = vmatmul.mubr.bf16.gmra.mxu0 %v518
  %v748 = vpop.f32.mrf.mxu0
  %v749 = vadd.f32 %v661, %v748
  %v750 = vpop.f32.mrf.mxu0
  %v751 = vpop.f32.mrf.mxu0
  %v752 = vadd.f32 %v664, %v751
  %v753 = vpop.f32.mrf.mxu0
  %754 = vmatprep.mubr.bf16.mxu0 0
  %755 = vmatmul.mubr.bf16.gmra.mxu0 %v521
  %v756 = vpop.f32.mrf.mxu0
  %v757 = vadd.f32 %v669, %v756
  %v758 = vpop.f32.mrf.mxu0
  %v759 = vpop.f32.mrf.mxu0
  %v760 = vadd.f32 %v672, %v759
  %v761 = vpop.f32.mrf.mxu0
  %762 = vmatprep.mubr.bf16.mxu0 0
  %763 = vmatmul.mubr.bf16.gmra.mxu0 %v524
  %v764 = vpop.f32.mrf.mxu0
  %v765 = vadd.f32 %v677, %v764
  %v766 = vpop.f32.mrf.mxu0
  %v767 = vpop.f32.mrf.mxu0
  %v768 = vadd.f32 %v680, %v767
  %v769 = vpop.f32.mrf.mxu0
  %770 = vmatprep.mubr.bf16.mxu0 0
  %771 = vmatmul.mubr.bf16.gmra.mxu0 %v527
  %v772 = vpop.f32.mrf.mxu0
  %v773 = vadd.f32 %v685, %v772
  %v774 = vpop.f32.mrf.mxu0
  %v775 = vpop.f32.mrf.mxu0
  %v776 = vadd.f32 %v688, %v775
  %v777 = vpop.f32.mrf.mxu0
  %778 = vmatprep.mubr.bf16.mxu0 0
  %779 = vmatmul.mubr.bf16.gmra.mxu0 %v530
  %v780 = vpop.f32.mrf.mxu0
  %v781 = vadd.f32 %v693, %v780
  %v782 = vpop.f32.mrf.mxu0
  %v783 = vpop.f32.mrf.mxu0
  %v784 = vadd.f32 %v696, %v783
  %v785 = vpop.f32.mrf.mxu0
  %786 = vmatprep.mubr.bf16.mxu0 0
  %787 = vmatmul.mubr.bf16.gmra.mxu0 %v533
  %v788 = vpop.f32.mrf.mxu0
  %v789 = vadd.f32 %v701, %v788
  %v790 = vpop.f32.mrf.mxu0
  %v791 = vpop.f32.mrf.mxu0
  %v792 = vadd.f32 %v704, %v791
  %v793 = vpop.f32.mrf.mxu0
  %794 = vmatprep.mubr.bf16.mxu0 0
  %795 = vmatmul.mubr.bf16.gmra.mxu0 %v536
  %v796 = vpop.f32.mrf.mxu0
  %v797 = vadd.f32 %v709, %v796
  %v798 = vpop.f32.mrf.mxu0
  %v799 = vpop.f32.mrf.mxu0
  %v800 = vpop.f32.mrf.mxu0
  %801 = vdwg.mxu0
  %v802 = vmax.f32 %v749, 0.0
  %v803 = vmax.f32 %v752, 0.0
  %v804 = vmax.f32 %v757, 0.0
  %v805 = vmax.f32 %v760, 0.0
  %v806 = vmax.f32 %v765, 0.0
  %v807 = vmax.f32 %v768, 0.0
  %v808 = vmax.f32 %v773, 0.0
  %v809 = vmax.f32 %v776, 0.0
  %v810 = vmax.f32 %v781, 0.0
  %v811 = vmax.f32 %v784, 0.0
  %v812 = vmax.f32 %v789, 0.0
  %v813 = vmax.f32 %v792, 0.0
  %v814 = vmax.f32 %v797, 0.0
  %815 = vst.msk [vmem:[%s3] sm:$0xff] %vm516, %v802
  %816 = vst.msk [vmem:[%s3 + $0x8] sm:$0xff] %vm516, %v803
  %817 = vst.msk [vmem:[%s3 + $0x10] sm:$0xff] %vm516, %v804
  %818 = vst.msk [vmem:[%s3 + $0x18] sm:$0xff] %vm516, %v805
  %819 = vst.msk [vmem:[%s3 + $0x20] sm:$0xff] %vm516, %v806
  %820 = vst.msk [vmem:[%s3 + $0x28] sm:$0xff] %vm516, %v807
  %821 = vst.msk [vmem:[%s3 + $0x30] sm:$0xff] %vm516, %v808
  %822 = vst.msk [vmem:[%s3 + $0x38] sm:$0xff] %vm516, %v809
  %823 = vst.msk [vmem:[%s3 + $0x40] sm:$0xff] %vm516, %v810
  %824 = vst.msk [vmem:[%s3 + $0x48] sm:$0xff] %vm516, %v811
  %825 = vst.msk [vmem:[%s3 + $0x50] sm:$0xff] %vm516, %v812
  %826 = vst.msk [vmem:[%s3 + $0x58] sm:$0xff] %vm516, %v813
  %vm827 = vcmask 517120
  %828 = vst.msk [vmem:[%s3 + $0x60] sm:$0x3] %vm827, %v814
  // Predicated region
  $region14: #{nature_net_forward.6} parent=0 // pred_check
    _
  $region15: #{nature_net_forward.6} parent=0 // pred_check_branch
    %830 = sbr.rel (0) target = $region17
  $region16: #{nature_net_forward.6} parent=0 // pred_region
    _
  $region17: #{nature_net_forward.6} parent=0 // pred_fallthru
    _
  // Predicated region
  $region18: #{nature_net_forward.6} parent=0 // pred_check
    _
  $region19: #{nature_net_forward.6} parent=0 // pred_check_branch
    %832 = sbr.rel (0) target = $region21
  $region20: #{nature_net_forward.6} parent=0 // pred_region
    _
  $region21: #{nature_net_forward.6} parent=0 // pred_fallthru
    _

// kernel: nature_net_forward.7
$region0: #{nature_net_forward.7}
  #allocation0 [shape = 'u32[]', space=smem, size = 0x4, offset = 0x4, fixed_abs, tag = 'smem constant byte address 0x4 - core index']
  #allocation1 [shape = 'u32[144,128]{1,0:T(1,128)}', space=vmem, size = 0x12000, scoped, tag = 'internal scratch']
  %s0 = inlined_call_operand.vmem [shape: bf16[2,3136], index: 0, kind: input, shape index: {}]
  %s1 = inlined_call_operand.vmem [shape: bf16[3136,512], index: 1, kind: input, shape index: {}]
  %s2 = inlined_call_operand.vmem [shape: f32[1,512], index: 2, kind: input, shape index: {}]
  %s3 = inlined_call_operand.vmem [shape: bf16[512,128], index: 3, kind: input, shape index: {}]
  %s4 = inlined_call_operand.vmem [shape: f32[1,128], index: 4, kind: input, shape index: {}]
  %s5 = inlined_call_operand.hbm [shape: f32[2,512], index: 5, kind: output, shape index: {0}]
  %s6 = inlined_call_operand.hbm [shape: f32[2,128], index: 6, kind: output, shape index: {1}]
  %7 = xla_tuple %s5, %s6
  %s8 = sld [smem:[#allocation0]]
  $region38: #{nature_net_forward.7} parent=0
    _
  %s10 = ssub.s32 1, %s8
  %s11 = scalar_select 0, %s10, %s8
  $region1: #{nature_net_forward.7} parent=0
    #allocation2 [shape = 'u8[4096]{0}', space=vmem, size = 0x1000, scoped, tag = 'output window, operand 0, single buffered']
    #allocation3 [shape = 's32[1]{0}', space=sflag, size = 0x4, scoped, tag = 'scoped memory for nature_net_forward.7']
    #allocation4 [shape = 'u8[1024]{0}', space=vmem, size = 0x400, scoped, tag = 'output window, operand 1, single buffered']
    #allocation5 [shape = 's32[1]{0}', space=sflag, size = 0x4, scoped, tag = 'scoped memory for nature_net_forward.7']
    %12 = vsyncpa [#allocation3], 0
    %13 = vsyncpa [#allocation5], 0
    // Predicated region
    $region2: #{nature_net_forward.7} parent=1 // pred_check
      _
    $region3: #{nature_net_forward.7} parent=1 // pred_check_branch
      %15 = sbr.rel (0) target = $region5
    $region4: #{nature_net_forward.7} parent=1 // pred_region
      _
    $region5: #{nature_net_forward.7} parent=1 // pred_fallthru
      _
    // Predicated region
    $region6: #{nature_net_forward.7} parent=1 // pred_check
      _
    $region7: #{nature_net_forward.7} parent=1 // pred_check_branch
      %17 = sbr.rel (0) target = $region9
    $region8: #{nature_net_forward.7} parent=1 // pred_region
      _
    $region9: #{nature_net_forward.7} parent=1 // pred_fallthru
      _
    // Predicated region
    $region10: #{nature_net_forward.7} parent=1 // pred_check
      _
    $region11: #{nature_net_forward.7} parent=1 // pred_check_branch
      %19 = sbr.rel (0) target = $region13
    $region12: #{nature_net_forward.7} parent=1 // pred_region
      _
    $region13: #{nature_net_forward.7} parent=1 // pred_fallthru
      _
    // Predicated region
    $region14: #{nature_net_forward.7} parent=1 // pred_check
      _
    $region15: #{nature_net_forward.7} parent=1 // pred_check_branch
      %21 = sbr.rel (0) target = $region17
    $region16: #{nature_net_forward.7} parent=1 // pred_region
      _
    $region17: #{nature_net_forward.7} parent=1 // pred_fallthru
      _
    // Predicated region
    $region18: #{nature_net_forward.7} parent=1 // pred_check
      _
    $region19: #{nature_net_forward.7} parent=1 // pred_check_branch
      %23 = sbr.rel (0) target = $region21
    $region20: #{nature_net_forward.7} parent=1 // pred_region
      _
    $region21: #{nature_net_forward.7} parent=1 // pred_fallthru
      _
    %v25 = vld [vmem:[%s0] sm:$0xff]
    %v26 = vld [vmem:[%s0 + $0x8] sm:$0xff]
    %v27 = vld [vmem:[%s0 + $0x10] sm:$0xff]
    %v28 = vld [vmem:[%s0 + $0x18] sm:$0x1]
    %v29 = vld [vmem:[%s1] sm:$0xff]
    %v30 = vld [vmem:[%s1 + $0x8] sm:$0xff]
    %v31 = vld [vmem:[%s1 + $0x10] sm:$0xff]
    %v32 = vld [vmem:[%s1 + $0x18] sm:$0xff]
    %v33 = vld [vmem:[%s1 + $0x20] sm:$0xff]
    %v34 = vld [vmem:[%s1 + $0x28] sm:$0xff]
    %v35 = vld [vmem:[%s1 + $0x30] sm:$0xff]
    %v36 = vld [vmem:[%s1 + $0x38] sm:$0xff]
    %v37 = vld [vmem:[%s1 + $0x40] sm:$0xff]
    %v38 = vld [vmem:[%s1 + $0x48] sm:$0xff]
    %v39 = vld [vmem:[%s1 + $0x50] sm:$0xff]
    %v40 = vld [vmem:[%s1 + $0x58] sm:$0xff]
    %v41 = vld [vmem:[%s1 + $0x60] sm:$0xff]
    %v42 = vld [vmem:[%s1 + $0x68] sm:$0xff]
    %v43 = vld [vmem:[%s1 + $0x70] sm:$0xff]
    %v44 = vld [vmem:[%s1 + $0x78] sm:$0xff]
    %v45 = vld [vmem:[%s1 + $0x80] sm:$0xff]
    %v46 = vld [vmem:[%s1 + $0x88] sm:$0xff]
    %v47 = vld [vmem:[%s1 + $0x90] sm:$0xff]
    %v48 = vld [vmem:[%s1 + $0x98] sm:$0xff]
    %v49 = vld [vmem:[%s1 + $0xa0] sm:$0xff]
    %v50 = vld [vmem:[%s1 + $0xa8] sm:$0xff]
    %v51 = vld [vmem:[%s1 + $0xb0] sm:$0xff]
    %v52 = vld [vmem:[%s1 + $0xb8] sm:$0xff]
    %v53 = vld [vmem:[%s1 + $0xc0] sm:$0xff]
    %v54 = vld [vmem:[%s1 + $0xc8] sm:$0xff]
    %v55 = vld [vmem:[%s1 + $0xd0] sm:$0xff]
    %v56 = vld [vmem:[%s1 + $0xd8] sm:$0xff]
    %v57 = vld [vmem:[%s1 + $0xe0] sm:$0xff]
    %v58 = vld [vmem:[%s1 + $0xe8] sm:$0xff]
    %v59 = vld [vmem:[%s1 + $0xf0] sm:$0xff]
    %v60 = vld [vmem:[%s1 + $0xf8] sm:$0xff]
    %v61 = vld [vmem:[%s1 + $0x100] sm:$0xff]
    %v62 = vld [vmem:[%s1 + $0x108] sm:$0xff]
    %v63 = vld [vmem:[%s1 + $0x110] sm:$0xff]
    %v64 = vld [vmem:[%s1 + $0x118] sm:$0xff]
    %v65 = vld [vmem:[%s1 + $0x120] sm:$0xff]
    %v66 = vld [vmem:[%s1 + $0x128] sm:$0xff]
    %v67 = vld [vmem:[%s1 + $0x130] sm:$0xff]
    %v68 = vld [vmem:[%s1 + $0x138] sm:$0xff]
    %v69 = vld [vmem:[%s1 + $0x140] sm:$0xff]
    %v70 = vld [vmem:[%s1 + $0x148] sm:$0xff]
    %v71 = vld [vmem:[%s1 + $0x150] sm:$0xff]
    %v72 = vld [vmem:[%s1 + $0x158] sm:$0xff]
    %v73 = vld [vmem:[%s1 + $0x160] sm:$0xff]
    %v74 = vld [vmem:[%s1 + $0x168] sm:$0xff]
    %v75 = vld [vmem:[%s1 + $0x170] sm:$0xff]
    %v76 = vld [vmem:[%s1 + $0x178] sm:$0xff]
    %v77 = vld [vmem:[%s1 + $0x180] sm:$0xff]
    %v78 = vld [vmem:[%s1 + $0x188] sm:$0xff]
    %v79 = vld [vmem:[%s1 + $0x190] sm:$0xff]
    %v80 = vld [vmem:[%s1 + $0x198] sm:$0xff]
    %v81 = vld [vmem:[%s1 + $0x1a0] sm:$0xff]
    %v82 = vld [vmem:[%s1 + $0x1a8] sm:$0xff]
    %v83 = vld [vmem:[%s1 + $0x1b0] sm:$0xff]
    %v84 = vld [vmem:[%s1 + $0x1b8] sm:$0xff]
    %v85 = vld [vmem:[%s1 + $0x1c0] sm:$0xff]
    %v86 = vld [vmem:[%s1 + $0x1c8] sm:$0xff]
    %v87 = vld [vmem:[%s1 + $0x1d0] sm:$0xff]
    %v88 = vld [vmem:[%s1 + $0x1d8] sm:$0xff]
    %v89 = vld [vmem:[%s1 + $0x1e0] sm:$0xff]
    %v90 = vld [vmem:[%s1 + $0x1e8] sm:$0xff]
    %v91 = vld [vmem:[%s1 + $0x1f0] sm:$0xff]
    %v92 = vld [vmem:[%s1 + $0x1f8] sm:$0xff]
    %v93 = vld [vmem:[%s1 + $0x200] sm:$0xff]
    %v94 = vld [vmem:[%s1 + $0x208] sm:$0xff]
    %v95 = vld [vmem:[%s1 + $0x210] sm:$0xff]
    %v96 = vld [vmem:[%s1 + $0x218] sm:$0xff]
    %v97 = vld [vmem:[%s1 + $0x220] sm:$0xff]
    %v98 = vld [vmem:[%s1 + $0x228] sm:$0xff]
    %v99 = vld [vmem:[%s1 + $0x230] sm:$0xff]
    %v100 = vld [vmem:[%s1 + $0x238] sm:$0xff]
    %v101 = vld [vmem:[%s1 + $0x240] sm:$0xff]
    %v102 = vld [vmem:[%s1 + $0x248] sm:$0xff]
    %v103 = vld [vmem:[%s1 + $0x250] sm:$0xff]
    %v104 = vld [vmem:[%s1 + $0x258] sm:$0xff]
    %v105 = vld [vmem:[%s1 + $0x260] sm:$0xff]
    %v106 = vld [vmem:[%s1 + $0x268] sm:$0xff]
    %v107 = vld [vmem:[%s1 + $0x270] sm:$0xff]
    %v108 = vld [vmem:[%s1 + $0x278] sm:$0xff]
    %v109 = vld [vmem:[%s1 + $0x280] sm:$0xff]
    %v110 = vld [vmem:[%s1 + $0x288] sm:$0xff]
    %v111 = vld [vmem:[%s1 + $0x290] sm:$0xff]
    %v112 = vld [vmem:[%s1 + $0x298] sm:$0xff]
    %v113 = vld [vmem:[%s1 + $0x2a0] sm:$0xff]
    %v114 = vld [vmem:[%s1 + $0x2a8] sm:$0xff]
    %v115 = vld [vmem:[%s1 + $0x2b0] sm:$0xff]
    %v116 = vld [vmem:[%s1 + $0x2b8] sm:$0xff]
    %v117 = vld [vmem:[%s1 + $0x2c0] sm:$0xff]
    %v118 = vld [vmem:[%s1 + $0x2c8] sm:$0xff]
    %v119 = vld [vmem:[%s1 + $0x2d0] sm:$0xff]
    %v120 = vld [vmem:[%s1 + $0x2d8] sm:$0xff]
    %v121 = vld [vmem:[%s1 + $0x2e0] sm:$0xff]
    %v122 = vld [vmem:[%s1 + $0x2e8] sm:$0xff]
    %v123 = vld [vmem:[%s1 + $0x2f0] sm:$0xff]
    %v124 = vld [vmem:[%s1 + $0x2f8] sm:$0xff]
    %v125 = vld [vmem:[%s1 + $0x300] sm:$0xff]
    %v126 = vld [vmem:[%s1 + $0x308] sm:$0xff]
    %v127 = vld [vmem:[%s1 + $0x310] sm:$0xff]
    %v128 = vld [vmem:[%s1 + $0x318] sm:$0xff]
    %v129 = vld [vmem:[%s1 + $0x320] sm:$0xff]
    %v130 = vld [vmem:[%s1 + $0x328] sm:$0xff]
    %v131 = vld [vmem:[%s1 + $0x330] sm:$0xff]
    %v132 = vld [vmem:[%s1 + $0x338] sm:$0xff]
    %v133 = vld [vmem:[%s1 + $0x340] sm:$0xff]
    %v134 = vld [vmem:[%s1 + $0x348] sm:$0xff]
    %v135 = vld [vmem:[%s1 + $0x350] sm:$0xff]
    %v136 = vld [vmem:[%s1 + $0x358] sm:$0xff]
    %v137 = vld [vmem:[%s1 + $0x360] sm:$0xff]
    %v138 = vld [vmem:[%s1 + $0x368] sm:$0xff]
    %v139 = vld [vmem:[%s1 + $0x370] sm:$0xff]
    %v140 = vld [vmem:[%s1 + $0x378] sm:$0xff]
    %v141 = vld [vmem:[%s1 + $0x380] sm:$0xff]
    %v142 = vld [vmem:[%s1 + $0x388] sm:$0xff]
    %v143 = vld [vmem:[%s1 + $0x390] sm:$0xff]
    %v144 = vld [vmem:[%s1 + $0x398] sm:$0xff]
    %v145 = vld [vmem:[%s1 + $0x3a0] sm:$0xff]
    %v146 = vld [vmem:[%s1 + $0x3a8] sm:$0xff]
    %v147 = vld [vmem:[%s1 + $0x3b0] sm:$0xff]
    %v148 = vld [vmem:[%s1 + $0x3b8] sm:$0xff]
    %v149 = vld [vmem:[%s1 + $0x3c0] sm:$0xff]
    %v150 = vld [vmem:[%s1 + $0x3c8] sm:$0xff]
    %v151 = vld [vmem:[%s1 + $0x3d0] sm:$0xff]
    %v152 = vld [vmem:[%s1 + $0x3d8] sm:$0xff]
    %v153 = vld [vmem:[%s1 + $0x3e0] sm:$0xff]
    %v154 = vld [vmem:[%s1 + $0x3e8] sm:$0xff]
    %v155 = vld [vmem:[%s1 + $0x3f0] sm:$0xff]
    %v156 = vld [vmem:[%s1 + $0x3f8] sm:$0xff]
    %v157 = vld [vmem:[%s1 + $0x400] sm:$0xff]
    %v158 = vld [vmem:[%s1 + $0x408] sm:$0xff]
    %v159 = vld [vmem:[%s1 + $0x410] sm:$0xff]
    %v160 = vld [vmem:[%s1 + $0x418] sm:$0xff]
    %v161 = vld [vmem:[%s1 + $0x420] sm:$0xff]
    %v162 = vld [vmem:[%s1 + $0x428] sm:$0xff]
    %v163 = vld [vmem:[%s1 + $0x430] sm:$0xff]
    %v164 = vld [vmem:[%s1 + $0x438] sm:$0xff]
    %v165 = vld [vmem:[%s1 + $0x440] sm:$0xff]
    %v166 = vld [vmem:[%s1 + $0x448] sm:$0xff]
    %v167 = vld [vmem:[%s1 + $0x450] sm:$0xff]
    %v168 = vld [vmem:[%s1 + $0x458] sm:$0xff]
    %v169 = vld [vmem:[%s1 + $0x460] sm:$0xff]
    %v170 = vld [vmem:[%s1 + $0x468] sm:$0xff]
    %v171 = vld [vmem:[%s1 + $0x470] sm:$0xff]
    %v172 = vld [vmem:[%s1 + $0x478] sm:$0xff]
    %v173 = vld [vmem:[%s1 + $0x480] sm:$0xff]
    %v174 = vld [vmem:[%s1 + $0x488] sm:$0xff]
    %v175 = vld [vmem:[%s1 + $0x490] sm:$0xff]
    %v176 = vld [vmem:[%s1 + $0x498] sm:$0xff]
    %v177 = vld [vmem:[%s1 + $0x4a0] sm:$0xff]
    %v178 = vld [vmem:[%s1 + $0x4a8] sm:$0xff]
    %v179 = vld [vmem:[%s1 + $0x4b0] sm:$0xff]
    %v180 = vld [vmem:[%s1 + $0x4b8] sm:$0xff]
    %v181 = vld [vmem:[%s1 + $0x4c0] sm:$0xff]
    %v182 = vld [vmem:[%s1 + $0x4c8] sm:$0xff]
    %v183 = vld [vmem:[%s1 + $0x4d0] sm:$0xff]
    %v184 = vld [vmem:[%s1 + $0x4d8] sm:$0xff]
    %v185 = vld [vmem:[%s1 + $0x4e0] sm:$0xff]
    %v186 = vld [vmem:[%s1 + $0x4e8] sm:$0xff]
    %v187 = vld [vmem:[%s1 + $0x4f0] sm:$0xff]
    %v188 = vld [vmem:[%s1 + $0x4f8] sm:$0xff]
    %v189 = vld [vmem:[%s1 + $0x500] sm:$0xff]
    %v190 = vld [vmem:[%s1 + $0x508] sm:$0xff]
    %v191 = vld [vmem:[%s1 + $0x510] sm:$0xff]
    %v192 = vld [vmem:[%s1 + $0x518] sm:$0xff]
    %v193 = vld [vmem:[%s1 + $0x520] sm:$0xff]
    %v194 = vld [vmem:[%s1 + $0x528] sm:$0xff]
    %v195 = vld [vmem:[%s1 + $0x530] sm:$0xff]
    %v196 = vld [vmem:[%s1 + $0x538] sm:$0xff]
    %v197 = vld [vmem:[%s1 + $0x540] sm:$0xff]
    %v198 = vld [vmem:[%s1 + $0x548] sm:$0xff]
    %v199 = vld [vmem:[%s1 + $0x550] sm:$0xff]
    %v200 = vld [vmem:[%s1 + $0x558] sm:$0xff]
    %v201 = vld [vmem:[%s1 + $0x560] sm:$0xff]
    %v202 = vld [vmem:[%s1 + $0x568] sm:$0xff]
    %v203 = vld [vmem:[%s1 + $0x570] sm:$0xff]
    %v204 = vld [vmem:[%s1 + $0x578] sm:$0xff]
    %v205 = vld [vmem:[%s1 + $0x580] sm:$0xff]
    %v206 = vld [vmem:[%s1 + $0x588] sm:$0xff]
    %v207 = vld [vmem:[%s1 + $0x590] sm:$0xff]
    %v208 = vld [vmem:[%s1 + $0x598] sm:$0xff]
    %v209 = vld [vmem:[%s1 + $0x5a0] sm:$0xff]
    %v210 = vld [vmem:[%s1 + $0x5a8] sm:$0xff]
    %v211 = vld [vmem:[%s1 + $0x5b0] sm:$0xff]
    %v212 = vld [vmem:[%s1 + $0x5b8] sm:$0xff]
    %v213 = vld [vmem:[%s1 + $0x5c0] sm:$0xff]
    %v214 = vld [vmem:[%s1 + $0x5c8] sm:$0xff]
    %v215 = vld [vmem:[%s1 + $0x5d0] sm:$0xff]
    %v216 = vld [vmem:[%s1 + $0x5d8] sm:$0xff]
    %v217 = vld [vmem:[%s1 + $0x5e0] sm:$0xff]
    %v218 = vld [vmem:[%s1 + $0x5e8] sm:$0xff]
    %v219 = vld [vmem:[%s1 + $0x5f0] sm:$0xff]
    %v220 = vld [vmem:[%s1 + $0x5f8] sm:$0xff]
    %v221 = vld [vmem:[%s1 + $0x600] sm:$0xff]
    %v222 = vld [vmem:[%s1 + $0x608] sm:$0xff]
    %v223 = vld [vmem:[%s1 + $0x610] sm:$0xff]
    %v224 = vld [vmem:[%s1 + $0x618] sm:$0xff]
    %v225 = vld [vmem:[%s1 + $0x620] sm:$0xff]
    %v226 = vld [vmem:[%s1 + $0x628] sm:$0xff]
    %v227 = vld [vmem:[%s1 + $0x630] sm:$0xff]
    %v228 = vld [vmem:[%s1 + $0x638] sm:$0xff]
    %v229 = vld [vmem:[%s1 + $0x640] sm:$0xff]
    %v230 = vld [vmem:[%s1 + $0x648] sm:$0xff]
    %v231 = vld [vmem:[%s1 + $0x650] sm:$0xff]
    %v232 = vld [vmem:[%s1 + $0x658] sm:$0xff]
    %v233 = vld [vmem:[%s1 + $0x660] sm:$0xff]
    %v234 = vld [vmem:[%s1 + $0x668] sm:$0xff]
    %v235 = vld [vmem:[%s1 + $0x670] sm:$0xff]
    %v236 = vld [vmem:[%s1 + $0x678] sm:$0xff]
    %v237 = vld [vmem:[%s1 + $0x680] sm:$0xff]
    %v238 = vld [vmem:[%s1 + $0x688] sm:$0xff]
    %v239 = vld [vmem:[%s1 + $0x690] sm:$0xff]
    %v240 = vld [vmem:[%s1 + $0x698] sm:$0xff]
    %v241 = vld [vmem:[%s1 + $0x6a0] sm:$0xff]
    %v242 = vld [vmem:[%s1 + $0x6a8] sm:$0xff]
    %v243 = vld [vmem:[%s1 + $0x6b0] sm:$0xff]
    %v244 = vld [vmem:[%s1 + $0x6b8] sm:$0xff]
    %v245 = vld [vmem:[%s1 + $0x6c0] sm:$0xff]
    %v246 = vld [vmem:[%s1 + $0x6c8] sm:$0xff]
    %v247 = vld [vmem:[%s1 + $0x6d0] sm:$0xff]
    %v248 = vld [vmem:[%s1 + $0x6d8] sm:$0xff]
    %v249 = vld [vmem:[%s1 + $0x6e0] sm:$0xff]
    %v250 = vld [vmem:[%s1 + $0x6e8] sm:$0xff]
    %v251 = vld [vmem:[%s1 + $0x6f0] sm:$0xff]
    %v252 = vld [vmem:[%s1 + $0x6f8] sm:$0xff]
    %v253 = vld [vmem:[%s1 + $0x700] sm:$0xff]
    %v254 = vld [vmem:[%s1 + $0x708] sm:$0xff]
    %v255 = vld [vmem:[%s1 + $0x710] sm:$0xff]
    %v256 = vld [vmem:[%s1 + $0x718] sm:$0xff]
    %v257 = vld [vmem:[%s1 + $0x720] sm:$0xff]
    %v258 = vld [vmem:[%s1 + $0x728] sm:$0xff]
    %v259 = vld [vmem:[%s1 + $0x730] sm:$0xff]
    %v260 = vld [vmem:[%s1 + $0x738] sm:$0xff]
    %v261 = vld [vmem:[%s1 + $0x740] sm:$0xff]
    %v262 = vld [vmem:[%s1 + $0x748] sm:$0xff]
    %v263 = vld [vmem:[%s1 + $0x750] sm:$0xff]
    %v264 = vld [vmem:[%s1 + $0x758] sm:$0xff]
    %v265 = vld [vmem:[%s1 + $0x760] sm:$0xff]
    %v266 = vld [vmem:[%s1 + $0x768] sm:$0xff]
    %v267 = vld [vmem:[%s1 + $0x770] sm:$0xff]
    %v268 = vld [vmem:[%s1 + $0x778] sm:$0xff]
    %v269 = vld [vmem:[%s1 + $0x780] sm:$0xff]
    %v270 = vld [vmem:[%s1 + $0x788] sm:$0xff]
    %v271 = vld [vmem:[%s1 + $0x790] sm:$0xff]
    %v272 = vld [vmem:[%s1 + $0x798] sm:$0xff]
    %v273 = vld [vmem:[%s1 + $0x7a0] sm:$0xff]
    %v274 = vld [vmem:[%s1 + $0x7a8] sm:$0xff]
    %v275 = vld [vmem:[%s1 + $0x7b0] sm:$0xff]
    %v276 = vld [vmem:[%s1 + $0x7b8] sm:$0xff]
    %v277 = vld [vmem:[%s1 + $0x7c0] sm:$0xff]
    %v278 = vld [vmem:[%s1 + $0x7c8] sm:$0xff]
    %v279 = vld [vmem:[%s1 + $0x7d0] sm:$0xff]
    %v280 = vld [vmem:[%s1 + $0x7d8] sm:$0xff]
    %v281 = vld [vmem:[%s1 + $0x7e0] sm:$0xff]
    %v282 = vld [vmem:[%s1 + $0x7e8] sm:$0xff]
    %v283 = vld [vmem:[%s1 + $0x7f0] sm:$0xff]
    %v284 = vld [vmem:[%s1 + $0x7f8] sm:$0xff]
    %v285 = vld [vmem:[%s1 + $0x800] sm:$0xff]
    %v286 = vld [vmem:[%s1 + $0x808] sm:$0xff]
    %v287 = vld [vmem:[%s1 + $0x810] sm:$0xff]
    %v288 = vld [vmem:[%s1 + $0x818] sm:$0xff]
    %v289 = vld [vmem:[%s1 + $0x820] sm:$0xff]
    %v290 = vld [vmem:[%s1 + $0x828] sm:$0xff]
    %v291 = vld [vmem:[%s1 + $0x830] sm:$0xff]
    %v292 = vld [vmem:[%s1 + $0x838] sm:$0xff]
    %v293 = vld [vmem:[%s1 + $0x840] sm:$0xff]
    %v294 = vld [vmem:[%s1 + $0x848] sm:$0xff]
    %v295 = vld [vmem:[%s1 + $0x850] sm:$0xff]
    %v296 = vld [vmem:[%s1 + $0x858] sm:$0xff]
    %v297 = vld [vmem:[%s1 + $0x860] sm:$0xff]
    %v298 = vld [vmem:[%s1 + $0x868] sm:$0xff]
    %v299 = vld [vmem:[%s1 + $0x870] sm:$0xff]
    %v300 = vld [vmem:[%s1 + $0x878] sm:$0xff]
    %v301 = vld [vmem:[%s1 + $0x880] sm:$0xff]
    %v302 = vld [vmem:[%s1 + $0x888] sm:$0xff]
    %v303 = vld [vmem:[%s1 + $0x890] sm:$0xff]
    %v304 = vld [vmem:[%s1 + $0x898] sm:$0xff]
    %v305 = vld [vmem:[%s1 + $0x8a0] sm:$0xff]
    %v306 = vld [vmem:[%s1 + $0x8a8] sm:$0xff]
    %v307 = vld [vmem:[%s1 + $0x8b0] sm:$0xff]
    %v308 = vld [vmem:[%s1 + $0x8b8] sm:$0xff]
    %v309 = vld [vmem:[%s1 + $0x8c0] sm:$0xff]
    %v310 = vld [vmem:[%s1 + $0x8c8] sm:$0xff]
    %v311 = vld [vmem:[%s1 + $0x8d0] sm:$0xff]
    %v312 = vld [vmem:[%s1 + $0x8d8] sm:$0xff]
    %v313 = vld [vmem:[%s1 + $0x8e0] sm:$0xff]
    %v314 = vld [vmem:[%s1 + $0x8e8] sm:$0xff]
    %v315 = vld [vmem:[%s1 + $0x8f0] sm:$0xff]
    %v316 = vld [vmem:[%s1 + $0x8f8] sm:$0xff]
    %v317 = vld [vmem:[%s1 + $0x900] sm:$0xff]
    %v318 = vld [vmem:[%s1 + $0x908] sm:$0xff]
    %v319 = vld [vmem:[%s1 + $0x910] sm:$0xff]
    %v320 = vld [vmem:[%s1 + $0x918] sm:$0xff]
    %v321 = vld [vmem:[%s1 + $0x920] sm:$0xff]
    %v322 = vld [vmem:[%s1 + $0x928] sm:$0xff]
    %v323 = vld [vmem:[%s1 + $0x930] sm:$0xff]
    %v324 = vld [vmem:[%s1 + $0x938] sm:$0xff]
    %v325 = vld [vmem:[%s1 + $0x940] sm:$0xff]
    %v326 = vld [vmem:[%s1 + $0x948] sm:$0xff]
    %v327 = vld [vmem:[%s1 + $0x950] sm:$0xff]
    %v328 = vld [vmem:[%s1 + $0x958] sm:$0xff]
    %v329 = vld [vmem:[%s1 + $0x960] sm:$0xff]
    %v330 = vld [vmem:[%s1 + $0x968] sm:$0xff]
    %v331 = vld [vmem:[%s1 + $0x970] sm:$0xff]
    %v332 = vld [vmem:[%s1 + $0x978] sm:$0xff]
    %v333 = vld [vmem:[%s1 + $0x980] sm:$0xff]
    %v334 = vld [vmem:[%s1 + $0x988] sm:$0xff]
    %v335 = vld [vmem:[%s1 + $0x990] sm:$0xff]
    %v336 = vld [vmem:[%s1 + $0x998] sm:$0xff]
    %v337 = vld [vmem:[%s1 + $0x9a0] sm:$0xff]
    %v338 = vld [vmem:[%s1 + $0x9a8] sm:$0xff]
    %v339 = vld [vmem:[%s1 + $0x9b0] sm:$0xff]
    %v340 = vld [vmem:[%s1 + $0x9b8] sm:$0xff]
    %v341 = vld [vmem:[%s1 + $0x9c0] sm:$0xff]
    %v342 = vld [vmem:[%s1 + $0x9c8] sm:$0xff]
    %v343 = vld [vmem:[%s1 + $0x9d0] sm:$0xff]
    %v344 = vld [vmem:[%s1 + $0x9d8] sm:$0xff]
    %v345 = vld [vmem:[%s1 + $0x9e0] sm:$0xff]
    %v346 = vld [vmem:[%s1 + $0x9e8] sm:$0xff]
    %v347 = vld [vmem:[%s1 + $0x9f0] sm:$0xff]
    %v348 = vld [vmem:[%s1 + $0x9f8] sm:$0xff]
    %v349 = vld [vmem:[%s1 + $0xa00] sm:$0xff]
    %v350 = vld [vmem:[%s1 + $0xa08] sm:$0xff]
    %v351 = vld [vmem:[%s1 + $0xa10] sm:$0xff]
    %v352 = vld [vmem:[%s1 + $0xa18] sm:$0xff]
    %v353 = vld [vmem:[%s1 + $0xa20] sm:$0xff]
    %v354 = vld [vmem:[%s1 + $0xa28] sm:$0xff]
    %v355 = vld [vmem:[%s1 + $0xa30] sm:$0xff]
    %v356 = vld [vmem:[%s1 + $0xa38] sm:$0xff]
    %v357 = vld [vmem:[%s1 + $0xa40] sm:$0xff]
    %v358 = vld [vmem:[%s1 + $0xa48] sm:$0xff]
    %v359 = vld [vmem:[%s1 + $0xa50] sm:$0xff]
    %v360 = vld [vmem:[%s1 + $0xa58] sm:$0xff]
    %v361 = vld [vmem:[%s1 + $0xa60] sm:$0xff]
    %v362 = vld [vmem:[%s1 + $0xa68] sm:$0xff]
    %v363 = vld [vmem:[%s1 + $0xa70] sm:$0xff]
    %v364 = vld [vmem:[%s1 + $0xa78] sm:$0xff]
    %v365 = vld [vmem:[%s1 + $0xa80] sm:$0xff]
    %v366 = vld [vmem:[%s1 + $0xa88] sm:$0xff]
    %v367 = vld [vmem:[%s1 + $0xa90] sm:$0xff]
    %v368 = vld [vmem:[%s1 + $0xa98] sm:$0xff]
    %v369 = vld [vmem:[%s1 + $0xaa0] sm:$0xff]
    %v370 = vld [vmem:[%s1 + $0xaa8] sm:$0xff]
    %v371 = vld [vmem:[%s1 + $0xab0] sm:$0xff]
    %v372 = vld [vmem:[%s1 + $0xab8] sm:$0xff]
    %v373 = vld [vmem:[%s1 + $0xac0] sm:$0xff]
    %v374 = vld [vmem:[%s1 + $0xac8] sm:$0xff]
    %v375 = vld [vmem:[%s1 + $0xad0] sm:$0xff]
    %v376 = vld [vmem:[%s1 + $0xad8] sm:$0xff]
    %v377 = vld [vmem:[%s1 + $0xae0] sm:$0xff]
    %v378 = vld [vmem:[%s1 + $0xae8] sm:$0xff]
    %v379 = vld [vmem:[%s1 + $0xaf0] sm:$0xff]
    %v380 = vld [vmem:[%s1 + $0xaf8] sm:$0xff]
    %v381 = vld [vmem:[%s1 + $0xb00] sm:$0xff]
    %v382 = vld [vmem:[%s1 + $0xb08] sm:$0xff]
    %v383 = vld [vmem:[%s1 + $0xb10] sm:$0xff]
    %v384 = vld [vmem:[%s1 + $0xb18] sm:$0xff]
    %v385 = vld [vmem:[%s1 + $0xb20] sm:$0xff]
    %v386 = vld [vmem:[%s1 + $0xb28] sm:$0xff]
    %v387 = vld [vmem:[%s1 + $0xb30] sm:$0xff]
    %v388 = vld [vmem:[%s1 + $0xb38] sm:$0xff]
    %v389 = vld [vmem:[%s1 + $0xb40] sm:$0xff]
    %v390 = vld [vmem:[%s1 + $0xb48] sm:$0xff]
    %v391 = vld [vmem:[%s1 + $0xb50] sm:$0xff]
    %v392 = vld [vmem:[%s1 + $0xb58] sm:$0xff]
    %v393 = vld [vmem:[%s1 + $0xb60] sm:$0xff]
    %v394 = vld [vmem:[%s1 + $0xb68] sm:$0xff]
    %v395 = vld [vmem:[%s1 + $0xb70] sm:$0xff]
    %v396 = vld [vmem:[%s1 + $0xb78] sm:$0xff]
    %v397 = vld [vmem:[%s1 + $0xb80] sm:$0xff]
    %v398 = vld [vmem:[%s1 + $0xb88] sm:$0xff]
    %v399 = vld [vmem:[%s1 + $0xb90] sm:$0xff]
    %v400 = vld [vmem:[%s1 + $0xb98] sm:$0xff]
    %v401 = vld [vmem:[%s1 + $0xba0] sm:$0xff]
    %v402 = vld [vmem:[%s1 + $0xba8] sm:$0xff]
    %v403 = vld [vmem:[%s1 + $0xbb0] sm:$0xff]
    %v404 = vld [vmem:[%s1 + $0xbb8] sm:$0xff]
    %v405 = vld [vmem:[%s1 + $0xbc0] sm:$0xff]
    %v406 = vld [vmem:[%s1 + $0xbc8] sm:$0xff]
    %v407 = vld [vmem:[%s1 + $0xbd0] sm:$0xff]
    %v408 = vld [vmem:[%s1 + $0xbd8] sm:$0xff]
    %v409 = vld [vmem:[%s1 + $0xbe0] sm:$0xff]
    %v410 = vld [vmem:[%s1 + $0xbe8] sm:$0xff]
    %v411 = vld [vmem:[%s1 + $0xbf0] sm:$0xff]
    %v412 = vld [vmem:[%s1 + $0xbf8] sm:$0xff]
    %v413 = vld [vmem:[%s1 + $0xc00] sm:$0xff]
    %v414 = vld [vmem:[%s1 + $0xc08] sm:$0xff]
    %v415 = vld [vmem:[%s1 + $0xc10] sm:$0xff]
    %v416 = vld [vmem:[%s1 + $0xc18] sm:$0xff]
    %v417 = vld [vmem:[%s1 + $0xc20] sm:$0xff]
    %v418 = vld [vmem:[%s1 + $0xc28] sm:$0xff]
    %v419 = vld [vmem:[%s1 + $0xc30] sm:$0xff]
    %v420 = vld [vmem:[%s1 + $0xc38] sm:$0xff]
    %v421 = vld [vmem:[%s1 + $0xc40] sm:$0xff]
    %v422 = vld [vmem:[%s1 + $0xc48] sm:$0xff]
    %v423 = vld [vmem:[%s1 + $0xc50] sm:$0xff]
    %v424 = vld [vmem:[%s1 + $0xc58] sm:$0xff]
    %v425 = vld [vmem:[%s1 + $0xc60] sm:$0xff]
    %v426 = vld [vmem:[%s1 + $0xc68] sm:$0xff]
    %v427 = vld [vmem:[%s1 + $0xc70] sm:$0xff]
    %v428 = vld [vmem:[%s1 + $0xc78] sm:$0xff]
    %v429 = vld [vmem:[%s1 + $0xc80] sm:$0xff]
    %v430 = vld [vmem:[%s1 + $0xc88] sm:$0xff]
    %v431 = vld [vmem:[%s1 + $0xc90] sm:$0xff]
    %v432 = vld [vmem:[%s1 + $0xc98] sm:$0xff]
    %v433 = vld [vmem:[%s1 + $0xca0] sm:$0xff]
    %v434 = vld [vmem:[%s1 + $0xca8] sm:$0xff]
    %v435 = vld [vmem:[%s1 + $0xcb0] sm:$0xff]
    %v436 = vld [vmem:[%s1 + $0xcb8] sm:$0xff]
    %v437 = vld [vmem:[%s1 + $0xcc0] sm:$0xff]
    %v438 = vld [vmem:[%s1 + $0xcc8] sm:$0xff]
    %v439 = vld [vmem:[%s1 + $0xcd0] sm:$0xff]
    %v440 = vld [vmem:[%s1 + $0xcd8] sm:$0xff]
    %v441 = vld [vmem:[%s1 + $0xce0] sm:$0xff]
    %v442 = vld [vmem:[%s1 + $0xce8] sm:$0xff]
    %v443 = vld [vmem:[%s1 + $0xcf0] sm:$0xff]
    %v444 = vld [vmem:[%s1 + $0xcf8] sm:$0xff]
    %v445 = vld [vmem:[%s1 + $0xd00] sm:$0xff]
    %v446 = vld [vmem:[%s1 + $0xd08] sm:$0xff]
    %v447 = vld [vmem:[%s1 + $0xd10] sm:$0xff]
    %v448 = vld [vmem:[%s1 + $0xd18] sm:$0xff]
    %v449 = vld [vmem:[%s1 + $0xd20] sm:$0xff]
    %v450 = vld [vmem:[%s1 + $0xd28] sm:$0xff]
    %v451 = vld [vmem:[%s1 + $0xd30] sm:$0xff]
    %v452 = vld [vmem:[%s1 + $0xd38] sm:$0xff]
    %v453 = vld [vmem:[%s1 + $0xd40] sm:$0xff]
    %v454 = vld [vmem:[%s1 + $0xd48] sm:$0xff]
    %v455 = vld [vmem:[%s1 + $0xd50] sm:$0xff]
    %v456 = vld [vmem:[%s1 + $0xd58] sm:$0xff]
    %v457 = vld [vmem:[%s1 + $0xd60] sm:$0xff]
    %v458 = vld [vmem:[%s1 + $0xd68] sm:$0xff]
    %v459 = vld [vmem:[%s1 + $0xd70] sm:$0xff]
    %v460 = vld [vmem:[%s1 + $0xd78] sm:$0xff]
    %v461 = vld [vmem:[%s1 + $0xd80] sm:$0xff]
    %v462 = vld [vmem:[%s1 + $0xd88] sm:$0xff]
    %v463 = vld [vmem:[%s1 + $0xd90] sm:$0xff]
    %v464 = vld [vmem:[%s1 + $0xd98] sm:$0xff]
    %v465 = vld [vmem:[%s1 + $0xda0] sm:$0xff]
    %v466 = vld [vmem:[%s1 + $0xda8] sm:$0xff]
    %v467 = vld [vmem:[%s1 + $0xdb0] sm:$0xff]
    %v468 = vld [vmem:[%s1 + $0xdb8] sm:$0xff]
    %v469 = vld [vmem:[%s1 + $0xdc0] sm:$0xff]
    %v470 = vld [vmem:[%s1 + $0xdc8] sm:$0xff]
    %v471 = vld [vmem:[%s1 + $0xdd0] sm:$0xff]
    %v472 = vld [vmem:[%s1 + $0xdd8] sm:$0xff]
    %v473 = vld [vmem:[%s1 + $0xde0] sm:$0xff]
    %v474 = vld [vmem:[%s1 + $0xde8] sm:$0xff]
    %v475 = vld [vmem:[%s1 + $0xdf0] sm:$0xff]
    %v476 = vld [vmem:[%s1 + $0xdf8] sm:$0xff]
    %v477 = vld [vmem:[%s1 + $0xe00] sm:$0xff]
    %v478 = vld [vmem:[%s1 + $0xe08] sm:$0xff]
    %v479 = vld [vmem:[%s1 + $0xe10] sm:$0xff]
    %v480 = vld [vmem:[%s1 + $0xe18] sm:$0xff]
    %v481 = vld [vmem:[%s1 + $0xe20] sm:$0xff]
    %v482 = vld [vmem:[%s1 + $0xe28] sm:$0xff]
    %v483 = vld [vmem:[%s1 + $0xe30] sm:$0xff]
    %v484 = vld [vmem:[%s1 + $0xe38] sm:$0xff]
    %v485 = vld [vmem:[%s1 + $0xe40] sm:$0xff]
    %v486 = vld [vmem:[%s1 + $0xe48] sm:$0xff]
    %v487 = vld [vmem:[%s1 + $0xe50] sm:$0xff]
    %v488 = vld [vmem:[%s1 + $0xe58] sm:$0xff]
    %v489 = vld [vmem:[%s1 + $0xe60] sm:$0xff]
    %v490 = vld [vmem:[%s1 + $0xe68] sm:$0xff]
    %v491 = vld [vmem:[%s1 + $0xe70] sm:$0xff]
    %v492 = vld [vmem:[%s1 + $0xe78] sm:$0xff]
    %v493 = vld [vmem:[%s1 + $0xe80] sm:$0xff]
    %v494 = vld [vmem:[%s1 + $0xe88] sm:$0xff]
    %v495 = vld [vmem:[%s1 + $0xe90] sm:$0xff]
    %v496 = vld [vmem:[%s1 + $0xe98] sm:$0xff]
    %v497 = vld [vmem:[%s1 + $0xea0] sm:$0xff]
    %v498 = vld [vmem:[%s1 + $0xea8] sm:$0xff]
    %v499 = vld [vmem:[%s1 + $0xeb0] sm:$0xff]
    %v500 = vld [vmem:[%s1 + $0xeb8] sm:$0xff]
    %v501 = vld [vmem:[%s1 + $0xec0] sm:$0xff]
    %v502 = vld [vmem:[%s1 + $0xec8] sm:$0xff]
    %v503 = vld [vmem:[%s1 + $0xed0] sm:$0xff]
    %v504 = vld [vmem:[%s1 + $0xed8] sm:$0xff]
    %v505 = vld [vmem:[%s1 + $0xee0] sm:$0xff]
    %v506 = vld [vmem:[%s1 + $0xee8] sm:$0xff]
    %v507 = vld [vmem:[%s1 + $0xef0] sm:$0xff]
    %v508 = vld [vmem:[%s1 + $0xef8] sm:$0xff]
    %v509 = vld [vmem:[%s1 + $0xf00] sm:$0xff]
    %v510 = vld [vmem:[%s1 + $0xf08] sm:$0xff]
    %v511 = vld [vmem:[%s1 + $0xf10] sm:$0xff]
    %v512 = vld [vmem:[%s1 + $0xf18] sm:$0xff]
    %v513 = vld [vmem:[%s1 + $0xf20] sm:$0xff]
    %v514 = vld [vmem:[%s1 + $0xf28] sm:$0xff]
    %v515 = vld [vmem:[%s1 + $0xf30] sm:$0xff]
    %v516 = vld [vmem:[%s1 + $0xf38] sm:$0xff]
    %v517 = vld [vmem:[%s1 + $0xf40] sm:$0xff]
    %v518 = vld [vmem:[%s1 + $0xf48] sm:$0xff]
    %v519 = vld [vmem:[%s1 + $0xf50] sm:$0xff]
    %v520 = vld [vmem:[%s1 + $0xf58] sm:$0xff]
    %v521 = vld [vmem:[%s1 + $0xf60] sm:$0xff]
    %v522 = vld [vmem:[%s1 + $0xf68] sm:$0xff]
    %v523 = vld [vmem:[%s1 + $0xf70] sm:$0xff]
    %v524 = vld [vmem:[%s1 + $0xf78] sm:$0xff]
    %v525 = vld [vmem:[%s1 + $0xf80] sm:$0xff]
    %v526 = vld [vmem:[%s1 + $0xf88] sm:$0xff]
    %v527 = vld [vmem:[%s1 + $0xf90] sm:$0xff]
    %v528 = vld [vmem:[%s1 + $0xf98] sm:$0xff]
    %v529 = vld [vmem:[%s1 + $0xfa0] sm:$0xff]
    %v530 = vld [vmem:[%s1 + $0xfa8] sm:$0xff]
    %v531 = vld [vmem:[%s1 + $0xfb0] sm:$0xff]
    %v532 = vld [vmem:[%s1 + $0xfb8] sm:$0xff]
    %v533 = vld [vmem:[%s1 + $0xfc0] sm:$0xff]
    %v534 = vld [vmem:[%s1 + $0xfc8] sm:$0xff]
    %v535 = vld [vmem:[%s1 + $0xfd0] sm:$0xff]
    %v536 = vld [vmem:[%s1 + $0xfd8] sm:$0xff]
    %v537 = vld [vmem:[%s1 + $0xfe0] sm:$0xff]
    %v538 = vld [vmem:[%s1 + $0xfe8] sm:$0xff]
    %v539 = vld [vmem:[%s1 + $0xff0] sm:$0xff]
    %v540 = vld [vmem:[%s1 + $0xff8] sm:$0xff]
    %v541 = vld [vmem:[%s1 + $0x1000] sm:$0xff]
    %v542 = vld [vmem:[%s1 + $0x1008] sm:$0xff]
    %v543 = vld [vmem:[%s1 + $0x1010] sm:$0xff]
    %v544 = vld [vmem:[%s1 + $0x1018] sm:$0xff]
    %v545 = vld [vmem:[%s1 + $0x1020] sm:$0xff]
    %v546 = vld [vmem:[%s1 + $0x1028] sm:$0xff]
    %v547 = vld [vmem:[%s1 + $0x1030] sm:$0xff]
    %v548 = vld [vmem:[%s1 + $0x1038] sm:$0xff]
    %v549 = vld [vmem:[%s1 + $0x1040] sm:$0xff]
    %v550 = vld [vmem:[%s1 + $0x1048] sm:$0xff]
    %v551 = vld [vmem:[%s1 + $0x1050] sm:$0xff]
    %v552 = vld [vmem:[%s1 + $0x1058] sm:$0xff]
    %v553 = vld [vmem:[%s1 + $0x1060] sm:$0xff]
    %v554 = vld [vmem:[%s1 + $0x1068] sm:$0xff]
    %v555 = vld [vmem:[%s1 + $0x1070] sm:$0xff]
    %v556 = vld [vmem:[%s1 + $0x1078] sm:$0xff]
    %v557 = vld [vmem:[%s1 + $0x1080] sm:$0xff]
    %v558 = vld [vmem:[%s1 + $0x1088] sm:$0xff]
    %v559 = vld [vmem:[%s1 + $0x1090] sm:$0xff]
    %v560 = vld [vmem:[%s1 + $0x1098] sm:$0xff]
    %v561 = vld [vmem:[%s1 + $0x10a0] sm:$0xff]
    %v562 = vld [vmem:[%s1 + $0x10a8] sm:$0xff]
    %v563 = vld [vmem:[%s1 + $0x10b0] sm:$0xff]
    %v564 = vld [vmem:[%s1 + $0x10b8] sm:$0xff]
    %v565 = vld [vmem:[%s1 + $0x10c0] sm:$0xff]
    %v566 = vld [vmem:[%s1 + $0x10c8] sm:$0xff]
    %v567 = vld [vmem:[%s1 + $0x10d0] sm:$0xff]
    %v568 = vld [vmem:[%s1 + $0x10d8] sm:$0xff]
    %v569 = vld [vmem:[%s1 + $0x10e0] sm:$0xff]
    %v570 = vld [vmem:[%s1 + $0x10e8] sm:$0xff]
    %v571 = vld [vmem:[%s1 + $0x10f0] sm:$0xff]
    %v572 = vld [vmem:[%s1 + $0x10f8] sm:$0xff]
    %v573 = vld [vmem:[%s1 + $0x1100] sm:$0xff]
    %v574 = vld [vmem:[%s1 + $0x1108] sm:$0xff]
    %v575 = vld [vmem:[%s1 + $0x1110] sm:$0xff]
    %v576 = vld [vmem:[%s1 + $0x1118] sm:$0xff]
    %v577 = vld [vmem:[%s1 + $0x1120] sm:$0xff]
    %v578 = vld [vmem:[%s1 + $0x1128] sm:$0xff]
    %v579 = vld [vmem:[%s1 + $0x1130] sm:$0xff]
    %v580 = vld [vmem:[%s1 + $0x1138] sm:$0xff]
    %v581 = vld [vmem:[%s1 + $0x1140] sm:$0xff]
    %v582 = vld [vmem:[%s1 + $0x1148] sm:$0xff]
    %v583 = vld [vmem:[%s1 + $0x1150] sm:$0xff]
    %v584 = vld [vmem:[%s1 + $0x1158] sm:$0xff]
    %v585 = vld [vmem:[%s1 + $0x1160] sm:$0xff]
    %v586 = vld [vmem:[%s1 + $0x1168] sm:$0xff]
    %v587 = vld [vmem:[%s1 + $0x1170] sm:$0xff]
    %v588 = vld [vmem:[%s1 + $0x1178] sm:$0xff]
    %v589 = vld [vmem:[%s1 + $0x1180] sm:$0xff]
    %v590 = vld [vmem:[%s1 + $0x1188] sm:$0xff]
    %v591 = vld [vmem:[%s1 + $0x1190] sm:$0xff]
    %v592 = vld [vmem:[%s1 + $0x1198] sm:$0xff]
    %v593 = vld [vmem:[%s1 + $0x11a0] sm:$0xff]
    %v594 = vld [vmem:[%s1 + $0x11a8] sm:$0xff]
    %v595 = vld [vmem:[%s1 + $0x11b0] sm:$0xff]
    %v596 = vld [vmem:[%s1 + $0x11b8] sm:$0xff]
    %v597 = vld [vmem:[%s1 + $0x11c0] sm:$0xff]
    %v598 = vld [vmem:[%s1 + $0x11c8] sm:$0xff]
    %v599 = vld [vmem:[%s1 + $0x11d0] sm:$0xff]
    %v600 = vld [vmem:[%s1 + $0x11d8] sm:$0xff]
    %v601 = vld [vmem:[%s1 + $0x11e0] sm:$0xff]
    %v602 = vld [vmem:[%s1 + $0x11e8] sm:$0xff]
    %v603 = vld [vmem:[%s1 + $0x11f0] sm:$0xff]
    %v604 = vld [vmem:[%s1 + $0x11f8] sm:$0xff]
    %v605 = vld [vmem:[%s1 + $0x1200] sm:$0xff]
    %v606 = vld [vmem:[%s1 + $0x1208] sm:$0xff]
    %v607 = vld [vmem:[%s1 + $0x1210] sm:$0xff]
    %v608 = vld [vmem:[%s1 + $0x1218] sm:$0xff]
    %v609 = vld [vmem:[%s1 + $0x1220] sm:$0xff]
    %v610 = vld [vmem:[%s1 + $0x1228] sm:$0xff]
    %v611 = vld [vmem:[%s1 + $0x1230] sm:$0xff]
    %v612 = vld [vmem:[%s1 + $0x1238] sm:$0xff]
    %v613 = vld [vmem:[%s1 + $0x1240] sm:$0xff]
    %v614 = vld [vmem:[%s1 + $0x1248] sm:$0xff]
    %v615 = vld [vmem:[%s1 + $0x1250] sm:$0xff]
    %v616 = vld [vmem:[%s1 + $0x1258] sm:$0xff]
    %v617 = vld [vmem:[%s1 + $0x1260] sm:$0xff]
    %v618 = vld [vmem:[%s1 + $0x1268] sm:$0xff]
    %v619 = vld [vmem:[%s1 + $0x1270] sm:$0xff]
    %v620 = vld [vmem:[%s1 + $0x1278] sm:$0xff]
    %v621 = vld [vmem:[%s1 + $0x1280] sm:$0xff]
    %v622 = vld [vmem:[%s1 + $0x1288] sm:$0xff]
    %v623 = vld [vmem:[%s1 + $0x1290] sm:$0xff]
    %v624 = vld [vmem:[%s1 + $0x1298] sm:$0xff]
    %v625 = vld [vmem:[%s1 + $0x12a0] sm:$0xff]
    %v626 = vld [vmem:[%s1 + $0x12a8] sm:$0xff]
    %v627 = vld [vmem:[%s1 + $0x12b0] sm:$0xff]
    %v628 = vld [vmem:[%s1 + $0x12b8] sm:$0xff]
    %v629 = vld [vmem:[%s1 + $0x12c0] sm:$0xff]
    %v630 = vld [vmem:[%s1 + $0x12c8] sm:$0xff]
    %v631 = vld [vmem:[%s1 + $0x12d0] sm:$0xff]
    %v632 = vld [vmem:[%s1 + $0x12d8] sm:$0xff]
    %v633 = vld [vmem:[%s1 + $0x12e0] sm:$0xff]
    %v634 = vld [vmem:[%s1 + $0x12e8] sm:$0xff]
    %v635 = vld [vmem:[%s1 + $0x12f0] sm:$0xff]
    %v636 = vld [vmem:[%s1 + $0x12f8] sm:$0xff]
    %v637 = vld [vmem:[%s1 + $0x1300] sm:$0xff]
    %v638 = vld [vmem:[%s1 + $0x1308] sm:$0xff]
    %v639 = vld [vmem:[%s1 + $0x1310] sm:$0xff]
    %v640 = vld [vmem:[%s1 + $0x1318] sm:$0xff]
    %v641 = vld [vmem:[%s1 + $0x1320] sm:$0xff]
    %v642 = vld [vmem:[%s1 + $0x1328] sm:$0xff]
    %v643 = vld [vmem:[%s1 + $0x1330] sm:$0xff]
    %v644 = vld [vmem:[%s1 + $0x1338] sm:$0xff]
    %v645 = vld [vmem:[%s1 + $0x1340] sm:$0xff]
    %v646 = vld [vmem:[%s1 + $0x1348] sm:$0xff]
    %v647 = vld [vmem:[%s1 + $0x1350] sm:$0xff]
    %v648 = vld [vmem:[%s1 + $0x1358] sm:$0xff]
    %v649 = vld [vmem:[%s1 + $0x1360] sm:$0xff]
    %v650 = vld [vmem:[%s1 + $0x1368] sm:$0xff]
    %v651 = vld [vmem:[%s1 + $0x1370] sm:$0xff]
    %v652 = vld [vmem:[%s1 + $0x1378] sm:$0xff]
    %v653 = vld [vmem:[%s1 + $0x1380] sm:$0xff]
    %v654 = vld [vmem:[%s1 + $0x1388] sm:$0xff]
    %v655 = vld [vmem:[%s1 + $0x1390] sm:$0xff]
    %v656 = vld [vmem:[%s1 + $0x1398] sm:$0xff]
    %v657 = vld [vmem:[%s1 + $0x13a0] sm:$0xff]
    %v658 = vld [vmem:[%s1 + $0x13a8] sm:$0xff]
    %v659 = vld [vmem:[%s1 + $0x13b0] sm:$0xff]
    %v660 = vld [vmem:[%s1 + $0x13b8] sm:$0xff]
    %v661 = vld [vmem:[%s1 + $0x13c0] sm:$0xff]
    %v662 = vld [vmem:[%s1 + $0x13c8] sm:$0xff]
    %v663 = vld [vmem:[%s1 + $0x13d0] sm:$0xff]
    %v664 = vld [vmem:[%s1 + $0x13d8] sm:$0xff]
    %v665 = vld [vmem:[%s1 + $0x13e0] sm:$0xff]
    %v666 = vld [vmem:[%s1 + $0x13e8] sm:$0xff]
    %v667 = vld [vmem:[%s1 + $0x13f0] sm:$0xff]
    %v668 = vld [vmem:[%s1 + $0x13f8] sm:$0xff]
    %v669 = vld [vmem:[%s1 + $0x1400] sm:$0xff]
    %v670 = vld [vmem:[%s1 + $0x1408] sm:$0xff]
    %v671 = vld [vmem:[%s1 + $0x1410] sm:$0xff]
    %v672 = vld [vmem:[%s1 + $0x1418] sm:$0xff]
    %v673 = vld [vmem:[%s1 + $0x1420] sm:$0xff]
    %v674 = vld [vmem:[%s1 + $0x1428] sm:$0xff]
    %v675 = vld [vmem:[%s1 + $0x1430] sm:$0xff]
    %v676 = vld [vmem:[%s1 + $0x1438] sm:$0xff]
    %v677 = vld [vmem:[%s1 + $0x1440] sm:$0xff]
    %v678 = vld [vmem:[%s1 + $0x1448] sm:$0xff]
    %v679 = vld [vmem:[%s1 + $0x1450] sm:$0xff]
    %v680 = vld [vmem:[%s1 + $0x1458] sm:$0xff]
    %v681 = vld [vmem:[%s1 + $0x1460] sm:$0xff]
    %v682 = vld [vmem:[%s1 + $0x1468] sm:$0xff]
    %v683 = vld [vmem:[%s1 + $0x1470] sm:$0xff]
    %v684 = vld [vmem:[%s1 + $0x1478] sm:$0xff]
    %v685 = vld [vmem:[%s1 + $0x1480] sm:$0xff]
    %v686 = vld [vmem:[%s1 + $0x1488] sm:$0xff]
    %v687 = vld [vmem:[%s1 + $0x1490] sm:$0xff]
    %v688 = vld [vmem:[%s1 + $0x1498] sm:$0xff]
    %v689 = vld [vmem:[%s1 + $0x14a0] sm:$0xff]
    %v690 = vld [vmem:[%s1 + $0x14a8] sm:$0xff]
    %v691 = vld [vmem:[%s1 + $0x14b0] sm:$0xff]
    %v692 = vld [vmem:[%s1 + $0x14b8] sm:$0xff]
    %v693 = vld [vmem:[%s1 + $0x14c0] sm:$0xff]
    %v694 = vld [vmem:[%s1 + $0x14c8] sm:$0xff]
    %v695 = vld [vmem:[%s1 + $0x14d0] sm:$0xff]
    %v696 = vld [vmem:[%s1 + $0x14d8] sm:$0xff]
    %v697 = vld [vmem:[%s1 + $0x14e0] sm:$0xff]
    %v698 = vld [vmem:[%s1 + $0x14e8] sm:$0xff]
    %v699 = vld [vmem:[%s1 + $0x14f0] sm:$0xff]
    %v700 = vld [vmem:[%s1 + $0x14f8] sm:$0xff]
    %v701 = vld [vmem:[%s1 + $0x1500] sm:$0xff]
    %v702 = vld [vmem:[%s1 + $0x1508] sm:$0xff]
    %v703 = vld [vmem:[%s1 + $0x1510] sm:$0xff]
    %v704 = vld [vmem:[%s1 + $0x1518] sm:$0xff]
    %v705 = vld [vmem:[%s1 + $0x1520] sm:$0xff]
    %v706 = vld [vmem:[%s1 + $0x1528] sm:$0xff]
    %v707 = vld [vmem:[%s1 + $0x1530] sm:$0xff]
    %v708 = vld [vmem:[%s1 + $0x1538] sm:$0xff]
    %v709 = vld [vmem:[%s1 + $0x1540] sm:$0xff]
    %v710 = vld [vmem:[%s1 + $0x1548] sm:$0xff]
    %v711 = vld [vmem:[%s1 + $0x1550] sm:$0xff]
    %v712 = vld [vmem:[%s1 + $0x1558] sm:$0xff]
    %v713 = vld [vmem:[%s1 + $0x1560] sm:$0xff]
    %v714 = vld [vmem:[%s1 + $0x1568] sm:$0xff]
    %v715 = vld [vmem:[%s1 + $0x1570] sm:$0xff]
    %v716 = vld [vmem:[%s1 + $0x1578] sm:$0xff]
    %v717 = vld [vmem:[%s1 + $0x1580] sm:$0xff]
    %v718 = vld [vmem:[%s1 + $0x1588] sm:$0xff]
    %v719 = vld [vmem:[%s1 + $0x1590] sm:$0xff]
    %v720 = vld [vmem:[%s1 + $0x1598] sm:$0xff]
    %v721 = vld [vmem:[%s1 + $0x15a0] sm:$0xff]
    %v722 = vld [vmem:[%s1 + $0x15a8] sm:$0xff]
    %v723 = vld [vmem:[%s1 + $0x15b0] sm:$0xff]
    %v724 = vld [vmem:[%s1 + $0x15b8] sm:$0xff]
    %v725 = vld [vmem:[%s1 + $0x15c0] sm:$0xff]
    %v726 = vld [vmem:[%s1 + $0x15c8] sm:$0xff]
    %v727 = vld [vmem:[%s1 + $0x15d0] sm:$0xff]
    %v728 = vld [vmem:[%s1 + $0x15d8] sm:$0xff]
    %v729 = vld [vmem:[%s1 + $0x15e0] sm:$0xff]
    %v730 = vld [vmem:[%s1 + $0x15e8] sm:$0xff]
    %v731 = vld [vmem:[%s1 + $0x15f0] sm:$0xff]
    %v732 = vld [vmem:[%s1 + $0x15f8] sm:$0xff]
    %v733 = vld [vmem:[%s1 + $0x1600] sm:$0xff]
    %v734 = vld [vmem:[%s1 + $0x1608] sm:$0xff]
    %v735 = vld [vmem:[%s1 + $0x1610] sm:$0xff]
    %v736 = vld [vmem:[%s1 + $0x1618] sm:$0xff]
    %v737 = vld [vmem:[%s1 + $0x1620] sm:$0xff]
    %v738 = vld [vmem:[%s1 + $0x1628] sm:$0xff]
    %v739 = vld [vmem:[%s1 + $0x1630] sm:$0xff]
    %v740 = vld [vmem:[%s1 + $0x1638] sm:$0xff]
    %v741 = vld [vmem:[%s1 + $0x1640] sm:$0xff]
    %v742 = vld [vmem:[%s1 + $0x1648] sm:$0xff]
    %v743 = vld [vmem:[%s1 + $0x1650] sm:$0xff]
    %v744 = vld [vmem:[%s1 + $0x1658] sm:$0xff]
    %v745 = vld [vmem:[%s1 + $0x1660] sm:$0xff]
    %v746 = vld [vmem:[%s1 + $0x1668] sm:$0xff]
    %v747 = vld [vmem:[%s1 + $0x1670] sm:$0xff]
    %v748 = vld [vmem:[%s1 + $0x1678] sm:$0xff]
    %v749 = vld [vmem:[%s1 + $0x1680] sm:$0xff]
    %v750 = vld [vmem:[%s1 + $0x1688] sm:$0xff]
    %v751 = vld [vmem:[%s1 + $0x1690] sm:$0xff]
    %v752 = vld [vmem:[%s1 + $0x1698] sm:$0xff]
    %v753 = vld [vmem:[%s1 + $0x16a0] sm:$0xff]
    %v754 = vld [vmem:[%s1 + $0x16a8] sm:$0xff]
    %v755 = vld [vmem:[%s1 + $0x16b0] sm:$0xff]
    %v756 = vld [vmem:[%s1 + $0x16b8] sm:$0xff]
    %v757 = vld [vmem:[%s1 + $0x16c0] sm:$0xff]
    %v758 = vld [vmem:[%s1 + $0x16c8] sm:$0xff]
    %v759 = vld [vmem:[%s1 + $0x16d0] sm:$0xff]
    %v760 = vld [vmem:[%s1 + $0x16d8] sm:$0xff]
    %v761 = vld [vmem:[%s1 + $0x16e0] sm:$0xff]
    %v762 = vld [vmem:[%s1 + $0x16e8] sm:$0xff]
    %v763 = vld [vmem:[%s1 + $0x16f0] sm:$0xff]
    %v764 = vld [vmem:[%s1 + $0x16f8] sm:$0xff]
    %v765 = vld [vmem:[%s1 + $0x1700] sm:$0xff]
    %v766 = vld [vmem:[%s1 + $0x1708] sm:$0xff]
    %v767 = vld [vmem:[%s1 + $0x1710] sm:$0xff]
    %v768 = vld [vmem:[%s1 + $0x1718] sm:$0xff]
    %v769 = vld [vmem:[%s1 + $0x1720] sm:$0xff]
    %v770 = vld [vmem:[%s1 + $0x1728] sm:$0xff]
    %v771 = vld [vmem:[%s1 + $0x1730] sm:$0xff]
    %v772 = vld [vmem:[%s1 + $0x1738] sm:$0xff]
    %v773 = vld [vmem:[%s1 + $0x1740] sm:$0xff]
    %v774 = vld [vmem:[%s1 + $0x1748] sm:$0xff]
    %v775 = vld [vmem:[%s1 + $0x1750] sm:$0xff]
    %v776 = vld [vmem:[%s1 + $0x1758] sm:$0xff]
    %v777 = vld [vmem:[%s1 + $0x1760] sm:$0xff]
    %v778 = vld [vmem:[%s1 + $0x1768] sm:$0xff]
    %v779 = vld [vmem:[%s1 + $0x1770] sm:$0xff]
    %v780 = vld [vmem:[%s1 + $0x1778] sm:$0xff]
    %v781 = vld [vmem:[%s1 + $0x1780] sm:$0xff]
    %v782 = vld [vmem:[%s1 + $0x1788] sm:$0xff]
    %v783 = vld [vmem:[%s1 + $0x1790] sm:$0xff]
    %v784 = vld [vmem:[%s1 + $0x1798] sm:$0xff]
    %v785 = vld [vmem:[%s1 + $0x17a0] sm:$0xff]
    %v786 = vld [vmem:[%s1 + $0x17a8] sm:$0xff]
    %v787 = vld [vmem:[%s1 + $0x17b0] sm:$0xff]
    %v788 = vld [vmem:[%s1 + $0x17b8] sm:$0xff]
    %v789 = vld [vmem:[%s1 + $0x17c0] sm:$0xff]
    %v790 = vld [vmem:[%s1 + $0x17c8] sm:$0xff]
    %v791 = vld [vmem:[%s1 + $0x17d0] sm:$0xff]
    %v792 = vld [vmem:[%s1 + $0x17d8] sm:$0xff]
    %v793 = vld [vmem:[%s1 + $0x17e0] sm:$0xff]
    %v794 = vld [vmem:[%s1 + $0x17e8] sm:$0xff]
    %v795 = vld [vmem:[%s1 + $0x17f0] sm:$0xff]
    %v796 = vld [vmem:[%s1 + $0x17f8] sm:$0xff]
    %v797 = vld [vmem:[%s1 + $0x1800] sm:$0xff]
    %v798 = vld [vmem:[%s1 + $0x1808] sm:$0xff]
    %v799 = vld [vmem:[%s1 + $0x1810] sm:$0xff]
    %v800 = vld [vmem:[%s1 + $0x1818] sm:$0xff]
    %v801 = vld [vmem:[%s1 + $0x1820] sm:$0xff]
    %v802 = vld [vmem:[%s1 + $0x1828] sm:$0xff]
    %v803 = vld [vmem:[%s1 + $0x1830] sm:$0xff]
    %v804 = vld [vmem:[%s1 + $0x1838] sm:$0xff]
    %v805 = vld [vmem:[%s1 + $0x1840] sm:$0xff]
    %v806 = vld [vmem:[%s1 + $0x1848] sm:$0xff]
    %v807 = vld [vmem:[%s1 + $0x1850] sm:$0xff]
    %v808 = vld [vmem:[%s1 + $0x1858] sm:$0xff]
    %v809 = vld [vmem:[%s1 + $0x1860] sm:$0xff]
    %v810 = vld [vmem:[%s1 + $0x1868] sm:$0xff]
    %v811 = vld [vmem:[%s1 + $0x1870] sm:$0xff]
    %v812 = vld [vmem:[%s1 + $0x1878] sm:$0xff]
    %v813 = vld [vmem:[%s2] sm:$0xf]
    %v815 = vlaneseq
    %v816 = vshrl.u32 %v815, 7
    %v817 = vsub.s32 0, %v816
    %v818 = vrot.slane %v813, %v817
    %v819 = vlaneseq
    %v820 = vshrl.u32 %v819, 7
    %v821 = vsub.s32 1, %v820
    %v822 = vrot.slane %v813, %v821
    %v823 = vlaneseq
    %v824 = vshrl.u32 %v823, 7
    %v825 = vsub.s32 2, %v824
    %v826 = vrot.slane %v813, %v825
    %v827 = vlaneseq
    %v828 = vshrl.u32 %v827, 7
    %v829 = vsub.s32 3, %v828
    %v830 = vrot.slane %v813, %v829
    %v839 = vcombine.high %v25, %v25
    %v841 = vunpack.c.l.s4 1966171168
    %v842 = vunpack.c.0.s8 %v841
    %v843 = vlaneseq
    %v844 = vshrl.u32 %v843, 7
    %v845 = vsub.s32 %v842, %v844
    %v846 = vrot.slane %v25, %v845
    %v848 = vunpack.c.l.s4 1966171168
    %v849 = vunpack.c.0.s8 %v848
    %v850 = vlaneseq
    %v851 = vshrl.u32 %v850, 7
    %v852 = vsub.s32 %v849, %v851
    %v853 = vrot.slane %v839, %v852
    %v854 = vcombine.high %v846, %v846
    %v855 = vcombine.high %v853, %v853
    %v857 = vunpack.c.l.s4 1966171168
    %v858 = vunpack.c.0.s8 %v857
    %v859 = vlaneseq
    %v860 = vshrl.u32 %v859, 7
    %v861 = vsub.s32 %v858, %v860
    %v862 = vrot.slane %v846, %v861
    %v864 = vunpack.c.l.s4 1966171168
    %v865 = vunpack.c.0.s8 %v864
    %v866 = vlaneseq
    %v867 = vshrl.u32 %v866, 7
    %v868 = vsub.s32 %v865, %v867
    %v869 = vrot.slane %v853, %v868
    %v871 = vunpack.c.l.s4 1966171168
    %v872 = vunpack.c.0.s8 %v871
    %v873 = vlaneseq
    %v874 = vshrl.u32 %v873, 7
    %v875 = vsub.s32 %v872, %v874
    %v876 = vrot.slane %v854, %v875
    %v878 = vunpack.c.l.s4 1966171168
    %v879 = vunpack.c.0.s8 %v878
    %v880 = vlaneseq
    %v881 = vshrl.u32 %v880, 7
    %v882 = vsub.s32 %v879, %v881
    %v883 = vrot.slane %v855, %v882
    %v884 = vcombine.high %v862, %v862
    %v885 = vcombine.high %v869, %v869
    %v886 = vcombine.high %v876, %v876
    %v887 = vcombine.high %v883, %v883
    %v888 = vcombine.high %v26, %v26
    %v890 = vunpack.c.l.s4 1966171168
    %v891 = vunpack.c.0.s8 %v890
    %v892 = vlaneseq
    %v893 = vshrl.u32 %v892, 7
    %v894 = vsub.s32 %v891, %v893
    %v895 = vrot.slane %v26, %v894
    %v897 = vunpack.c.l.s4 1966171168
    %v898 = vunpack.c.0.s8 %v897
    %v899 = vlaneseq
    %v900 = vshrl.u32 %v899, 7
    %v901 = vsub.s32 %v898, %v900
    %v902 = vrot.slane %v888, %v901
    %v903 = vcombine.high %v895, %v895
    %v904 = vcombine.high %v902, %v902
    %v906 = vunpack.c.l.s4 1966171168
    %v907 = vunpack.c.0.s8 %v906
    %v908 = vlaneseq
    %v909 = vshrl.u32 %v908, 7
    %v910 = vsub.s32 %v907, %v909
    %v911 = vrot.slane %v895, %v910
    %v913 = vunpack.c.l.s4 1966171168
    %v914 = vunpack.c.0.s8 %v913
    %v915 = vlaneseq
    %v916 = vshrl.u32 %v915, 7
    %v917 = vsub.s32 %v914, %v916
    %v918 = vrot.slane %v902, %v917
    %v920 = vunpack.c.l.s4 1966171168
    %v921 = vunpack.c.0.s8 %v920
    %v922 = vlaneseq
    %v923 = vshrl.u32 %v922, 7
    %v924 = vsub.s32 %v921, %v923
    %v925 = vrot.slane %v903, %v924
    %v927 = vunpack.c.l.s4 1966171168
    %v928 = vunpack.c.0.s8 %v927
    %v929 = vlaneseq
    %v930 = vshrl.u32 %v929, 7
    %v931 = vsub.s32 %v928, %v930
    %v932 = vrot.slane %v904, %v931
    %v933 = vcombine.high %v911, %v911
    %v934 = vcombine.high %v918, %v918
    %v935 = vcombine.high %v925, %v925
    %v936 = vcombine.high %v932, %v932
    %v937 = vcombine.high %v27, %v27
    %v939 = vunpack.c.l.s4 1966171168
    %v940 = vunpack.c.0.s8 %v939
    %v941 = vlaneseq
    %v942 = vshrl.u32 %v941, 7
    %v943 = vsub.s32 %v940, %v942
    %v944 = vrot.slane %v27, %v943
    %v946 = vunpack.c.l.s4 1966171168
    %v947 = vunpack.c.0.s8 %v946
    %v948 = vlaneseq
    %v949 = vshrl.u32 %v948, 7
    %v950 = vsub.s32 %v947, %v949
    %v951 = vrot.slane %v937, %v950
    %v952 = vcombine.high %v944, %v944
    %v953 = vcombine.high %v951, %v951
    %v955 = vunpack.c.l.s4 1966171168
    %v956 = vunpack.c.0.s8 %v955
    %v957 = vlaneseq
    %v958 = vshrl.u32 %v957, 7
    %v959 = vsub.s32 %v956, %v958
    %v960 = vrot.slane %v944, %v959
    %v962 = vunpack.c.l.s4 1966171168
    %v963 = vunpack.c.0.s8 %v962
    %v964 = vlaneseq
    %v965 = vshrl.u32 %v964, 7
    %v966 = vsub.s32 %v963, %v965
    %v967 = vrot.slane %v951, %v966
    %v969 = vunpack.c.l.s4 1966171168
    %v970 = vunpack.c.0.s8 %v969
    %v971 = vlaneseq
    %v972 = vshrl.u32 %v971, 7
    %v973 = vsub.s32 %v970, %v972
    %v974 = vrot.slane %v952, %v973
    %v976 = vunpack.c.l.s4 1966171168
    %v977 = vunpack.c.0.s8 %v976
    %v978 = vlaneseq
    %v979 = vshrl.u32 %v978, 7
    %v980 = vsub.s32 %v977, %v979
    %v981 = vrot.slane %v953, %v980
    %v982 = vcombine.high %v960, %v960
    %v983 = vcombine.high %v967, %v967
    %v984 = vcombine.high %v974, %v974
    %v985 = vcombine.high %v981, %v981
    %v987 = vunpack.c.l.s4 1966171168
    %v988 = vunpack.c.0.s8 %v987
    %v989 = vlaneseq
    %v990 = vshrl.u32 %v989, 7
    %v991 = vsub.s32 %v988, %v990
    %v992 = vrot.slane %v28, %v991
    %v994 = vunpack.c.l.s4 1966171168
    %v995 = vunpack.c.0.s8 %v994
    %v996 = vlaneseq
    %v997 = vshrl.u32 %v996, 7
    %v998 = vsub.s32 %v995, %v997
    %v999 = vrot.slane %v992, %v998
    %v1808 = vunpack.c.l.b16 %v29
    %v1809 = vunpack.c.h.b16 %v29
    %v1810 = vunpack.c.l.b16 %v30
    %v1811 = vunpack.c.h.b16 %v30
    %v1812 = vunpack.c.l.b16 %v31
    %v1813 = vunpack.c.h.b16 %v31
    %v1814 = vunpack.c.l.b16 %v32
    %v1815 = vunpack.c.h.b16 %v32
    %v1816 = vunpack.c.l.b16 %v33
    %v1817 = vunpack.c.h.b16 %v33
    %v1818 = vunpack.c.l.b16 %v34
    %v1819 = vunpack.c.h.b16 %v34
    %v1820 = vunpack.c.l.b16 %v35
    %v1821 = vunpack.c.h.b16 %v35
    %v1822 = vunpack.c.l.b16 %v36
    %v1823 = vunpack.c.h.b16 %v36
    %v1824 = vunpack.c.l.b16 %v37
    %v1825 = vunpack.c.h.b16 %v37
    %v1826 = vunpack.c.l.b16 %v38
    %v1827 = vunpack.c.h.b16 %v38
    %v1828 = vunpack.c.l.b16 %v39
    %v1829 = vunpack.c.h.b16 %v39
    %v1830 = vunpack.c.l.b16 %v40
    %v1831 = vunpack.c.h.b16 %v40
    %v1832 = vunpack.c.l.b16 %v41
    %v1833 = vunpack.c.h.b16 %v41
    %v1834 = vunpack.c.l.b16 %v42
    %v1835 = vunpack.c.h.b16 %v42
    %v1836 = vunpack.c.l.b16 %v43
    %v1837 = vunpack.c.h.b16 %v43
    %v1838 = vunpack.c.l.b16 %v44
    %v1839 = vunpack.c.h.b16 %v44
    %v1840 = vunpack.c.l.b16 %v45
    %v1841 = vunpack.c.h.b16 %v45
    %v1842 = vunpack.c.l.b16 %v46
    %v1843 = vunpack.c.h.b16 %v46
    %v1844 = vunpack.c.l.b16 %v47
    %v1845 = vunpack.c.h.b16 %v47
    %v1846 = vunpack.c.l.b16 %v48
    %v1847 = vunpack.c.h.b16 %v48
    %v1848 = vunpack.c.l.b16 %v49
    %v1849 = vunpack.c.h.b16 %v49
    %v1850 = vunpack.c.l.b16 %v50
    %v1851 = vunpack.c.h.b16 %v50
    %v1852 = vunpack.c.l.b16 %v51
    %v1853 = vunpack.c.h.b16 %v51
    %v1854 = vunpack.c.l.b16 %v52
    %v1855 = vunpack.c.h.b16 %v52
    %v1856 = vunpack.c.l.b16 %v53
    %v1857 = vunpack.c.h.b16 %v53
    %v1858 = vunpack.c.l.b16 %v54
    %v1859 = vunpack.c.h.b16 %v54
    %v1860 = vunpack.c.l.b16 %v55
    %v1861 = vunpack.c.h.b16 %v55
    %v1862 = vunpack.c.l.b16 %v56
    %v1863 = vunpack.c.h.b16 %v56
    %v1864 = vunpack.c.l.b16 %v57
    %v1865 = vunpack.c.h.b16 %v57
    %v1866 = vunpack.c.l.b16 %v58
    %v1867 = vunpack.c.h.b16 %v58
    %v1868 = vunpack.c.l.b16 %v59
    %v1869 = vunpack.c.h.b16 %v59
    %v1870 = vunpack.c.l.b16 %v60
    %v1871 = vunpack.c.h.b16 %v60
    %v1872 = vunpack.c.l.b16 %v61
    %v1873 = vunpack.c.h.b16 %v61
    %v1874 = vunpack.c.l.b16 %v62
    %v1875 = vunpack.c.h.b16 %v62
    %v1876 = vunpack.c.l.b16 %v63
    %v1877 = vunpack.c.h.b16 %v63
    %v1878 = vunpack.c.l.b16 %v64
    %v1879 = vunpack.c.h.b16 %v64
    %v1880 = vunpack.c.l.b16 %v65
    %v1881 = vunpack.c.h.b16 %v65
    %v1882 = vunpack.c.l.b16 %v66
    %v1883 = vunpack.c.h.b16 %v66
    %v1884 = vunpack.c.l.b16 %v67
    %v1885 = vunpack.c.h.b16 %v67
    %v1886 = vunpack.c.l.b16 %v68
    %v1887 = vunpack.c.h.b16 %v68
    %v1888 = vunpack.c.l.b16 %v69
    %v1889 = vunpack.c.h.b16 %v69
    %v1890 = vunpack.c.l.b16 %v70
    %v1891 = vunpack.c.h.b16 %v70
    %v1892 = vunpack.c.l.b16 %v71
    %v1893 = vunpack.c.h.b16 %v71
    %v1894 = vunpack.c.l.b16 %v72
    %v1895 = vunpack.c.h.b16 %v72
    %v1896 = vunpack.c.l.b16 %v73
    %v1897 = vunpack.c.h.b16 %v73
    %v1898 = vunpack.c.l.b16 %v74
    %v1899 = vunpack.c.h.b16 %v74
    %v1900 = vunpack.c.l.b16 %v75
    %v1901 = vunpack.c.h.b16 %v75
    %v1902 = vunpack.c.l.b16 %v76
    %v1903 = vunpack.c.h.b16 %v76
    %v1904 = vunpack.c.l.b16 %v77
    %v1905 = vunpack.c.h.b16 %v77
    %v1906 = vunpack.c.l.b16 %v78
    %v1907 = vunpack.c.h.b16 %v78
    %v1908 = vunpack.c.l.b16 %v79
    %v1909 = vunpack.c.h.b16 %v79
    %v1910 = vunpack.c.l.b16 %v80
    %v1911 = vunpack.c.h.b16 %v80
    %v1912 = vunpack.c.l.b16 %v81
    %v1913 = vunpack.c.h.b16 %v81
    %v1914 = vunpack.c.l.b16 %v82
    %v1915 = vunpack.c.h.b16 %v82
    %v1916 = vunpack.c.l.b16 %v83
    %v1917 = vunpack.c.h.b16 %v83
    %v1918 = vunpack.c.l.b16 %v84
    %v1919 = vunpack.c.h.b16 %v84
    %v1920 = vunpack.c.l.b16 %v85
    %v1921 = vunpack.c.h.b16 %v85
    %v1922 = vunpack.c.l.b16 %v86
    %v1923 = vunpack.c.h.b16 %v86
    %v1924 = vunpack.c.l.b16 %v87
    %v1925 = vunpack.c.h.b16 %v87
    %v1926 = vunpack.c.l.b16 %v88
    %v1927 = vunpack.c.h.b16 %v88
    %v1928 = vunpack.c.l.b16 %v89
    %v1929 = vunpack.c.h.b16 %v89
    %v1930 = vunpack.c.l.b16 %v90
    %v1931 = vunpack.c.h.b16 %v90
    %v1932 = vunpack.c.l.b16 %v91
    %v1933 = vunpack.c.h.b16 %v91
    %v1934 = vunpack.c.l.b16 %v92
    %v1935 = vunpack.c.h.b16 %v92
    %v1936 = vunpack.c.l.b16 %v93
    %v1937 = vunpack.c.h.b16 %v93
    %v1938 = vunpack.c.l.b16 %v94
    %v1939 = vunpack.c.h.b16 %v94
    %v1940 = vunpack.c.l.b16 %v95
    %v1941 = vunpack.c.h.b16 %v95
    %v1942 = vunpack.c.l.b16 %v96
    %v1943 = vunpack.c.h.b16 %v96
    %v1944 = vunpack.c.l.b16 %v97
    %v1945 = vunpack.c.h.b16 %v97
    %v1946 = vunpack.c.l.b16 %v98
    %v1947 = vunpack.c.h.b16 %v98
    %v1948 = vunpack.c.l.b16 %v99
    %v1949 = vunpack.c.h.b16 %v99
    %v1950 = vunpack.c.l.b16 %v100
    %v1951 = vunpack.c.h.b16 %v100
    %v1952 = vunpack.c.l.b16 %v101
    %v1953 = vunpack.c.h.b16 %v101
    %v1954 = vunpack.c.l.b16 %v102
    %v1955 = vunpack.c.h.b16 %v102
    %v1956 = vunpack.c.l.b16 %v103
    %v1957 = vunpack.c.h.b16 %v103
    %v1958 = vunpack.c.l.b16 %v104
    %v1959 = vunpack.c.h.b16 %v104
    %v1960 = vunpack.c.l.b16 %v105
    %v1961 = vunpack.c.h.b16 %v105
    %v1962 = vunpack.c.l.b16 %v106
    %v1963 = vunpack.c.h.b16 %v106
    %v1964 = vunpack.c.l.b16 %v107
    %v1965 = vunpack.c.h.b16 %v107
    %v1966 = vunpack.c.l.b16 %v108
    %v1967 = vunpack.c.h.b16 %v108
    %v1968 = vunpack.c.l.b16 %v109
    %v1969 = vunpack.c.h.b16 %v109
    %v1970 = vunpack.c.l.b16 %v110
    %v1971 = vunpack.c.h.b16 %v110
    %v1972 = vunpack.c.l.b16 %v111
    %v1973 = vunpack.c.h.b16 %v111
    %v1974 = vunpack.c.l.b16 %v112
    %v1975 = vunpack.c.h.b16 %v112
    %v1976 = vunpack.c.l.b16 %v113
    %v1977 = vunpack.c.h.b16 %v113
    %v1978 = vunpack.c.l.b16 %v114
    %v1979 = vunpack.c.h.b16 %v114
    %v1980 = vunpack.c.l.b16 %v115
    %v1981 = vunpack.c.h.b16 %v115
    %v1982 = vunpack.c.l.b16 %v116
    %v1983 = vunpack.c.h.b16 %v116
    %v1984 = vunpack.c.l.b16 %v117
    %v1985 = vunpack.c.h.b16 %v117
    %v1986 = vunpack.c.l.b16 %v118
    %v1987 = vunpack.c.h.b16 %v118
    %v1988 = vunpack.c.l.b16 %v119
    %v1989 = vunpack.c.h.b16 %v119
    %v1990 = vunpack.c.l.b16 %v120
    %v1991 = vunpack.c.h.b16 %v120
    %v1992 = vunpack.c.l.b16 %v121
    %v1993 = vunpack.c.h.b16 %v121
    %v1994 = vunpack.c.l.b16 %v122
    %v1995 = vunpack.c.h.b16 %v122
    %v1996 = vunpack.c.l.b16 %v123
    %v1997 = vunpack.c.h.b16 %v123
    %v1998 = vunpack.c.l.b16 %v124
    %v1999 = vunpack.c.h.b16 %v124
    %v2000 = vunpack.c.l.b16 %v125
    %v2001 = vunpack.c.h.b16 %v125
    %v2002 = vunpack.c.l.b16 %v126
    %v2003 = vunpack.c.h.b16 %v126
    %v2004 = vunpack.c.l.b16 %v127
    %v2005 = vunpack.c.h.b16 %v127
    %v2006 = vunpack.c.l.b16 %v128
    %v2007 = vunpack.c.h.b16 %v128
    %v2008 = vunpack.c.l.b16 %v129
    %v2009 = vunpack.c.h.b16 %v129
    %v2010 = vunpack.c.l.b16 %v130
    %v2011 = vunpack.c.h.b16 %v130
    %v2012 = vunpack.c.l.b16 %v131
    %v2013 = vunpack.c.h.b16 %v131
    %v2014 = vunpack.c.l.b16 %v132
    %v2015 = vunpack.c.h.b16 %v132
    %v2016 = vunpack.c.l.b16 %v133
    %v2017 = vunpack.c.h.b16 %v133
    %v2018 = vunpack.c.l.b16 %v134
    %v2019 = vunpack.c.h.b16 %v134
    %v2020 = vunpack.c.l.b16 %v135
    %v2021 = vunpack.c.h.b16 %v135
    %v2022 = vunpack.c.l.b16 %v136
    %v2023 = vunpack.c.h.b16 %v136
    %v2024 = vunpack.c.l.b16 %v137
    %v2025 = vunpack.c.h.b16 %v137
    %v2026 = vunpack.c.l.b16 %v138
    %v2027 = vunpack.c.h.b16 %v138
    %v2028 = vunpack.c.l.b16 %v139
    %v2029 = vunpack.c.h.b16 %v139
    %v2030 = vunpack.c.l.b16 %v140
    %v2031 = vunpack.c.h.b16 %v140
    %v2032 = vunpack.c.l.b16 %v141
    %v2033 = vunpack.c.h.b16 %v141
    %v2034 = vunpack.c.l.b16 %v142
    %v2035 = vunpack.c.h.b16 %v142
    %v2036 = vunpack.c.l.b16 %v143
    %v2037 = vunpack.c.h.b16 %v143
    %v2038 = vunpack.c.l.b16 %v144
    %v2039 = vunpack.c.h.b16 %v144
    %v2040 = vunpack.c.l.b16 %v145
    %v2041 = vunpack.c.h.b16 %v145
    %v2042 = vunpack.c.l.b16 %v146
    %v2043 = vunpack.c.h.b16 %v146
    %v2044 = vunpack.c.l.b16 %v147
    %v2045 = vunpack.c.h.b16 %v147
    %v2046 = vunpack.c.l.b16 %v148
    %v2047 = vunpack.c.h.b16 %v148
    %v2048 = vunpack.c.l.b16 %v149
    %v2049 = vunpack.c.h.b16 %v149
    %v2050 = vunpack.c.l.b16 %v150
    %v2051 = vunpack.c.h.b16 %v150
    %v2052 = vunpack.c.l.b16 %v151
    %v2053 = vunpack.c.h.b16 %v151
    %v2054 = vunpack.c.l.b16 %v152
    %v2055 = vunpack.c.h.b16 %v152
    %v2056 = vunpack.c.l.b16 %v153
    %v2057 = vunpack.c.h.b16 %v153
    %v2058 = vunpack.c.l.b16 %v154
    %v2059 = vunpack.c.h.b16 %v154
    %v2060 = vunpack.c.l.b16 %v155
    %v2061 = vunpack.c.h.b16 %v155
    %v2062 = vunpack.c.l.b16 %v156
    %v2063 = vunpack.c.h.b16 %v156
    %v2064 = vunpack.c.l.b16 %v157
    %v2065 = vunpack.c.h.b16 %v157
    %v2066 = vunpack.c.l.b16 %v158
    %v2067 = vunpack.c.h.b16 %v158
    %v2068 = vunpack.c.l.b16 %v159
    %v2069 = vunpack.c.h.b16 %v159
    %v2070 = vunpack.c.l.b16 %v160
    %v2071 = vunpack.c.h.b16 %v160
    %v2072 = vunpack.c.l.b16 %v161
    %v2073 = vunpack.c.h.b16 %v161
    %v2074 = vunpack.c.l.b16 %v162
    %v2075 = vunpack.c.h.b16 %v162
    %v2076 = vunpack.c.l.b16 %v163
    %v2077 = vunpack.c.h.b16 %v163
    %v2078 = vunpack.c.l.b16 %v164
    %v2079 = vunpack.c.h.b16 %v164
    %v2080 = vunpack.c.l.b16 %v165
    %v2081 = vunpack.c.h.b16 %v165
    %v2082 = vunpack.c.l.b16 %v166
    %v2083 = vunpack.c.h.b16 %v166
    %v2084 = vunpack.c.l.b16 %v167
    %v2085 = vunpack.c.h.b16 %v167
    %v2086 = vunpack.c.l.b16 %v168
    %v2087 = vunpack.c.h.b16 %v168
    %v2088 = vunpack.c.l.b16 %v169
    %v2089 = vunpack.c.h.b16 %v169
    %v2090 = vunpack.c.l.b16 %v170
    %v2091 = vunpack.c.h.b16 %v170
    %v2092 = vunpack.c.l.b16 %v171
    %v2093 = vunpack.c.h.b16 %v171
    %v2094 = vunpack.c.l.b16 %v172
    %v2095 = vunpack.c.h.b16 %v172
    %v2096 = vunpack.c.l.b16 %v173
    %v2097 = vunpack.c.h.b16 %v173
    %v2098 = vunpack.c.l.b16 %v174
    %v2099 = vunpack.c.h.b16 %v174
    %v2100 = vunpack.c.l.b16 %v175
    %v2101 = vunpack.c.h.b16 %v175
    %v2102 = vunpack.c.l.b16 %v176
    %v2103 = vunpack.c.h.b16 %v176
    %v2104 = vunpack.c.l.b16 %v177
    %v2105 = vunpack.c.h.b16 %v177
    %v2106 = vunpack.c.l.b16 %v178
    %v2107 = vunpack.c.h.b16 %v178
    %v2108 = vunpack.c.l.b16 %v179
    %v2109 = vunpack.c.h.b16 %v179
    %v2110 = vunpack.c.l.b16 %v180
    %v2111 = vunpack.c.h.b16 %v180
    %v2112 = vunpack.c.l.b16 %v181
    %v2113 = vunpack.c.h.b16 %v181
    %v2114 = vunpack.c.l.b16 %v182
    %v2115 = vunpack.c.h.b16 %v182
    %v2116 = vunpack.c.l.b16 %v183
    %v2117 = vunpack.c.h.b16 %v183
    %v2118 = vunpack.c.l.b16 %v184
    %v2119 = vunpack.c.h.b16 %v184
    %v2120 = vunpack.c.l.b16 %v185
    %v2121 = vunpack.c.h.b16 %v185
    %v2122 = vunpack.c.l.b16 %v186
    %v2123 = vunpack.c.h.b16 %v186
    %v2124 = vunpack.c.l.b16 %v187
    %v2125 = vunpack.c.h.b16 %v187
    %v2126 = vunpack.c.l.b16 %v188
    %v2127 = vunpack.c.h.b16 %v188
    %v2128 = vunpack.c.l.b16 %v189
    %v2129 = vunpack.c.h.b16 %v189
    %v2130 = vunpack.c.l.b16 %v190
    %v2131 = vunpack.c.h.b16 %v190
    %v2132 = vunpack.c.l.b16 %v191
    %v2133 = vunpack.c.h.b16 %v191
    %v2134 = vunpack.c.l.b16 %v192
    %v2135 = vunpack.c.h.b16 %v192
    %v2136 = vunpack.c.l.b16 %v193
    %v2137 = vunpack.c.h.b16 %v193
    %v2138 = vunpack.c.l.b16 %v194
    %v2139 = vunpack.c.h.b16 %v194
    %v2140 = vunpack.c.l.b16 %v195
    %v2141 = vunpack.c.h.b16 %v195
    %v2142 = vunpack.c.l.b16 %v196
    %v2143 = vunpack.c.h.b16 %v196
    %v2144 = vunpack.c.l.b16 %v197
    %v2145 = vunpack.c.h.b16 %v197
    %v2146 = vunpack.c.l.b16 %v198
    %v2147 = vunpack.c.h.b16 %v198
    %v2148 = vunpack.c.l.b16 %v199
    %v2149 = vunpack.c.h.b16 %v199
    %v2150 = vunpack.c.l.b16 %v200
    %v2151 = vunpack.c.h.b16 %v200
    %v2152 = vunpack.c.l.b16 %v201
    %v2153 = vunpack.c.h.b16 %v201
    %v2154 = vunpack.c.l.b16 %v202
    %v2155 = vunpack.c.h.b16 %v202
    %v2156 = vunpack.c.l.b16 %v203
    %v2157 = vunpack.c.h.b16 %v203
    %v2158 = vunpack.c.l.b16 %v204
    %v2159 = vunpack.c.h.b16 %v204
    %v2160 = vunpack.c.l.b16 %v205
    %v2161 = vunpack.c.h.b16 %v205
    %v2162 = vunpack.c.l.b16 %v206
    %v2163 = vunpack.c.h.b16 %v206
    %v2164 = vunpack.c.l.b16 %v207
    %v2165 = vunpack.c.h.b16 %v207
    %v2166 = vunpack.c.l.b16 %v208
    %v2167 = vunpack.c.h.b16 %v208
    %v2168 = vunpack.c.l.b16 %v209
    %v2169 = vunpack.c.h.b16 %v209
    %v2170 = vunpack.c.l.b16 %v210
    %v2171 = vunpack.c.h.b16 %v210
    %v2172 = vunpack.c.l.b16 %v211
    %v2173 = vunpack.c.h.b16 %v211
    %v2174 = vunpack.c.l.b16 %v212
    %v2175 = vunpack.c.h.b16 %v212
    %v2176 = vunpack.c.l.b16 %v213
    %v2177 = vunpack.c.h.b16 %v213
    %v2178 = vunpack.c.l.b16 %v214
    %v2179 = vunpack.c.h.b16 %v214
    %v2180 = vunpack.c.l.b16 %v215
    %v2181 = vunpack.c.h.b16 %v215
    %v2182 = vunpack.c.l.b16 %v216
    %v2183 = vunpack.c.h.b16 %v216
    %v2184 = vunpack.c.l.b16 %v217
    %v2185 = vunpack.c.h.b16 %v217
    %v2186 = vunpack.c.l.b16 %v218
    %v2187 = vunpack.c.h.b16 %v218
    %v2188 = vunpack.c.l.b16 %v219
    %v2189 = vunpack.c.h.b16 %v219
    %v2190 = vunpack.c.l.b16 %v220
    %v2191 = vunpack.c.h.b16 %v220
    %v2192 = vunpack.c.l.b16 %v221
    %v2193 = vunpack.c.h.b16 %v221
    %v2194 = vunpack.c.l.b16 %v222
    %v2195 = vunpack.c.h.b16 %v222
    %v2196 = vunpack.c.l.b16 %v223
    %v2197 = vunpack.c.h.b16 %v223
    %v2198 = vunpack.c.l.b16 %v224
    %v2199 = vunpack.c.h.b16 %v224
    %v2200 = vunpack.c.l.b16 %v225
    %v2201 = vunpack.c.h.b16 %v225
    %v2202 = vunpack.c.l.b16 %v226
    %v2203 = vunpack.c.h.b16 %v226
    %v2204 = vunpack.c.l.b16 %v227
    %v2205 = vunpack.c.h.b16 %v227
    %v2206 = vunpack.c.l.b16 %v228
    %v2207 = vunpack.c.h.b16 %v228
    %v2208 = vunpack.c.l.b16 %v229
    %v2209 = vunpack.c.h.b16 %v229
    %v2210 = vunpack.c.l.b16 %v230
    %v2211 = vunpack.c.h.b16 %v230
    %v2212 = vunpack.c.l.b16 %v231
    %v2213 = vunpack.c.h.b16 %v231
    %v2214 = vunpack.c.l.b16 %v232
    %v2215 = vunpack.c.h.b16 %v232
    %v2216 = vunpack.c.l.b16 %v233
    %v2217 = vunpack.c.h.b16 %v233
    %v2218 = vunpack.c.l.b16 %v234
    %v2219 = vunpack.c.h.b16 %v234
    %v2220 = vunpack.c.l.b16 %v235
    %v2221 = vunpack.c.h.b16 %v235
    %v2222 = vunpack.c.l.b16 %v236
    %v2223 = vunpack.c.h.b16 %v236
    %v2224 = vunpack.c.l.b16 %v237
    %v2225 = vunpack.c.h.b16 %v237
    %v2226 = vunpack.c.l.b16 %v238
    %v2227 = vunpack.c.h.b16 %v238
    %v2228 = vunpack.c.l.b16 %v239
    %v2229 = vunpack.c.h.b16 %v239
    %v2230 = vunpack.c.l.b16 %v240
    %v2231 = vunpack.c.h.b16 %v240
    %v2232 = vunpack.c.l.b16 %v241
    %v2233 = vunpack.c.h.b16 %v241
    %v2234 = vunpack.c.l.b16 %v242
    %v2235 = vunpack.c.h.b16 %v242
    %v2236 = vunpack.c.l.b16 %v243
    %v2237 = vunpack.c.h.b16 %v243
    %v2238 = vunpack.c.l.b16 %v244
    %v2239 = vunpack.c.h.b16 %v244
    %v2240 = vunpack.c.l.b16 %v245
    %v2241 = vunpack.c.h.b16 %v245
    %v2242 = vunpack.c.l.b16 %v246
    %v2243 = vunpack.c.h.b16 %v246
    %v2244 = vunpack.c.l.b16 %v247
    %v2245 = vunpack.c.h.b16 %v247
    %v2246 = vunpack.c.l.b16 %v248
    %v2247 = vunpack.c.h.b16 %v248
    %v2248 = vunpack.c.l.b16 %v249
    %v2249 = vunpack.c.h.b16 %v249
    %v2250 = vunpack.c.l.b16 %v250
    %v2251 = vunpack.c.h.b16 %v250
    %v2252 = vunpack.c.l.b16 %v251
    %v2253 = vunpack.c.h.b16 %v251
    %v2254 = vunpack.c.l.b16 %v252
    %v2255 = vunpack.c.h.b16 %v252
    %v2256 = vunpack.c.l.b16 %v253
    %v2257 = vunpack.c.h.b16 %v253
    %v2258 = vunpack.c.l.b16 %v254
    %v2259 = vunpack.c.h.b16 %v254
    %v2260 = vunpack.c.l.b16 %v255
    %v2261 = vunpack.c.h.b16 %v255
    %v2262 = vunpack.c.l.b16 %v256
    %v2263 = vunpack.c.h.b16 %v256
    %v2264 = vunpack.c.l.b16 %v257
    %v2265 = vunpack.c.h.b16 %v257
    %v2266 = vunpack.c.l.b16 %v258
    %v2267 = vunpack.c.h.b16 %v258
    %v2268 = vunpack.c.l.b16 %v259
    %v2269 = vunpack.c.h.b16 %v259
    %v2270 = vunpack.c.l.b16 %v260
    %v2271 = vunpack.c.h.b16 %v260
    %v2272 = vunpack.c.l.b16 %v261
    %v2273 = vunpack.c.h.b16 %v261
    %v2274 = vunpack.c.l.b16 %v262
    %v2275 = vunpack.c.h.b16 %v262
    %v2276 = vunpack.c.l.b16 %v263
    %v2277 = vunpack.c.h.b16 %v263
    %v2278 = vunpack.c.l.b16 %v264
    %v2279 = vunpack.c.h.b16 %v264
    %v2280 = vunpack.c.l.b16 %v265
    %v2281 = vunpack.c.h.b16 %v265
    %v2282 = vunpack.c.l.b16 %v266
    %v2283 = vunpack.c.h.b16 %v266
    %v2284 = vunpack.c.l.b16 %v267
    %v2285 = vunpack.c.h.b16 %v267
    %v2286 = vunpack.c.l.b16 %v268
    %v2287 = vunpack.c.h.b16 %v268
    %v2288 = vunpack.c.l.b16 %v269
    %v2289 = vunpack.c.h.b16 %v269
    %v2290 = vunpack.c.l.b16 %v270
    %v2291 = vunpack.c.h.b16 %v270
    %v2292 = vunpack.c.l.b16 %v271
    %v2293 = vunpack.c.h.b16 %v271
    %v2294 = vunpack.c.l.b16 %v272
    %v2295 = vunpack.c.h.b16 %v272
    %v2296 = vunpack.c.l.b16 %v273
    %v2297 = vunpack.c.h.b16 %v273
    %v2298 = vunpack.c.l.b16 %v274
    %v2299 = vunpack.c.h.b16 %v274
    %v2300 = vunpack.c.l.b16 %v275
    %v2301 = vunpack.c.h.b16 %v275
    %v2302 = vunpack.c.l.b16 %v276
    %v2303 = vunpack.c.h.b16 %v276
    %v2304 = vunpack.c.l.b16 %v277
    %v2305 = vunpack.c.h.b16 %v277
    %v2306 = vunpack.c.l.b16 %v278
    %v2307 = vunpack.c.h.b16 %v278
    %v2308 = vunpack.c.l.b16 %v279
    %v2309 = vunpack.c.h.b16 %v279
    %v2310 = vunpack.c.l.b16 %v280
    %v2311 = vunpack.c.h.b16 %v280
    %v2312 = vunpack.c.l.b16 %v281
    %v2313 = vunpack.c.h.b16 %v281
    %v2314 = vunpack.c.l.b16 %v282
    %v2315 = vunpack.c.h.b16 %v282
    %v2316 = vunpack.c.l.b16 %v283
    %v2317 = vunpack.c.h.b16 %v283
    %v2318 = vunpack.c.l.b16 %v284
    %v2319 = vunpack.c.h.b16 %v284
    %v2320 = vunpack.c.l.b16 %v285
    %v2321 = vunpack.c.h.b16 %v285
    %v2322 = vunpack.c.l.b16 %v286
    %v2323 = vunpack.c.h.b16 %v286
    %v2324 = vunpack.c.l.b16 %v287
    %v2325 = vunpack.c.h.b16 %v287
    %v2326 = vunpack.c.l.b16 %v288
    %v2327 = vunpack.c.h.b16 %v288
    %v2328 = vunpack.c.l.b16 %v289
    %v2329 = vunpack.c.h.b16 %v289
    %v2330 = vunpack.c.l.b16 %v290
    %v2331 = vunpack.c.h.b16 %v290
    %v2332 = vunpack.c.l.b16 %v291
    %v2333 = vunpack.c.h.b16 %v291
    %v2334 = vunpack.c.l.b16 %v292
    %v2335 = vunpack.c.h.b16 %v292
    %v2336 = vunpack.c.l.b16 %v293
    %v2337 = vunpack.c.h.b16 %v293
    %v2338 = vunpack.c.l.b16 %v294
    %v2339 = vunpack.c.h.b16 %v294
    %v2340 = vunpack.c.l.b16 %v295
    %v2341 = vunpack.c.h.b16 %v295
    %v2342 = vunpack.c.l.b16 %v296
    %v2343 = vunpack.c.h.b16 %v296
    %v2344 = vunpack.c.l.b16 %v297
    %v2345 = vunpack.c.h.b16 %v297
    %v2346 = vunpack.c.l.b16 %v298
    %v2347 = vunpack.c.h.b16 %v298
    %v2348 = vunpack.c.l.b16 %v299
    %v2349 = vunpack.c.h.b16 %v299
    %v2350 = vunpack.c.l.b16 %v300
    %v2351 = vunpack.c.h.b16 %v300
    %v2352 = vunpack.c.l.b16 %v301
    %v2353 = vunpack.c.h.b16 %v301
    %v2354 = vunpack.c.l.b16 %v302
    %v2355 = vunpack.c.h.b16 %v302
    %v2356 = vunpack.c.l.b16 %v303
    %v2357 = vunpack.c.h.b16 %v303
    %v2358 = vunpack.c.l.b16 %v304
    %v2359 = vunpack.c.h.b16 %v304
    %v2360 = vunpack.c.l.b16 %v305
    %v2361 = vunpack.c.h.b16 %v305
    %v2362 = vunpack.c.l.b16 %v306
    %v2363 = vunpack.c.h.b16 %v306
    %v2364 = vunpack.c.l.b16 %v307
    %v2365 = vunpack.c.h.b16 %v307
    %v2366 = vunpack.c.l.b16 %v308
    %v2367 = vunpack.c.h.b16 %v308
    %v2368 = vunpack.c.l.b16 %v309
    %v2369 = vunpack.c.h.b16 %v309
    %v2370 = vunpack.c.l.b16 %v310
    %v2371 = vunpack.c.h.b16 %v310
    %v2372 = vunpack.c.l.b16 %v311
    %v2373 = vunpack.c.h.b16 %v311
    %v2374 = vunpack.c.l.b16 %v312
    %v2375 = vunpack.c.h.b16 %v312
    %v2376 = vunpack.c.l.b16 %v313
    %v2377 = vunpack.c.h.b16 %v313
    %v2378 = vunpack.c.l.b16 %v314
    %v2379 = vunpack.c.h.b16 %v314
    %v2380 = vunpack.c.l.b16 %v315
    %v2381 = vunpack.c.h.b16 %v315
    %v2382 = vunpack.c.l.b16 %v316
    %v2383 = vunpack.c.h.b16 %v316
    %v2384 = vunpack.c.l.b16 %v317
    %v2385 = vunpack.c.h.b16 %v317
    %v2386 = vunpack.c.l.b16 %v318
    %v2387 = vunpack.c.h.b16 %v318
    %v2388 = vunpack.c.l.b16 %v319
    %v2389 = vunpack.c.h.b16 %v319
    %v2390 = vunpack.c.l.b16 %v320
    %v2391 = vunpack.c.h.b16 %v320
    %v2392 = vunpack.c.l.b16 %v321
    %v2393 = vunpack.c.h.b16 %v321
    %v2394 = vunpack.c.l.b16 %v322
    %v2395 = vunpack.c.h.b16 %v322
    %v2396 = vunpack.c.l.b16 %v323
    %v2397 = vunpack.c.h.b16 %v323
    %v2398 = vunpack.c.l.b16 %v324
    %v2399 = vunpack.c.h.b16 %v324
    %v2400 = vunpack.c.l.b16 %v325
    %v2401 = vunpack.c.h.b16 %v325
    %v2402 = vunpack.c.l.b16 %v326
    %v2403 = vunpack.c.h.b16 %v326
    %v2404 = vunpack.c.l.b16 %v327
    %v2405 = vunpack.c.h.b16 %v327
    %v2406 = vunpack.c.l.b16 %v328
    %v2407 = vunpack.c.h.b16 %v328
    %v2408 = vunpack.c.l.b16 %v329
    %v2409 = vunpack.c.h.b16 %v329
    %v2410 = vunpack.c.l.b16 %v330
    %v2411 = vunpack.c.h.b16 %v330
    %v2412 = vunpack.c.l.b16 %v331
    %v2413 = vunpack.c.h.b16 %v331
    %v2414 = vunpack.c.l.b16 %v332
    %v2415 = vunpack.c.h.b16 %v332
    %v2416 = vunpack.c.l.b16 %v333
    %v2417 = vunpack.c.h.b16 %v333
    %v2418 = vunpack.c.l.b16 %v334
    %v2419 = vunpack.c.h.b16 %v334
    %v2420 = vunpack.c.l.b16 %v335
    %v2421 = vunpack.c.h.b16 %v335
    %v2422 = vunpack.c.l.b16 %v336
    %v2423 = vunpack.c.h.b16 %v336
    %v2424 = vunpack.c.l.b16 %v337
    %v2425 = vunpack.c.h.b16 %v337
    %v2426 = vunpack.c.l.b16 %v338
    %v2427 = vunpack.c.h.b16 %v338
    %v2428 = vunpack.c.l.b16 %v339
    %v2429 = vunpack.c.h.b16 %v339
    %v2430 = vunpack.c.l.b16 %v340
    %v2431 = vunpack.c.h.b16 %v340
    %v2432 = vunpack.c.l.b16 %v341
    %v2433 = vunpack.c.h.b16 %v341
    %v2434 = vunpack.c.l.b16 %v342
    %v2435 = vunpack.c.h.b16 %v342
    %v2436 = vunpack.c.l.b16 %v343
    %v2437 = vunpack.c.h.b16 %v343
    %v2438 = vunpack.c.l.b16 %v344
    %v2439 = vunpack.c.h.b16 %v344
    %v2440 = vunpack.c.l.b16 %v345
    %v2441 = vunpack.c.h.b16 %v345
    %v2442 = vunpack.c.l.b16 %v346
    %v2443 = vunpack.c.h.b16 %v346
    %v2444 = vunpack.c.l.b16 %v347
    %v2445 = vunpack.c.h.b16 %v347
    %v2446 = vunpack.c.l.b16 %v348
    %v2447 = vunpack.c.h.b16 %v348
    %v2448 = vunpack.c.l.b16 %v349
    %v2449 = vunpack.c.h.b16 %v349
    %v2450 = vunpack.c.l.b16 %v350
    %v2451 = vunpack.c.h.b16 %v350
    %v2452 = vunpack.c.l.b16 %v351
    %v2453 = vunpack.c.h.b16 %v351
    %v2454 = vunpack.c.l.b16 %v352
    %v2455 = vunpack.c.h.b16 %v352
    %v2456 = vunpack.c.l.b16 %v353
    %v2457 = vunpack.c.h.b16 %v353
    %v2458 = vunpack.c.l.b16 %v354
    %v2459 = vunpack.c.h.b16 %v354
    %v2460 = vunpack.c.l.b16 %v355
    %v2461 = vunpack.c.h.b16 %v355
    %v2462 = vunpack.c.l.b16 %v356
    %v2463 = vunpack.c.h.b16 %v356
    %v2464 = vunpack.c.l.b16 %v357
    %v2465 = vunpack.c.h.b16 %v357
    %v2466 = vunpack.c.l.b16 %v358
    %v2467 = vunpack.c.h.b16 %v358
    %v2468 = vunpack.c.l.b16 %v359
    %v2469 = vunpack.c.h.b16 %v359
    %v2470 = vunpack.c.l.b16 %v360
    %v2471 = vunpack.c.h.b16 %v360
    %v2472 = vunpack.c.l.b16 %v361
    %v2473 = vunpack.c.h.b16 %v361
    %v2474 = vunpack.c.l.b16 %v362
    %v2475 = vunpack.c.h.b16 %v362
    %v2476 = vunpack.c.l.b16 %v363
    %v2477 = vunpack.c.h.b16 %v363
    %v2478 = vunpack.c.l.b16 %v364
    %v2479 = vunpack.c.h.b16 %v364
    %v2480 = vunpack.c.l.b16 %v365
    %v2481 = vunpack.c.h.b16 %v365
    %v2482 = vunpack.c.l.b16 %v366
    %v2483 = vunpack.c.h.b16 %v366
    %v2484 = vunpack.c.l.b16 %v367
    %v2485 = vunpack.c.h.b16 %v367
    %v2486 = vunpack.c.l.b16 %v368
    %v2487 = vunpack.c.h.b16 %v368
    %v2488 = vunpack.c.l.b16 %v369
    %v2489 = vunpack.c.h.b16 %v369
    %v2490 = vunpack.c.l.b16 %v370
    %v2491 = vunpack.c.h.b16 %v370
    %v2492 = vunpack.c.l.b16 %v371
    %v2493 = vunpack.c.h.b16 %v371
    %v2494 = vunpack.c.l.b16 %v372
    %v2495 = vunpack.c.h.b16 %v372
    %v2496 = vunpack.c.l.b16 %v373
    %v2497 = vunpack.c.h.b16 %v373
    %v2498 = vunpack.c.l.b16 %v374
    %v2499 = vunpack.c.h.b16 %v374
    %v2500 = vunpack.c.l.b16 %v375
    %v2501 = vunpack.c.h.b16 %v375
    %v2502 = vunpack.c.l.b16 %v376
    %v2503 = vunpack.c.h.b16 %v376
    %v2504 = vunpack.c.l.b16 %v377
    %v2505 = vunpack.c.h.b16 %v377
    %v2506 = vunpack.c.l.b16 %v378
    %v2507 = vunpack.c.h.b16 %v378
    %v2508 = vunpack.c.l.b16 %v379
    %v2509 = vunpack.c.h.b16 %v379
    %v2510 = vunpack.c.l.b16 %v380
    %v2511 = vunpack.c.h.b16 %v380
    %v2512 = vunpack.c.l.b16 %v381
    %v2513 = vunpack.c.h.b16 %v381
    %v2514 = vunpack.c.l.b16 %v382
    %v2515 = vunpack.c.h.b16 %v382
    %v2516 = vunpack.c.l.b16 %v383
    %v2517 = vunpack.c.h.b16 %v383
    %v2518 = vunpack.c.l.b16 %v384
    %v2519 = vunpack.c.h.b16 %v384
    %v2520 = vunpack.c.l.b16 %v385
    %v2521 = vunpack.c.h.b16 %v385
    %v2522 = vunpack.c.l.b16 %v386
    %v2523 = vunpack.c.h.b16 %v386
    %v2524 = vunpack.c.l.b16 %v387
    %v2525 = vunpack.c.h.b16 %v387
    %v2526 = vunpack.c.l.b16 %v388
    %v2527 = vunpack.c.h.b16 %v388
    %v2528 = vunpack.c.l.b16 %v389
    %v2529 = vunpack.c.h.b16 %v389
    %v2530 = vunpack.c.l.b16 %v390
    %v2531 = vunpack.c.h.b16 %v390
    %v2532 = vunpack.c.l.b16 %v391
    %v2533 = vunpack.c.h.b16 %v391
    %v2534 = vunpack.c.l.b16 %v392
    %v2535 = vunpack.c.h.b16 %v392
    %v2536 = vunpack.c.l.b16 %v393
    %v2537 = vunpack.c.h.b16 %v393
    %v2538 = vunpack.c.l.b16 %v394
    %v2539 = vunpack.c.h.b16 %v394
    %v2540 = vunpack.c.l.b16 %v395
    %v2541 = vunpack.c.h.b16 %v395
    %v2542 = vunpack.c.l.b16 %v396
    %v2543 = vunpack.c.h.b16 %v396
    %v2544 = vunpack.c.l.b16 %v397
    %v2545 = vunpack.c.h.b16 %v397
    %v2546 = vunpack.c.l.b16 %v398
    %v2547 = vunpack.c.h.b16 %v398
    %v2548 = vunpack.c.l.b16 %v399
    %v2549 = vunpack.c.h.b16 %v399
    %v2550 = vunpack.c.l.b16 %v400
    %v2551 = vunpack.c.h.b16 %v400
    %v2552 = vunpack.c.l.b16 %v401
    %v2553 = vunpack.c.h.b16 %v401
    %v2554 = vunpack.c.l.b16 %v402
    %v2555 = vunpack.c.h.b16 %v402
    %v2556 = vunpack.c.l.b16 %v403
    %v2557 = vunpack.c.h.b16 %v403
    %v2558 = vunpack.c.l.b16 %v404
    %v2559 = vunpack.c.h.b16 %v404
    %v2560 = vunpack.c.l.b16 %v405
    %v2561 = vunpack.c.h.b16 %v405
    %v2562 = vunpack.c.l.b16 %v406
    %v2563 = vunpack.c.h.b16 %v406
    %v2564 = vunpack.c.l.b16 %v407
    %v2565 = vunpack.c.h.b16 %v407
    %v2566 = vunpack.c.l.b16 %v408
    %v2567 = vunpack.c.h.b16 %v408
    %v2568 = vunpack.c.l.b16 %v409
    %v2569 = vunpack.c.h.b16 %v409
    %v2570 = vunpack.c.l.b16 %v410
    %v2571 = vunpack.c.h.b16 %v410
    %v2572 = vunpack.c.l.b16 %v411
    %v2573 = vunpack.c.h.b16 %v411
    %v2574 = vunpack.c.l.b16 %v412
    %v2575 = vunpack.c.h.b16 %v412
    %v2576 = vunpack.c.l.b16 %v413
    %v2577 = vunpack.c.h.b16 %v413
    %v2578 = vunpack.c.l.b16 %v414
    %v2579 = vunpack.c.h.b16 %v414
    %v2580 = vunpack.c.l.b16 %v415
    %v2581 = vunpack.c.h.b16 %v415
    %v2582 = vunpack.c.l.b16 %v416
    %v2583 = vunpack.c.h.b16 %v416
    %v2584 = vunpack.c.l.b16 %v417
    %v2585 = vunpack.c.h.b16 %v417
    %v2586 = vunpack.c.l.b16 %v418
    %v2587 = vunpack.c.h.b16 %v418
    %v2588 = vunpack.c.l.b16 %v419
    %v2589 = vunpack.c.h.b16 %v419
    %v2590 = vunpack.c.l.b16 %v420
    %v2591 = vunpack.c.h.b16 %v420
    %v2592 = vunpack.c.l.b16 %v421
    %v2593 = vunpack.c.h.b16 %v421
    %v2594 = vunpack.c.l.b16 %v422
    %v2595 = vunpack.c.h.b16 %v422
    %v2596 = vunpack.c.l.b16 %v423
    %v2597 = vunpack.c.h.b16 %v423
    %v2598 = vunpack.c.l.b16 %v424
    %v2599 = vunpack.c.h.b16 %v424
    %v2600 = vunpack.c.l.b16 %v425
    %v2601 = vunpack.c.h.b16 %v425
    %v2602 = vunpack.c.l.b16 %v426
    %v2603 = vunpack.c.h.b16 %v426
    %v2604 = vunpack.c.l.b16 %v427
    %v2605 = vunpack.c.h.b16 %v427
    %v2606 = vunpack.c.l.b16 %v428
    %v2607 = vunpack.c.h.b16 %v428
    %v2608 = vunpack.c.l.b16 %v429
    %v2609 = vunpack.c.h.b16 %v429
    %v2610 = vunpack.c.l.b16 %v430
    %v2611 = vunpack.c.h.b16 %v430
    %v2612 = vunpack.c.l.b16 %v431
    %v2613 = vunpack.c.h.b16 %v431
    %v2614 = vunpack.c.l.b16 %v432
    %v2615 = vunpack.c.h.b16 %v432
    %v2616 = vunpack.c.l.b16 %v433
    %v2617 = vunpack.c.h.b16 %v433
    %v2618 = vunpack.c.l.b16 %v434
    %v2619 = vunpack.c.h.b16 %v434
    %v2620 = vunpack.c.l.b16 %v435
    %v2621 = vunpack.c.h.b16 %v435
    %v2622 = vunpack.c.l.b16 %v436
    %v2623 = vunpack.c.h.b16 %v436
    %v2624 = vunpack.c.l.b16 %v437
    %v2625 = vunpack.c.h.b16 %v437
    %v2626 = vunpack.c.l.b16 %v438
    %v2627 = vunpack.c.h.b16 %v438
    %v2628 = vunpack.c.l.b16 %v439
    %v2629 = vunpack.c.h.b16 %v439
    %v2630 = vunpack.c.l.b16 %v440
    %v2631 = vunpack.c.h.b16 %v440
    %v2632 = vunpack.c.l.b16 %v441
    %v2633 = vunpack.c.h.b16 %v441
    %v2634 = vunpack.c.l.b16 %v442
    %v2635 = vunpack.c.h.b16 %v442
    %v2636 = vunpack.c.l.b16 %v443
    %v2637 = vunpack.c.h.b16 %v443
    %v2638 = vunpack.c.l.b16 %v444
    %v2639 = vunpack.c.h.b16 %v444
    %v2640 = vunpack.c.l.b16 %v445
    %v2641 = vunpack.c.h.b16 %v445
    %v2642 = vunpack.c.l.b16 %v446
    %v2643 = vunpack.c.h.b16 %v446
    %v2644 = vunpack.c.l.b16 %v447
    %v2645 = vunpack.c.h.b16 %v447
    %v2646 = vunpack.c.l.b16 %v448
    %v2647 = vunpack.c.h.b16 %v448
    %v2648 = vunpack.c.l.b16 %v449
    %v2649 = vunpack.c.h.b16 %v449
    %v2650 = vunpack.c.l.b16 %v450
    %v2651 = vunpack.c.h.b16 %v450
    %v2652 = vunpack.c.l.b16 %v451
    %v2653 = vunpack.c.h.b16 %v451
    %v2654 = vunpack.c.l.b16 %v452
    %v2655 = vunpack.c.h.b16 %v452
    %v2656 = vunpack.c.l.b16 %v453
    %v2657 = vunpack.c.h.b16 %v453
    %v2658 = vunpack.c.l.b16 %v454
    %v2659 = vunpack.c.h.b16 %v454
    %v2660 = vunpack.c.l.b16 %v455
    %v2661 = vunpack.c.h.b16 %v455
    %v2662 = vunpack.c.l.b16 %v456
    %v2663 = vunpack.c.h.b16 %v456
    %v2664 = vunpack.c.l.b16 %v457
    %v2665 = vunpack.c.h.b16 %v457
    %v2666 = vunpack.c.l.b16 %v458
    %v2667 = vunpack.c.h.b16 %v458
    %v2668 = vunpack.c.l.b16 %v459
    %v2669 = vunpack.c.h.b16 %v459
    %v2670 = vunpack.c.l.b16 %v460
    %v2671 = vunpack.c.h.b16 %v460
    %v2672 = vunpack.c.l.b16 %v461
    %v2673 = vunpack.c.h.b16 %v461
    %v2674 = vunpack.c.l.b16 %v462
    %v2675 = vunpack.c.h.b16 %v462
    %v2676 = vunpack.c.l.b16 %v463
    %v2677 = vunpack.c.h.b16 %v463
    %v2678 = vunpack.c.l.b16 %v464
    %v2679 = vunpack.c.h.b16 %v464
    %v2680 = vunpack.c.l.b16 %v465
    %v2681 = vunpack.c.h.b16 %v465
    %v2682 = vunpack.c.l.b16 %v466
    %v2683 = vunpack.c.h.b16 %v466
    %v2684 = vunpack.c.l.b16 %v467
    %v2685 = vunpack.c.h.b16 %v467
    %v2686 = vunpack.c.l.b16 %v468
    %v2687 = vunpack.c.h.b16 %v468
    %v2688 = vunpack.c.l.b16 %v469
    %v2689 = vunpack.c.h.b16 %v469
    %v2690 = vunpack.c.l.b16 %v470
    %v2691 = vunpack.c.h.b16 %v470
    %v2692 = vunpack.c.l.b16 %v471
    %v2693 = vunpack.c.h.b16 %v471
    %v2694 = vunpack.c.l.b16 %v472
    %v2695 = vunpack.c.h.b16 %v472
    %v2696 = vunpack.c.l.b16 %v473
    %v2697 = vunpack.c.h.b16 %v473
    %v2698 = vunpack.c.l.b16 %v474
    %v2699 = vunpack.c.h.b16 %v474
    %v2700 = vunpack.c.l.b16 %v475
    %v2701 = vunpack.c.h.b16 %v475
    %v2702 = vunpack.c.l.b16 %v476
    %v2703 = vunpack.c.h.b16 %v476
    %v2704 = vunpack.c.l.b16 %v477
    %v2705 = vunpack.c.h.b16 %v477
    %v2706 = vunpack.c.l.b16 %v478
    %v2707 = vunpack.c.h.b16 %v478
    %v2708 = vunpack.c.l.b16 %v479
    %v2709 = vunpack.c.h.b16 %v479
    %v2710 = vunpack.c.l.b16 %v480
    %v2711 = vunpack.c.h.b16 %v480
    %v2712 = vunpack.c.l.b16 %v481
    %v2713 = vunpack.c.h.b16 %v481
    %v2714 = vunpack.c.l.b16 %v482
    %v2715 = vunpack.c.h.b16 %v482
    %v2716 = vunpack.c.l.b16 %v483
    %v2717 = vunpack.c.h.b16 %v483
    %v2718 = vunpack.c.l.b16 %v484
    %v2719 = vunpack.c.h.b16 %v484
    %v2720 = vunpack.c.l.b16 %v485
    %v2721 = vunpack.c.h.b16 %v485
    %v2722 = vunpack.c.l.b16 %v486
    %v2723 = vunpack.c.h.b16 %v486
    %v2724 = vunpack.c.l.b16 %v487
    %v2725 = vunpack.c.h.b16 %v487
    %v2726 = vunpack.c.l.b16 %v488
    %v2727 = vunpack.c.h.b16 %v488
    %v2728 = vunpack.c.l.b16 %v489
    %v2729 = vunpack.c.h.b16 %v489
    %v2730 = vunpack.c.l.b16 %v490
    %v2731 = vunpack.c.h.b16 %v490
    %v2732 = vunpack.c.l.b16 %v491
    %v2733 = vunpack.c.h.b16 %v491
    %v2734 = vunpack.c.l.b16 %v492
    %v2735 = vunpack.c.h.b16 %v492
    %v2736 = vunpack.c.l.b16 %v493
    %v2737 = vunpack.c.h.b16 %v493
    %v2738 = vunpack.c.l.b16 %v494
    %v2739 = vunpack.c.h.b16 %v494
    %v2740 = vunpack.c.l.b16 %v495
    %v2741 = vunpack.c.h.b16 %v495
    %v2742 = vunpack.c.l.b16 %v496
    %v2743 = vunpack.c.h.b16 %v496
    %v2744 = vunpack.c.l.b16 %v497
    %v2745 = vunpack.c.h.b16 %v497
    %v2746 = vunpack.c.l.b16 %v498
    %v2747 = vunpack.c.h.b16 %v498
    %v2748 = vunpack.c.l.b16 %v499
    %v2749 = vunpack.c.h.b16 %v499
    %v2750 = vunpack.c.l.b16 %v500
    %v2751 = vunpack.c.h.b16 %v500
    %v2752 = vunpack.c.l.b16 %v501
    %v2753 = vunpack.c.h.b16 %v501
    %v2754 = vunpack.c.l.b16 %v502
    %v2755 = vunpack.c.h.b16 %v502
    %v2756 = vunpack.c.l.b16 %v503
    %v2757 = vunpack.c.h.b16 %v503
    %v2758 = vunpack.c.l.b16 %v504
    %v2759 = vunpack.c.h.b16 %v504
    %v2760 = vunpack.c.l.b16 %v505
    %v2761 = vunpack.c.h.b16 %v505
    %v2762 = vunpack.c.l.b16 %v506
    %v2763 = vunpack.c.h.b16 %v506
    %v2764 = vunpack.c.l.b16 %v507
    %v2765 = vunpack.c.h.b16 %v507
    %v2766 = vunpack.c.l.b16 %v508
    %v2767 = vunpack.c.h.b16 %v508
    %v2768 = vunpack.c.l.b16 %v509
    %v2769 = vunpack.c.h.b16 %v509
    %v2770 = vunpack.c.l.b16 %v510
    %v2771 = vunpack.c.h.b16 %v510
    %v2772 = vunpack.c.l.b16 %v511
    %v2773 = vunpack.c.h.b16 %v511
    %v2774 = vunpack.c.l.b16 %v512
    %v2775 = vunpack.c.h.b16 %v512
    %v2776 = vunpack.c.l.b16 %v513
    %v2777 = vunpack.c.h.b16 %v513
    %v2778 = vunpack.c.l.b16 %v514
    %v2779 = vunpack.c.h.b16 %v514
    %v2780 = vunpack.c.l.b16 %v515
    %v2781 = vunpack.c.h.b16 %v515
    %v2782 = vunpack.c.l.b16 %v516
    %v2783 = vunpack.c.h.b16 %v516
    %v2784 = vunpack.c.l.b16 %v517
    %v2785 = vunpack.c.h.b16 %v517
    %v2786 = vunpack.c.l.b16 %v518
    %v2787 = vunpack.c.h.b16 %v518
    %v2788 = vunpack.c.l.b16 %v519
    %v2789 = vunpack.c.h.b16 %v519
    %v2790 = vunpack.c.l.b16 %v520
    %v2791 = vunpack.c.h.b16 %v520
    %v2792 = vunpack.c.l.b16 %v521
    %v2793 = vunpack.c.h.b16 %v521
    %v2794 = vunpack.c.l.b16 %v522
    %v2795 = vunpack.c.h.b16 %v522
    %v2796 = vunpack.c.l.b16 %v523
    %v2797 = vunpack.c.h.b16 %v523
    %v2798 = vunpack.c.l.b16 %v524
    %v2799 = vunpack.c.h.b16 %v524
    %v2800 = vunpack.c.l.b16 %v525
    %v2801 = vunpack.c.h.b16 %v525
    %v2802 = vunpack.c.l.b16 %v526
    %v2803 = vunpack.c.h.b16 %v526
    %v2804 = vunpack.c.l.b16 %v527
    %v2805 = vunpack.c.h.b16 %v527
    %v2806 = vunpack.c.l.b16 %v528
    %v2807 = vunpack.c.h.b16 %v528
    %v2808 = vunpack.c.l.b16 %v529
    %v2809 = vunpack.c.h.b16 %v529
    %v2810 = vunpack.c.l.b16 %v530
    %v2811 = vunpack.c.h.b16 %v530
    %v2812 = vunpack.c.l.b16 %v531
    %v2813 = vunpack.c.h.b16 %v531
    %v2814 = vunpack.c.l.b16 %v532
    %v2815 = vunpack.c.h.b16 %v532
    %v2816 = vunpack.c.l.b16 %v533
    %v2817 = vunpack.c.h.b16 %v533
    %v2818 = vunpack.c.l.b16 %v534
    %v2819 = vunpack.c.h.b16 %v534
    %v2820 = vunpack.c.l.b16 %v535
    %v2821 = vunpack.c.h.b16 %v535
    %v2822 = vunpack.c.l.b16 %v536
    %v2823 = vunpack.c.h.b16 %v536
    %v2824 = vunpack.c.l.b16 %v537
    %v2825 = vunpack.c.h.b16 %v537
    %v2826 = vunpack.c.l.b16 %v538
    %v2827 = vunpack.c.h.b16 %v538
    %v2828 = vunpack.c.l.b16 %v539
    %v2829 = vunpack.c.h.b16 %v539
    %v2830 = vunpack.c.l.b16 %v540
    %v2831 = vunpack.c.h.b16 %v540
    %v2832 = vunpack.c.l.b16 %v541
    %v2833 = vunpack.c.h.b16 %v541
    %v2834 = vunpack.c.l.b16 %v542
    %v2835 = vunpack.c.h.b16 %v542
    %v2836 = vunpack.c.l.b16 %v543
    %v2837 = vunpack.c.h.b16 %v543
    %v2838 = vunpack.c.l.b16 %v544
    %v2839 = vunpack.c.h.b16 %v544
    %v2840 = vunpack.c.l.b16 %v545
    %v2841 = vunpack.c.h.b16 %v545
    %v2842 = vunpack.c.l.b16 %v546
    %v2843 = vunpack.c.h.b16 %v546
    %v2844 = vunpack.c.l.b16 %v547
    %v2845 = vunpack.c.h.b16 %v547
    %v2846 = vunpack.c.l.b16 %v548
    %v2847 = vunpack.c.h.b16 %v548
    %v2848 = vunpack.c.l.b16 %v549
    %v2849 = vunpack.c.h.b16 %v549
    %v2850 = vunpack.c.l.b16 %v550
    %v2851 = vunpack.c.h.b16 %v550
    %v2852 = vunpack.c.l.b16 %v551
    %v2853 = vunpack.c.h.b16 %v551
    %v2854 = vunpack.c.l.b16 %v552
    %v2855 = vunpack.c.h.b16 %v552
    %v2856 = vunpack.c.l.b16 %v553
    %v2857 = vunpack.c.h.b16 %v553
    %v2858 = vunpack.c.l.b16 %v554
    %v2859 = vunpack.c.h.b16 %v554
    %v2860 = vunpack.c.l.b16 %v555
    %v2861 = vunpack.c.h.b16 %v555
    %v2862 = vunpack.c.l.b16 %v556
    %v2863 = vunpack.c.h.b16 %v556
    %v2864 = vunpack.c.l.b16 %v557
    %v2865 = vunpack.c.h.b16 %v557
    %v2866 = vunpack.c.l.b16 %v558
    %v2867 = vunpack.c.h.b16 %v558
    %v2868 = vunpack.c.l.b16 %v559
    %v2869 = vunpack.c.h.b16 %v559
    %v2870 = vunpack.c.l.b16 %v560
    %v2871 = vunpack.c.h.b16 %v560
    %v2872 = vunpack.c.l.b16 %v561
    %v2873 = vunpack.c.h.b16 %v561
    %v2874 = vunpack.c.l.b16 %v562
    %v2875 = vunpack.c.h.b16 %v562
    %v2876 = vunpack.c.l.b16 %v563
    %v2877 = vunpack.c.h.b16 %v563
    %v2878 = vunpack.c.l.b16 %v564
    %v2879 = vunpack.c.h.b16 %v564
    %v2880 = vunpack.c.l.b16 %v565
    %v2881 = vunpack.c.h.b16 %v565
    %v2882 = vunpack.c.l.b16 %v566
    %v2883 = vunpack.c.h.b16 %v566
    %v2884 = vunpack.c.l.b16 %v567
    %v2885 = vunpack.c.h.b16 %v567
    %v2886 = vunpack.c.l.b16 %v568
    %v2887 = vunpack.c.h.b16 %v568
    %v2888 = vunpack.c.l.b16 %v569
    %v2889 = vunpack.c.h.b16 %v569
    %v2890 = vunpack.c.l.b16 %v570
    %v2891 = vunpack.c.h.b16 %v570
    %v2892 = vunpack.c.l.b16 %v571
    %v2893 = vunpack.c.h.b16 %v571
    %v2894 = vunpack.c.l.b16 %v572
    %v2895 = vunpack.c.h.b16 %v572
    %v2896 = vunpack.c.l.b16 %v573
    %v2897 = vunpack.c.h.b16 %v573
    %v2898 = vunpack.c.l.b16 %v574
    %v2899 = vunpack.c.h.b16 %v574
    %v2900 = vunpack.c.l.b16 %v575
    %v2901 = vunpack.c.h.b16 %v575
    %v2902 = vunpack.c.l.b16 %v576
    %v2903 = vunpack.c.h.b16 %v576
    %v2904 = vunpack.c.l.b16 %v577
    %v2905 = vunpack.c.h.b16 %v577
    %v2906 = vunpack.c.l.b16 %v578
    %v2907 = vunpack.c.h.b16 %v578
    %v2908 = vunpack.c.l.b16 %v579
    %v2909 = vunpack.c.h.b16 %v579
    %v2910 = vunpack.c.l.b16 %v580
    %v2911 = vunpack.c.h.b16 %v580
    %v2912 = vunpack.c.l.b16 %v581
    %v2913 = vunpack.c.h.b16 %v581
    %v2914 = vunpack.c.l.b16 %v582
    %v2915 = vunpack.c.h.b16 %v582
    %v2916 = vunpack.c.l.b16 %v583
    %v2917 = vunpack.c.h.b16 %v583
    %v2918 = vunpack.c.l.b16 %v584
    %v2919 = vunpack.c.h.b16 %v584
    %v2920 = vunpack.c.l.b16 %v585
    %v2921 = vunpack.c.h.b16 %v585
    %v2922 = vunpack.c.l.b16 %v586
    %v2923 = vunpack.c.h.b16 %v586
    %v2924 = vunpack.c.l.b16 %v587
    %v2925 = vunpack.c.h.b16 %v587
    %v2926 = vunpack.c.l.b16 %v588
    %v2927 = vunpack.c.h.b16 %v588
    %v2928 = vunpack.c.l.b16 %v589
    %v2929 = vunpack.c.h.b16 %v589
    %v2930 = vunpack.c.l.b16 %v590
    %v2931 = vunpack.c.h.b16 %v590
    %v2932 = vunpack.c.l.b16 %v591
    %v2933 = vunpack.c.h.b16 %v591
    %v2934 = vunpack.c.l.b16 %v592
    %v2935 = vunpack.c.h.b16 %v592
    %v2936 = vunpack.c.l.b16 %v593
    %v2937 = vunpack.c.h.b16 %v593
    %v2938 = vunpack.c.l.b16 %v594
    %v2939 = vunpack.c.h.b16 %v594
    %v2940 = vunpack.c.l.b16 %v595
    %v2941 = vunpack.c.h.b16 %v595
    %v2942 = vunpack.c.l.b16 %v596
    %v2943 = vunpack.c.h.b16 %v596
    %v2944 = vunpack.c.l.b16 %v597
    %v2945 = vunpack.c.h.b16 %v597
    %v2946 = vunpack.c.l.b16 %v598
    %v2947 = vunpack.c.h.b16 %v598
    %v2948 = vunpack.c.l.b16 %v599
    %v2949 = vunpack.c.h.b16 %v599
    %v2950 = vunpack.c.l.b16 %v600
    %v2951 = vunpack.c.h.b16 %v600
    %v2952 = vunpack.c.l.b16 %v601
    %v2953 = vunpack.c.h.b16 %v601
    %v2954 = vunpack.c.l.b16 %v602
    %v2955 = vunpack.c.h.b16 %v602
    %v2956 = vunpack.c.l.b16 %v603
    %v2957 = vunpack.c.h.b16 %v603
    %v2958 = vunpack.c.l.b16 %v604
    %v2959 = vunpack.c.h.b16 %v604
    %v2960 = vunpack.c.l.b16 %v605
    %v2961 = vunpack.c.h.b16 %v605
    %v2962 = vunpack.c.l.b16 %v606
    %v2963 = vunpack.c.h.b16 %v606
    %v2964 = vunpack.c.l.b16 %v607
    %v2965 = vunpack.c.h.b16 %v607
    %v2966 = vunpack.c.l.b16 %v608
    %v2967 = vunpack.c.h.b16 %v608
    %v2968 = vunpack.c.l.b16 %v609
    %v2969 = vunpack.c.h.b16 %v609
    %v2970 = vunpack.c.l.b16 %v610
    %v2971 = vunpack.c.h.b16 %v610
    %v2972 = vunpack.c.l.b16 %v611
    %v2973 = vunpack.c.h.b16 %v611
    %v2974 = vunpack.c.l.b16 %v612
    %v2975 = vunpack.c.h.b16 %v612
    %v2976 = vunpack.c.l.b16 %v613
    %v2977 = vunpack.c.h.b16 %v613
    %v2978 = vunpack.c.l.b16 %v614
    %v2979 = vunpack.c.h.b16 %v614
    %v2980 = vunpack.c.l.b16 %v615
    %v2981 = vunpack.c.h.b16 %v615
    %v2982 = vunpack.c.l.b16 %v616
    %v2983 = vunpack.c.h.b16 %v616
    %v2984 = vunpack.c.l.b16 %v617
    %v2985 = vunpack.c.h.b16 %v617
    %v2986 = vunpack.c.l.b16 %v618
    %v2987 = vunpack.c.h.b16 %v618
    %v2988 = vunpack.c.l.b16 %v619
    %v2989 = vunpack.c.h.b16 %v619
    %v2990 = vunpack.c.l.b16 %v620
    %v2991 = vunpack.c.h.b16 %v620
    %v2992 = vunpack.c.l.b16 %v621
    %v2993 = vunpack.c.h.b16 %v621
    %v2994 = vunpack.c.l.b16 %v622
    %v2995 = vunpack.c.h.b16 %v622
    %v2996 = vunpack.c.l.b16 %v623
    %v2997 = vunpack.c.h.b16 %v623
    %v2998 = vunpack.c.l.b16 %v624
    %v2999 = vunpack.c.h.b16 %v624
    %v3000 = vunpack.c.l.b16 %v625
    %v3001 = vunpack.c.h.b16 %v625
    %v3002 = vunpack.c.l.b16 %v626
    %v3003 = vunpack.c.h.b16 %v626
    %v3004 = vunpack.c.l.b16 %v627
    %v3005 = vunpack.c.h.b16 %v627
    %v3006 = vunpack.c.l.b16 %v628
    %v3007 = vunpack.c.h.b16 %v628
    %v3008 = vunpack.c.l.b16 %v629
    %v3009 = vunpack.c.h.b16 %v629
    %v3010 = vunpack.c.l.b16 %v630
    %v3011 = vunpack.c.h.b16 %v630
    %v3012 = vunpack.c.l.b16 %v631
    %v3013 = vunpack.c.h.b16 %v631
    %v3014 = vunpack.c.l.b16 %v632
    %v3015 = vunpack.c.h.b16 %v632
    %v3016 = vunpack.c.l.b16 %v633
    %v3017 = vunpack.c.h.b16 %v633
    %v3018 = vunpack.c.l.b16 %v634
    %v3019 = vunpack.c.h.b16 %v634
    %v3020 = vunpack.c.l.b16 %v635
    %v3021 = vunpack.c.h.b16 %v635
    %v3022 = vunpack.c.l.b16 %v636
    %v3023 = vunpack.c.h.b16 %v636
    %v3024 = vunpack.c.l.b16 %v637
    %v3025 = vunpack.c.h.b16 %v637
    %v3026 = vunpack.c.l.b16 %v638
    %v3027 = vunpack.c.h.b16 %v638
    %v3028 = vunpack.c.l.b16 %v639
    %v3029 = vunpack.c.h.b16 %v639
    %v3030 = vunpack.c.l.b16 %v640
    %v3031 = vunpack.c.h.b16 %v640
    %v3032 = vunpack.c.l.b16 %v641
    %v3033 = vunpack.c.h.b16 %v641
    %v3034 = vunpack.c.l.b16 %v642
    %v3035 = vunpack.c.h.b16 %v642
    %v3036 = vunpack.c.l.b16 %v643
    %v3037 = vunpack.c.h.b16 %v643
    %v3038 = vunpack.c.l.b16 %v644
    %v3039 = vunpack.c.h.b16 %v644
    %v3040 = vunpack.c.l.b16 %v645
    %v3041 = vunpack.c.h.b16 %v645
    %v3042 = vunpack.c.l.b16 %v646
    %v3043 = vunpack.c.h.b16 %v646
    %v3044 = vunpack.c.l.b16 %v647
    %v3045 = vunpack.c.h.b16 %v647
    %v3046 = vunpack.c.l.b16 %v648
    %v3047 = vunpack.c.h.b16 %v648
    %v3048 = vunpack.c.l.b16 %v649
    %v3049 = vunpack.c.h.b16 %v649
    %v3050 = vunpack.c.l.b16 %v650
    %v3051 = vunpack.c.h.b16 %v650
    %v3052 = vunpack.c.l.b16 %v651
    %v3053 = vunpack.c.h.b16 %v651
    %v3054 = vunpack.c.l.b16 %v652
    %v3055 = vunpack.c.h.b16 %v652
    %v3056 = vunpack.c.l.b16 %v653
    %v3057 = vunpack.c.h.b16 %v653
    %v3058 = vunpack.c.l.b16 %v654
    %v3059 = vunpack.c.h.b16 %v654
    %v3060 = vunpack.c.l.b16 %v655
    %v3061 = vunpack.c.h.b16 %v655
    %v3062 = vunpack.c.l.b16 %v656
    %v3063 = vunpack.c.h.b16 %v656
    %v3064 = vunpack.c.l.b16 %v657
    %v3065 = vunpack.c.h.b16 %v657
    %v3066 = vunpack.c.l.b16 %v658
    %v3067 = vunpack.c.h.b16 %v658
    %v3068 = vunpack.c.l.b16 %v659
    %v3069 = vunpack.c.h.b16 %v659
    %v3070 = vunpack.c.l.b16 %v660
    %v3071 = vunpack.c.h.b16 %v660
    %v3072 = vunpack.c.l.b16 %v661
    %v3073 = vunpack.c.h.b16 %v661
    %v3074 = vunpack.c.l.b16 %v662
    %v3075 = vunpack.c.h.b16 %v662
    %v3076 = vunpack.c.l.b16 %v663
    %v3077 = vunpack.c.h.b16 %v663
    %v3078 = vunpack.c.l.b16 %v664
    %v3079 = vunpack.c.h.b16 %v664
    %v3080 = vunpack.c.l.b16 %v665
    %v3081 = vunpack.c.h.b16 %v665
    %v3082 = vunpack.c.l.b16 %v666
    %v3083 = vunpack.c.h.b16 %v666
    %v3084 = vunpack.c.l.b16 %v667
    %v3085 = vunpack.c.h.b16 %v667
    %v3086 = vunpack.c.l.b16 %v668
    %v3087 = vunpack.c.h.b16 %v668
    %v3088 = vunpack.c.l.b16 %v669
    %v3089 = vunpack.c.h.b16 %v669
    %v3090 = vunpack.c.l.b16 %v670
    %v3091 = vunpack.c.h.b16 %v670
    %v3092 = vunpack.c.l.b16 %v671
    %v3093 = vunpack.c.h.b16 %v671
    %v3094 = vunpack.c.l.b16 %v672
    %v3095 = vunpack.c.h.b16 %v672
    %v3096 = vunpack.c.l.b16 %v673
    %v3097 = vunpack.c.h.b16 %v673
    %v3098 = vunpack.c.l.b16 %v674
    %v3099 = vunpack.c.h.b16 %v674
    %v3100 = vunpack.c.l.b16 %v675
    %v3101 = vunpack.c.h.b16 %v675
    %v3102 = vunpack.c.l.b16 %v676
    %v3103 = vunpack.c.h.b16 %v676
    %v3104 = vunpack.c.l.b16 %v677
    %v3105 = vunpack.c.h.b16 %v677
    %v3106 = vunpack.c.l.b16 %v678
    %v3107 = vunpack.c.h.b16 %v678
    %v3108 = vunpack.c.l.b16 %v679
    %v3109 = vunpack.c.h.b16 %v679
    %v3110 = vunpack.c.l.b16 %v680
    %v3111 = vunpack.c.h.b16 %v680
    %v3112 = vunpack.c.l.b16 %v681
    %v3113 = vunpack.c.h.b16 %v681
    %v3114 = vunpack.c.l.b16 %v682
    %v3115 = vunpack.c.h.b16 %v682
    %v3116 = vunpack.c.l.b16 %v683
    %v3117 = vunpack.c.h.b16 %v683
    %v3118 = vunpack.c.l.b16 %v684
    %v3119 = vunpack.c.h.b16 %v684
    %v3120 = vunpack.c.l.b16 %v685
    %v3121 = vunpack.c.h.b16 %v685
    %v3122 = vunpack.c.l.b16 %v686
    %v3123 = vunpack.c.h.b16 %v686
    %v3124 = vunpack.c.l.b16 %v687
    %v3125 = vunpack.c.h.b16 %v687
    %v3126 = vunpack.c.l.b16 %v688
    %v3127 = vunpack.c.h.b16 %v688
    %v3128 = vunpack.c.l.b16 %v689
    %v3129 = vunpack.c.h.b16 %v689
    %v3130 = vunpack.c.l.b16 %v690
    %v3131 = vunpack.c.h.b16 %v690
    %v3132 = vunpack.c.l.b16 %v691
    %v3133 = vunpack.c.h.b16 %v691
    %v3134 = vunpack.c.l.b16 %v692
    %v3135 = vunpack.c.h.b16 %v692
    %v3136 = vunpack.c.l.b16 %v693
    %v3137 = vunpack.c.h.b16 %v693
    %v3138 = vunpack.c.l.b16 %v694
    %v3139 = vunpack.c.h.b16 %v694
    %v3140 = vunpack.c.l.b16 %v695
    %v3141 = vunpack.c.h.b16 %v695
    %v3142 = vunpack.c.l.b16 %v696
    %v3143 = vunpack.c.h.b16 %v696
    %v3144 = vunpack.c.l.b16 %v697
    %v3145 = vunpack.c.h.b16 %v697
    %v3146 = vunpack.c.l.b16 %v698
    %v3147 = vunpack.c.h.b16 %v698
    %v3148 = vunpack.c.l.b16 %v699
    %v3149 = vunpack.c.h.b16 %v699
    %v3150 = vunpack.c.l.b16 %v700
    %v3151 = vunpack.c.h.b16 %v700
    %v3152 = vunpack.c.l.b16 %v701
    %v3153 = vunpack.c.h.b16 %v701
    %v3154 = vunpack.c.l.b16 %v702
    %v3155 = vunpack.c.h.b16 %v702
    %v3156 = vunpack.c.l.b16 %v703
    %v3157 = vunpack.c.h.b16 %v703
    %v3158 = vunpack.c.l.b16 %v704
    %v3159 = vunpack.c.h.b16 %v704
    %v3160 = vunpack.c.l.b16 %v705
    %v3161 = vunpack.c.h.b16 %v705
    %v3162 = vunpack.c.l.b16 %v706
    %v3163 = vunpack.c.h.b16 %v706
    %v3164 = vunpack.c.l.b16 %v707
    %v3165 = vunpack.c.h.b16 %v707
    %v3166 = vunpack.c.l.b16 %v708
    %v3167 = vunpack.c.h.b16 %v708
    %v3168 = vunpack.c.l.b16 %v709
    %v3169 = vunpack.c.h.b16 %v709
    %v3170 = vunpack.c.l.b16 %v710
    %v3171 = vunpack.c.h.b16 %v710
    %v3172 = vunpack.c.l.b16 %v711
    %v3173 = vunpack.c.h.b16 %v711
    %v3174 = vunpack.c.l.b16 %v712
    %v3175 = vunpack.c.h.b16 %v712
    %v3176 = vunpack.c.l.b16 %v713
    %v3177 = vunpack.c.h.b16 %v713
    %v3178 = vunpack.c.l.b16 %v714
    %v3179 = vunpack.c.h.b16 %v714
    %v3180 = vunpack.c.l.b16 %v715
    %v3181 = vunpack.c.h.b16 %v715
    %v3182 = vunpack.c.l.b16 %v716
    %v3183 = vunpack.c.h.b16 %v716
    %v3184 = vunpack.c.l.b16 %v717
    %v3185 = vunpack.c.h.b16 %v717
    %v3186 = vunpack.c.l.b16 %v718
    %v3187 = vunpack.c.h.b16 %v718
    %v3188 = vunpack.c.l.b16 %v719
    %v3189 = vunpack.c.h.b16 %v719
    %v3190 = vunpack.c.l.b16 %v720
    %v3191 = vunpack.c.h.b16 %v720
    %v3192 = vunpack.c.l.b16 %v721
    %v3193 = vunpack.c.h.b16 %v721
    %v3194 = vunpack.c.l.b16 %v722
    %v3195 = vunpack.c.h.b16 %v722
    %v3196 = vunpack.c.l.b16 %v723
    %v3197 = vunpack.c.h.b16 %v723
    %v3198 = vunpack.c.l.b16 %v724
    %v3199 = vunpack.c.h.b16 %v724
    %v3200 = vunpack.c.l.b16 %v725
    %v3201 = vunpack.c.h.b16 %v725
    %v3202 = vunpack.c.l.b16 %v726
    %v3203 = vunpack.c.h.b16 %v726
    %v3204 = vunpack.c.l.b16 %v727
    %v3205 = vunpack.c.h.b16 %v727
    %v3206 = vunpack.c.l.b16 %v728
    %v3207 = vunpack.c.h.b16 %v728
    %v3208 = vunpack.c.l.b16 %v729
    %v3209 = vunpack.c.h.b16 %v729
    %v3210 = vunpack.c.l.b16 %v730
    %v3211 = vunpack.c.h.b16 %v730
    %v3212 = vunpack.c.l.b16 %v731
    %v3213 = vunpack.c.h.b16 %v731
    %v3214 = vunpack.c.l.b16 %v732
    %v3215 = vunpack.c.h.b16 %v732
    %v3216 = vunpack.c.l.b16 %v733
    %v3217 = vunpack.c.h.b16 %v733
    %v3218 = vunpack.c.l.b16 %v734
    %v3219 = vunpack.c.h.b16 %v734
    %v3220 = vunpack.c.l.b16 %v735
    %v3221 = vunpack.c.h.b16 %v735
    %v3222 = vunpack.c.l.b16 %v736
    %v3223 = vunpack.c.h.b16 %v736
    %v3224 = vunpack.c.l.b16 %v737
    %v3225 = vunpack.c.h.b16 %v737
    %v3226 = vunpack.c.l.b16 %v738
    %v3227 = vunpack.c.h.b16 %v738
    %v3228 = vunpack.c.l.b16 %v739
    %v3229 = vunpack.c.h.b16 %v739
    %v3230 = vunpack.c.l.b16 %v740
    %v3231 = vunpack.c.h.b16 %v740
    %v3232 = vunpack.c.l.b16 %v741
    %v3233 = vunpack.c.h.b16 %v741
    %v3234 = vunpack.c.l.b16 %v742
    %v3235 = vunpack.c.h.b16 %v742
    %v3236 = vunpack.c.l.b16 %v743
    %v3237 = vunpack.c.h.b16 %v743
    %v3238 = vunpack.c.l.b16 %v744
    %v3239 = vunpack.c.h.b16 %v744
    %v3240 = vunpack.c.l.b16 %v745
    %v3241 = vunpack.c.h.b16 %v745
    %v3242 = vunpack.c.l.b16 %v746
    %v3243 = vunpack.c.h.b16 %v746
    %v3244 = vunpack.c.l.b16 %v747
    %v3245 = vunpack.c.h.b16 %v747
    %v3246 = vunpack.c.l.b16 %v748
    %v3247 = vunpack.c.h.b16 %v748
    %v3248 = vunpack.c.l.b16 %v749
    %v3249 = vunpack.c.h.b16 %v749
    %v3250 = vunpack.c.l.b16 %v750
    %v3251 = vunpack.c.h.b16 %v750
    %v3252 = vunpack.c.l.b16 %v751
    %v3253 = vunpack.c.h.b16 %v751
    %v3254 = vunpack.c.l.b16 %v752
    %v3255 = vunpack.c.h.b16 %v752
    %v3256 = vunpack.c.l.b16 %v753
    %v3257 = vunpack.c.h.b16 %v753
    %v3258 = vunpack.c.l.b16 %v754
    %v3259 = vunpack.c.h.b16 %v754
    %v3260 = vunpack.c.l.b16 %v755
    %v3261 = vunpack.c.h.b16 %v755
    %v3262 = vunpack.c.l.b16 %v756
    %v3263 = vunpack.c.h.b16 %v756
    %v3264 = vunpack.c.l.b16 %v757
    %v3265 = vunpack.c.h.b16 %v757
    %v3266 = vunpack.c.l.b16 %v758
    %v3267 = vunpack.c.h.b16 %v758
    %v3268 = vunpack.c.l.b16 %v759
    %v3269 = vunpack.c.h.b16 %v759
    %v3270 = vunpack.c.l.b16 %v760
    %v3271 = vunpack.c.h.b16 %v760
    %v3272 = vunpack.c.l.b16 %v761
    %v3273 = vunpack.c.h.b16 %v761
    %v3274 = vunpack.c.l.b16 %v762
    %v3275 = vunpack.c.h.b16 %v762
    %v3276 = vunpack.c.l.b16 %v763
    %v3277 = vunpack.c.h.b16 %v763
    %v3278 = vunpack.c.l.b16 %v764
    %v3279 = vunpack.c.h.b16 %v764
    %v3280 = vunpack.c.l.b16 %v765
    %v3281 = vunpack.c.h.b16 %v765
    %v3282 = vunpack.c.l.b16 %v766
    %v3283 = vunpack.c.h.b16 %v766
    %v3284 = vunpack.c.l.b16 %v767
    %v3285 = vunpack.c.h.b16 %v767
    %v3286 = vunpack.c.l.b16 %v768
    %v3287 = vunpack.c.h.b16 %v768
    %v3288 = vunpack.c.l.b16 %v769
    %v3289 = vunpack.c.h.b16 %v769
    %v3290 = vunpack.c.l.b16 %v770
    %v3291 = vunpack.c.h.b16 %v770
    %v3292 = vunpack.c.l.b16 %v771
    %v3293 = vunpack.c.h.b16 %v771
    %v3294 = vunpack.c.l.b16 %v772
    %v3295 = vunpack.c.h.b16 %v772
    %v3296 = vunpack.c.l.b16 %v773
    %v3297 = vunpack.c.h.b16 %v773
    %v3298 = vunpack.c.l.b16 %v774
    %v3299 = vunpack.c.h.b16 %v774
    %v3300 = vunpack.c.l.b16 %v775
    %v3301 = vunpack.c.h.b16 %v775
    %v3302 = vunpack.c.l.b16 %v776
    %v3303 = vunpack.c.h.b16 %v776
    %v3304 = vunpack.c.l.b16 %v777
    %v3305 = vunpack.c.h.b16 %v777
    %v3306 = vunpack.c.l.b16 %v778
    %v3307 = vunpack.c.h.b16 %v778
    %v3308 = vunpack.c.l.b16 %v779
    %v3309 = vunpack.c.h.b16 %v779
    %v3310 = vunpack.c.l.b16 %v780
    %v3311 = vunpack.c.h.b16 %v780
    %v3312 = vunpack.c.l.b16 %v781
    %v3313 = vunpack.c.h.b16 %v781
    %v3314 = vunpack.c.l.b16 %v782
    %v3315 = vunpack.c.h.b16 %v782
    %v3316 = vunpack.c.l.b16 %v783
    %v3317 = vunpack.c.h.b16 %v783
    %v3318 = vunpack.c.l.b16 %v784
    %v3319 = vunpack.c.h.b16 %v784
    %v3320 = vunpack.c.l.b16 %v785
    %v3321 = vunpack.c.h.b16 %v785
    %v3322 = vunpack.c.l.b16 %v786
    %v3323 = vunpack.c.h.b16 %v786
    %v3324 = vunpack.c.l.b16 %v787
    %v3325 = vunpack.c.h.b16 %v787
    %v3326 = vunpack.c.l.b16 %v788
    %v3327 = vunpack.c.h.b16 %v788
    %v3328 = vunpack.c.l.b16 %v789
    %v3329 = vunpack.c.h.b16 %v789
    %v3330 = vunpack.c.l.b16 %v790
    %v3331 = vunpack.c.h.b16 %v790
    %v3332 = vunpack.c.l.b16 %v791
    %v3333 = vunpack.c.h.b16 %v791
    %v3334 = vunpack.c.l.b16 %v792
    %v3335 = vunpack.c.h.b16 %v792
    %v3336 = vunpack.c.l.b16 %v793
    %v3337 = vunpack.c.h.b16 %v793
    %v3338 = vunpack.c.l.b16 %v794
    %v3339 = vunpack.c.h.b16 %v794
    %v3340 = vunpack.c.l.b16 %v795
    %v3341 = vunpack.c.h.b16 %v795
    %v3342 = vunpack.c.l.b16 %v796
    %v3343 = vunpack.c.h.b16 %v796
    %v3344 = vunpack.c.l.b16 %v797
    %v3345 = vunpack.c.h.b16 %v797
    %v3346 = vunpack.c.l.b16 %v798
    %v3347 = vunpack.c.h.b16 %v798
    %v3348 = vunpack.c.l.b16 %v799
    %v3349 = vunpack.c.h.b16 %v799
    %v3350 = vunpack.c.l.b16 %v800
    %v3351 = vunpack.c.h.b16 %v800
    %v3352 = vunpack.c.l.b16 %v801
    %v3353 = vunpack.c.h.b16 %v801
    %v3354 = vunpack.c.l.b16 %v802
    %v3355 = vunpack.c.h.b16 %v802
    %v3356 = vunpack.c.l.b16 %v803
    %v3357 = vunpack.c.h.b16 %v803
    %v3358 = vunpack.c.l.b16 %v804
    %v3359 = vunpack.c.h.b16 %v804
    %v3360 = vunpack.c.l.b16 %v805
    %v3361 = vunpack.c.h.b16 %v805
    %v3362 = vunpack.c.l.b16 %v806
    %v3363 = vunpack.c.h.b16 %v806
    %v3364 = vunpack.c.l.b16 %v807
    %v3365 = vunpack.c.h.b16 %v807
    %v3366 = vunpack.c.l.b16 %v808
    %v3367 = vunpack.c.h.b16 %v808
    %v3368 = vunpack.c.l.b16 %v809
    %v3369 = vunpack.c.h.b16 %v809
    %v3370 = vunpack.c.l.b16 %v810
    %v3371 = vunpack.c.h.b16 %v810
    %v3372 = vunpack.c.l.b16 %v811
    %v3373 = vunpack.c.h.b16 %v811
    %v3374 = vunpack.c.l.b16 %v812
    %v3375 = vunpack.c.h.b16 %v812
    %v3376 = vpack.c.b16 %v1812, %v1808
    %v3377 = vpack.c.b16 %v1813, %v1809
    %v3378 = vpack.c.b16 %v1814, %v1810
    %v3379 = vpack.c.b16 %v1815, %v1811
    %v3380 = vpack.c.b16 %v1820, %v1816
    %v3381 = vpack.c.b16 %v1821, %v1817
    %v3382 = vpack.c.b16 %v1822, %v1818
    %v3383 = vpack.c.b16 %v1823, %v1819
    %v3384 = vpack.c.b16 %v1828, %v1824
    %v3385 = vpack.c.b16 %v1829, %v1825
    %v3386 = vpack.c.b16 %v1830, %v1826
    %v3387 = vpack.c.b16 %v1831, %v1827
    %v3388 = vpack.c.b16 %v1836, %v1832
    %v3389 = vpack.c.b16 %v1837, %v1833
    %v3390 = vpack.c.b16 %v1838, %v1834
    %v3391 = vpack.c.b16 %v1839, %v1835
    %v3392 = vpack.c.b16 %v1844, %v1840
    %v3393 = vpack.c.b16 %v1845, %v1841
    %v3394 = vpack.c.b16 %v1846, %v1842
    %v3395 = vpack.c.b16 %v1847, %v1843
    %v3396 = vpack.c.b16 %v1852, %v1848
    %v3397 = vpack.c.b16 %v1853, %v1849
    %v3398 = vpack.c.b16 %v1854, %v1850
    %v3399 = vpack.c.b16 %v1855, %v1851
    %v3400 = vpack.c.b16 %v1860, %v1856
    %v3401 = vpack.c.b16 %v1861, %v1857
    %v3402 = vpack.c.b16 %v1862, %v1858
    %v3403 = vpack.c.b16 %v1863, %v1859
    %v3404 = vpack.c.b16 %v1868, %v1864
    %v3405 = vpack.c.b16 %v1869, %v1865
    %v3406 = vpack.c.b16 %v1870, %v1866
    %v3407 = vpack.c.b16 %v1871, %v1867
    %v3408 = vpack.c.b16 %v1876, %v1872
    %v3409 = vpack.c.b16 %v1877, %v1873
    %v3410 = vpack.c.b16 %v1878, %v1874
    %v3411 = vpack.c.b16 %v1879, %v1875
    %v3412 = vpack.c.b16 %v1884, %v1880
    %v3413 = vpack.c.b16 %v1885, %v1881
    %v3414 = vpack.c.b16 %v1886, %v1882
    %v3415 = vpack.c.b16 %v1887, %v1883
    %v3416 = vpack.c.b16 %v1892, %v1888
    %v3417 = vpack.c.b16 %v1893, %v1889
    %v3418 = vpack.c.b16 %v1894, %v1890
    %v3419 = vpack.c.b16 %v1895, %v1891
    %v3420 = vpack.c.b16 %v1900, %v1896
    %v3421 = vpack.c.b16 %v1901, %v1897
    %v3422 = vpack.c.b16 %v1902, %v1898
    %v3423 = vpack.c.b16 %v1903, %v1899
    %v3424 = vpack.c.b16 %v1908, %v1904
    %v3425 = vpack.c.b16 %v1909, %v1905
    %v3426 = vpack.c.b16 %v1910, %v1906
    %v3427 = vpack.c.b16 %v1911, %v1907
    %v3428 = vpack.c.b16 %v1916, %v1912
    %v3429 = vpack.c.b16 %v1917, %v1913
    %v3430 = vpack.c.b16 %v1918, %v1914
    %v3431 = vpack.c.b16 %v1919, %v1915
    %v3432 = vpack.c.b16 %v1924, %v1920
    %v3433 = vpack.c.b16 %v1925, %v1921
    %v3434 = vpack.c.b16 %v1926, %v1922
    %v3435 = vpack.c.b16 %v1927, %v1923
    %v3436 = vpack.c.b16 %v1932, %v1928
    %v3437 = vpack.c.b16 %v1933, %v1929
    %v3438 = vpack.c.b16 %v1934, %v1930
    %v3439 = vpack.c.b16 %v1935, %v1931
    %v3440 = vpack.c.b16 %v1940, %v1936
    %v3441 = vpack.c.b16 %v1941, %v1937
    %v3442 = vpack.c.b16 %v1942, %v1938
    %v3443 = vpack.c.b16 %v1943, %v1939
    %v3444 = vpack.c.b16 %v1948, %v1944
    %v3445 = vpack.c.b16 %v1949, %v1945
    %v3446 = vpack.c.b16 %v1950, %v1946
    %v3447 = vpack.c.b16 %v1951, %v1947
    %v3448 = vpack.c.b16 %v1956, %v1952
    %v3449 = vpack.c.b16 %v1957, %v1953
    %v3450 = vpack.c.b16 %v1958, %v1954
    %v3451 = vpack.c.b16 %v1959, %v1955
    %v3452 = vpack.c.b16 %v1964, %v1960
    %v3453 = vpack.c.b16 %v1965, %v1961
    %v3454 = vpack.c.b16 %v1966, %v1962
    %v3455 = vpack.c.b16 %v1967, %v1963
    %v3456 = vpack.c.b16 %v1972, %v1968
    %v3457 = vpack.c.b16 %v1973, %v1969
    %v3458 = vpack.c.b16 %v1974, %v1970
    %v3459 = vpack.c.b16 %v1975, %v1971
    %v3460 = vpack.c.b16 %v1980, %v1976
    %v3461 = vpack.c.b16 %v1981, %v1977
    %v3462 = vpack.c.b16 %v1982, %v1978
    %v3463 = vpack.c.b16 %v1983, %v1979
    %v3464 = vpack.c.b16 %v1988, %v1984
    %v3465 = vpack.c.b16 %v1989, %v1985
    %v3466 = vpack.c.b16 %v1990, %v1986
    %v3467 = vpack.c.b16 %v1991, %v1987
    %v3468 = vpack.c.b16 %v1996, %v1992
    %v3469 = vpack.c.b16 %v1997, %v1993
    %v3470 = vpack.c.b16 %v1998, %v1994
    %v3471 = vpack.c.b16 %v1999, %v1995
    %v3472 = vpack.c.b16 %v2004, %v2000
    %v3473 = vpack.c.b16 %v2005, %v2001
    %v3474 = vpack.c.b16 %v2006, %v2002
    %v3475 = vpack.c.b16 %v2007, %v2003
    %v3476 = vpack.c.b16 %v2012, %v2008
    %v3477 = vpack.c.b16 %v2013, %v2009
    %v3478 = vpack.c.b16 %v2014, %v2010
    %v3479 = vpack.c.b16 %v2015, %v2011
    %v3480 = vpack.c.b16 %v2020, %v2016
    %v3481 = vpack.c.b16 %v2021, %v2017
    %v3482 = vpack.c.b16 %v2022, %v2018
    %v3483 = vpack.c.b16 %v2023, %v2019
    %v3484 = vpack.c.b16 %v2028, %v2024
    %v3485 = vpack.c.b16 %v2029, %v2025
    %v3486 = vpack.c.b16 %v2030, %v2026
    %v3487 = vpack.c.b16 %v2031, %v2027
    %v3488 = vpack.c.b16 %v2036, %v2032
    %v3489 = vpack.c.b16 %v2037, %v2033
    %v3490 = vpack.c.b16 %v2038, %v2034
    %v3491 = vpack.c.b16 %v2039, %v2035
    %v3492 = vpack.c.b16 %v2044, %v2040
    %v3493 = vpack.c.b16 %v2045, %v2041
    %v3494 = vpack.c.b16 %v2046, %v2042
    %v3495 = vpack.c.b16 %v2047, %v2043
    %v3496 = vpack.c.b16 %v2052, %v2048
    %v3497 = vpack.c.b16 %v2053, %v2049
    %v3498 = vpack.c.b16 %v2054, %v2050
    %v3499 = vpack.c.b16 %v2055, %v2051
    %v3500 = vpack.c.b16 %v2060, %v2056
    %v3501 = vpack.c.b16 %v2061, %v2057
    %v3502 = vpack.c.b16 %v2062, %v2058
    %v3503 = vpack.c.b16 %v2063, %v2059
    %v3504 = vpack.c.b16 %v2068, %v2064
    %v3505 = vpack.c.b16 %v2069, %v2065
    %v3506 = vpack.c.b16 %v2070, %v2066
    %v3507 = vpack.c.b16 %v2071, %v2067
    %v3508 = vpack.c.b16 %v2076, %v2072
    %v3509 = vpack.c.b16 %v2077, %v2073
    %v3510 = vpack.c.b16 %v2078, %v2074
    %v3511 = vpack.c.b16 %v2079, %v2075
    %v3512 = vpack.c.b16 %v2084, %v2080
    %v3513 = vpack.c.b16 %v2085, %v2081
    %v3514 = vpack.c.b16 %v2086, %v2082
    %v3515 = vpack.c.b16 %v2087, %v2083
    %v3516 = vpack.c.b16 %v2092, %v2088
    %v3517 = vpack.c.b16 %v2093, %v2089
    %v3518 = vpack.c.b16 %v2094, %v2090
    %v3519 = vpack.c.b16 %v2095, %v2091
    %v3520 = vpack.c.b16 %v2100, %v2096
    %v3521 = vpack.c.b16 %v2101, %v2097
    %v3522 = vpack.c.b16 %v2102, %v2098
    %v3523 = vpack.c.b16 %v2103, %v2099
    %v3524 = vpack.c.b16 %v2108, %v2104
    %v3525 = vpack.c.b16 %v2109, %v2105
    %v3526 = vpack.c.b16 %v2110, %v2106
    %v3527 = vpack.c.b16 %v2111, %v2107
    %v3528 = vpack.c.b16 %v2116, %v2112
    %v3529 = vpack.c.b16 %v2117, %v2113
    %v3530 = vpack.c.b16 %v2118, %v2114
    %v3531 = vpack.c.b16 %v2119, %v2115
    %v3532 = vpack.c.b16 %v2124, %v2120
    %v3533 = vpack.c.b16 %v2125, %v2121
    %v3534 = vpack.c.b16 %v2126, %v2122
    %v3535 = vpack.c.b16 %v2127, %v2123
    %v3536 = vpack.c.b16 %v2132, %v2128
    %v3537 = vpack.c.b16 %v2133, %v2129
    %v3538 = vpack.c.b16 %v2134, %v2130
    %v3539 = vpack.c.b16 %v2135, %v2131
    %v3540 = vpack.c.b16 %v2140, %v2136
    %v3541 = vpack.c.b16 %v2141, %v2137
    %v3542 = vpack.c.b16 %v2142, %v2138
    %v3543 = vpack.c.b16 %v2143, %v2139
    %v3544 = vpack.c.b16 %v2148, %v2144
    %v3545 = vpack.c.b16 %v2149, %v2145
    %v3546 = vpack.c.b16 %v2150, %v2146
    %v3547 = vpack.c.b16 %v2151, %v2147
    %v3548 = vpack.c.b16 %v2156, %v2152
    %v3549 = vpack.c.b16 %v2157, %v2153
    %v3550 = vpack.c.b16 %v2158, %v2154
    %v3551 = vpack.c.b16 %v2159, %v2155
    %v3552 = vpack.c.b16 %v2164, %v2160
    %v3553 = vpack.c.b16 %v2165, %v2161
    %v3554 = vpack.c.b16 %v2166, %v2162
    %v3555 = vpack.c.b16 %v2167, %v2163
    %v3556 = vpack.c.b16 %v2172, %v2168
    %v3557 = vpack.c.b16 %v2173, %v2169
    %v3558 = vpack.c.b16 %v2174, %v2170
    %v3559 = vpack.c.b16 %v2175, %v2171
    %v3560 = vpack.c.b16 %v2180, %v2176
    %v3561 = vpack.c.b16 %v2181, %v2177
    %v3562 = vpack.c.b16 %v2182, %v2178
    %v3563 = vpack.c.b16 %v2183, %v2179
    %v3564 = vpack.c.b16 %v2188, %v2184
    %v3565 = vpack.c.b16 %v2189, %v2185
    %v3566 = vpack.c.b16 %v2190, %v2186
    %v3567 = vpack.c.b16 %v2191, %v2187
    %v3568 = vpack.c.b16 %v2196, %v2192
    %v3569 = vpack.c.b16 %v2197, %v2193
    %v3570 = vpack.c.b16 %v2198, %v2194
    %v3571 = vpack.c.b16 %v2199, %v2195
    %v3572 = vpack.c.b16 %v2204, %v2200
    %v3573 = vpack.c.b16 %v2205, %v2201
    %v3574 = vpack.c.b16 %v2206, %v2202
    %v3575 = vpack.c.b16 %v2207, %v2203
    %v3576 = vpack.c.b16 %v2212, %v2208
    %v3577 = vpack.c.b16 %v2213, %v2209
    %v3578 = vpack.c.b16 %v2214, %v2210
    %v3579 = vpack.c.b16 %v2215, %v2211
    %v3580 = vpack.c.b16 %v2220, %v2216
    %v3581 = vpack.c.b16 %v2221, %v2217
    %v3582 = vpack.c.b16 %v2222, %v2218
    %v3583 = vpack.c.b16 %v2223, %v2219
    %v3584 = vpack.c.b16 %v2228, %v2224
    %v3585 = vpack.c.b16 %v2229, %v2225
    %v3586 = vpack.c.b16 %v2230, %v2226
    %v3587 = vpack.c.b16 %v2231, %v2227
    %v3588 = vpack.c.b16 %v2236, %v2232
    %v3589 = vpack.c.b16 %v2237, %v2233
    %v3590 = vpack.c.b16 %v2238, %v2234
    %v3591 = vpack.c.b16 %v2239, %v2235
    %v3592 = vpack.c.b16 %v2244, %v2240
    %v3593 = vpack.c.b16 %v2245, %v2241
    %v3594 = vpack.c.b16 %v2246, %v2242
    %v3595 = vpack.c.b16 %v2247, %v2243
    %v3596 = vpack.c.b16 %v2252, %v2248
    %v3597 = vpack.c.b16 %v2253, %v2249
    %v3598 = vpack.c.b16 %v2254, %v2250
    %v3599 = vpack.c.b16 %v2255, %v2251
    %v3600 = vpack.c.b16 %v2260, %v2256
    %v3601 = vpack.c.b16 %v2261, %v2257
    %v3602 = vpack.c.b16 %v2262, %v2258
    %v3603 = vpack.c.b16 %v2263, %v2259
    %v3604 = vpack.c.b16 %v2268, %v2264
    %v3605 = vpack.c.b16 %v2269, %v2265
    %v3606 = vpack.c.b16 %v2270, %v2266
    %v3607 = vpack.c.b16 %v2271, %v2267
    %v3608 = vpack.c.b16 %v2276, %v2272
    %v3609 = vpack.c.b16 %v2277, %v2273
    %v3610 = vpack.c.b16 %v2278, %v2274
    %v3611 = vpack.c.b16 %v2279, %v2275
    %v3612 = vpack.c.b16 %v2284, %v2280
    %v3613 = vpack.c.b16 %v2285, %v2281
    %v3614 = vpack.c.b16 %v2286, %v2282
    %v3615 = vpack.c.b16 %v2287, %v2283
    %v3616 = vpack.c.b16 %v2292, %v2288
    %v3617 = vpack.c.b16 %v2293, %v2289
    %v3618 = vpack.c.b16 %v2294, %v2290
    %v3619 = vpack.c.b16 %v2295, %v2291
    %v3620 = vpack.c.b16 %v2300, %v2296
    %v3621 = vpack.c.b16 %v2301, %v2297
    %v3622 = vpack.c.b16 %v2302, %v2298
    %v3623 = vpack.c.b16 %v2303, %v2299
    %v3624 = vpack.c.b16 %v2308, %v2304
    %v3625 = vpack.c.b16 %v2309, %v2305
    %v3626 = vpack.c.b16 %v2310, %v2306
    %v3627 = vpack.c.b16 %v2311, %v2307
    %v3628 = vpack.c.b16 %v2316, %v2312
    %v3629 = vpack.c.b16 %v2317, %v2313
    %v3630 = vpack.c.b16 %v2318, %v2314
    %v3631 = vpack.c.b16 %v2319, %v2315
    %v3632 = vpack.c.b16 %v2324, %v2320
    %v3633 = vpack.c.b16 %v2325, %v2321
    %v3634 = vpack.c.b16 %v2326, %v2322
    %v3635 = vpack.c.b16 %v2327, %v2323
    %v3636 = vpack.c.b16 %v2332, %v2328
    %v3637 = vpack.c.b16 %v2333, %v2329
    %v3638 = vpack.c.b16 %v2334, %v2330
    %v3639 = vpack.c.b16 %v2335, %v2331
    %v3640 = vpack.c.b16 %v2340, %v2336
    %v3641 = vpack.c.b16 %v2341, %v2337
    %v3642 = vpack.c.b16 %v2342, %v2338
    %v3643 = vpack.c.b16 %v2343, %v2339
    %v3644 = vpack.c.b16 %v2348, %v2344
    %v3645 = vpack.c.b16 %v2349, %v2345
    %v3646 = vpack.c.b16 %v2350, %v2346
    %v3647 = vpack.c.b16 %v2351, %v2347
    %v3648 = vpack.c.b16 %v2356, %v2352
    %v3649 = vpack.c.b16 %v2357, %v2353
    %v3650 = vpack.c.b16 %v2358, %v2354
    %v3651 = vpack.c.b16 %v2359, %v2355
    %v3652 = vpack.c.b16 %v2364, %v2360
    %v3653 = vpack.c.b16 %v2365, %v2361
    %v3654 = vpack.c.b16 %v2366, %v2362
    %v3655 = vpack.c.b16 %v2367, %v2363
    %v3656 = vpack.c.b16 %v2372, %v2368
    %v3657 = vpack.c.b16 %v2373, %v2369
    %v3658 = vpack.c.b16 %v2374, %v2370
    %v3659 = vpack.c.b16 %v2375, %v2371
    %v3660 = vpack.c.b16 %v2380, %v2376
    %v3661 = vpack.c.b16 %v2381, %v2377
    %v3662 = vpack.c.b16 %v2382, %v2378
    %v3663 = vpack.c.b16 %v2383, %v2379
    %v3664 = vpack.c.b16 %v2388, %v2384
    %v3665 = vpack.c.b16 %v2389, %v2385
    %v3666 = vpack.c.b16 %v2390, %v2386
    %v3667 = vpack.c.b16 %v2391, %v2387
    %v3668 = vpack.c.b16 %v2396, %v2392
    %v3669 = vpack.c.b16 %v2397, %v2393
    %v3670 = vpack.c.b16 %v2398, %v2394
    %v3671 = vpack.c.b16 %v2399, %v2395
    %v3672 = vpack.c.b16 %v2404, %v2400
    %v3673 = vpack.c.b16 %v2405, %v2401
    %v3674 = vpack.c.b16 %v2406, %v2402
    %v3675 = vpack.c.b16 %v2407, %v2403
    %v3676 = vpack.c.b16 %v2412, %v2408
    %v3677 = vpack.c.b16 %v2413, %v2409
    %v3678 = vpack.c.b16 %v2414, %v2410
    %v3679 = vpack.c.b16 %v2415, %v2411
    %v3680 = vpack.c.b16 %v2420, %v2416
    %v3681 = vpack.c.b16 %v2421, %v2417
    %v3682 = vpack.c.b16 %v2422, %v2418
    %v3683 = vpack.c.b16 %v2423, %v2419
    %v3684 = vpack.c.b16 %v2428, %v2424
    %v3685 = vpack.c.b16 %v2429, %v2425
    %v3686 = vpack.c.b16 %v2430, %v2426
    %v3687 = vpack.c.b16 %v2431, %v2427
    %v3688 = vpack.c.b16 %v2436, %v2432
    %v3689 = vpack.c.b16 %v2437, %v2433
    %v3690 = vpack.c.b16 %v2438, %v2434
    %v3691 = vpack.c.b16 %v2439, %v2435
    %v3692 = vpack.c.b16 %v2444, %v2440
    %v3693 = vpack.c.b16 %v2445, %v2441
    %v3694 = vpack.c.b16 %v2446, %v2442
    %v3695 = vpack.c.b16 %v2447, %v2443
    %v3696 = vpack.c.b16 %v2452, %v2448
    %v3697 = vpack.c.b16 %v2453, %v2449
    %v3698 = vpack.c.b16 %v2454, %v2450
    %v3699 = vpack.c.b16 %v2455, %v2451
    %v3700 = vpack.c.b16 %v2460, %v2456
    %v3701 = vpack.c.b16 %v2461, %v2457
    %v3702 = vpack.c.b16 %v2462, %v2458
    %v3703 = vpack.c.b16 %v2463, %v2459
    %v3704 = vpack.c.b16 %v2468, %v2464
    %v3705 = vpack.c.b16 %v2469, %v2465
    %v3706 = vpack.c.b16 %v2470, %v2466
    %v3707 = vpack.c.b16 %v2471, %v2467
    %v3708 = vpack.c.b16 %v2476, %v2472
    %v3709 = vpack.c.b16 %v2477, %v2473
    %v3710 = vpack.c.b16 %v2478, %v2474
    %v3711 = vpack.c.b16 %v2479, %v2475
    %v3712 = vpack.c.b16 %v2484, %v2480
    %v3713 = vpack.c.b16 %v2485, %v2481
    %v3714 = vpack.c.b16 %v2486, %v2482
    %v3715 = vpack.c.b16 %v2487, %v2483
    %v3716 = vpack.c.b16 %v2492, %v2488
    %v3717 = vpack.c.b16 %v2493, %v2489
    %v3718 = vpack.c.b16 %v2494, %v2490
    %v3719 = vpack.c.b16 %v2495, %v2491
    %v3720 = vpack.c.b16 %v2500, %v2496
    %v3721 = vpack.c.b16 %v2501, %v2497
    %v3722 = vpack.c.b16 %v2502, %v2498
    %v3723 = vpack.c.b16 %v2503, %v2499
    %v3724 = vpack.c.b16 %v2508, %v2504
    %v3725 = vpack.c.b16 %v2509, %v2505
    %v3726 = vpack.c.b16 %v2510, %v2506
    %v3727 = vpack.c.b16 %v2511, %v2507
    %v3728 = vpack.c.b16 %v2516, %v2512
    %v3729 = vpack.c.b16 %v2517, %v2513
    %v3730 = vpack.c.b16 %v2518, %v2514
    %v3731 = vpack.c.b16 %v2519, %v2515
    %v3732 = vpack.c.b16 %v2524, %v2520
    %v3733 = vpack.c.b16 %v2525, %v2521
    %v3734 = vpack.c.b16 %v2526, %v2522
    %v3735 = vpack.c.b16 %v2527, %v2523
    %v3736 = vpack.c.b16 %v2532, %v2528
    %v3737 = vpack.c.b16 %v2533, %v2529
    %v3738 = vpack.c.b16 %v2534, %v2530
    %v3739 = vpack.c.b16 %v2535, %v2531
    %v3740 = vpack.c.b16 %v2540, %v2536
    %v3741 = vpack.c.b16 %v2541, %v2537
    %v3742 = vpack.c.b16 %v2542, %v2538
    %v3743 = vpack.c.b16 %v2543, %v2539
    %v3744 = vpack.c.b16 %v2548, %v2544
    %v3745 = vpack.c.b16 %v2549, %v2545
    %v3746 = vpack.c.b16 %v2550, %v2546
    %v3747 = vpack.c.b16 %v2551, %v2547
    %v3748 = vpack.c.b16 %v2556, %v2552
    %v3749 = vpack.c.b16 %v2557, %v2553
    %v3750 = vpack.c.b16 %v2558, %v2554
    %v3751 = vpack.c.b16 %v2559, %v2555
    %v3752 = vpack.c.b16 %v2564, %v2560
    %v3753 = vpack.c.b16 %v2565, %v2561
    %v3754 = vpack.c.b16 %v2566, %v2562
    %v3755 = vpack.c.b16 %v2567, %v2563
    %v3756 = vpack.c.b16 %v2572, %v2568
    %v3757 = vpack.c.b16 %v2573, %v2569
    %v3758 = vpack.c.b16 %v2574, %v2570
    %v3759 = vpack.c.b16 %v2575, %v2571
    %v3760 = vpack.c.b16 %v2580, %v2576
    %v3761 = vpack.c.b16 %v2581, %v2577
    %v3762 = vpack.c.b16 %v2582, %v2578
    %v3763 = vpack.c.b16 %v2583, %v2579
    %v3764 = vpack.c.b16 %v2588, %v2584
    %v3765 = vpack.c.b16 %v2589, %v2585
    %v3766 = vpack.c.b16 %v2590, %v2586
    %v3767 = vpack.c.b16 %v2591, %v2587
    %v3768 = vpack.c.b16 %v2596, %v2592
    %v3769 = vpack.c.b16 %v2597, %v2593
    %v3770 = vpack.c.b16 %v2598, %v2594
    %v3771 = vpack.c.b16 %v2599, %v2595
    %v3772 = vpack.c.b16 %v2604, %v2600
    %v3773 = vpack.c.b16 %v2605, %v2601
    %v3774 = vpack.c.b16 %v2606, %v2602
    %v3775 = vpack.c.b16 %v2607, %v2603
    %v3776 = vpack.c.b16 %v2612, %v2608
    %v3777 = vpack.c.b16 %v2613, %v2609
    %v3778 = vpack.c.b16 %v2614, %v2610
    %v3779 = vpack.c.b16 %v2615, %v2611
    %v3780 = vpack.c.b16 %v2620, %v2616
    %v3781 = vpack.c.b16 %v2621, %v2617
    %v3782 = vpack.c.b16 %v2622, %v2618
    %v3783 = vpack.c.b16 %v2623, %v2619
    %v3784 = vpack.c.b16 %v2628, %v2624
    %v3785 = vpack.c.b16 %v2629, %v2625
    %v3786 = vpack.c.b16 %v2630, %v2626
    %v3787 = vpack.c.b16 %v2631, %v2627
    %v3788 = vpack.c.b16 %v2636, %v2632
    %v3789 = vpack.c.b16 %v2637, %v2633
    %v3790 = vpack.c.b16 %v2638, %v2634
    %v3791 = vpack.c.b16 %v2639, %v2635
    %v3792 = vpack.c.b16 %v2644, %v2640
    %v3793 = vpack.c.b16 %v2645, %v2641
    %v3794 = vpack.c.b16 %v2646, %v2642
    %v3795 = vpack.c.b16 %v2647, %v2643
    %v3796 = vpack.c.b16 %v2652, %v2648
    %v3797 = vpack.c.b16 %v2653, %v2649
    %v3798 = vpack.c.b16 %v2654, %v2650
    %v3799 = vpack.c.b16 %v2655, %v2651
    %v3800 = vpack.c.b16 %v2660, %v2656
    %v3801 = vpack.c.b16 %v2661, %v2657
    %v3802 = vpack.c.b16 %v2662, %v2658
    %v3803 = vpack.c.b16 %v2663, %v2659
    %v3804 = vpack.c.b16 %v2668, %v2664
    %v3805 = vpack.c.b16 %v2669, %v2665
    %v3806 = vpack.c.b16 %v2670, %v2666
    %v3807 = vpack.c.b16 %v2671, %v2667
    %v3808 = vpack.c.b16 %v2676, %v2672
    %v3809 = vpack.c.b16 %v2677, %v2673
    %v3810 = vpack.c.b16 %v2678, %v2674
    %v3811 = vpack.c.b16 %v2679, %v2675
    %v3812 = vpack.c.b16 %v2684, %v2680
    %v3813 = vpack.c.b16 %v2685, %v2681
    %v3814 = vpack.c.b16 %v2686, %v2682
    %v3815 = vpack.c.b16 %v2687, %v2683
    %v3816 = vpack.c.b16 %v2692, %v2688
    %v3817 = vpack.c.b16 %v2693, %v2689
    %v3818 = vpack.c.b16 %v2694, %v2690
    %v3819 = vpack.c.b16 %v2695, %v2691
    %v3820 = vpack.c.b16 %v2700, %v2696
    %v3821 = vpack.c.b16 %v2701, %v2697
    %v3822 = vpack.c.b16 %v2702, %v2698
    %v3823 = vpack.c.b16 %v2703, %v2699
    %v3824 = vpack.c.b16 %v2708, %v2704
    %v3825 = vpack.c.b16 %v2709, %v2705
    %v3826 = vpack.c.b16 %v2710, %v2706
    %v3827 = vpack.c.b16 %v2711, %v2707
    %v3828 = vpack.c.b16 %v2716, %v2712
    %v3829 = vpack.c.b16 %v2717, %v2713
    %v3830 = vpack.c.b16 %v2718, %v2714
    %v3831 = vpack.c.b16 %v2719, %v2715
    %v3832 = vpack.c.b16 %v2724, %v2720
    %v3833 = vpack.c.b16 %v2725, %v2721
    %v3834 = vpack.c.b16 %v2726, %v2722
    %v3835 = vpack.c.b16 %v2727, %v2723
    %v3836 = vpack.c.b16 %v2732, %v2728
    %v3837 = vpack.c.b16 %v2733, %v2729
    %v3838 = vpack.c.b16 %v2734, %v2730
    %v3839 = vpack.c.b16 %v2735, %v2731
    %v3840 = vpack.c.b16 %v2740, %v2736
    %v3841 = vpack.c.b16 %v2741, %v2737
    %v3842 = vpack.c.b16 %v2742, %v2738
    %v3843 = vpack.c.b16 %v2743, %v2739
    %v3844 = vpack.c.b16 %v2748, %v2744
    %v3845 = vpack.c.b16 %v2749, %v2745
    %v3846 = vpack.c.b16 %v2750, %v2746
    %v3847 = vpack.c.b16 %v2751, %v2747
    %v3848 = vpack.c.b16 %v2756, %v2752
    %v3849 = vpack.c.b16 %v2757, %v2753
    %v3850 = vpack.c.b16 %v2758, %v2754
    %v3851 = vpack.c.b16 %v2759, %v2755
    %v3852 = vpack.c.b16 %v2764, %v2760
    %v3853 = vpack.c.b16 %v2765, %v2761
    %v3854 = vpack.c.b16 %v2766, %v2762
    %v3855 = vpack.c.b16 %v2767, %v2763
    %v3856 = vpack.c.b16 %v2772, %v2768
    %v3857 = vpack.c.b16 %v2773, %v2769
    %v3858 = vpack.c.b16 %v2774, %v2770
    %v3859 = vpack.c.b16 %v2775, %v2771
    %v3860 = vpack.c.b16 %v2780, %v2776
    %v3861 = vpack.c.b16 %v2781, %v2777
    %v3862 = vpack.c.b16 %v2782, %v2778
    %v3863 = vpack.c.b16 %v2783, %v2779
    %v3864 = vpack.c.b16 %v2788, %v2784
    %v3865 = vpack.c.b16 %v2789, %v2785
    %v3866 = vpack.c.b16 %v2790, %v2786
    %v3867 = vpack.c.b16 %v2791, %v2787
    %v3868 = vpack.c.b16 %v2796, %v2792
    %v3869 = vpack.c.b16 %v2797, %v2793
    %v3870 = vpack.c.b16 %v2798, %v2794
    %v3871 = vpack.c.b16 %v2799, %v2795
    %v3872 = vpack.c.b16 %v2804, %v2800
    %v3873 = vpack.c.b16 %v2805, %v2801
    %v3874 = vpack.c.b16 %v2806, %v2802
    %v3875 = vpack.c.b16 %v2807, %v2803
    %v3876 = vpack.c.b16 %v2812, %v2808
    %v3877 = vpack.c.b16 %v2813, %v2809
    %v3878 = vpack.c.b16 %v2814, %v2810
    %v3879 = vpack.c.b16 %v2815, %v2811
    %v3880 = vpack.c.b16 %v2820, %v2816
    %v3881 = vpack.c.b16 %v2821, %v2817
    %v3882 = vpack.c.b16 %v2822, %v2818
    %v3883 = vpack.c.b16 %v2823, %v2819
    %v3884 = vpack.c.b16 %v2828, %v2824
    %v3885 = vpack.c.b16 %v2829, %v2825
    %v3886 = vpack.c.b16 %v2830, %v2826
    %v3887 = vpack.c.b16 %v2831, %v2827
    %v3888 = vpack.c.b16 %v2836, %v2832
    %v3889 = vpack.c.b16 %v2837, %v2833
    %v3890 = vpack.c.b16 %v2838, %v2834
    %v3891 = vpack.c.b16 %v2839, %v2835
    %v3892 = vpack.c.b16 %v2844, %v2840
    %v3893 = vpack.c.b16 %v2845, %v2841
    %v3894 = vpack.c.b16 %v2846, %v2842
    %v3895 = vpack.c.b16 %v2847, %v2843
    %v3896 = vpack.c.b16 %v2852, %v2848
    %v3897 = vpack.c.b16 %v2853, %v2849
    %v3898 = vpack.c.b16 %v2854, %v2850
    %v3899 = vpack.c.b16 %v2855, %v2851
    %v3900 = vpack.c.b16 %v2860, %v2856
    %v3901 = vpack.c.b16 %v2861, %v2857
    %v3902 = vpack.c.b16 %v2862, %v2858
    %v3903 = vpack.c.b16 %v2863, %v2859
    %v3904 = vpack.c.b16 %v2868, %v2864
    %v3905 = vpack.c.b16 %v2869, %v2865
    %v3906 = vpack.c.b16 %v2870, %v2866
    %v3907 = vpack.c.b16 %v2871, %v2867
    %v3908 = vpack.c.b16 %v2876, %v2872
    %v3909 = vpack.c.b16 %v2877, %v2873
    %v3910 = vpack.c.b16 %v2878, %v2874
    %v3911 = vpack.c.b16 %v2879, %v2875
    %v3912 = vpack.c.b16 %v2884, %v2880
    %v3913 = vpack.c.b16 %v2885, %v2881
    %v3914 = vpack.c.b16 %v2886, %v2882
    %v3915 = vpack.c.b16 %v2887, %v2883
    %v3916 = vpack.c.b16 %v2892, %v2888
    %v3917 = vpack.c.b16 %v2893, %v2889
    %v3918 = vpack.c.b16 %v2894, %v2890
    %v3919 = vpack.c.b16 %v2895, %v2891
    %v3920 = vpack.c.b16 %v2900, %v2896
    %v3921 = vpack.c.b16 %v2901, %v2897
    %v3922 = vpack.c.b16 %v2902, %v2898
    %v3923 = vpack.c.b16 %v2903, %v2899
    %v3924 = vpack.c.b16 %v2908, %v2904
    %v3925 = vpack.c.b16 %v2909, %v2905
    %v3926 = vpack.c.b16 %v2910, %v2906
    %v3927 = vpack.c.b16 %v2911, %v2907
    %v3928 = vpack.c.b16 %v2916, %v2912
    %v3929 = vpack.c.b16 %v2917, %v2913
    %v3930 = vpack.c.b16 %v2918, %v2914
    %v3931 = vpack.c.b16 %v2919, %v2915
    %v3932 = vpack.c.b16 %v2924, %v2920
    %v3933 = vpack.c.b16 %v2925, %v2921
    %v3934 = vpack.c.b16 %v2926, %v2922
    %v3935 = vpack.c.b16 %v2927, %v2923
    %v3936 = vpack.c.b16 %v2932, %v2928
    %v3937 = vpack.c.b16 %v2933, %v2929
    %v3938 = vpack.c.b16 %v2934, %v2930
    %v3939 = vpack.c.b16 %v2935, %v2931
    %v3940 = vpack.c.b16 %v2940, %v2936
    %v3941 = vpack.c.b16 %v2941, %v2937
    %v3942 = vpack.c.b16 %v2942, %v2938
    %v3943 = vpack.c.b16 %v2943, %v2939
    %v3944 = vpack.c.b16 %v2948, %v2944
    %v3945 = vpack.c.b16 %v2949, %v2945
    %v3946 = vpack.c.b16 %v2950, %v2946
    %v3947 = vpack.c.b16 %v2951, %v2947
    %v3948 = vpack.c.b16 %v2956, %v2952
    %v3949 = vpack.c.b16 %v2957, %v2953
    %v3950 = vpack.c.b16 %v2958, %v2954
    %v3951 = vpack.c.b16 %v2959, %v2955
    %v3952 = vpack.c.b16 %v2964, %v2960
    %v3953 = vpack.c.b16 %v2965, %v2961
    %v3954 = vpack.c.b16 %v2966, %v2962
    %v3955 = vpack.c.b16 %v2967, %v2963
    %v3956 = vpack.c.b16 %v2972, %v2968
    %v3957 = vpack.c.b16 %v2973, %v2969
    %v3958 = vpack.c.b16 %v2974, %v2970
    %v3959 = vpack.c.b16 %v2975, %v2971
    %v3960 = vpack.c.b16 %v2980, %v2976
    %v3961 = vpack.c.b16 %v2981, %v2977
    %v3962 = vpack.c.b16 %v2982, %v2978
    %v3963 = vpack.c.b16 %v2983, %v2979
    %v3964 = vpack.c.b16 %v2988, %v2984
    %v3965 = vpack.c.b16 %v2989, %v2985
    %v3966 = vpack.c.b16 %v2990, %v2986
    %v3967 = vpack.c.b16 %v2991, %v2987
    %v3968 = vpack.c.b16 %v2996, %v2992
    %v3969 = vpack.c.b16 %v2997, %v2993
    %v3970 = vpack.c.b16 %v2998, %v2994
    %v3971 = vpack.c.b16 %v2999, %v2995
    %v3972 = vpack.c.b16 %v3004, %v3000
    %v3973 = vpack.c.b16 %v3005, %v3001
    %v3974 = vpack.c.b16 %v3006, %v3002
    %v3975 = vpack.c.b16 %v3007, %v3003
    %v3976 = vpack.c.b16 %v3012, %v3008
    %v3977 = vpack.c.b16 %v3013, %v3009
    %v3978 = vpack.c.b16 %v3014, %v3010
    %v3979 = vpack.c.b16 %v3015, %v3011
    %v3980 = vpack.c.b16 %v3020, %v3016
    %v3981 = vpack.c.b16 %v3021, %v3017
    %v3982 = vpack.c.b16 %v3022, %v3018
    %v3983 = vpack.c.b16 %v3023, %v3019
    %v3984 = vpack.c.b16 %v3028, %v3024
    %v3985 = vpack.c.b16 %v3029, %v3025
    %v3986 = vpack.c.b16 %v3030, %v3026
    %v3987 = vpack.c.b16 %v3031, %v3027
    %v3988 = vpack.c.b16 %v3036, %v3032
    %v3989 = vpack.c.b16 %v3037, %v3033
    %v3990 = vpack.c.b16 %v3038, %v3034
    %v3991 = vpack.c.b16 %v3039, %v3035
    %v3992 = vpack.c.b16 %v3044, %v3040
    %v3993 = vpack.c.b16 %v3045, %v3041
    %v3994 = vpack.c.b16 %v3046, %v3042
    %v3995 = vpack.c.b16 %v3047, %v3043
    %v3996 = vpack.c.b16 %v3052, %v3048
    %v3997 = vpack.c.b16 %v3053, %v3049
    %v3998 = vpack.c.b16 %v3054, %v3050
    %v3999 = vpack.c.b16 %v3055, %v3051
    %v4000 = vpack.c.b16 %v3060, %v3056
    %v4001 = vpack.c.b16 %v3061, %v3057
    %v4002 = vpack.c.b16 %v3062, %v3058
    %v4003 = vpack.c.b16 %v3063, %v3059
    %v4004 = vpack.c.b16 %v3068, %v3064
    %v4005 = vpack.c.b16 %v3069, %v3065
    %v4006 = vpack.c.b16 %v3070, %v3066
    %v4007 = vpack.c.b16 %v3071, %v3067
    %v4008 = vpack.c.b16 %v3076, %v3072
    %v4009 = vpack.c.b16 %v3077, %v3073
    %v4010 = vpack.c.b16 %v3078, %v3074
    %v4011 = vpack.c.b16 %v3079, %v3075
    %v4012 = vpack.c.b16 %v3084, %v3080
    %v4013 = vpack.c.b16 %v3085, %v3081
    %v4014 = vpack.c.b16 %v3086, %v3082
    %v4015 = vpack.c.b16 %v3087, %v3083
    %v4016 = vpack.c.b16 %v3092, %v3088
    %v4017 = vpack.c.b16 %v3093, %v3089
    %v4018 = vpack.c.b16 %v3094, %v3090
    %v4019 = vpack.c.b16 %v3095, %v3091
    %v4020 = vpack.c.b16 %v3100, %v3096
    %v4021 = vpack.c.b16 %v3101, %v3097
    %v4022 = vpack.c.b16 %v3102, %v3098
    %v4023 = vpack.c.b16 %v3103, %v3099
    %v4024 = vpack.c.b16 %v3108, %v3104
    %v4025 = vpack.c.b16 %v3109, %v3105
    %v4026 = vpack.c.b16 %v3110, %v3106
    %v4027 = vpack.c.b16 %v3111, %v3107
    %v4028 = vpack.c.b16 %v3116, %v3112
    %v4029 = vpack.c.b16 %v3117, %v3113
    %v4030 = vpack.c.b16 %v3118, %v3114
    %v4031 = vpack.c.b16 %v3119, %v3115
    %v4032 = vpack.c.b16 %v3124, %v3120
    %v4033 = vpack.c.b16 %v3125, %v3121
    %v4034 = vpack.c.b16 %v3126, %v3122
    %v4035 = vpack.c.b16 %v3127, %v3123
    %v4036 = vpack.c.b16 %v3132, %v3128
    %v4037 = vpack.c.b16 %v3133, %v3129
    %v4038 = vpack.c.b16 %v3134, %v3130
    %v4039 = vpack.c.b16 %v3135, %v3131
    %v4040 = vpack.c.b16 %v3140, %v3136
    %v4041 = vpack.c.b16 %v3141, %v3137
    %v4042 = vpack.c.b16 %v3142, %v3138
    %v4043 = vpack.c.b16 %v3143, %v3139
    %v4044 = vpack.c.b16 %v3148, %v3144
    %v4045 = vpack.c.b16 %v3149, %v3145
    %v4046 = vpack.c.b16 %v3150, %v3146
    %v4047 = vpack.c.b16 %v3151, %v3147
    %v4048 = vpack.c.b16 %v3156, %v3152
    %v4049 = vpack.c.b16 %v3157, %v3153
    %v4050 = vpack.c.b16 %v3158, %v3154
    %v4051 = vpack.c.b16 %v3159, %v3155
    %v4052 = vpack.c.b16 %v3164, %v3160
    %v4053 = vpack.c.b16 %v3165, %v3161
    %v4054 = vpack.c.b16 %v3166, %v3162
    %v4055 = vpack.c.b16 %v3167, %v3163
    %v4056 = vpack.c.b16 %v3172, %v3168
    %v4057 = vpack.c.b16 %v3173, %v3169
    %v4058 = vpack.c.b16 %v3174, %v3170
    %v4059 = vpack.c.b16 %v3175, %v3171
    %v4060 = vpack.c.b16 %v3180, %v3176
    %v4061 = vpack.c.b16 %v3181, %v3177
    %v4062 = vpack.c.b16 %v3182, %v3178
    %v4063 = vpack.c.b16 %v3183, %v3179
    %v4064 = vpack.c.b16 %v3188, %v3184
    %v4065 = vpack.c.b16 %v3189, %v3185
    %v4066 = vpack.c.b16 %v3190, %v3186
    %v4067 = vpack.c.b16 %v3191, %v3187
    %v4068 = vpack.c.b16 %v3196, %v3192
    %v4069 = vpack.c.b16 %v3197, %v3193
    %v4070 = vpack.c.b16 %v3198, %v3194
    %v4071 = vpack.c.b16 %v3199, %v3195
    %v4072 = vpack.c.b16 %v3204, %v3200
    %v4073 = vpack.c.b16 %v3205, %v3201
    %v4074 = vpack.c.b16 %v3206, %v3202
    %v4075 = vpack.c.b16 %v3207, %v3203
    %v4076 = vpack.c.b16 %v3212, %v3208
    %v4077 = vpack.c.b16 %v3213, %v3209
    %v4078 = vpack.c.b16 %v3214, %v3210
    %v4079 = vpack.c.b16 %v3215, %v3211
    %v4080 = vpack.c.b16 %v3220, %v3216
    %v4081 = vpack.c.b16 %v3221, %v3217
    %v4082 = vpack.c.b16 %v3222, %v3218
    %v4083 = vpack.c.b16 %v3223, %v3219
    %v4084 = vpack.c.b16 %v3228, %v3224
    %v4085 = vpack.c.b16 %v3229, %v3225
    %v4086 = vpack.c.b16 %v3230, %v3226
    %v4087 = vpack.c.b16 %v3231, %v3227
    %v4088 = vpack.c.b16 %v3236, %v3232
    %v4089 = vpack.c.b16 %v3237, %v3233
    %v4090 = vpack.c.b16 %v3238, %v3234
    %v4091 = vpack.c.b16 %v3239, %v3235
    %v4092 = vpack.c.b16 %v3244, %v3240
    %v4093 = vpack.c.b16 %v3245, %v3241
    %v4094 = vpack.c.b16 %v3246, %v3242
    %v4095 = vpack.c.b16 %v3247, %v3243
    %v4096 = vpack.c.b16 %v3252, %v3248
    %v4097 = vpack.c.b16 %v3253, %v3249
    %v4098 = vpack.c.b16 %v3254, %v3250
    %v4099 = vpack.c.b16 %v3255, %v3251
    %v4100 = vpack.c.b16 %v3260, %v3256
    %v4101 = vpack.c.b16 %v3261, %v3257
    %v4102 = vpack.c.b16 %v3262, %v3258
    %v4103 = vpack.c.b16 %v3263, %v3259
    %v4104 = vpack.c.b16 %v3268, %v3264
    %v4105 = vpack.c.b16 %v3269, %v3265
    %v4106 = vpack.c.b16 %v3270, %v3266
    %v4107 = vpack.c.b16 %v3271, %v3267
    %v4108 = vpack.c.b16 %v3276, %v3272
    %v4109 = vpack.c.b16 %v3277, %v3273
    %v4110 = vpack.c.b16 %v3278, %v3274
    %v4111 = vpack.c.b16 %v3279, %v3275
    %v4112 = vpack.c.b16 %v3284, %v3280
    %v4113 = vpack.c.b16 %v3285, %v3281
    %v4114 = vpack.c.b16 %v3286, %v3282
    %v4115 = vpack.c.b16 %v3287, %v3283
    %v4116 = vpack.c.b16 %v3292, %v3288
    %v4117 = vpack.c.b16 %v3293, %v3289
    %v4118 = vpack.c.b16 %v3294, %v3290
    %v4119 = vpack.c.b16 %v3295, %v3291
    %v4120 = vpack.c.b16 %v3300, %v3296
    %v4121 = vpack.c.b16 %v3301, %v3297
    %v4122 = vpack.c.b16 %v3302, %v3298
    %v4123 = vpack.c.b16 %v3303, %v3299
    %v4124 = vpack.c.b16 %v3308, %v3304
    %v4125 = vpack.c.b16 %v3309, %v3305
    %v4126 = vpack.c.b16 %v3310, %v3306
    %v4127 = vpack.c.b16 %v3311, %v3307
    %v4128 = vpack.c.b16 %v3316, %v3312
    %v4129 = vpack.c.b16 %v3317, %v3313
    %v4130 = vpack.c.b16 %v3318, %v3314
    %v4131 = vpack.c.b16 %v3319, %v3315
    %v4132 = vpack.c.b16 %v3324, %v3320
    %v4133 = vpack.c.b16 %v3325, %v3321
    %v4134 = vpack.c.b16 %v3326, %v3322
    %v4135 = vpack.c.b16 %v3327, %v3323
    %v4136 = vpack.c.b16 %v3332, %v3328
    %v4137 = vpack.c.b16 %v3333, %v3329
    %v4138 = vpack.c.b16 %v3334, %v3330
    %v4139 = vpack.c.b16 %v3335, %v3331
    %v4140 = vpack.c.b16 %v3340, %v3336
    %v4141 = vpack.c.b16 %v3341, %v3337
    %v4142 = vpack.c.b16 %v3342, %v3338
    %v4143 = vpack.c.b16 %v3343, %v3339
    %v4144 = vpack.c.b16 %v3348, %v3344
    %v4145 = vpack.c.b16 %v3349, %v3345
    %v4146 = vpack.c.b16 %v3350, %v3346
    %v4147 = vpack.c.b16 %v3351, %v3347
    %v4148 = vpack.c.b16 %v3356, %v3352
    %v4149 = vpack.c.b16 %v3357, %v3353
    %v4150 = vpack.c.b16 %v3358, %v3354
    %v4151 = vpack.c.b16 %v3359, %v3355
    %v4152 = vpack.c.b16 %v3364, %v3360
    %v4153 = vpack.c.b16 %v3365, %v3361
    %v4154 = vpack.c.b16 %v3366, %v3362
    %v4155 = vpack.c.b16 %v3367, %v3363
    %v4156 = vpack.c.b16 %v3372, %v3368
    %v4157 = vpack.c.b16 %v3373, %v3369
    %v4158 = vpack.c.b16 %v3374, %v3370
    %v4159 = vpack.c.b16 %v3375, %v3371
    %vm4944 = vcmask 523264
    %v4946 = vsel %vm4944, %v999, 0
    %4948 = vmatprep.subr.bf16.mxu0 %v3405
    %4949 = vmatpush1.bf16.msra.mxu0 %v3404
    %4950 = vmatprep.subr.bf16.mxu0 %v3401
    %4951 = vmatpush1.bf16.msra.mxu0 %v3400
    %4952 = vmatprep.subr.bf16.mxu0 %v3397
    %4953 = vmatpush1.bf16.msra.mxu0 %v3396
    %4954 = vmatprep.subr.bf16.mxu0 %v3393
    %4955 = vmatpush1.bf16.msra.mxu0 %v3392
    %4956 = vmatprep.subr.bf16.mxu0 %v3389
    %4957 = vmatpush1.bf16.msra.mxu0 %v3388
    %4958 = vmatprep.subr.bf16.mxu0 %v3385
    %4959 = vmatpush1.bf16.msra.mxu0 %v3384
    %4960 = vmatprep.subr.bf16.mxu0 %v3381
    %4961 = vmatpush1.bf16.msra.mxu0 %v3380
    %4962 = vmatprep.subr.bf16.mxu0 %v3377
    %4963 = vmatpush1.bf16.msra.mxu0 %v3376
    %4964 = vmatprep.subr.bf16.mxu0 %v3437
    %4965 = vmatpush2.bf16.msra.mxu0 %v3436
    %4966 = vmatprep.subr.bf16.mxu0 %v3433
    %4967 = vmatpush2.bf16.msra.mxu0 %v3432
    %4968 = vmatprep.subr.bf16.mxu0 %v3429
    %4969 = vmatpush2.bf16.msra.mxu0 %v3428
    %4970 = vmatprep.subr.bf16.mxu0 %v3425
    %4971 = vmatpush2.bf16.msra.mxu0 %v3424
    %4972 = vmatprep.subr.bf16.mxu0 %v3421
    %4973 = vmatpush2.bf16.msra.mxu0 %v3420
    %4974 = vmatprep.subr.bf16.mxu0 %v3417
    %4975 = vmatpush2.bf16.msra.mxu0 %v3416
    %4976 = vmatprep.subr.bf16.mxu0 %v3413
    %4977 = vmatpush2.bf16.msra.mxu0 %v3412
    %4978 = vmatprep.subr.bf16.mxu0 %v3409
    %4979 = vmatpush2.bf16.msra.mxu0 %v3408
    %4980 = vmatprep.mubr.bf16.mxu0 %v876
    %4981 = vmatmul.mubr.bf16.gmra.mxu0 %v862
    %v4982 = vpop.f32.mrf.mxu0
    %v4983 = vadd.f32 %v818, %v4982
    %v4984 = vpop.f32.mrf.mxu0
    %v4985 = vadd.f32 %v822, %v4984
    %v4986 = vpop.f32.mrf.mxu0
    %v4987 = vpop.f32.mrf.mxu0
    %4988 = vdwg.mxu0
    %4989 = vmatprep.subr.bf16.mxu0 %v3469
    %4990 = vmatpush1.bf16.msra.mxu0 %v3468
    %4991 = vmatprep.subr.bf16.mxu0 %v3465
    %4992 = vmatpush1.bf16.msra.mxu0 %v3464
    %4993 = vmatprep.subr.bf16.mxu0 %v3461
    %4994 = vmatpush1.bf16.msra.mxu0 %v3460
    %4995 = vmatprep.subr.bf16.mxu0 %v3457
    %4996 = vmatpush1.bf16.msra.mxu0 %v3456
    %4997 = vmatprep.subr.bf16.mxu0 %v3453
    %4998 = vmatpush1.bf16.msra.mxu0 %v3452
    %4999 = vmatprep.subr.bf16.mxu0 %v3449
    %5000 = vmatpush1.bf16.msra.mxu0 %v3448
    %5001 = vmatprep.subr.bf16.mxu0 %v3445
    %5002 = vmatpush1.bf16.msra.mxu0 %v3444
    %5003 = vmatprep.subr.bf16.mxu0 %v3441
    %5004 = vmatpush1.bf16.msra.mxu0 %v3440
    %5005 = vmatprep.subr.bf16.mxu0 %v3501
    %5006 = vmatpush2.bf16.msra.mxu0 %v3500
    %5007 = vmatprep.subr.bf16.mxu0 %v3497
    %5008 = vmatpush2.bf16.msra.mxu0 %v3496
    %5009 = vmatprep.subr.bf16.mxu0 %v3493
    %5010 = vmatpush2.bf16.msra.mxu0 %v3492
    %5011 = vmatprep.subr.bf16.mxu0 %v3489
    %5012 = vmatpush2.bf16.msra.mxu0 %v3488
    %5013 = vmatprep.subr.bf16.mxu0 %v3485
    %5014 = vmatpush2.bf16.msra.mxu0 %v3484
    %5015 = vmatprep.subr.bf16.mxu0 %v3481
    %5016 = vmatpush2.bf16.msra.mxu0 %v3480
    %5017 = vmatprep.subr.bf16.mxu0 %v3477
    %5018 = vmatpush2.bf16.msra.mxu0 %v3476
    %5019 = vmatprep.subr.bf16.mxu0 %v3473
    %5020 = vmatpush2.bf16.msra.mxu0 %v3472
    %5021 = vmatprep.mubr.bf16.mxu0 %v886
    %5022 = vmatmul.mubr.bf16.gmra.mxu0 %v884
    %v5023 = vpop.f32.mrf.mxu0
    %v5024 = vadd.f32 %v4983, %v5023
    %v5025 = vpop.f32.mrf.mxu0
    %v5026 = vadd.f32 %v4985, %v5025
    %v5027 = vpop.f32.mrf.mxu0
    %v5028 = vpop.f32.mrf.mxu0
    %5029 = vdwg.mxu0
    %5030 = vmatprep.subr.bf16.mxu0 %v3533
    %5031 = vmatpush1.bf16.msra.mxu0 %v3532
    %5032 = vmatprep.subr.bf16.mxu0 %v3529
    %5033 = vmatpush1.bf16.msra.mxu0 %v3528
    %5034 = vmatprep.subr.bf16.mxu0 %v3525
    %5035 = vmatpush1.bf16.msra.mxu0 %v3524
    %5036 = vmatprep.subr.bf16.mxu0 %v3521
    %5037 = vmatpush1.bf16.msra.mxu0 %v3520
    %5038 = vmatprep.subr.bf16.mxu0 %v3517
    %5039 = vmatpush1.bf16.msra.mxu0 %v3516
    %5040 = vmatprep.subr.bf16.mxu0 %v3513
    %5041 = vmatpush1.bf16.msra.mxu0 %v3512
    %5042 = vmatprep.subr.bf16.mxu0 %v3509
    %5043 = vmatpush1.bf16.msra.mxu0 %v3508
    %5044 = vmatprep.subr.bf16.mxu0 %v3505
    %5045 = vmatpush1.bf16.msra.mxu0 %v3504
    %5046 = vmatprep.subr.bf16.mxu0 %v3565
    %5047 = vmatpush2.bf16.msra.mxu0 %v3564
    %5048 = vmatprep.subr.bf16.mxu0 %v3561
    %5049 = vmatpush2.bf16.msra.mxu0 %v3560
    %5050 = vmatprep.subr.bf16.mxu0 %v3557
    %5051 = vmatpush2.bf16.msra.mxu0 %v3556
    %5052 = vmatprep.subr.bf16.mxu0 %v3553
    %5053 = vmatpush2.bf16.msra.mxu0 %v3552
    %5054 = vmatprep.subr.bf16.mxu0 %v3549
    %5055 = vmatpush2.bf16.msra.mxu0 %v3548
    %5056 = vmatprep.subr.bf16.mxu0 %v3545
    %5057 = vmatpush2.bf16.msra.mxu0 %v3544
    %5058 = vmatprep.subr.bf16.mxu0 %v3541
    %5059 = vmatpush2.bf16.msra.mxu0 %v3540
    %5060 = vmatprep.subr.bf16.mxu0 %v3537
    %5061 = vmatpush2.bf16.msra.mxu0 %v3536
    %5062 = vmatprep.mubr.bf16.mxu0 %v883
    %5063 = vmatmul.mubr.bf16.gmra.mxu0 %v869
    %v5064 = vpop.f32.mrf.mxu0
    %v5065 = vadd.f32 %v5024, %v5064
    %v5066 = vpop.f32.mrf.mxu0
    %v5067 = vadd.f32 %v5026, %v5066
    %v5068 = vpop.f32.mrf.mxu0
    %v5069 = vpop.f32.mrf.mxu0
    %5070 = vdwg.mxu0
    %5071 = vmatprep.subr.bf16.mxu0 %v3597
    %5072 = vmatpush1.bf16.msra.mxu0 %v3596
    %5073 = vmatprep.subr.bf16.mxu0 %v3593
    %5074 = vmatpush1.bf16.msra.mxu0 %v3592
    %5075 = vmatprep.subr.bf16.mxu0 %v3589
    %5076 = vmatpush1.bf16.msra.mxu0 %v3588
    %5077 = vmatprep.subr.bf16.mxu0 %v3585
    %5078 = vmatpush1.bf16.msra.mxu0 %v3584
    %5079 = vmatprep.subr.bf16.mxu0 %v3581
    %5080 = vmatpush1.bf16.msra.mxu0 %v3580
    %5081 = vmatprep.subr.bf16.mxu0 %v3577
    %5082 = vmatpush1.bf16.msra.mxu0 %v3576
    %5083 = vmatprep.subr.bf16.mxu0 %v3573
    %5084 = vmatpush1.bf16.msra.mxu0 %v3572
    %5085 = vmatprep.subr.bf16.mxu0 %v3569
    %5086 = vmatpush1.bf16.msra.mxu0 %v3568
    %5087 = vmatprep.subr.bf16.mxu0 %v3629
    %5088 = vmatpush2.bf16.msra.mxu0 %v3628
    %5089 = vmatprep.subr.bf16.mxu0 %v3625
    %5090 = vmatpush2.bf16.msra.mxu0 %v3624
    %5091 = vmatprep.subr.bf16.mxu0 %v3621
    %5092 = vmatpush2.bf16.msra.mxu0 %v3620
    %5093 = vmatprep.subr.bf16.mxu0 %v3617
    %5094 = vmatpush2.bf16.msra.mxu0 %v3616
    %5095 = vmatprep.subr.bf16.mxu0 %v3613
    %5096 = vmatpush2.bf16.msra.mxu0 %v3612
    %5097 = vmatprep.subr.bf16.mxu0 %v3609
    %5098 = vmatpush2.bf16.msra.mxu0 %v3608
    %5099 = vmatprep.subr.bf16.mxu0 %v3605
    %5100 = vmatpush2.bf16.msra.mxu0 %v3604
    %5101 = vmatprep.subr.bf16.mxu0 %v3601
    %5102 = vmatpush2.bf16.msra.mxu0 %v3600
    %5103 = vmatprep.mubr.bf16.mxu0 %v887
    %5104 = vmatmul.mubr.bf16.gmra.mxu0 %v885
    %v5105 = vpop.f32.mrf.mxu0
    %v5106 = vadd.f32 %v5065, %v5105
    %v5107 = vpop.f32.mrf.mxu0
    %v5108 = vadd.f32 %v5067, %v5107
    %v5109 = vpop.f32.mrf.mxu0
    %v5110 = vpop.f32.mrf.mxu0
    %5111 = vdwg.mxu0
    %5112 = vmatprep.subr.bf16.mxu0 %v3661
    %5113 = vmatpush1.bf16.msra.mxu0 %v3660
    %5114 = vmatprep.subr.bf16.mxu0 %v3657
    %5115 = vmatpush1.bf16.msra.mxu0 %v3656
    %5116 = vmatprep.subr.bf16.mxu0 %v3653
    %5117 = vmatpush1.bf16.msra.mxu0 %v3652
    %5118 = vmatprep.subr.bf16.mxu0 %v3649
    %5119 = vmatpush1.bf16.msra.mxu0 %v3648
    %5120 = vmatprep.subr.bf16.mxu0 %v3645
    %5121 = vmatpush1.bf16.msra.mxu0 %v3644
    %5122 = vmatprep.subr.bf16.mxu0 %v3641
    %5123 = vmatpush1.bf16.msra.mxu0 %v3640
    %5124 = vmatprep.subr.bf16.mxu0 %v3637
    %5125 = vmatpush1.bf16.msra.mxu0 %v3636
    %5126 = vmatprep.subr.bf16.mxu0 %v3633
    %5127 = vmatpush1.bf16.msra.mxu0 %v3632
    %5128 = vmatprep.subr.bf16.mxu0 %v3693
    %5129 = vmatpush2.bf16.msra.mxu0 %v3692
    %5130 = vmatprep.subr.bf16.mxu0 %v3689
    %5131 = vmatpush2.bf16.msra.mxu0 %v3688
    %5132 = vmatprep.subr.bf16.mxu0 %v3685
    %5133 = vmatpush2.bf16.msra.mxu0 %v3684
    %5134 = vmatprep.subr.bf16.mxu0 %v3681
    %5135 = vmatpush2.bf16.msra.mxu0 %v3680
    %5136 = vmatprep.subr.bf16.mxu0 %v3677
    %5137 = vmatpush2.bf16.msra.mxu0 %v3676
    %5138 = vmatprep.subr.bf16.mxu0 %v3673
    %5139 = vmatpush2.bf16.msra.mxu0 %v3672
    %5140 = vmatprep.subr.bf16.mxu0 %v3669
    %5141 = vmatpush2.bf16.msra.mxu0 %v3668
    %5142 = vmatprep.subr.bf16.mxu0 %v3665
    %5143 = vmatpush2.bf16.msra.mxu0 %v3664
    %5144 = vmatprep.mubr.bf16.mxu0 %v925
    %5145 = vmatmul.mubr.bf16.gmra.mxu0 %v911
    %v5146 = vpop.f32.mrf.mxu0
    %v5147 = vadd.f32 %v5106, %v5146
    %v5148 = vpop.f32.mrf.mxu0
    %v5149 = vadd.f32 %v5108, %v5148
    %v5150 = vpop.f32.mrf.mxu0
    %v5151 = vpop.f32.mrf.mxu0
    %5152 = vdwg.mxu0
    %5153 = vmatprep.subr.bf16.mxu0 %v3725
    %5154 = vmatpush1.bf16.msra.mxu0 %v3724
    %5155 = vmatprep.subr.bf16.mxu0 %v3721
    %5156 = vmatpush1.bf16.msra.mxu0 %v3720
    %5157 = vmatprep.subr.bf16.mxu0 %v3717
    %5158 = vmatpush1.bf16.msra.mxu0 %v3716
    %5159 = vmatprep.subr.bf16.mxu0 %v3713
    %5160 = vmatpush1.bf16.msra.mxu0 %v3712
    %5161 = vmatprep.subr.bf16.mxu0 %v3709
    %5162 = vmatpush1.bf16.msra.mxu0 %v3708
    %5163 = vmatprep.subr.bf16.mxu0 %v3705
    %5164 = vmatpush1.bf16.msra.mxu0 %v3704
    %5165 = vmatprep.subr.bf16.mxu0 %v3701
    %5166 = vmatpush1.bf16.msra.mxu0 %v3700
    %5167 = vmatprep.subr.bf16.mxu0 %v3697
    %5168 = vmatpush1.bf16.msra.mxu0 %v3696
    %5169 = vmatprep.subr.bf16.mxu0 %v3757
    %5170 = vmatpush2.bf16.msra.mxu0 %v3756
    %5171 = vmatprep.subr.bf16.mxu0 %v3753
    %5172 = vmatpush2.bf16.msra.mxu0 %v3752
    %5173 = vmatprep.subr.bf16.mxu0 %v3749
    %5174 = vmatpush2.bf16.msra.mxu0 %v3748
    %5175 = vmatprep.subr.bf16.mxu0 %v3745
    %5176 = vmatpush2.bf16.msra.mxu0 %v3744
    %5177 = vmatprep.subr.bf16.mxu0 %v3741
    %5178 = vmatpush2.bf16.msra.mxu0 %v3740
    %5179 = vmatprep.subr.bf16.mxu0 %v3737
    %5180 = vmatpush2.bf16.msra.mxu0 %v3736
    %5181 = vmatprep.subr.bf16.mxu0 %v3733
    %5182 = vmatpush2.bf16.msra.mxu0 %v3732
    %5183 = vmatprep.subr.bf16.mxu0 %v3729
    %5184 = vmatpush2.bf16.msra.mxu0 %v3728
    %5185 = vmatprep.mubr.bf16.mxu0 %v935
    %5186 = vmatmul.mubr.bf16.gmra.mxu0 %v933
    %v5187 = vpop.f32.mrf.mxu0
    %v5188 = vadd.f32 %v5147, %v5187
    %v5189 = vpop.f32.mrf.mxu0
    %v5190 = vadd.f32 %v5149, %v5189
    %v5191 = vpop.f32.mrf.mxu0
    %v5192 = vpop.f32.mrf.mxu0
    %5193 = vdwg.mxu0
    %5194 = vmatprep.subr.bf16.mxu0 %v3789
    %5195 = vmatpush1.bf16.msra.mxu0 %v3788
    %5196 = vmatprep.subr.bf16.mxu0 %v3785
    %5197 = vmatpush1.bf16.msra.mxu0 %v3784
    %5198 = vmatprep.subr.bf16.mxu0 %v3781
    %5199 = vmatpush1.bf16.msra.mxu0 %v3780
    %5200 = vmatprep.subr.bf16.mxu0 %v3777
    %5201 = vmatpush1.bf16.msra.mxu0 %v3776
    %5202 = vmatprep.subr.bf16.mxu0 %v3773
    %5203 = vmatpush1.bf16.msra.mxu0 %v3772
    %5204 = vmatprep.subr.bf16.mxu0 %v3769
    %5205 = vmatpush1.bf16.msra.mxu0 %v3768
    %5206 = vmatprep.subr.bf16.mxu0 %v3765
    %5207 = vmatpush1.bf16.msra.mxu0 %v3764
    %5208 = vmatprep.subr.bf16.mxu0 %v3761
    %5209 = vmatpush1.bf16.msra.mxu0 %v3760
    %5210 = vmatprep.subr.bf16.mxu0 %v3821
    %5211 = vmatpush2.bf16.msra.mxu0 %v3820
    %5212 = vmatprep.subr.bf16.mxu0 %v3817
    %5213 = vmatpush2.bf16.msra.mxu0 %v3816
    %5214 = vmatprep.subr.bf16.mxu0 %v3813
    %5215 = vmatpush2.bf16.msra.mxu0 %v3812
    %5216 = vmatprep.subr.bf16.mxu0 %v3809
    %5217 = vmatpush2.bf16.msra.mxu0 %v3808
    %5218 = vmatprep.subr.bf16.mxu0 %v3805
    %5219 = vmatpush2.bf16.msra.mxu0 %v3804
    %5220 = vmatprep.subr.bf16.mxu0 %v3801
    %5221 = vmatpush2.bf16.msra.mxu0 %v3800
    %5222 = vmatprep.subr.bf16.mxu0 %v3797
    %5223 = vmatpush2.bf16.msra.mxu0 %v3796
    %5224 = vmatprep.subr.bf16.mxu0 %v3793
    %5225 = vmatpush2.bf16.msra.mxu0 %v3792
    %5226 = vmatprep.mubr.bf16.mxu0 %v932
    %5227 = vmatmul.mubr.bf16.gmra.mxu0 %v918
    %v5228 = vpop.f32.mrf.mxu0
    %v5229 = vadd.f32 %v5188, %v5228
    %v5230 = vpop.f32.mrf.mxu0
    %v5231 = vadd.f32 %v5190, %v5230
    %v5232 = vpop.f32.mrf.mxu0
    %v5233 = vpop.f32.mrf.mxu0
    %5234 = vdwg.mxu0
    %5235 = vmatprep.subr.bf16.mxu0 %v3853
    %5236 = vmatpush1.bf16.msra.mxu0 %v3852
    %5237 = vmatprep.subr.bf16.mxu0 %v3849
    %5238 = vmatpush1.bf16.msra.mxu0 %v3848
    %5239 = vmatprep.subr.bf16.mxu0 %v3845
    %5240 = vmatpush1.bf16.msra.mxu0 %v3844
    %5241 = vmatprep.subr.bf16.mxu0 %v3841
    %5242 = vmatpush1.bf16.msra.mxu0 %v3840
    %5243 = vmatprep.subr.bf16.mxu0 %v3837
    %5244 = vmatpush1.bf16.msra.mxu0 %v3836
    %5245 = vmatprep.subr.bf16.mxu0 %v3833
    %5246 = vmatpush1.bf16.msra.mxu0 %v3832
    %5247 = vmatprep.subr.bf16.mxu0 %v3829
    %5248 = vmatpush1.bf16.msra.mxu0 %v3828
    %5249 = vmatprep.subr.bf16.mxu0 %v3825
    %5250 = vmatpush1.bf16.msra.mxu0 %v3824
    %5251 = vmatprep.subr.bf16.mxu0 %v3885
    %5252 = vmatpush2.bf16.msra.mxu0 %v3884
    %5253 = vmatprep.subr.bf16.mxu0 %v3881
    %5254 = vmatpush2.bf16.msra.mxu0 %v3880
    %5255 = vmatprep.subr.bf16.mxu0 %v3877
    %5256 = vmatpush2.bf16.msra.mxu0 %v3876
    %5257 = vmatprep.subr.bf16.mxu0 %v3873
    %5258 = vmatpush2.bf16.msra.mxu0 %v3872
    %5259 = vmatprep.subr.bf16.mxu0 %v3869
    %5260 = vmatpush2.bf16.msra.mxu0 %v3868
    %5261 = vmatprep.subr.bf16.mxu0 %v3865
    %5262 = vmatpush2.bf16.msra.mxu0 %v3864
    %5263 = vmatprep.subr.bf16.mxu0 %v3861
    %5264 = vmatpush2.bf16.msra.mxu0 %v3860
    %5265 = vmatprep.subr.bf16.mxu0 %v3857
    %5266 = vmatpush2.bf16.msra.mxu0 %v3856
    %5267 = vmatprep.mubr.bf16.mxu0 %v936
    %5268 = vmatmul.mubr.bf16.gmra.mxu0 %v934
    %v5269 = vpop.f32.mrf.mxu0
    %v5270 = vadd.f32 %v5229, %v5269
    %v5271 = vpop.f32.mrf.mxu0
    %v5272 = vadd.f32 %v5231, %v5271
    %v5273 = vpop.f32.mrf.mxu0
    %v5274 = vpop.f32.mrf.mxu0
    %5275 = vdwg.mxu0
    %5276 = vmatprep.subr.bf16.mxu0 %v3917
    %5277 = vmatpush1.bf16.msra.mxu0 %v3916
    %5278 = vmatprep.subr.bf16.mxu0 %v3913
    %5279 = vmatpush1.bf16.msra.mxu0 %v3912
    %5280 = vmatprep.subr.bf16.mxu0 %v3909
    %5281 = vmatpush1.bf16.msra.mxu0 %v3908
    %5282 = vmatprep.subr.bf16.mxu0 %v3905
    %5283 = vmatpush1.bf16.msra.mxu0 %v3904
    %5284 = vmatprep.subr.bf16.mxu0 %v3901
    %5285 = vmatpush1.bf16.msra.mxu0 %v3900
    %5286 = vmatprep.subr.bf16.mxu0 %v3897
    %5287 = vmatpush1.bf16.msra.mxu0 %v3896
    %5288 = vmatprep.subr.bf16.mxu0 %v3893
    %5289 = vmatpush1.bf16.msra.mxu0 %v3892
    %5290 = vmatprep.subr.bf16.mxu0 %v3889
    %5291 = vmatpush1.bf16.msra.mxu0 %v3888
    %5292 = vmatprep.subr.bf16.mxu0 %v3949
    %5293 = vmatpush2.bf16.msra.mxu0 %v3948
    %5294 = vmatprep.subr.bf16.mxu0 %v3945
    %5295 = vmatpush2.bf16.msra.mxu0 %v3944
    %5296 = vmatprep.subr.bf16.mxu0 %v3941
    %5297 = vmatpush2.bf16.msra.mxu0 %v3940
    %5298 = vmatprep.subr.bf16.mxu0 %v3937
    %5299 = vmatpush2.bf16.msra.mxu0 %v3936
    %5300 = vmatprep.subr.bf16.mxu0 %v3933
    %5301 = vmatpush2.bf16.msra.mxu0 %v3932
    %5302 = vmatprep.subr.bf16.mxu0 %v3929
    %5303 = vmatpush2.bf16.msra.mxu0 %v3928
    %5304 = vmatprep.subr.bf16.mxu0 %v3925
    %5305 = vmatpush2.bf16.msra.mxu0 %v3924
    %5306 = vmatprep.subr.bf16.mxu0 %v3921
    %5307 = vmatpush2.bf16.msra.mxu0 %v3920
    %5308 = vmatprep.mubr.bf16.mxu0 %v974
    %5309 = vmatmul.mubr.bf16.gmra.mxu0 %v960
    %v5310 = vpop.f32.mrf.mxu0
    %v5311 = vadd.f32 %v5270, %v5310
    %v5312 = vpop.f32.mrf.mxu0
    %v5313 = vadd.f32 %v5272, %v5312
    %v5314 = vpop.f32.mrf.mxu0
    %v5315 = vpop.f32.mrf.mxu0
    %5316 = vdwg.mxu0
    %5317 = vmatprep.subr.bf16.mxu0 %v3981
    %5318 = vmatpush1.bf16.msra.mxu0 %v3980
    %5319 = vmatprep.subr.bf16.mxu0 %v3977
    %5320 = vmatpush1.bf16.msra.mxu0 %v3976
    %5321 = vmatprep.subr.bf16.mxu0 %v3973
    %5322 = vmatpush1.bf16.msra.mxu0 %v3972
    %5323 = vmatprep.subr.bf16.mxu0 %v3969
    %5324 = vmatpush1.bf16.msra.mxu0 %v3968
    %5325 = vmatprep.subr.bf16.mxu0 %v3965
    %5326 = vmatpush1.bf16.msra.mxu0 %v3964
    %5327 = vmatprep.subr.bf16.mxu0 %v3961
    %5328 = vmatpush1.bf16.msra.mxu0 %v3960
    %5329 = vmatprep.subr.bf16.mxu0 %v3957
    %5330 = vmatpush1.bf16.msra.mxu0 %v3956
    %5331 = vmatprep.subr.bf16.mxu0 %v3953
    %5332 = vmatpush1.bf16.msra.mxu0 %v3952
    %5333 = vmatprep.subr.bf16.mxu0 %v4013
    %5334 = vmatpush2.bf16.msra.mxu0 %v4012
    %5335 = vmatprep.subr.bf16.mxu0 %v4009
    %5336 = vmatpush2.bf16.msra.mxu0 %v4008
    %5337 = vmatprep.subr.bf16.mxu0 %v4005
    %5338 = vmatpush2.bf16.msra.mxu0 %v4004
    %5339 = vmatprep.subr.bf16.mxu0 %v4001
    %5340 = vmatpush2.bf16.msra.mxu0 %v4000
    %5341 = vmatprep.subr.bf16.mxu0 %v3997
    %5342 = vmatpush2.bf16.msra.mxu0 %v3996
    %5343 = vmatprep.subr.bf16.mxu0 %v3993
    %5344 = vmatpush2.bf16.msra.mxu0 %v3992
    %5345 = vmatprep.subr.bf16.mxu0 %v3989
    %5346 = vmatpush2.bf16.msra.mxu0 %v3988
    %5347 = vmatprep.subr.bf16.mxu0 %v3985
    %5348 = vmatpush2.bf16.msra.mxu0 %v3984
    %5349 = vmatprep.mubr.bf16.mxu0 %v984
    %5350 = vmatmul.mubr.bf16.gmra.mxu0 %v982
    %v5351 = vpop.f32.mrf.mxu0
    %v5352 = vadd.f32 %v5311, %v5351
    %v5353 = vpop.f32.mrf.mxu0
    %v5354 = vadd.f32 %v5313, %v5353
    %v5355 = vpop.f32.mrf.mxu0
    %v5356 = vpop.f32.mrf.mxu0
    %5357 = vdwg.mxu0
    %5358 = vmatprep.subr.bf16.mxu0 %v4045
    %5359 = vmatpush1.bf16.msra.mxu0 %v4044
    %5360 = vmatprep.subr.bf16.mxu0 %v4041
    %5361 = vmatpush1.bf16.msra.mxu0 %v4040
    %5362 = vmatprep.subr.bf16.mxu0 %v4037
    %5363 = vmatpush1.bf16.msra.mxu0 %v4036
    %5364 = vmatprep.subr.bf16.mxu0 %v4033
    %5365 = vmatpush1.bf16.msra.mxu0 %v4032
    %5366 = vmatprep.subr.bf16.mxu0 %v4029
    %5367 = vmatpush1.bf16.msra.mxu0 %v4028
    %5368 = vmatprep.subr.bf16.mxu0 %v4025
    %5369 = vmatpush1.bf16.msra.mxu0 %v4024
    %5370 = vmatprep.subr.bf16.mxu0 %v4021
    %5371 = vmatpush1.bf16.msra.mxu0 %v4020
    %5372 = vmatprep.subr.bf16.mxu0 %v4017
    %5373 = vmatpush1.bf16.msra.mxu0 %v4016
    %5374 = vmatprep.subr.bf16.mxu0 %v4077
    %5375 = vmatpush2.bf16.msra.mxu0 %v4076
    %5376 = vmatprep.subr.bf16.mxu0 %v4073
    %5377 = vmatpush2.bf16.msra.mxu0 %v4072
    %5378 = vmatprep.subr.bf16.mxu0 %v4069
    %5379 = vmatpush2.bf16.msra.mxu0 %v4068
    %5380 = vmatprep.subr.bf16.mxu0 %v4065
    %5381 = vmatpush2.bf16.msra.mxu0 %v4064
    %5382 = vmatprep.subr.bf16.mxu0 %v4061
    %5383 = vmatpush2.bf16.msra.mxu0 %v4060
    %5384 = vmatprep.subr.bf16.mxu0 %v4057
    %5385 = vmatpush2.bf16.msra.mxu0 %v4056
    %5386 = vmatprep.subr.bf16.mxu0 %v4053
    %5387 = vmatpush2.bf16.msra.mxu0 %v4052
    %5388 = vmatprep.subr.bf16.mxu0 %v4049
    %5389 = vmatpush2.bf16.msra.mxu0 %v4048
    %5390 = vmatprep.mubr.bf16.mxu0 %v981
    %5391 = vmatmul.mubr.bf16.gmra.mxu0 %v967
    %v5392 = vpop.f32.mrf.mxu0
    %v5393 = vadd.f32 %v5352, %v5392
    %v5394 = vpop.f32.mrf.mxu0
    %v5395 = vadd.f32 %v5354, %v5394
    %v5396 = vpop.f32.mrf.mxu0
    %v5397 = vpop.f32.mrf.mxu0
    %5398 = vdwg.mxu0
    %5399 = vmatprep.subr.bf16.mxu0 %v4109
    %5400 = vmatpush1.bf16.msra.mxu0 %v4108
    %5401 = vmatprep.subr.bf16.mxu0 %v4105
    %5402 = vmatpush1.bf16.msra.mxu0 %v4104
    %5403 = vmatprep.subr.bf16.mxu0 %v4101
    %5404 = vmatpush1.bf16.msra.mxu0 %v4100
    %5405 = vmatprep.subr.bf16.mxu0 %v4097
    %5406 = vmatpush1.bf16.msra.mxu0 %v4096
    %5407 = vmatprep.subr.bf16.mxu0 %v4093
    %5408 = vmatpush1.bf16.msra.mxu0 %v4092
    %5409 = vmatprep.subr.bf16.mxu0 %v4089
    %5410 = vmatpush1.bf16.msra.mxu0 %v4088
    %5411 = vmatprep.subr.bf16.mxu0 %v4085
    %5412 = vmatpush1.bf16.msra.mxu0 %v4084
    %5413 = vmatprep.subr.bf16.mxu0 %v4081
    %5414 = vmatpush1.bf16.msra.mxu0 %v4080
    %5415 = vmatprep.subr.bf16.mxu0 %v4141
    %5416 = vmatpush2.bf16.msra.mxu0 %v4140
    %5417 = vmatprep.subr.bf16.mxu0 %v4137
    %5418 = vmatpush2.bf16.msra.mxu0 %v4136
    %5419 = vmatprep.subr.bf16.mxu0 %v4133
    %5420 = vmatpush2.bf16.msra.mxu0 %v4132
    %5421 = vmatprep.subr.bf16.mxu0 %v4129
    %5422 = vmatpush2.bf16.msra.mxu0 %v4128
    %5423 = vmatprep.subr.bf16.mxu0 %v4125
    %5424 = vmatpush2.bf16.msra.mxu0 %v4124
    %5425 = vmatprep.subr.bf16.mxu0 %v4121
    %5426 = vmatpush2.bf16.msra.mxu0 %v4120
    %5427 = vmatprep.subr.bf16.mxu0 %v4117
    %5428 = vmatpush2.bf16.msra.mxu0 %v4116
    %5429 = vmatprep.subr.bf16.mxu0 %v4113
    %5430 = vmatpush2.bf16.msra.mxu0 %v4112
    %5431 = vmatprep.mubr.bf16.mxu0 %v985
    %5432 = vmatmul.mubr.bf16.gmra.mxu0 %v983
    %v5433 = vpop.f32.mrf.mxu0
    %v5434 = vadd.f32 %v5393, %v5433
    %v5435 = vpop.f32.mrf.mxu0
    %v5436 = vadd.f32 %v5395, %v5435
    %v5437 = vpop.f32.mrf.mxu0
    %v5438 = vpop.f32.mrf.mxu0
    %5439 = vdwg.mxu0
    %5440 = vmatprep.subr.bf16.mxu0 0
    %5441 = vmatpush1.bf16.msra.mxu0 0
    %5442 = vmatprep.subr.bf16.mxu0 0
    %5443 = vmatpush1.bf16.msra.mxu0 0
    %5444 = vmatprep.subr.bf16.mxu0 0
    %5445 = vmatpush1.bf16.msra.mxu0 0
    %5446 = vmatprep.subr.bf16.mxu0 0
    %5447 = vmatpush1.bf16.msra.mxu0 0
    %5448 = vmatprep.subr.bf16.mxu0 %v4157
    %5449 = vmatpush1.bf16.msra.mxu0 %v4156
    %5450 = vmatprep.subr.bf16.mxu0 %v4153
    %5451 = vmatpush1.bf16.msra.mxu0 %v4152
    %5452 = vmatprep.subr.bf16.mxu0 %v4149
    %5453 = vmatpush1.bf16.msra.mxu0 %v4148
    %5454 = vmatprep.subr.bf16.mxu0 %v4145
    %5455 = vmatpush1.bf16.msra.mxu0 %v4144
    %5456 = vmatprep.subr.bf16.mxu0 0
    %5457 = vmatpush2.bf16.msra.mxu0 0
    %5458 = vmatprep.subr.bf16.mxu0 0
    %5459 = vmatpush2.bf16.msra.mxu0 0
    %5460 = vmatprep.subr.bf16.mxu0 0
    %5461 = vmatpush2.bf16.msra.mxu0 0
    %5462 = vmatprep.subr.bf16.mxu0 0
    %5463 = vmatpush2.bf16.msra.mxu0 0
    %5464 = vmatprep.subr.bf16.mxu0 0
    %5465 = vmatpush2.bf16.msra.mxu0 0
    %5466 = vmatprep.subr.bf16.mxu0 0
    %5467 = vmatpush2.bf16.msra.mxu0 0
    %5468 = vmatprep.subr.bf16.mxu0 0
    %5469 = vmatpush2.bf16.msra.mxu0 0
    %5470 = vmatprep.subr.bf16.mxu0 0
    %5471 = vmatpush2.bf16.msra.mxu0 0
    %5472 = vmatprep.mubr.bf16.mxu0 0
    %5473 = vmatmul.mubr.bf16.gmra.mxu0 %v4946
    %v5474 = vpop.f32.mrf.mxu0
    %v5475 = vadd.f32 %v5434, %v5474
    %v5476 = vpop.f32.mrf.mxu0
    %v5477 = vadd.f32 %v5436, %v5476
    %v5478 = vpop.f32.mrf.mxu0
    %v5479 = vpop.f32.mrf.mxu0
    %5480 = vdwg.mxu0
    %5481 = vmatprep.subr.bf16.mxu0 %v3407
    %5482 = vmatpush1.bf16.msra.mxu0 %v3406
    %5483 = vmatprep.subr.bf16.mxu0 %v3403
    %5484 = vmatpush1.bf16.msra.mxu0 %v3402
    %5485 = vmatprep.subr.bf16.mxu0 %v3399
    %5486 = vmatpush1.bf16.msra.mxu0 %v3398
    %5487 = vmatprep.subr.bf16.mxu0 %v3395
    %5488 = vmatpush1.bf16.msra.mxu0 %v3394
    %5489 = vmatprep.subr.bf16.mxu0 %v3391
    %5490 = vmatpush1.bf16.msra.mxu0 %v3390
    %5491 = vmatprep.subr.bf16.mxu0 %v3387
    %5492 = vmatpush1.bf16.msra.mxu0 %v3386
    %5493 = vmatprep.subr.bf16.mxu0 %v3383
    %5494 = vmatpush1.bf16.msra.mxu0 %v3382
    %5495 = vmatprep.subr.bf16.mxu0 %v3379
    %5496 = vmatpush1.bf16.msra.mxu0 %v3378
    %5497 = vmatprep.subr.bf16.mxu0 %v3439
    %5498 = vmatpush2.bf16.msra.mxu0 %v3438
    %5499 = vmatprep.subr.bf16.mxu0 %v3435
    %5500 = vmatpush2.bf16.msra.mxu0 %v3434
    %5501 = vmatprep.subr.bf16.mxu0 %v3431
    %5502 = vmatpush2.bf16.msra.mxu0 %v3430
    %5503 = vmatprep.subr.bf16.mxu0 %v3427
    %5504 = vmatpush2.bf16.msra.mxu0 %v3426
    %5505 = vmatprep.subr.bf16.mxu0 %v3423
    %5506 = vmatpush2.bf16.msra.mxu0 %v3422
    %5507 = vmatprep.subr.bf16.mxu0 %v3419
    %5508 = vmatpush2.bf16.msra.mxu0 %v3418
    %5509 = vmatprep.subr.bf16.mxu0 %v3415
    %5510 = vmatpush2.bf16.msra.mxu0 %v3414
    %5511 = vmatprep.subr.bf16.mxu0 %v3411
    %5512 = vmatpush2.bf16.msra.mxu0 %v3410
    %5513 = vmatprep.mubr.bf16.mxu0 %v876
    %5514 = vmatmul.mubr.bf16.gmra.mxu0 %v862
    %v5515 = vpop.f32.mrf.mxu0
    %v5516 = vadd.f32 %v826, %v5515
    %v5517 = vpop.f32.mrf.mxu0
    %v5518 = vadd.f32 %v830, %v5517
    %v5519 = vpop.f32.mrf.mxu0
    %v5520 = vpop.f32.mrf.mxu0
    %5521 = vdwg.mxu0
    %5522 = vmatprep.subr.bf16.mxu0 %v3471
    %5523 = vmatpush1.bf16.msra.mxu0 %v3470
    %5524 = vmatprep.subr.bf16.mxu0 %v3467
    %5525 = vmatpush1.bf16.msra.mxu0 %v3466
    %5526 = vmatprep.subr.bf16.mxu0 %v3463
    %5527 = vmatpush1.bf16.msra.mxu0 %v3462
    %5528 = vmatprep.subr.bf16.mxu0 %v3459
    %5529 = vmatpush1.bf16.msra.mxu0 %v3458
    %5530 = vmatprep.subr.bf16.mxu0 %v3455
    %5531 = vmatpush1.bf16.msra.mxu0 %v3454
    %5532 = vmatprep.subr.bf16.mxu0 %v3451
    %5533 = vmatpush1.bf16.msra.mxu0 %v3450
    %5534 = vmatprep.subr.bf16.mxu0 %v3447
    %5535 = vmatpush1.bf16.msra.mxu0 %v3446
    %5536 = vmatprep.subr.bf16.mxu0 %v3443
    %5537 = vmatpush1.bf16.msra.mxu0 %v3442
    %5538 = vmatprep.subr.bf16.mxu0 %v3503
    %5539 = vmatpush2.bf16.msra.mxu0 %v3502
    %5540 = vmatprep.subr.bf16.mxu0 %v3499
    %5541 = vmatpush2.bf16.msra.mxu0 %v3498
    %5542 = vmatprep.subr.bf16.mxu0 %v3495
    %5543 = vmatpush2.bf16.msra.mxu0 %v3494
    %5544 = vmatprep.subr.bf16.mxu0 %v3491
    %5545 = vmatpush2.bf16.msra.mxu0 %v3490
    %5546 = vmatprep.subr.bf16.mxu0 %v3487
    %5547 = vmatpush2.bf16.msra.mxu0 %v3486
    %5548 = vmatprep.subr.bf16.mxu0 %v3483
    %5549 = vmatpush2.bf16.msra.mxu0 %v3482
    %5550 = vmatprep.subr.bf16.mxu0 %v3479
    %5551 = vmatpush2.bf16.msra.mxu0 %v3478
    %5552 = vmatprep.subr.bf16.mxu0 %v3475
    %5553 = vmatpush2.bf16.msra.mxu0 %v3474
    %5554 = vmatprep.mubr.bf16.mxu0 %v886
    %5555 = vmatmul.mubr.bf16.gmra.mxu0 %v884
    %v5556 = vpop.f32.mrf.mxu0
    %v5557 = vadd.f32 %v5516, %v5556
    %v5558 = vpop.f32.mrf.mxu0
    %v5559 = vadd.f32 %v5518, %v5558
    %v5560 = vpop.f32.mrf.mxu0
    %v5561 = vpop.f32.mrf.mxu0
    %5562 = vdwg.mxu0
    %5563 = vmatprep.subr.bf16.mxu0 %v3535
    %5564 = vmatpush1.bf16.msra.mxu0 %v3534
    %5565 = vmatprep.subr.bf16.mxu0 %v3531
    %5566 = vmatpush1.bf16.msra.mxu0 %v3530
    %5567 = vmatprep.subr.bf16.mxu0 %v3527
    %5568 = vmatpush1.bf16.msra.mxu0 %v3526
    %5569 = vmatprep.subr.bf16.mxu0 %v3523
    %5570 = vmatpush1.bf16.msra.mxu0 %v3522
    %5571 = vmatprep.subr.bf16.mxu0 %v3519
    %5572 = vmatpush1.bf16.msra.mxu0 %v3518
    %5573 = vmatprep.subr.bf16.mxu0 %v3515
    %5574 = vmatpush1.bf16.msra.mxu0 %v3514
    %5575 = vmatprep.subr.bf16.mxu0 %v3511
    %5576 = vmatpush1.bf16.msra.mxu0 %v3510
    %5577 = vmatprep.subr.bf16.mxu0 %v3507
    %5578 = vmatpush1.bf16.msra.mxu0 %v3506
    %5579 = vmatprep.subr.bf16.mxu0 %v3567
    %5580 = vmatpush2.bf16.msra.mxu0 %v3566
    %5581 = vmatprep.subr.bf16.mxu0 %v3563
    %5582 = vmatpush2.bf16.msra.mxu0 %v3562
    %5583 = vmatprep.subr.bf16.mxu0 %v3559
    %5584 = vmatpush2.bf16.msra.mxu0 %v3558
    %5585 = vmatprep.subr.bf16.mxu0 %v3555
    %5586 = vmatpush2.bf16.msra.mxu0 %v3554
    %5587 = vmatprep.subr.bf16.mxu0 %v3551
    %5588 = vmatpush2.bf16.msra.mxu0 %v3550
    %5589 = vmatprep.subr.bf16.mxu0 %v3547
    %5590 = vmatpush2.bf16.msra.mxu0 %v3546
    %5591 = vmatprep.subr.bf16.mxu0 %v3543
    %5592 = vmatpush2.bf16.msra.mxu0 %v3542
    %5593 = vmatprep.subr.bf16.mxu0 %v3539
    %5594 = vmatpush2.bf16.msra.mxu0 %v3538
    %5595 = vmatprep.mubr.bf16.mxu0 %v883
    %5596 = vmatmul.mubr.bf16.gmra.mxu0 %v869
    %v5597 = vpop.f32.mrf.mxu0
    %v5598 = vadd.f32 %v5557, %v5597
    %v5599 = vpop.f32.mrf.mxu0
    %v5600 = vadd.f32 %v5559, %v5599
    %v5601 = vpop.f32.mrf.mxu0
    %v5602 = vpop.f32.mrf.mxu0
    %5603 = vdwg.mxu0
    %5604 = vmatprep.subr.bf16.mxu0 %v3599
    %5605 = vmatpush1.bf16.msra.mxu0 %v3598
    %5606 = vmatprep.subr.bf16.mxu0 %v3595
    %5607 = vmatpush1.bf16.msra.mxu0 %v3594
    %5608 = vmatprep.subr.bf16.mxu0 %v3591
    %5609 = vmatpush1.bf16.msra.mxu0 %v3590
    %5610 = vmatprep.subr.bf16.mxu0 %v3587
    %5611 = vmatpush1.bf16.msra.mxu0 %v3586
    %5612 = vmatprep.subr.bf16.mxu0 %v3583
    %5613 = vmatpush1.bf16.msra.mxu0 %v3582
    %5614 = vmatprep.subr.bf16.mxu0 %v3579
    %5615 = vmatpush1.bf16.msra.mxu0 %v3578
    %5616 = vmatprep.subr.bf16.mxu0 %v3575
    %5617 = vmatpush1.bf16.msra.mxu0 %v3574
    %5618 = vmatprep.subr.bf16.mxu0 %v3571
    %5619 = vmatpush1.bf16.msra.mxu0 %v3570
    %5620 = vmatprep.subr.bf16.mxu0 %v3631
    %5621 = vmatpush2.bf16.msra.mxu0 %v3630
    %5622 = vmatprep.subr.bf16.mxu0 %v3627
    %5623 = vmatpush2.bf16.msra.mxu0 %v3626
    %5624 = vmatprep.subr.bf16.mxu0 %v3623
    %5625 = vmatpush2.bf16.msra.mxu0 %v3622
    %5626 = vmatprep.subr.bf16.mxu0 %v3619
    %5627 = vmatpush2.bf16.msra.mxu0 %v3618
    %5628 = vmatprep.subr.bf16.mxu0 %v3615
    %5629 = vmatpush2.bf16.msra.mxu0 %v3614
    %5630 = vmatprep.subr.bf16.mxu0 %v3611
    %5631 = vmatpush2.bf16.msra.mxu0 %v3610
    %5632 = vmatprep.subr.bf16.mxu0 %v3607
    %5633 = vmatpush2.bf16.msra.mxu0 %v3606
    %5634 = vmatprep.subr.bf16.mxu0 %v3603
    %5635 = vmatpush2.bf16.msra.mxu0 %v3602
    %5636 = vmatprep.mubr.bf16.mxu0 %v887
    %5637 = vmatmul.mubr.bf16.gmra.mxu0 %v885
    %v5638 = vpop.f32.mrf.mxu0
    %v5639 = vadd.f32 %v5598, %v5638
    %v5640 = vpop.f32.mrf.mxu0
    %v5641 = vadd.f32 %v5600, %v5640
    %v5642 = vpop.f32.mrf.mxu0
    %v5643 = vpop.f32.mrf.mxu0
    %5644 = vdwg.mxu0
    %5645 = vmatprep.subr.bf16.mxu0 %v3663
    %5646 = vmatpush1.bf16.msra.mxu0 %v3662
    %5647 = vmatprep.subr.bf16.mxu0 %v3659
    %5648 = vmatpush1.bf16.msra.mxu0 %v3658
    %5649 = vmatprep.subr.bf16.mxu0 %v3655
    %5650 = vmatpush1.bf16.msra.mxu0 %v3654
    %5651 = vmatprep.subr.bf16.mxu0 %v3651
    %5652 = vmatpush1.bf16.msra.mxu0 %v3650
    %5653 = vmatprep.subr.bf16.mxu0 %v3647
    %5654 = vmatpush1.bf16.msra.mxu0 %v3646
    %5655 = vmatprep.subr.bf16.mxu0 %v3643
    %5656 = vmatpush1.bf16.msra.mxu0 %v3642
    %5657 = vmatprep.subr.bf16.mxu0 %v3639
    %5658 = vmatpush1.bf16.msra.mxu0 %v3638
    %5659 = vmatprep.subr.bf16.mxu0 %v3635
    %5660 = vmatpush1.bf16.msra.mxu0 %v3634
    %5661 = vmatprep.subr.bf16.mxu0 %v3695
    %5662 = vmatpush2.bf16.msra.mxu0 %v3694
    %5663 = vmatprep.subr.bf16.mxu0 %v3691
    %5664 = vmatpush2.bf16.msra.mxu0 %v3690
    %5665 = vmatprep.subr.bf16.mxu0 %v3687
    %5666 = vmatpush2.bf16.msra.mxu0 %v3686
    %5667 = vmatprep.subr.bf16.mxu0 %v3683
    %5668 = vmatpush2.bf16.msra.mxu0 %v3682
    %5669 = vmatprep.subr.bf16.mxu0 %v3679
    %5670 = vmatpush2.bf16.msra.mxu0 %v3678
    %5671 = vmatprep.subr.bf16.mxu0 %v3675
    %5672 = vmatpush2.bf16.msra.mxu0 %v3674
    %5673 = vmatprep.subr.bf16.mxu0 %v3671
    %5674 = vmatpush2.bf16.msra.mxu0 %v3670
    %5675 = vmatprep.subr.bf16.mxu0 %v3667
    %5676 = vmatpush2.bf16.msra.mxu0 %v3666
    %5677 = vmatprep.mubr.bf16.mxu0 %v925
    %5678 = vmatmul.mubr.bf16.gmra.mxu0 %v911
    %v5679 = vpop.f32.mrf.mxu0
    %v5680 = vadd.f32 %v5639, %v5679
    %v5681 = vpop.f32.mrf.mxu0
    %v5682 = vadd.f32 %v5641, %v5681
    %v5683 = vpop.f32.mrf.mxu0
    %v5684 = vpop.f32.mrf.mxu0
    %5685 = vdwg.mxu0
    %5686 = vmatprep.subr.bf16.mxu0 %v3727
    %5687 = vmatpush1.bf16.msra.mxu0 %v3726
    %5688 = vmatprep.subr.bf16.mxu0 %v3723
    %5689 = vmatpush1.bf16.msra.mxu0 %v3722
    %5690 = vmatprep.subr.bf16.mxu0 %v3719
    %5691 = vmatpush1.bf16.msra.mxu0 %v3718
    %5692 = vmatprep.subr.bf16.mxu0 %v3715
    %5693 = vmatpush1.bf16.msra.mxu0 %v3714
    %5694 = vmatprep.subr.bf16.mxu0 %v3711
    %5695 = vmatpush1.bf16.msra.mxu0 %v3710
    %5696 = vmatprep.subr.bf16.mxu0 %v3707
    %5697 = vmatpush1.bf16.msra.mxu0 %v3706
    %5698 = vmatprep.subr.bf16.mxu0 %v3703
    %5699 = vmatpush1.bf16.msra.mxu0 %v3702
    %5700 = vmatprep.subr.bf16.mxu0 %v3699
    %5701 = vmatpush1.bf16.msra.mxu0 %v3698
    %5702 = vmatprep.subr.bf16.mxu0 %v3759
    %5703 = vmatpush2.bf16.msra.mxu0 %v3758
    %5704 = vmatprep.subr.bf16.mxu0 %v3755
    %5705 = vmatpush2.bf16.msra.mxu0 %v3754
    %5706 = vmatprep.subr.bf16.mxu0 %v3751
    %5707 = vmatpush2.bf16.msra.mxu0 %v3750
    %5708 = vmatprep.subr.bf16.mxu0 %v3747
    %5709 = vmatpush2.bf16.msra.mxu0 %v3746
    %5710 = vmatprep.subr.bf16.mxu0 %v3743
    %5711 = vmatpush2.bf16.msra.mxu0 %v3742
    %5712 = vmatprep.subr.bf16.mxu0 %v3739
    %5713 = vmatpush2.bf16.msra.mxu0 %v3738
    %5714 = vmatprep.subr.bf16.mxu0 %v3735
    %5715 = vmatpush2.bf16.msra.mxu0 %v3734
    %5716 = vmatprep.subr.bf16.mxu0 %v3731
    %5717 = vmatpush2.bf16.msra.mxu0 %v3730
    %5718 = vmatprep.mubr.bf16.mxu0 %v935
    %5719 = vmatmul.mubr.bf16.gmra.mxu0 %v933
    %v5720 = vpop.f32.mrf.mxu0
    %v5721 = vadd.f32 %v5680, %v5720
    %v5722 = vpop.f32.mrf.mxu0
    %v5723 = vadd.f32 %v5682, %v5722
    %v5724 = vpop.f32.mrf.mxu0
    %v5725 = vpop.f32.mrf.mxu0
    %5726 = vdwg.mxu0
    %5727 = vmatprep.subr.bf16.mxu0 %v3791
    %5728 = vmatpush1.bf16.msra.mxu0 %v3790
    %5729 = vmatprep.subr.bf16.mxu0 %v3787
    %5730 = vmatpush1.bf16.msra.mxu0 %v3786
    %5731 = vmatprep.subr.bf16.mxu0 %v3783
    %5732 = vmatpush1.bf16.msra.mxu0 %v3782
    %5733 = vmatprep.subr.bf16.mxu0 %v3779
    %5734 = vmatpush1.bf16.msra.mxu0 %v3778
    %5735 = vmatprep.subr.bf16.mxu0 %v3775
    %5736 = vmatpush1.bf16.msra.mxu0 %v3774
    %5737 = vmatprep.subr.bf16.mxu0 %v3771
    %5738 = vmatpush1.bf16.msra.mxu0 %v3770
    %5739 = vmatprep.subr.bf16.mxu0 %v3767
    %5740 = vmatpush1.bf16.msra.mxu0 %v3766
    %5741 = vmatprep.subr.bf16.mxu0 %v3763
    %5742 = vmatpush1.bf16.msra.mxu0 %v3762
    %5743 = vmatprep.subr.bf16.mxu0 %v3823
    %5744 = vmatpush2.bf16.msra.mxu0 %v3822
    %5745 = vmatprep.subr.bf16.mxu0 %v3819
    %5746 = vmatpush2.bf16.msra.mxu0 %v3818
    %5747 = vmatprep.subr.bf16.mxu0 %v3815
    %5748 = vmatpush2.bf16.msra.mxu0 %v3814
    %5749 = vmatprep.subr.bf16.mxu0 %v3811
    %5750 = vmatpush2.bf16.msra.mxu0 %v3810
    %5751 = vmatprep.subr.bf16.mxu0 %v3807
    %5752 = vmatpush2.bf16.msra.mxu0 %v3806
    %5753 = vmatprep.subr.bf16.mxu0 %v3803
    %5754 = vmatpush2.bf16.msra.mxu0 %v3802
    %5755 = vmatprep.subr.bf16.mxu0 %v3799
    %5756 = vmatpush2.bf16.msra.mxu0 %v3798
    %5757 = vmatprep.subr.bf16.mxu0 %v3795
    %5758 = vmatpush2.bf16.msra.mxu0 %v3794
    %5759 = vmatprep.mubr.bf16.mxu0 %v932
    %5760 = vmatmul.mubr.bf16.gmra.mxu0 %v918
    %v5761 = vpop.f32.mrf.mxu0
    %v5762 = vadd.f32 %v5721, %v5761
    %v5763 = vpop.f32.mrf.mxu0
    %v5764 = vadd.f32 %v5723, %v5763
    %v5765 = vpop.f32.mrf.mxu0
    %v5766 = vpop.f32.mrf.mxu0
    %5767 = vdwg.mxu0
    %5768 = vmatprep.subr.bf16.mxu0 %v3855
    %5769 = vmatpush1.bf16.msra.mxu0 %v3854
    %5770 = vmatprep.subr.bf16.mxu0 %v3851
    %5771 = vmatpush1.bf16.msra.mxu0 %v3850
    %5772 = vmatprep.subr.bf16.mxu0 %v3847
    %5773 = vmatpush1.bf16.msra.mxu0 %v3846
    %5774 = vmatprep.subr.bf16.mxu0 %v3843
    %5775 = vmatpush1.bf16.msra.mxu0 %v3842
    %5776 = vmatprep.subr.bf16.mxu0 %v3839
    %5777 = vmatpush1.bf16.msra.mxu0 %v3838
    %5778 = vmatprep.subr.bf16.mxu0 %v3835
    %5779 = vmatpush1.bf16.msra.mxu0 %v3834
    %5780 = vmatprep.subr.bf16.mxu0 %v3831
    %5781 = vmatpush1.bf16.msra.mxu0 %v3830
    %5782 = vmatprep.subr.bf16.mxu0 %v3827
    %5783 = vmatpush1.bf16.msra.mxu0 %v3826
    %5784 = vmatprep.subr.bf16.mxu0 %v3887
    %5785 = vmatpush2.bf16.msra.mxu0 %v3886
    %5786 = vmatprep.subr.bf16.mxu0 %v3883
    %5787 = vmatpush2.bf16.msra.mxu0 %v3882
    %5788 = vmatprep.subr.bf16.mxu0 %v3879
    %5789 = vmatpush2.bf16.msra.mxu0 %v3878
    %5790 = vmatprep.subr.bf16.mxu0 %v3875
    %5791 = vmatpush2.bf16.msra.mxu0 %v3874
    %5792 = vmatprep.subr.bf16.mxu0 %v3871
    %5793 = vmatpush2.bf16.msra.mxu0 %v3870
    %5794 = vmatprep.subr.bf16.mxu0 %v3867
    %5795 = vmatpush2.bf16.msra.mxu0 %v3866
    %5796 = vmatprep.subr.bf16.mxu0 %v3863
    %5797 = vmatpush2.bf16.msra.mxu0 %v3862
    %5798 = vmatprep.subr.bf16.mxu0 %v3859
    %5799 = vmatpush2.bf16.msra.mxu0 %v3858
    %5800 = vmatprep.mubr.bf16.mxu0 %v936
    %5801 = vmatmul.mubr.bf16.gmra.mxu0 %v934
    %v5802 = vpop.f32.mrf.mxu0
    %v5803 = vadd.f32 %v5762, %v5802
    %v5804 = vpop.f32.mrf.mxu0
    %v5805 = vadd.f32 %v5764, %v5804
    %v5806 = vpop.f32.mrf.mxu0
    %v5807 = vpop.f32.mrf.mxu0
    %5808 = vdwg.mxu0
    %5809 = vmatprep.subr.bf16.mxu0 %v3919
    %5810 = vmatpush1.bf16.msra.mxu0 %v3918
    %5811 = vmatprep.subr.bf16.mxu0 %v3915
    %5812 = vmatpush1.bf16.msra.mxu0 %v3914
    %5813 = vmatprep.subr.bf16.mxu0 %v3911
    %5814 = vmatpush1.bf16.msra.mxu0 %v3910
    %5815 = vmatprep.subr.bf16.mxu0 %v3907
    %5816 = vmatpush1.bf16.msra.mxu0 %v3906
    %5817 = vmatprep.subr.bf16.mxu0 %v3903
    %5818 = vmatpush1.bf16.msra.mxu0 %v3902
    %5819 = vmatprep.subr.bf16.mxu0 %v3899
    %5820 = vmatpush1.bf16.msra.mxu0 %v3898
    %5821 = vmatprep.subr.bf16.mxu0 %v3895
    %5822 = vmatpush1.bf16.msra.mxu0 %v3894
    %5823 = vmatprep.subr.bf16.mxu0 %v3891
    %5824 = vmatpush1.bf16.msra.mxu0 %v3890
    %5825 = vmatprep.subr.bf16.mxu0 %v3951
    %5826 = vmatpush2.bf16.msra.mxu0 %v3950
    %5827 = vmatprep.subr.bf16.mxu0 %v3947
    %5828 = vmatpush2.bf16.msra.mxu0 %v3946
    %5829 = vmatprep.subr.bf16.mxu0 %v3943
    %5830 = vmatpush2.bf16.msra.mxu0 %v3942
    %5831 = vmatprep.subr.bf16.mxu0 %v3939
    %5832 = vmatpush2.bf16.msra.mxu0 %v3938
    %5833 = vmatprep.subr.bf16.mxu0 %v3935
    %5834 = vmatpush2.bf16.msra.mxu0 %v3934
    %5835 = vmatprep.subr.bf16.mxu0 %v3931
    %5836 = vmatpush2.bf16.msra.mxu0 %v3930
    %5837 = vmatprep.subr.bf16.mxu0 %v3927
    %5838 = vmatpush2.bf16.msra.mxu0 %v3926
    %5839 = vmatprep.subr.bf16.mxu0 %v3923
    %5840 = vmatpush2.bf16.msra.mxu0 %v3922
    %5841 = vmatprep.mubr.bf16.mxu0 %v974
    %5842 = vmatmul.mubr.bf16.gmra.mxu0 %v960
    %v5843 = vpop.f32.mrf.mxu0
    %v5844 = vadd.f32 %v5803, %v5843
    %v5845 = vpop.f32.mrf.mxu0
    %v5846 = vadd.f32 %v5805, %v5845
    %v5847 = vpop.f32.mrf.mxu0
    %v5848 = vpop.f32.mrf.mxu0
    %5849 = vdwg.mxu0
    %5850 = vmatprep.subr.bf16.mxu0 %v3983
    %5851 = vmatpush1.bf16.msra.mxu0 %v3982
    %5852 = vmatprep.subr.bf16.mxu0 %v3979
    %5853 = vmatpush1.bf16.msra.mxu0 %v3978
    %5854 = vmatprep.subr.bf16.mxu0 %v3975
    %5855 = vmatpush1.bf16.msra.mxu0 %v3974
    %5856 = vmatprep.subr.bf16.mxu0 %v3971
    %5857 = vmatpush1.bf16.msra.mxu0 %v3970
    %5858 = vmatprep.subr.bf16.mxu0 %v3967
    %5859 = vmatpush1.bf16.msra.mxu0 %v3966
    %5860 = vmatprep.subr.bf16.mxu0 %v3963
    %5861 = vmatpush1.bf16.msra.mxu0 %v3962
    %5862 = vmatprep.subr.bf16.mxu0 %v3959
    %5863 = vmatpush1.bf16.msra.mxu0 %v3958
    %5864 = vmatprep.subr.bf16.mxu0 %v3955
    %5865 = vmatpush1.bf16.msra.mxu0 %v3954
    %5866 = vmatprep.subr.bf16.mxu0 %v4015
    %5867 = vmatpush2.bf16.msra.mxu0 %v4014
    %5868 = vmatprep.subr.bf16.mxu0 %v4011
    %5869 = vmatpush2.bf16.msra.mxu0 %v4010
    %5870 = vmatprep.subr.bf16.mxu0 %v4007
    %5871 = vmatpush2.bf16.msra.mxu0 %v4006
    %5872 = vmatprep.subr.bf16.mxu0 %v4003
    %5873 = vmatpush2.bf16.msra.mxu0 %v4002
    %5874 = vmatprep.subr.bf16.mxu0 %v3999
    %5875 = vmatpush2.bf16.msra.mxu0 %v3998
    %5876 = vmatprep.subr.bf16.mxu0 %v3995
    %5877 = vmatpush2.bf16.msra.mxu0 %v3994
    %5878 = vmatprep.subr.bf16.mxu0 %v3991
    %5879 = vmatpush2.bf16.msra.mxu0 %v3990
    %5880 = vmatprep.subr.bf16.mxu0 %v3987
    %5881 = vmatpush2.bf16.msra.mxu0 %v3986
    %5882 = vmatprep.mubr.bf16.mxu0 %v984
    %5883 = vmatmul.mubr.bf16.gmra.mxu0 %v982
    %v5884 = vpop.f32.mrf.mxu0
    %v5885 = vadd.f32 %v5844, %v5884
    %v5886 = vpop.f32.mrf.mxu0
    %v5887 = vadd.f32 %v5846, %v5886
    %v5888 = vpop.f32.mrf.mxu0
    %v5889 = vpop.f32.mrf.mxu0
    %5890 = vdwg.mxu0
    %5891 = vmatprep.subr.bf16.mxu0 %v4047
    %5892 = vmatpush1.bf16.msra.mxu0 %v4046
    %5893 = vmatprep.subr.bf16.mxu0 %v4043
    %5894 = vmatpush1.bf16.msra.mxu0 %v4042
    %5895 = vmatprep.subr.bf16.mxu0 %v4039
    %5896 = vmatpush1.bf16.msra.mxu0 %v4038
    %5897 = vmatprep.subr.bf16.mxu0 %v4035
    %5898 = vmatpush1.bf16.msra.mxu0 %v4034
    %5899 = vmatprep.subr.bf16.mxu0 %v4031
    %5900 = vmatpush1.bf16.msra.mxu0 %v4030
    %5901 = vmatprep.subr.bf16.mxu0 %v4027
    %5902 = vmatpush1.bf16.msra.mxu0 %v4026
    %5903 = vmatprep.subr.bf16.mxu0 %v4023
    %5904 = vmatpush1.bf16.msra.mxu0 %v4022
    %5905 = vmatprep.subr.bf16.mxu0 %v4019
    %5906 = vmatpush1.bf16.msra.mxu0 %v4018
    %5907 = vmatprep.subr.bf16.mxu0 %v4079
    %5908 = vmatpush2.bf16.msra.mxu0 %v4078
    %5909 = vmatprep.subr.bf16.mxu0 %v4075
    %5910 = vmatpush2.bf16.msra.mxu0 %v4074
    %5911 = vmatprep.subr.bf16.mxu0 %v4071
    %5912 = vmatpush2.bf16.msra.mxu0 %v4070
    %5913 = vmatprep.subr.bf16.mxu0 %v4067
    %5914 = vmatpush2.bf16.msra.mxu0 %v4066
    %5915 = vmatprep.subr.bf16.mxu0 %v4063
    %5916 = vmatpush2.bf16.msra.mxu0 %v4062
    %5917 = vmatprep.subr.bf16.mxu0 %v4059
    %5918 = vmatpush2.bf16.msra.mxu0 %v4058
    %5919 = vmatprep.subr.bf16.mxu0 %v4055
    %5920 = vmatpush2.bf16.msra.mxu0 %v4054
    %5921 = vmatprep.subr.bf16.mxu0 %v4051
    %5922 = vmatpush2.bf16.msra.mxu0 %v4050
    %5923 = vmatprep.mubr.bf16.mxu0 %v981
    %5924 = vmatmul.mubr.bf16.gmra.mxu0 %v967
    %v5925 = vpop.f32.mrf.mxu0
    %v5926 = vadd.f32 %v5885, %v5925
    %v5927 = vpop.f32.mrf.mxu0
    %v5928 = vadd.f32 %v5887, %v5927
    %v5929 = vpop.f32.mrf.mxu0
    %v5930 = vpop.f32.mrf.mxu0
    %5931 = vdwg.mxu0
    %5932 = vmatprep.subr.bf16.mxu0 %v4111
    %5933 = vmatpush1.bf16.msra.mxu0 %v4110
    %5934 = vmatprep.subr.bf16.mxu0 %v4107
    %5935 = vmatpush1.bf16.msra.mxu0 %v4106
    %5936 = vmatprep.subr.bf16.mxu0 %v4103
    %5937 = vmatpush1.bf16.msra.mxu0 %v4102
    %5938 = vmatprep.subr.bf16.mxu0 %v4099
    %5939 = vmatpush1.bf16.msra.mxu0 %v4098
    %5940 = vmatprep.subr.bf16.mxu0 %v4095
    %5941 = vmatpush1.bf16.msra.mxu0 %v4094
    %5942 = vmatprep.subr.bf16.mxu0 %v4091
    %5943 = vmatpush1.bf16.msra.mxu0 %v4090
    %5944 = vmatprep.subr.bf16.mxu0 %v4087
    %5945 = vmatpush1.bf16.msra.mxu0 %v4086
    %5946 = vmatprep.subr.bf16.mxu0 %v4083
    %5947 = vmatpush1.bf16.msra.mxu0 %v4082
    %5948 = vmatprep.subr.bf16.mxu0 %v4143
    %5949 = vmatpush2.bf16.msra.mxu0 %v4142
    %5950 = vmatprep.subr.bf16.mxu0 %v4139
    %5951 = vmatpush2.bf16.msra.mxu0 %v4138
    %5952 = vmatprep.subr.bf16.mxu0 %v4135
    %5953 = vmatpush2.bf16.msra.mxu0 %v4134
    %5954 = vmatprep.subr.bf16.mxu0 %v4131
    %5955 = vmatpush2.bf16.msra.mxu0 %v4130
    %5956 = vmatprep.subr.bf16.mxu0 %v4127
    %5957 = vmatpush2.bf16.msra.mxu0 %v4126
    %5958 = vmatprep.subr.bf16.mxu0 %v4123
    %5959 = vmatpush2.bf16.msra.mxu0 %v4122
    %5960 = vmatprep.subr.bf16.mxu0 %v4119
    %5961 = vmatpush2.bf16.msra.mxu0 %v4118
    %5962 = vmatprep.subr.bf16.mxu0 %v4115
    %5963 = vmatpush2.bf16.msra.mxu0 %v4114
    %5964 = vmatprep.mubr.bf16.mxu0 %v985
    %5965 = vmatmul.mubr.bf16.gmra.mxu0 %v983
    %v5966 = vpop.f32.mrf.mxu0
    %v5967 = vadd.f32 %v5926, %v5966
    %v5968 = vpop.f32.mrf.mxu0
    %v5969 = vadd.f32 %v5928, %v5968
    %v5970 = vpop.f32.mrf.mxu0
    %v5971 = vpop.f32.mrf.mxu0
    %5972 = vdwg.mxu0
    %5973 = vmatprep.subr.bf16.mxu0 0
    %5974 = vmatpush1.bf16.msra.mxu0 0
    %5975 = vmatprep.subr.bf16.mxu0 0
    %5976 = vmatpush1.bf16.msra.mxu0 0
    %5977 = vmatprep.subr.bf16.mxu0 0
    %5978 = vmatpush1.bf16.msra.mxu0 0
    %5979 = vmatprep.subr.bf16.mxu0 0
    %5980 = vmatpush1.bf16.msra.mxu0 0
    %5981 = vmatprep.subr.bf16.mxu0 %v4159
    %5982 = vmatpush1.bf16.msra.mxu0 %v4158
    %5983 = vmatprep.subr.bf16.mxu0 %v4155
    %5984 = vmatpush1.bf16.msra.mxu0 %v4154
    %5985 = vmatprep.subr.bf16.mxu0 %v4151
    %5986 = vmatpush1.bf16.msra.mxu0 %v4150
    %5987 = vmatprep.subr.bf16.mxu0 %v4147
    %5988 = vmatpush1.bf16.msra.mxu0 %v4146
    %5989 = vmatprep.subr.bf16.mxu0 0
    %5990 = vmatpush2.bf16.msra.mxu0 0
    %5991 = vmatprep.subr.bf16.mxu0 0
    %5992 = vmatpush2.bf16.msra.mxu0 0
    %5993 = vmatprep.subr.bf16.mxu0 0
    %5994 = vmatpush2.bf16.msra.mxu0 0
    %5995 = vmatprep.subr.bf16.mxu0 0
    %5996 = vmatpush2.bf16.msra.mxu0 0
    %5997 = vmatprep.subr.bf16.mxu0 0
    %5998 = vmatpush2.bf16.msra.mxu0 0
    %5999 = vmatprep.subr.bf16.mxu0 0
    %6000 = vmatpush2.bf16.msra.mxu0 0
    %6001 = vmatprep.subr.bf16.mxu0 0
    %6002 = vmatpush2.bf16.msra.mxu0 0
    %6003 = vmatprep.subr.bf16.mxu0 0
    %6004 = vmatpush2.bf16.msra.mxu0 0
    %6005 = vmatprep.mubr.bf16.mxu0 0
    %6006 = vmatmul.mubr.bf16.gmra.mxu0 %v4946
    %v6007 = vpop.f32.mrf.mxu0
    %v6008 = vadd.f32 %v5967, %v6007
    %v6009 = vpop.f32.mrf.mxu0
    %v6010 = vadd.f32 %v5969, %v6009
    %v6011 = vpop.f32.mrf.mxu0
    %v6012 = vpop.f32.mrf.mxu0
    %6013 = vdwg.mxu0
    %v6014 = vmax.f32 %v5475, 0.0
    %v6015 = vmax.f32 %v5477, 0.0
    %v6016 = vmax.f32 %v6008, 0.0
    %v6017 = vmax.f32 %v6010, 0.0
    %v6022 = vcombine.low %v6014, %v6015
    %v6023 = vcombine.low %v6016, %v6017
    %v6025 = vunpack.c.l.s4 1983009808
    %v6026 = vunpack.c.0.s8 %v6025
    %v6027 = vlaneseq
    %v6028 = vshrl.u32 %v6027, 7
    %v6029 = vsub.s32 %v6026, %v6028
    %v6030 = vrot.slane %v6022, %v6029
    %v6032 = vunpack.c.l.s4 1983009808
    %v6033 = vunpack.c.0.s8 %v6032
    %v6034 = vlaneseq
    %v6035 = vshrl.u32 %v6034, 7
    %v6036 = vsub.s32 %v6033, %v6035
    %v6037 = vrot.slane %v6023, %v6036
    %v6038 = vcombine.low %v6030, %v6037
    %6040 = vst [vmem:[#allocation2] sm:$0xff] %v6038
    %v6041 = vpack.c.bf16 %v6014, %v6014
    %v6042 = vpack.c.bf16 %v6015, %v6015
    %v6043 = vpack.c.bf16 %v6016, %v6016
    %v6044 = vpack.c.bf16 %v6017, %v6017
    %v6045 = vld [vmem:[%s3] sm:$0xf]
    %v6046 = vld [vmem:[%s3 + $0x4] sm:$0xf]
    %v6047 = vld [vmem:[%s3 + $0x8] sm:$0xf]
    %v6048 = vld [vmem:[%s3 + $0xc] sm:$0xf]
    %v6049 = vld [vmem:[%s3 + $0x10] sm:$0xf]
    %v6050 = vld [vmem:[%s3 + $0x14] sm:$0xf]
    %v6051 = vld [vmem:[%s3 + $0x18] sm:$0xf]
    %v6052 = vld [vmem:[%s3 + $0x1c] sm:$0xf]
    %v6053 = vld [vmem:[%s3 + $0x20] sm:$0xf]
    %v6054 = vld [vmem:[%s3 + $0x24] sm:$0xf]
    %v6055 = vld [vmem:[%s3 + $0x28] sm:$0xf]
    %v6056 = vld [vmem:[%s3 + $0x2c] sm:$0xf]
    %v6057 = vld [vmem:[%s3 + $0x30] sm:$0xf]
    %v6058 = vld [vmem:[%s3 + $0x34] sm:$0xf]
    %v6059 = vld [vmem:[%s3 + $0x38] sm:$0xf]
    %v6060 = vld [vmem:[%s3 + $0x3c] sm:$0xf]
    %v6061 = vld [vmem:[%s3 + $0x40] sm:$0xf]
    %v6062 = vld [vmem:[%s3 + $0x44] sm:$0xf]
    %v6063 = vld [vmem:[%s3 + $0x48] sm:$0xf]
    %v6064 = vld [vmem:[%s3 + $0x4c] sm:$0xf]
    %v6065 = vld [vmem:[%s3 + $0x50] sm:$0xf]
    %v6066 = vld [vmem:[%s3 + $0x54] sm:$0xf]
    %v6067 = vld [vmem:[%s3 + $0x58] sm:$0xf]
    %v6068 = vld [vmem:[%s3 + $0x5c] sm:$0xf]
    %v6069 = vld [vmem:[%s3 + $0x60] sm:$0xf]
    %v6070 = vld [vmem:[%s3 + $0x64] sm:$0xf]
    %v6071 = vld [vmem:[%s3 + $0x68] sm:$0xf]
    %v6072 = vld [vmem:[%s3 + $0x6c] sm:$0xf]
    %v6073 = vld [vmem:[%s3 + $0x70] sm:$0xf]
    %v6074 = vld [vmem:[%s3 + $0x74] sm:$0xf]
    %v6075 = vld [vmem:[%s3 + $0x78] sm:$0xf]
    %v6076 = vld [vmem:[%s3 + $0x7c] sm:$0xf]
    %v6077 = vld [vmem:[%s3 + $0x80] sm:$0xf]
    %v6078 = vld [vmem:[%s3 + $0x84] sm:$0xf]
    %v6079 = vld [vmem:[%s3 + $0x88] sm:$0xf]
    %v6080 = vld [vmem:[%s3 + $0x8c] sm:$0xf]
    %v6081 = vld [vmem:[%s3 + $0x90] sm:$0xf]
    %v6082 = vld [vmem:[%s3 + $0x94] sm:$0xf]
    %v6083 = vld [vmem:[%s3 + $0x98] sm:$0xf]
    %v6084 = vld [vmem:[%s3 + $0x9c] sm:$0xf]
    %v6085 = vld [vmem:[%s3 + $0xa0] sm:$0xf]
    %v6086 = vld [vmem:[%s3 + $0xa4] sm:$0xf]
    %v6087 = vld [vmem:[%s3 + $0xa8] sm:$0xf]
    %v6088 = vld [vmem:[%s3 + $0xac] sm:$0xf]
    %v6089 = vld [vmem:[%s3 + $0xb0] sm:$0xf]
    %v6090 = vld [vmem:[%s3 + $0xb4] sm:$0xf]
    %v6091 = vld [vmem:[%s3 + $0xb8] sm:$0xf]
    %v6092 = vld [vmem:[%s3 + $0xbc] sm:$0xf]
    %v6093 = vld [vmem:[%s3 + $0xc0] sm:$0xf]
    %v6094 = vld [vmem:[%s3 + $0xc4] sm:$0xf]
    %v6095 = vld [vmem:[%s3 + $0xc8] sm:$0xf]
    %v6096 = vld [vmem:[%s3 + $0xcc] sm:$0xf]
    %v6097 = vld [vmem:[%s3 + $0xd0] sm:$0xf]
    %v6098 = vld [vmem:[%s3 + $0xd4] sm:$0xf]
    %v6099 = vld [vmem:[%s3 + $0xd8] sm:$0xf]
    %v6100 = vld [vmem:[%s3 + $0xdc] sm:$0xf]
    %v6101 = vld [vmem:[%s3 + $0xe0] sm:$0xf]
    %v6102 = vld [vmem:[%s3 + $0xe4] sm:$0xf]
    %v6103 = vld [vmem:[%s3 + $0xe8] sm:$0xf]
    %v6104 = vld [vmem:[%s3 + $0xec] sm:$0xf]
    %v6105 = vld [vmem:[%s3 + $0xf0] sm:$0xf]
    %v6106 = vld [vmem:[%s3 + $0xf4] sm:$0xf]
    %v6107 = vld [vmem:[%s3 + $0xf8] sm:$0xf]
    %v6108 = vld [vmem:[%s3 + $0xfc] sm:$0xf]
    %v6109 = vld [vmem:[%s4] sm:$0x1]
    %v6111 = vlaneseq
    %v6112 = vshrl.u32 %v6111, 7
    %v6113 = vsub.s32 0, %v6112
    %v6114 = vrot.slane %v6109, %v6113
    %v6180 = vunpack.c.l.b16 %v6045
    %v6181 = vunpack.c.l.b16 %v6046
    %v6182 = vunpack.c.l.b16 %v6047
    %v6183 = vunpack.c.l.b16 %v6048
    %v6184 = vunpack.c.l.b16 %v6049
    %v6185 = vunpack.c.l.b16 %v6050
    %v6186 = vunpack.c.l.b16 %v6051
    %v6187 = vunpack.c.l.b16 %v6052
    %v6188 = vunpack.c.l.b16 %v6053
    %v6189 = vunpack.c.l.b16 %v6054
    %v6190 = vunpack.c.l.b16 %v6055
    %v6191 = vunpack.c.l.b16 %v6056
    %v6192 = vunpack.c.l.b16 %v6057
    %v6193 = vunpack.c.l.b16 %v6058
    %v6194 = vunpack.c.l.b16 %v6059
    %v6195 = vunpack.c.l.b16 %v6060
    %v6196 = vunpack.c.l.b16 %v6061
    %v6197 = vunpack.c.l.b16 %v6062
    %v6198 = vunpack.c.l.b16 %v6063
    %v6199 = vunpack.c.l.b16 %v6064
    %v6200 = vunpack.c.l.b16 %v6065
    %v6201 = vunpack.c.l.b16 %v6066
    %v6202 = vunpack.c.l.b16 %v6067
    %v6203 = vunpack.c.l.b16 %v6068
    %v6204 = vunpack.c.l.b16 %v6069
    %v6205 = vunpack.c.l.b16 %v6070
    %v6206 = vunpack.c.l.b16 %v6071
    %v6207 = vunpack.c.l.b16 %v6072
    %v6208 = vunpack.c.l.b16 %v6073
    %v6209 = vunpack.c.l.b16 %v6074
    %v6210 = vunpack.c.l.b16 %v6075
    %v6211 = vunpack.c.l.b16 %v6076
    %v6212 = vunpack.c.l.b16 %v6077
    %v6213 = vunpack.c.l.b16 %v6078
    %v6214 = vunpack.c.l.b16 %v6079
    %v6215 = vunpack.c.l.b16 %v6080
    %v6216 = vunpack.c.l.b16 %v6081
    %v6217 = vunpack.c.l.b16 %v6082
    %v6218 = vunpack.c.l.b16 %v6083
    %v6219 = vunpack.c.l.b16 %v6084
    %v6220 = vunpack.c.l.b16 %v6085
    %v6221 = vunpack.c.l.b16 %v6086
    %v6222 = vunpack.c.l.b16 %v6087
    %v6223 = vunpack.c.l.b16 %v6088
    %v6224 = vunpack.c.l.b16 %v6089
    %v6225 = vunpack.c.l.b16 %v6090
    %v6226 = vunpack.c.l.b16 %v6091
    %v6227 = vunpack.c.l.b16 %v6092
    %v6228 = vunpack.c.l.b16 %v6093
    %v6229 = vunpack.c.l.b16 %v6094
    %v6230 = vunpack.c.l.b16 %v6095
    %v6231 = vunpack.c.l.b16 %v6096
    %v6232 = vunpack.c.l.b16 %v6097
    %v6233 = vunpack.c.l.b16 %v6098
    %v6234 = vunpack.c.l.b16 %v6099
    %v6235 = vunpack.c.l.b16 %v6100
    %v6236 = vunpack.c.l.b16 %v6101
    %v6237 = vunpack.c.l.b16 %v6102
    %v6238 = vunpack.c.l.b16 %v6103
    %v6239 = vunpack.c.l.b16 %v6104
    %v6240 = vunpack.c.l.b16 %v6105
    %v6241 = vunpack.c.l.b16 %v6106
    %v6242 = vunpack.c.l.b16 %v6107
    %v6243 = vunpack.c.l.b16 %v6108
    %v6244 = vpack.c.b16 %v6181, %v6180
    %v6245 = vpack.c.b16 %v6183, %v6182
    %v6246 = vpack.c.b16 %v6185, %v6184
    %v6247 = vpack.c.b16 %v6187, %v6186
    %v6248 = vpack.c.b16 %v6189, %v6188
    %v6249 = vpack.c.b16 %v6191, %v6190
    %v6250 = vpack.c.b16 %v6193, %v6192
    %v6251 = vpack.c.b16 %v6195, %v6194
    %v6252 = vpack.c.b16 %v6197, %v6196
    %v6253 = vpack.c.b16 %v6199, %v6198
    %v6254 = vpack.c.b16 %v6201, %v6200
    %v6255 = vpack.c.b16 %v6203, %v6202
    %v6256 = vpack.c.b16 %v6205, %v6204
    %v6257 = vpack.c.b16 %v6207, %v6206
    %v6258 = vpack.c.b16 %v6209, %v6208
    %v6259 = vpack.c.b16 %v6211, %v6210
    %v6260 = vpack.c.b16 %v6213, %v6212
    %v6261 = vpack.c.b16 %v6215, %v6214
    %v6262 = vpack.c.b16 %v6217, %v6216
    %v6263 = vpack.c.b16 %v6219, %v6218
    %v6264 = vpack.c.b16 %v6221, %v6220
    %v6265 = vpack.c.b16 %v6223, %v6222
    %v6266 = vpack.c.b16 %v6225, %v6224
    %v6267 = vpack.c.b16 %v6227, %v6226
    %v6268 = vpack.c.b16 %v6229, %v6228
    %v6269 = vpack.c.b16 %v6231, %v6230
    %v6270 = vpack.c.b16 %v6233, %v6232
    %v6271 = vpack.c.b16 %v6235, %v6234
    %v6272 = vpack.c.b16 %v6237, %v6236
    %v6273 = vpack.c.b16 %v6239, %v6238
    %v6274 = vpack.c.b16 %v6241, %v6240
    %v6275 = vpack.c.b16 %v6243, %v6242
    %6308 = vmatprep.subr.bf16.mxu0 0
    %6309 = vmatpush1.bf16.msra.mxu0 %v6251
    %6310 = vmatprep.subr.bf16.mxu0 0
    %6311 = vmatpush1.bf16.msra.mxu0 %v6250
    %6312 = vmatprep.subr.bf16.mxu0 0
    %6313 = vmatpush1.bf16.msra.mxu0 %v6249
    %6314 = vmatprep.subr.bf16.mxu0 0
    %6315 = vmatpush1.bf16.msra.mxu0 %v6248
    %6316 = vmatprep.subr.bf16.mxu0 0
    %6317 = vmatpush1.bf16.msra.mxu0 %v6247
    %6318 = vmatprep.subr.bf16.mxu0 0
    %6319 = vmatpush1.bf16.msra.mxu0 %v6246
    %6320 = vmatprep.subr.bf16.mxu0 0
    %6321 = vmatpush1.bf16.msra.mxu0 %v6245
    %6322 = vmatprep.subr.bf16.mxu0 0
    %6323 = vmatpush1.bf16.msra.mxu0 %v6244
    %6324 = vmatprep.subr.bf16.mxu0 0
    %6325 = vmatpush2.bf16.msra.mxu0 %v6259
    %6326 = vmatprep.subr.bf16.mxu0 0
    %6327 = vmatpush2.bf16.msra.mxu0 %v6258
    %6328 = vmatprep.subr.bf16.mxu0 0
    %6329 = vmatpush2.bf16.msra.mxu0 %v6257
    %6330 = vmatprep.subr.bf16.mxu0 0
    %6331 = vmatpush2.bf16.msra.mxu0 %v6256
    %6332 = vmatprep.subr.bf16.mxu0 0
    %6333 = vmatpush2.bf16.msra.mxu0 %v6255
    %6334 = vmatprep.subr.bf16.mxu0 0
    %6335 = vmatpush2.bf16.msra.mxu0 %v6254
    %6336 = vmatprep.subr.bf16.mxu0 0
    %6337 = vmatpush2.bf16.msra.mxu0 %v6253
    %6338 = vmatprep.subr.bf16.mxu0 0
    %6339 = vmatpush2.bf16.msra.mxu0 %v6252
    %6340 = vmatprep.mubr.bf16.mxu0 %v6042
    %6341 = vmatmul.mubr.bf16.gmra.mxu0 %v6041
    %v6342 = vpop.f32.mrf.mxu0
    %v6343 = vadd.f32 %v6114, %v6342
    %v6344 = vpop.f32.mrf.mxu0
    %v6345 = vpop.f32.mrf.mxu0
    %v6346 = vpop.f32.mrf.mxu0
    %6347 = vdwg.mxu0
    %6348 = vmatprep.subr.bf16.mxu0 0
    %6349 = vmatpush1.bf16.msra.mxu0 %v6267
    %6350 = vmatprep.subr.bf16.mxu0 0
    %6351 = vmatpush1.bf16.msra.mxu0 %v6266
    %6352 = vmatprep.subr.bf16.mxu0 0
    %6353 = vmatpush1.bf16.msra.mxu0 %v6265
    %6354 = vmatprep.subr.bf16.mxu0 0
    %6355 = vmatpush1.bf16.msra.mxu0 %v6264
    %6356 = vmatprep.subr.bf16.mxu0 0
    %6357 = vmatpush1.bf16.msra.mxu0 %v6263
    %6358 = vmatprep.subr.bf16.mxu0 0
    %6359 = vmatpush1.bf16.msra.mxu0 %v6262
    %6360 = vmatprep.subr.bf16.mxu0 0
    %6361 = vmatpush1.bf16.msra.mxu0 %v6261
    %6362 = vmatprep.subr.bf16.mxu0 0
    %6363 = vmatpush1.bf16.msra.mxu0 %v6260
    %6364 = vmatprep.subr.bf16.mxu0 0
    %6365 = vmatpush2.bf16.msra.mxu0 %v6275
    %6366 = vmatprep.subr.bf16.mxu0 0
    %6367 = vmatpush2.bf16.msra.mxu0 %v6274
    %6368 = vmatprep.subr.bf16.mxu0 0
    %6369 = vmatpush2.bf16.msra.mxu0 %v6273
    %6370 = vmatprep.subr.bf16.mxu0 0
    %6371 = vmatpush2.bf16.msra.mxu0 %v6272
    %6372 = vmatprep.subr.bf16.mxu0 0
    %6373 = vmatpush2.bf16.msra.mxu0 %v6271
    %6374 = vmatprep.subr.bf16.mxu0 0
    %6375 = vmatpush2.bf16.msra.mxu0 %v6270
    %6376 = vmatprep.subr.bf16.mxu0 0
    %6377 = vmatpush2.bf16.msra.mxu0 %v6269
    %6378 = vmatprep.subr.bf16.mxu0 0
    %6379 = vmatpush2.bf16.msra.mxu0 %v6268
    %6380 = vmatprep.mubr.bf16.mxu0 %v6044
    %6381 = vmatmul.mubr.bf16.gmra.mxu0 %v6043
    %v6382 = vpop.f32.mrf.mxu0
    %v6383 = vadd.f32 %v6343, %v6382
    %v6384 = vpop.f32.mrf.mxu0
    %v6385 = vpop.f32.mrf.mxu0
    %v6386 = vpop.f32.mrf.mxu0
    %6387 = vdwg.mxu0
    %6388 = vst [vmem:[#allocation4] sm:$0x3] %v6383
    // Predicated region
    $region22: #{nature_net_forward.7} parent=1 // pred_check
      _
    $region23: #{nature_net_forward.7} parent=1 // pred_check_branch
      %6390 = sbr.rel (0) target = $region25
    $region24: #{nature_net_forward.7} parent=1 // pred_region
      %s6392 = ssub.s32 128, 128
      %6393 = vsyncadd [#allocation3], %s6392
      %s6395 = sshll.u32 [#allocation2], 4
      %s6396 = int_to_ptr.vmem [resolvable:$true] %s6395
      %6398 = dma.vmem_to_hbm [thread:$0]  %s6396, 128, %s5, [#allocation3]
    $region25: #{nature_net_forward.7} parent=1 // pred_fallthru
      _
    // Predicated region
    $region26: #{nature_net_forward.7} parent=1 // pred_check
      _
    $region27: #{nature_net_forward.7} parent=1 // pred_check_branch
      %6400 = sbr.rel (0) target = $region29
    $region28: #{nature_net_forward.7} parent=1 // pred_region
      %s6402 = ssub.s32 32, 32
      %6403 = vsyncadd [#allocation5], %s6402
      %s6405 = sshll.u32 [#allocation4], 4
      %s6406 = int_to_ptr.vmem [resolvable:$true] %s6405
      %6408 = dma.vmem_to_hbm [thread:$0]  %s6406, 32, %s6, [#allocation5]
    $region29: #{nature_net_forward.7} parent=1 // pred_fallthru
      _
    // Predicated region
    $region30: #{nature_net_forward.7} parent=1 // pred_check
      _
    $region31: #{nature_net_forward.7} parent=1 // pred_check_branch
      %6410 = sbr.rel (0) target = $region33
    $region32: #{nature_net_forward.7} parent=1 // pred_region
      %6411 = dma.done [#allocation3], 128
    $region33: #{nature_net_forward.7} parent=1 // pred_fallthru
      _
    // Predicated region
    $region34: #{nature_net_forward.7} parent=1 // pred_check
      _
    $region35: #{nature_net_forward.7} parent=1 // pred_check_branch
      %6413 = sbr.rel (0) target = $region37
    $region36: #{nature_net_forward.7} parent=1 // pred_region
      %6414 = dma.done [#allocation5], 32
    $region37: #{nature_net_forward.7} parent=1 // pred_fallthru
      _
    %6415 = vsyncpa [#allocation3], 1
    %6416 = vsyncpa [#allocation5], 1

</llo_original>
